<compile_context>
chip_gen: v6e
topology: v6e:2x2x1
jax: 0.10.0
libtpu: 0.0.40
codegen_flags: <defaults>
</compile_context>

<pallas_src>
import functools
import numpy as np
import jax
import jax.numpy as jnp
from jax.experimental import pallas as pl
from jax.experimental.pallas import tpu as pltpu

NEG_INF = -1e9
EPS = 1e-6  # Norm eps
# Scoped VMEM budget: raises v5e's 16 MiB default, fits v7x's 64 MiB physical.
VMEM_LIMIT = 48 * 1024 * 1024


def _round_up(x, m):
    return (x + m - 1) // m * m


# --------------------------------------------------------------- tiling plan

def _plan_dim(dim, single_max, tile_prefs):
    """Pick (tile, padded_dim) for one matmul dimension."""
    if dim <= single_max:
        return dim, dim                       # one full-width tile, no pad
    for t in tile_prefs:
        if dim % t == 0:
            return t, dim
    t = tile_prefs[0]
    return t, _round_up(dim, t)


def plan_linear(K, N):
    tk, K_pad = _plan_dim(K, 1024, (1024, 512, 256, 128))
    tn, N_pad = _plan_dim(N, 512, (512, 256, 128))
    return tk, K_pad, tn, N_pad


def _plan_rows(M):
    if M <= 512:
        tm = _round_up(M, 8)
    elif M <= 2048:
        tm = 256
    else:
        tm = 512
    return tm, _round_up(M, tm)


# -------------------------------------------------------- prepared params ---

@jax.tree_util.register_pytree_node_class
class LinearParams:
    """Pre-padded bf16 weight + f32 bias; K/N kept static (not traced)."""

    def __init__(self, w, b, K, N):
        self.w, self.b, self.K, self.N = w, b, K, N

    def tree_flatten(self):
        return (self.w, self.b), (self.K, self.N)

    @classmethod
    def tree_unflatten(cls, aux, children):
        return cls(children[0], children[1], aux[0], aux[1])


def prep_linear(w, b):
    """Pad once to the tile plan, store weight bf16 / bias f32."""
    K, N = w.shape
    _, K_pad, _, N_pad = plan_linear(K, N)
    if K_pad != K or N_pad != N:
        w = jnp.pad(w, ((0, K_pad - K), (0, N_pad - N)))
    if N_pad != N:
        b = jnp.pad(b, (0, N_pad - N))
    return LinearParams(w.astype(jnp.bfloat16),
                        b.reshape(1, N_pad).astype(jnp.float32), K, N)


# ------------------------------------------------------------------ linear ---

def _linear_kernel(*refs, relu, has_norm, has_res, multi_k):
    idx = 0
    x_ref = refs[idx]; idx += 1
    if has_norm:
        g_ref = refs[idx]; bt_ref = refs[idx + 1]; idx += 2
    w_ref = refs[idx]; b_ref = refs[idx + 1]; idx += 2
    if has_res:
        res_ref = refs[idx]; idx += 1
    o_ref = refs[idx]; idx += 1
    acc_ref = refs[idx] if multi_k else None

    x = x_ref[...]                                    # bf16 tile
    if has_norm:
        # torch Norm: alpha*(x-mean)/(std+eps)+bias, unbiased std, exact divide.
        xf = x.astype(jnp.float32)
        d = xf.shape[-1]
        mean = jnp.mean(xf, axis=-1, keepdims=True)
        var = jnp.sum((xf - mean) ** 2, axis=-1, keepdims=True) / (d - 1)
        inv = 1.0 / (jnp.sqrt(var) + EPS)
        x = (g_ref[...] * (xf - mean) * inv + bt_ref[...]).astype(jnp.bfloat16)

    part = jnp.dot(x, w_ref[...], preferred_element_type=jnp.float32)

    def _finalize(acc):
        out = acc + b_ref[...]
        if relu:
            out = jnp.maximum(out, 0.0)
        if has_res:
            out = out + res_ref[...].astype(jnp.float32)
        o_ref[...] = out.astype(o_ref.dtype)

    if multi_k:
        kk = pl.program_id(2)

        @pl.when(kk == 0)
        def _():
            acc_ref[...] = jnp.zeros_like(acc_ref)

        acc_ref[...] += part

        @pl.when(kk == pl.num_programs(2) - 1)
        def _():
            _finalize(acc_ref[...])
    else:
        _finalize(part)


def _norm_kernel(x_ref, g_ref, b_ref, o_ref):
    x = x_ref[...].astype(jnp.float32)
    d = x.shape[-1]
    mean = jnp.mean(x, axis=-1, keepdims=True)
    var = jnp.sum((x - mean) ** 2, axis=-1, keepdims=True) / (d - 1)
    inv = 1.0 / (jnp.sqrt(var) + EPS)                 # exact (accuracy)
    o_ref[...] = (g_ref[...] * (x - mean) * inv + b_ref[...]).astype(o_ref.dtype)


def norm2d(x2, gamma, beta):
    """Standalone Norm over the last dim of an (M, D) array -> bf16."""
    M, D = x2.shape
    tm = min(256, _round_up(M, 8))
    M_pad = _round_up(M, tm)
    xp = jnp.pad(x2, ((0, M_pad - M), (0, 0))) if M_pad != M else x2
    out = pl.pallas_call(
        _norm_kernel,
        out_shape=jax.ShapeDtypeStruct((M_pad, D), jnp.bfloat16),
        grid=(M_pad // tm,),
        in_specs=[pl.BlockSpec((tm, D), lambda i: (i, 0)),
                  pl.BlockSpec((1, D), lambda i: (0, 0)),
                  pl.BlockSpec((1, D), lambda i: (0, 0))],
        out_specs=pl.BlockSpec((tm, D), lambda i: (i, 0)),
        compiler_params=pltpu.CompilerParams(
            dimension_semantics=("parallel",), vmem_limit_bytes=VMEM_LIMIT),
    )(xp, gamma.reshape(1, D).astype(jnp.float32),
      beta.reshape(1, D).astype(jnp.float32))
    return out[:M] if M_pad != M else out


def linear(x, lp, *, relu=False, residual=None, pre_norm=None,
           out_dtype=jnp.bfloat16):
    """y = (pre_norm?(x)) @ W + b [+ReLU] [+residual].

    x: (..., K) any float dtype (cast to bf16 for DMA/MXU), lp: LinearParams
    with a pre-padded bf16 weight (K_pad, N_pad) and f32 bias (1, N_pad).
    f32 accumulation; output written in `out_dtype` (bf16 for intermediates).
    """
    *lead, K = x.shape
    assert K == lp.K
    N = lp.N
    tk, K_pad, tn, N_pad = plan_linear(K, N)
    nk, nn = K_pad // tk, N_pad // tn

    M = int(np.prod(lead))
    x2 = x.reshape(M, K).astype(jnp.bfloat16)
    res2 = (residual.reshape(M, N).astype(jnp.bfloat16)
            if residual is not None else None)

    # Pre-Norm fusion needs the full row in a single K tile; recomputing the
    # row stats per N tile is only acceptable for a handful of tiles.
    fuse_norm = pre_norm is not None and nk == 1 and nn <= 4
    if pre_norm is not None and not fuse_norm:
        x2 = norm2d(x2, pre_norm[0], pre_norm[1])

    tm, M_pad = _plan_rows(M)
    nm = M_pad // tm

    if M_pad != M or K_pad != K:
        x2 = jnp.pad(x2, ((0, M_pad - M), (0, K_pad - K)))
    if res2 is not None and (M_pad != M or N_pad != N):
        res2 = jnp.pad(res2, ((0, M_pad - M), (0, N_pad - N)))

    multi_k = nk > 1
    if multi_k:
        grid = (nm, nn, nk)
        sems = ("parallel", "parallel", "arbitrary")
        x_spec = pl.BlockSpec((tm, tk), lambda i, j, kk: (i, kk))
        w_spec = pl.BlockSpec((tk, tn), lambda i, j, kk: (kk, j))
        b_spec = pl.BlockSpec((1, tn), lambda i, j, kk: (0, j))
        r_spec = pl.BlockSpec((tm, tn), lambda i, j, kk: (i, j))
        o_spec = pl.BlockSpec((tm, tn), lambda i, j, kk: (i, j))
        g_spec = None
        scratch = [pltpu.VMEM((tm, tn), jnp.float32)]
    else:
        grid = (nm, nn)
        sems = ("parallel", "parallel")
        x_spec = pl.BlockSpec((tm, K_pad), lambda i, j: (i, 0))
        w_spec = pl.BlockSpec((K_pad, tn), lambda i, j: (0, j))
        b_spec = pl.BlockSpec((1, tn), lambda i, j: (0, j))
        r_spec = pl.BlockSpec((tm, tn), lambda i, j: (i, j))
        o_spec = pl.BlockSpec((tm, tn), lambda i, j: (i, j))
        g_spec = pl.BlockSpec((1, K_pad), lambda i, j: (0, 0))
        scratch = []

    in_specs, inputs = [x_spec], [x2]
    if fuse_norm:
        g, bt = pre_norm
        in_specs += [g_spec, g_spec]
        inputs += [g.reshape(1, K).astype(jnp.float32),
                   bt.reshape(1, K).astype(jnp.float32)]
    in_specs += [w_spec, b_spec]
    inputs += [lp.w, lp.b]
    if res2 is not None:
        in_specs.append(r_spec)
        inputs.append(res2)

    kern = functools.partial(_linear_kernel, relu=relu, has_norm=fuse_norm,
                             has_res=res2 is not None, multi_k=multi_k)
    flops = 2 * M_pad * N_pad * K_pad
    bytes_accessed = 2 * (M_pad * K_pad + K_pad * N_pad
                          + M_pad * N_pad * (2 if res2 is not None else 1))

    out = pl.pallas_call(
        kern,
        out_shape=jax.ShapeDtypeStruct((M_pad, N_pad), out_dtype),
        grid=grid,
        in_specs=in_specs,
        out_specs=o_spec,
        scratch_shapes=scratch,
        compiler_params=pltpu.CompilerParams(
            dimension_semantics=sems, vmem_limit_bytes=VMEM_LIMIT),
        cost_estimate=pl.CostEstimate(flops=flops, transcendentals=0,
                                      bytes_accessed=bytes_accessed),
    )(*inputs)

    if M_pad != M or N_pad != N:
        out = out[:M, :N]
    return out.reshape(*lead, N)


# --------------------------------------------------------- flash attention ---

def _attn_tiles(S):
    """(tq, tkv, S_pad) — larger kv blocks amortize per-grid-step overhead."""
    if S <= 256:
        s_pad = _round_up(S, 8)
        return s_pad, s_pad, s_pad
    if S <= 1024:
        return 256, 256, _round_up(S, 256)
    return 256, 512, _round_up(S, 512)


def _flash_attn_kernel(q_ref, k_ref, v_ref, m_ref, o_ref, m_sc, l_sc, acc_sc):
    ki = pl.program_id(3)

    @pl.when(ki == 0)
    def _():
        m_sc[...] = jnp.full_like(m_sc, -jnp.inf)
        l_sc[...] = jnp.zeros_like(l_sc)
        acc_sc[...] = jnp.zeros_like(acc_sc)

    q = q_ref[...]                                    # (tq, dk) bf16, pre-scaled
    k = k_ref[...]                                    # (tkv, dk) bf16
    s = jax.lax.dot_general(q, k, (((1,), (1,)), ((), ())),
                            preferred_element_type=jnp.float32)   # (tq, tkv)
    s = s + m_ref[...].astype(jnp.float32)            # additive bias: 0 / -1e9

    m_prev = m_sc[...]
    m_new = jnp.maximum(m_prev, jnp.max(s, axis=-1, keepdims=True))
    alpha = jnp.exp(m_prev - m_new)
    p = jnp.exp(s - m_new)
    l_sc[...] = alpha * l_sc[...] + jnp.sum(p, axis=-1, keepdims=True)
    acc_sc[...] = alpha * acc_sc[...] + jnp.dot(
        p.astype(jnp.bfloat16), v_ref[...], preferred_element_type=jnp.float32)
    m_sc[...] = m_new

    @pl.when(ki == pl.num_programs(3) - 1)
    def _():
        o_ref[...] = (acc_sc[...] *
                      pl.reciprocal(l_sc[...], approx=True)).astype(o_ref.dtype)


def mha_attention(qkv, mask_bias, *, heads):
    """qkv: (B, S, 3D) bf16 (q already scaled by 1/sqrt(dk));
    mask_bias: (B, S_pad, S_pad) bf16 additive bias.  Returns (B, S, D) bf16."""
    B, S, three_d = qkv.shape
    D = three_d // 3
    dk = D // heads
    tq, tkv, S_pad = _attn_tiles(S)
    grid = (B, heads, S_pad // tq, S_pad // tkv)
    sems = ("parallel", "parallel", "parallel", "arbitrary")
    scratch = [pltpu.VMEM((tq, 1), jnp.float32),
               pltpu.VMEM((tq, 1), jnp.float32),
               pltpu.VMEM((tq, dk), jnp.float32)]
    mask_spec = pl.BlockSpec((None, tq, tkv), lambda b, h, qi, ki: (b, qi, ki))
    ce = pl.CostEstimate(flops=4 * B * heads * S_pad * S_pad * dk,
                         transcendentals=2 * B * heads * S_pad * S_pad,
                         bytes_accessed=2 * (4 * B * S_pad * D
                                             + B * heads * S_pad * S_pad))
    cparams = pltpu.CompilerParams(dimension_semantics=sems,
                                   vmem_limit_bytes=VMEM_LIMIT)

    if dk % 128 == 0:
        # Lane-dense fast path: head slices are read straight from the fused
        # (B, S, 3D) tensor and the output is written directly in (B, S, D)
        # layout — no split / head-transpose copies through HBM.
        qkv_p = (jnp.pad(qkv, ((0, 0), (0, S_pad - S), (0, 0)))
                 if S_pad != S else qkv)
        q_spec = pl.BlockSpec((None, tq, dk), lambda b, h, qi, ki: (b, qi, h))
        k_spec = pl.BlockSpec((None, tkv, dk),
                              lambda b, h, qi, ki: (b, ki, heads + h))
        v_spec = pl.BlockSpec((None, tkv, dk),
                              lambda b, h, qi, ki: (b, ki, 2 * heads + h))
        o_spec = pl.BlockSpec((None, tq, dk), lambda b, h, qi, ki: (b, qi, h))
        out = pl.pallas_call(
            _flash_attn_kernel,
            out_shape=jax.ShapeDtypeStruct((B, S_pad, D), jnp.bfloat16),
            grid=grid,
            in_specs=[q_spec, k_spec, v_spec, mask_spec],
            out_specs=o_spec,
            scratch_shapes=scratch,
            compiler_params=cparams,
            cost_estimate=ce,
        )(qkv_p, qkv_p, qkv_p, mask_bias)
        return out[:, :S, :] if S_pad != S else out

    # General path (dk not a multiple of 128): per-head layout via XLA copies
    # (bf16 now, so half the traffic of the old f32 version).
    q, k, v = jnp.split(qkv, 3, axis=-1)

    def split_heads(t):
        t = t.reshape(B, S, heads, dk).transpose(0, 2, 1, 3)
        if S_pad != S:
            t = jnp.pad(t, ((0, 0), (0, 0), (0, S_pad - S), (0, 0)))
        return t

    qh, kh, vh = split_heads(q), split_heads(k), split_heads(v)
    q_spec = pl.BlockSpec((None, None, tq, dk), lambda b, h, qi, ki: (b, h, qi, 0))
    kv_spec = pl.BlockSpec((None, None, tkv, dk), lambda b, h, qi, ki: (b, h, ki, 0))
    o_spec = pl.BlockSpec((None, None, tq, dk), lambda b, h, qi, ki: (b, h, qi, 0))
    out = pl.pallas_call(
        _flash_attn_kernel,
        out_shape=jax.ShapeDtypeStruct((B, heads, S_pad, dk), jnp.bfloat16),
        grid=grid,
        in_specs=[q_spec, kv_spec, kv_spec, mask_spec],
        out_specs=o_spec,
        scratch_shapes=scratch,
        compiler_params=cparams,
        cost_estimate=ce,
    )(qh, kh, vh, mask_bias)
    out = out[:, :, :S, :]
    return out.transpose(0, 2, 1, 3).reshape(B, S, D)


# ----------------------------------------------------------- model (glue) ---

def decoder_layer(x, mask_bias, p, heads):
    # self-attention sublayer: fused pre-Norm + fused (scaled) QKV projection
    qkv = linear(x, p['qkv'], pre_norm=(p['n1_g'], p['n1_b']))   # (B,S,3D) bf16
    attn = mha_attention(qkv, mask_bias, heads=heads)            # (B,S,D) bf16
    x = linear(attn, p['o'], residual=x)                         # fused residual
    # feed-forward sublayer: fused pre-Norm into FF1, residual into FF2
    h = linear(x, p['ff1'], relu=True, pre_norm=(p['n2_g'], p['n2_b']))
    x = linear(h, p['ff2'], residual=x)
    return x


def transformer_forward(params, feature, step, trg_mask, *, heads, n_layers):
    del step  # embed(step) * 0 contributes exactly zero
    # feature projection: fc_layer(feature_shape, d_model)
    x = linear(feature, params['feat'])                          # (B,S,D) bf16
    B, S, D = x.shape
    # positional embedding lookup for arange(S)
    pos = params['pos_emb'][:S]
    x = (x.astype(jnp.float32) + pos[None, :, :]).astype(jnp.bfloat16)

    # attention mask -> additive bf16 bias, prepared once for all layers
    _, _, S_pad = _attn_tiles(S)
    m = trg_mask
    if S_pad != S:
        m = jnp.pad(m, ((0, 0), (0, S_pad - S), (0, S_pad - S)))
    mask_bias = jnp.where(m == 0, NEG_INF, 0.0).astype(jnp.bfloat16)

    for i in range(n_layers):
        x = decoder_layer(x, mask_bias, params['layers'][i], heads)

    # final Norm fused into the output projection fc_layer(d_model, vocab)
    return linear(x, params['out'],
                  pre_norm=(params['norm_g'], params['norm_b']),
                  out_dtype=jnp.float32)


# ----------------------------------------------------------------- params ---

def init_params(key, *, trg_vocab, d_model, n_layers, d_ff, feature_shape,
                max_length):
    """Raw (torch-like) f32 parameters."""
    def nrm(k, shape, scale=0.02):
        return scale * jax.random.normal(k, shape, dtype=jnp.float32)

    keys = jax.random.split(key, 4 + n_layers)
    params = {
        'feat_w': nrm(keys[0], (feature_shape, d_model)),
        'feat_b': jnp.zeros((d_model,), jnp.float32),
        'pos_emb': nrm(keys[1], (max_length, d_model)),
        'norm_g': jnp.ones((d_model,), jnp.float32),
        'norm_b': jnp.zeros((d_model,), jnp.float32),
        'out_w': nrm(keys[2], (d_model, trg_vocab)),
        'out_b': jnp.zeros((trg_vocab,), jnp.float32),
        'layers': [],
    }
    for i in range(n_layers):
        ks = jax.random.split(keys[4 + i], 4)
        params['layers'].append({
            'n1_g': jnp.ones((d_model,), jnp.float32),
            'n1_b': jnp.zeros((d_model,), jnp.float32),
            'n2_g': jnp.ones((d_model,), jnp.float32),
            'n2_b': jnp.zeros((d_model,), jnp.float32),
            'w_qkv': nrm(ks[0], (d_model, 3 * d_model)),     # q|k|v fused
            'b_qkv': jnp.zeros((3 * d_model,), jnp.float32),
            'wo': nrm(ks[1], (d_model, d_model)),
            'bo': jnp.zeros((d_model,), jnp.float32),
            'w1': nrm(ks[2], (d_model, d_ff)),
            'b1': jnp.zeros((d_ff,), jnp.float32),
            'w2': nrm(ks[3], (d_ff, d_model)),
            'b2': jnp.zeros((d_model,), jnp.float32),
        })
    return params


def prepare_params(raw, *, heads):
    """One-time conversion: fold 1/sqrt(dk) into q, pre-pad + bf16 weights."""
    d_model = raw['feat_w'].shape[1]
    dk = d_model // heads
    scale = 1.0 / float(np.sqrt(dk))
    out = {
        'feat': prep_linear(raw['feat_w'], raw['feat_b']),
        'pos_emb': raw['pos_emb'].astype(jnp.float32),
        'norm_g': raw['norm_g'], 'norm_b': raw['norm_b'],
        'out': prep_linear(raw['out_w'], raw['out_b']),
        'layers': [],
    }
    for lr in raw['layers']:
        w_qkv = lr['w_qkv'].at[:, :d_model].multiply(scale)
        b_qkv = lr['b_qkv'].at[:d_model].multiply(scale)
        out['layers'].append({
            'n1_g': lr['n1_g'], 'n1_b': lr['n1_b'],
            'n2_g': lr['n2_g'], 'n2_b': lr['n2_b'],
            'qkv': prep_linear(w_qkv, b_qkv),
            'o': prep_linear(lr['wo'], lr['bo']),
            'ff1': prep_linear(lr['w1'], lr['b1']),
            'ff2': prep_linear(lr['w2'], lr['b2']),
        })
    return out


if __name__ == "__main__":
    # Small-but-representative shapes: dk = 128 exercises the lane-dense
    # attention path; feature_shape/d_ff = 2048 exercise the K-tiled
    # accumulator path; 3*d_model exercises the multi-N-tile path.
    B, S = 2, 8
    d_model, heads, n_layers = 256, 2, 2
    trg_vocab = 16
    feature_shape = 2048     # stands in for 6*6*2048
    d_ff = 2048              # FeedForward default
    max_length = 1024

    key = jax.random.PRNGKey(0)
    kp, kf, ks = jax.random.split(key, 3)
    raw = init_params(kp, trg_vocab=trg_vocab, d_model=d_model,
                      n_layers=n_layers, d_ff=d_ff,
                      feature_shape=feature_shape, max_length=max_length)
    params = prepare_params(raw, heads=heads)

    feature = jax.random.normal(kf, (B, S, feature_shape), dtype=jnp.float32)
    step = jax.random.randint(ks, (B, S), 0, trg_vocab, dtype=jnp.int32)
    # causal (no-peek) target mask, (B, S, S)
    trg_mask = jnp.tril(jnp.ones((S, S), jnp.int32))[None].repeat(B, axis=0)

    fwd = jax.jit(functools.partial(transformer_forward,
                                    heads=heads, n_layers=n_layers))
    out = fwd(params, feature, step, trg_mask)
    out = jax.block_until_ready(out)
    assert out.shape == (B, S, trg_vocab) and out.dtype == jnp.float32
    assert bool(jnp.all(jnp.isfinite(out)))
    print("KERNEL_OK")
</pallas_src>

<mosaic_0001>
module attributes {stable_mosaic.version = 11 : i64} {
  func.func @_linear_kernel(%arg0: i32, %arg1: i32, %arg2: memref<16x256xbf16, #tpu.memory_space<vmem>>, %arg3: memref<1x256xf32, #tpu.memory_space<vmem>>, %arg4: memref<1x256xf32, #tpu.memory_space<vmem>>, %arg5: memref<256x256xbf16, #tpu.memory_space<vmem>>, %arg6: memref<1x256xf32, #tpu.memory_space<vmem>>, %arg7: memref<16x256xbf16, #tpu.memory_space<vmem>>) attributes {dimension_semantics = [#tpu.dimension_semantics<parallel>, #tpu.dimension_semantics<parallel>], iteration_bounds = array<i64: 1, 3>, scalar_prefetch = 0 : i64, scratch_operands = 0 : i64, tpu.core_type = #tpu.core_type<tc>, window_params = [{transform_indices = @transform_0, window_bounds = array<i64: 16, 256>}, {pipeline_mode = #tpu.pipeline_mode<synchronous>, transform_indices = @transform_1, window_bounds = array<i64: 1, 256>}, {pipeline_mode = #tpu.pipeline_mode<synchronous>, transform_indices = @transform_2, window_bounds = array<i64: 1, 256>}, {transform_indices = @transform_3, window_bounds = array<i64: 256, 256>}, {transform_indices = @transform_4, window_bounds = array<i64: 1, 256>}, {transform_indices = @transform_5, window_bounds = array<i64: 16, 256>}]} {
    %c0 = arith.constant 0 : index
    %c0_0 = arith.constant 0 : index
    %0 = vector.load %arg2[%c0, %c0_0] : memref<16x256xbf16, #tpu.memory_space<vmem>>, vector<16x256xbf16>
    %1 = arith.extf %0 : vector<16x256xbf16> to vector<16x256xf32>
    %cst = arith.constant dense<0.000000e+00> : vector<16xf32>
    %2 = vector.multi_reduction <add>, %1, %cst [1] : vector<16x256xf32> to vector<16xf32>
    %3 = vector.shape_cast %2 : vector<16xf32> to vector<16x1xf32>
    %cst_1 = arith.constant 2.560000e+02 : f32
    %4 = vector.broadcast %cst_1 : f32 to vector<16x1xf32>
    %5 = arith.divf %3, %4 : vector<16x1xf32>
    %6 = vector.broadcast %5 : vector<16x1xf32> to vector<16x256xf32>
    %7 = arith.subf %1, %6 : vector<16x256xf32>
    %8 = arith.mulf %7, %7 : vector<16x256xf32>
    %cst_2 = arith.constant dense<0.000000e+00> : vector<16xf32>
    %9 = vector.multi_reduction <add>, %8, %cst_2 [1] : vector<16x256xf32> to vector<16xf32>
    %10 = vector.shape_cast %9 : vector<16xf32> to vector<16x1xf32>
    %cst_3 = arith.constant 2.550000e+02 : f32
    %11 = vector.broadcast %cst_3 : f32 to vector<16x1xf32>
    %12 = arith.divf %10, %11 : vector<16x1xf32>
    %13 = math.sqrt %12 : vector<16x1xf32>
    %cst_4 = arith.constant 9.99999997E-7 : f32
    %14 = vector.broadcast %cst_4 : f32 to vector<16x1xf32>
    %15 = arith.addf %13, %14 : vector<16x1xf32>
    %cst_5 = arith.constant 1.000000e+00 : f32
    %16 = vector.broadcast %cst_5 : f32 to vector<16x1xf32>
    %17 = arith.divf %16, %15 : vector<16x1xf32>
    %c0_6 = arith.constant 0 : index
    %c0_7 = arith.constant 0 : index
    %18 = vector.load %arg3[%c0_6, %c0_7] : memref<1x256xf32, #tpu.memory_space<vmem>>, vector<1x256xf32>
    %19 = vector.broadcast %5 : vector<16x1xf32> to vector<16x256xf32>
    %20 = arith.subf %1, %19 : vector<16x256xf32>
    %21 = vector.broadcast %18 : vector<1x256xf32> to vector<16x256xf32>
    %22 = arith.mulf %21, %20 : vector<16x256xf32>
    %23 = vector.broadcast %17 : vector<16x1xf32> to vector<16x256xf32>
    %24 = arith.mulf %22, %23 : vector<16x256xf32>
    %c0_8 = arith.constant 0 : index
    %c0_9 = arith.constant 0 : index
    %25 = vector.load %arg4[%c0_8, %c0_9] : memref<1x256xf32, #tpu.memory_space<vmem>>, vector<1x256xf32>
    %26 = vector.broadcast %25 : vector<1x256xf32> to vector<16x256xf32>
    %27 = arith.addf %24, %26 : vector<16x256xf32>
    %28 = arith.truncf %27 : vector<16x256xf32> to vector<16x256xbf16>
    %c0_10 = arith.constant 0 : index
    %c0_11 = arith.constant 0 : index
    %29 = vector.load %arg5[%c0_10, %c0_11] : memref<256x256xbf16, #tpu.memory_space<vmem>>, vector<256x256xbf16>
    %cst_12 = arith.constant dense<0.000000e+00> : vector<16x256xf32>
    %30 = tpu.matmul %28, %29, %cst_12 {dimension_numbers = #tpu.dot_dimension_numbers<[1], [0], [0], [1], [0, 0, 1, 1], [], []>} : vector<16x256xbf16>, vector<256x256xbf16>, vector<16x256xf32> -> vector<16x256xf32>
    %c0_13 = arith.constant 0 : index
    %c0_14 = arith.constant 0 : index
    %31 = vector.load %arg6[%c0_13, %c0_14] : memref<1x256xf32, #tpu.memory_space<vmem>>, vector<1x256xf32>
    %32 = vector.broadcast %31 : vector<1x256xf32> to vector<16x256xf32>
    %33 = arith.addf %30, %32 : vector<16x256xf32>
    %34 = arith.truncf %33 : vector<16x256xf32> to vector<16x256xbf16>
    %c0_15 = arith.constant 0 : index
    %c0_16 = arith.constant 0 : index
    %35 = vector.load %arg7[%c0_15, %c0_16] : memref<16x256xbf16, #tpu.memory_space<vmem>>, vector<16x256xbf16>
    tpu.vector_store %arg7[%c0_15, %c0_16], %34 {strides = array<i32>} : memref<16x256xbf16, #tpu.memory_space<vmem>>, vector<16x256xbf16>,
    return
  }
  func.func @transform_0(%arg0: i32, %arg1: i32) -> (i32, i32) {
    %c0_i32 = arith.constant 0 : i32
    %c0_i32_0 = arith.constant 0 : i32
    return %arg0, %c0_i32 : i32, i32
  }
  func.func @transform_1(%arg0: i32, %arg1: i32) -> (i32, i32) {
    %c0_i32 = arith.constant 0 : i32
    %c0_i32_0 = arith.constant 0 : i32
    %c0_i32_1 = arith.constant 0 : i32
    return %c0_i32, %c0_i32_0 : i32, i32
  }
  func.func @transform_2(%arg0: i32, %arg1: i32) -> (i32, i32) {
    %c0_i32 = arith.constant 0 : i32
    %c0_i32_0 = arith.constant 0 : i32
    %c0_i32_1 = arith.constant 0 : i32
    return %c0_i32, %c0_i32_0 : i32, i32
  }
  func.func @transform_3(%arg0: i32, %arg1: i32) -> (i32, i32) {
    %c0_i32 = arith.constant 0 : i32
    %c0_i32_0 = arith.constant 0 : i32
    return %c0_i32, %arg1 : i32, i32
  }
  func.func @transform_4(%arg0: i32, %arg1: i32) -> (i32, i32) {
    %c0_i32 = arith.constant 0 : i32
    %c0_i32_0 = arith.constant 0 : i32
    return %c0_i32, %arg1 : i32, i32
  }
  func.func @transform_5(%arg0: i32, %arg1: i32) -> (i32, i32) {
    %c0_i32 = arith.constant 0 : i32
    return %arg0, %arg1 : i32, i32
  }
}

module attributes {stable_mosaic.version = 11 : i64} {
  func.func @_linear_kernel(%arg0: i32, %arg1: i32, %arg2: i32, %arg3: memref<16x1024xbf16, #tpu.memory_space<vmem>>, %arg4: memref<1024x256xbf16, #tpu.memory_space<vmem>>, %arg5: memref<1x256xf32, #tpu.memory_space<vmem>>, %arg6: memref<16x256xbf16, #tpu.memory_space<vmem>>, %arg7: memref<16x256xf32, #tpu.memory_space<vmem>>) attributes {dimension_semantics = [#tpu.dimension_semantics<parallel>, #tpu.dimension_semantics<parallel>, #tpu.dimension_semantics<arbitrary>], iteration_bounds = array<i64: 1, 1, 2>, scalar_prefetch = 0 : i64, scratch_operands = 1 : i64, tpu.core_type = #tpu.core_type<tc>, window_params = [{transform_indices = @transform_0, window_bounds = array<i64: 16, 1024>}, {transform_indices = @transform_1, window_bounds = array<i64: 1024, 256>}, {transform_indices = @transform_2, window_bounds = array<i64: 1, 256>}, {transform_indices = @transform_3, window_bounds = array<i64: 16, 256>}]} {
    %c0 = arith.constant 0 : index
    %c0_0 = arith.constant 0 : index
    %0 = vector.load %arg3[%c0, %c0_0] : memref<16x1024xbf16, #tpu.memory_space<vmem>>, vector<16x1024xbf16>
    %c0_1 = arith.constant 0 : index
    %c0_2 = arith.constant 0 : index
    %1 = vector.load %arg4[%c0_1, %c0_2] : memref<1024x256xbf16, #tpu.memory_space<vmem>>, vector<1024x256xbf16>
    %cst = arith.constant dense<0.000000e+00> : vector<16x256xf32>
    %2 = tpu.matmul %0, %1, %cst {dimension_numbers = #tpu.dot_dimension_numbers<[1], [0], [0], [1], [0, 0, 1, 1], [], []>} : vector<16x1024xbf16>, vector<1024x256xbf16>, vector<16x256xf32> -> vector<16x256xf32>
    %c0_i32 = arith.constant 0 : i32
    %3 = arith.cmpi eq, %arg2, %c0_i32 : i32
    %4 = arith.extui %3 : i1 to i32
    %c0_i32_3 = arith.constant 0 : i32
    %5 = arith.cmpi ne, %4, %c0_i32_3 : i32
    scf.if %5 {
      %cst_9 = arith.constant 0.000000e+00 : f32
      %12 = vector.broadcast %cst_9 : f32 to vector<16x256xf32>
      %c0_10 = arith.constant 0 : index
      %c0_11 = arith.constant 0 : index
      %13 = vector.load %arg7[%c0_10, %c0_11] : memref<16x256xf32, #tpu.memory_space<vmem>>, vector<16x256xf32>
      tpu.vector_store %arg7[%c0_10, %c0_11], %12 {strides = array<i32>} : memref<16x256xf32, #tpu.memory_space<vmem>>, vector<16x256xf32>,
    } else {
    }
    %c0_4 = arith.constant 0 : index
    %c0_5 = arith.constant 0 : index
    %6 = vector.load %arg7[%c0_4, %c0_5] : memref<16x256xf32, #tpu.memory_space<vmem>>, vector<16x256xf32>
    %7 = arith.addf %6, %2 : vector<16x256xf32>
    %c0_6 = arith.constant 0 : index
    %c0_7 = arith.constant 0 : index
    %8 = vector.load %arg7[%c0_6, %c0_7] : memref<16x256xf32, #tpu.memory_space<vmem>>, vector<16x256xf32>
    tpu.vector_store %arg7[%c0_6, %c0_7], %7 {strides = array<i32>} : memref<16x256xf32, #tpu.memory_space<vmem>>, vector<16x256xf32>,
    %c1_i32 = arith.constant 1 : i32
    %9 = arith.cmpi eq, %arg2, %c1_i32 : i32
    %10 = arith.extui %9 : i1 to i32
    %c0_i32_8 = arith.constant 0 : i32
    %11 = arith.cmpi ne, %10, %c0_i32_8 : i32
    scf.if %11 {
      %c0_9 = arith.constant 0 : index
      %c0_10 = arith.constant 0 : index
      %12 = vector.load %arg7[%c0_9, %c0_10] : memref<16x256xf32, #tpu.memory_space<vmem>>, vector<16x256xf32>
      %c0_11 = arith.constant 0 : index
      %c0_12 = arith.constant 0 : index
      %13 = vector.load %arg5[%c0_11, %c0_12] : memref<1x256xf32, #tpu.memory_space<vmem>>, vector<1x256xf32>
      %14 = vector.broadcast %13 : vector<1x256xf32> to vector<16x256xf32>
      %15 = arith.addf %12, %14 : vector<16x256xf32>
      %16 = arith.truncf %15 : vector<16x256xf32> to vector<16x256xbf16>
      %c0_13 = arith.constant 0 : index
      %c0_14 = arith.constant 0 : index
      %17 = vector.load %arg6[%c0_13, %c0_14] : memref<16x256xbf16, #tpu.memory_space<vmem>>, vector<16x256xbf16>
      tpu.vector_store %arg6[%c0_13, %c0_14], %16 {strides = array<i32>} : memref<16x256xbf16, #tpu.memory_space<vmem>>, vector<16x256xbf16>,
    } else {
    }
    return
  }
  func.func @transform_0(%arg0: i32, %arg1: i32, %arg2: i32) -> (i32, i32) {
    %c0_i32 = arith.constant 0 : i32
    return %arg0, %arg2 : i32, i32
  }
  func.func @transform_1(%arg0: i32, %arg1: i32, %arg2: i32) -> (i32, i32) {
    %c0_i32 = arith.constant 0 : i32
    return %arg2, %arg1 : i32, i32
  }
  func.func @transform_2(%arg0: i32, %arg1: i32, %arg2: i32) -> (i32, i32) {
    %c0_i32 = arith.constant 0 : i32
    %c0_i32_0 = arith.constant 0 : i32
    return %c0_i32, %arg1 : i32, i32
  }
  func.func @transform_3(%arg0: i32, %arg1: i32, %arg2: i32) -> (i32, i32) {
    %c0_i32 = arith.constant 0 : i32
    return %arg0, %arg1 : i32, i32
  }
}

module attributes {stable_mosaic.version = 11 : i64} {
  func.func @_flash_attn_kernel(%arg0: i32, %arg1: i32, %arg2: i32, %arg3: i32, %arg4: memref<1x8x128xbf16, #tpu.memory_space<vmem>>, %arg5: memref<1x8x128xbf16, #tpu.memory_space<vmem>>, %arg6: memref<1x8x128xbf16, #tpu.memory_space<vmem>>, %arg7: memref<1x8x8xbf16, #tpu.memory_space<vmem>>, %arg8: memref<1x8x128xbf16, #tpu.memory_space<vmem>>, %arg9: memref<8x1xf32, #tpu.memory_space<vmem>>, %arg10: memref<8x1xf32, #tpu.memory_space<vmem>>, %arg11: memref<8x128xf32, #tpu.memory_space<vmem>>) attributes {dimension_semantics = [#tpu.dimension_semantics<parallel>, #tpu.dimension_semantics<parallel>, #tpu.dimension_semantics<parallel>, #tpu.dimension_semantics<arbitrary>], iteration_bounds = array<i64: 2, 2, 1, 1>, scalar_prefetch = 0 : i64, scratch_operands = 3 : i64, tpu.core_type = #tpu.core_type<tc>, window_params = [{transform_indices = @transform_0, window_bounds = array<i64: 1, 8, 128>}, {transform_indices = @transform_1, window_bounds = array<i64: 1, 8, 128>}, {transform_indices = @transform_2, window_bounds = array<i64: 1, 8, 128>}, {transform_indices = @transform_3, window_bounds = array<i64: 1, 8, 8>}, {transform_indices = @transform_4, window_bounds = array<i64: 1, 8, 128>}]} {
    %c0_i32 = arith.constant 0 : i32
    %0 = arith.cmpi eq, %arg3, %c0_i32 : i32
    %1 = arith.extui %0 : i1 to i32
    %c0_i32_0 = arith.constant 0 : i32
    %2 = arith.cmpi ne, %1, %c0_i32_0 : i32
    scf.if %2 {
      %cst_29 = arith.constant 0xFF800000 : f32
      %40 = vector.broadcast %cst_29 : f32 to vector<8x1xf32>
      %c0_30 = arith.constant 0 : index
      %c0_31 = arith.constant 0 : index
      %41 = vector.load %arg9[%c0_30, %c0_31] : memref<8x1xf32, #tpu.memory_space<vmem>>, vector<8x1xf32>
      tpu.vector_store %arg9[%c0_30, %c0_31], %40 {strides = array<i32>} : memref<8x1xf32, #tpu.memory_space<vmem>>, vector<8x1xf32>,
      %cst_32 = arith.constant 0.000000e+00 : f32
      %42 = vector.broadcast %cst_32 : f32 to vector<8x1xf32>
      %c0_33 = arith.constant 0 : index
      %c0_34 = arith.constant 0 : index
      %43 = vector.load %arg10[%c0_33, %c0_34] : memref<8x1xf32, #tpu.memory_space<vmem>>, vector<8x1xf32>
      tpu.vector_store %arg10[%c0_33, %c0_34], %42 {strides = array<i32>} : memref<8x1xf32, #tpu.memory_space<vmem>>, vector<8x1xf32>,
      %cst_35 = arith.constant 0.000000e+00 : f32
      %44 = vector.broadcast %cst_35 : f32 to vector<8x128xf32>
      %c0_36 = arith.constant 0 : index
      %c0_37 = arith.constant 0 : index
      %45 = vector.load %arg11[%c0_36, %c0_37] : memref<8x128xf32, #tpu.memory_space<vmem>>, vector<8x128xf32>
      tpu.vector_store %arg11[%c0_36, %c0_37], %44 {strides = array<i32>} : memref<8x128xf32, #tpu.memory_space<vmem>>, vector<8x128xf32>,
    } else {
    }
    %c0 = arith.constant 0 : index
    %c0_1 = arith.constant 0 : index
    %c0_2 = arith.constant 0 : index
    %3 = vector.load %arg4[%c0, %c0_1, %c0_2] : memref<1x8x128xbf16, #tpu.memory_space<vmem>>, vector<1x8x128xbf16>
    %4 = vector.shape_cast %3 : vector<1x8x128xbf16> to vector<8x128xbf16>
    %c0_3 = arith.constant 0 : index
    %c0_4 = arith.constant 0 : index
    %c0_5 = arith.constant 0 : index
    %5 = vector.load %arg5[%c0_3, %c0_4, %c0_5] : memref<1x8x128xbf16, #tpu.memory_space<vmem>>, vector<1x8x128xbf16>
    %6 = vector.shape_cast %5 : vector<1x8x128xbf16> to vector<8x128xbf16>
    %cst = arith.constant dense<0.000000e+00> : vector<8x8xf32>
    %7 = tpu.matmul %4, %6, %cst {dimension_numbers = #tpu.dot_dimension_numbers<[1], [1], [0], [0], [0, 0, 1, 0], [], []>} : vector<8x128xbf16>, vector<8x128xbf16>, vector<8x8xf32> -> vector<8x8xf32>
    %c0_6 = arith.constant 0 : index
    %c0_7 = arith.constant 0 : index
    %c0_8 = arith.constant 0 : index
    %8 = vector.load %arg7[%c0_6, %c0_7, %c0_8] : memref<1x8x8xbf16, #tpu.memory_space<vmem>>, vector<1x8x8xbf16>
    %9 = vector.shape_cast %8 : vector<1x8x8xbf16> to vector<8x8xbf16>
    %10 = arith.extf %9 : vector<8x8xbf16> to vector<8x8xf32>
    %11 = arith.addf %7, %10 : vector<8x8xf32>
    %c0_9 = arith.constant 0 : index
    %c0_10 = arith.constant 0 : index
    %12 = vector.load %arg9[%c0_9, %c0_10] : memref<8x1xf32, #tpu.memory_space<vmem>>, vector<8x1xf32>
    %cst_11 = arith.constant dense<0xFF800000> : vector<8xf32>
    %13 = vector.multi_reduction <maximumf>, %11, %cst_11 [1] : vector<8x8xf32> to vector<8xf32>
    %14 = vector.shape_cast %13 : vector<8xf32> to vector<8x1xf32>
    %15 = arith.maximumf %12, %14 : vector<8x1xf32>
    %16 = arith.subf %12, %15 : vector<8x1xf32>
    %17 = math.exp %16 : vector<8x1xf32>
    %18 = vector.broadcast %15 : vector<8x1xf32> to vector<8x8xf32>
    %19 = arith.subf %11, %18 : vector<8x8xf32>
    %20 = math.exp %19 : vector<8x8xf32>
    %c0_12 = arith.constant 0 : index
    %c0_13 = arith.constant 0 : index
    %21 = vector.load %arg10[%c0_12, %c0_13] : memref<8x1xf32, #tpu.memory_space<vmem>>, vector<8x1xf32>
    %22 = arith.mulf %17, %21 : vector<8x1xf32>
    %cst_14 = arith.constant dense<0.000000e+00> : vector<8xf32>
    %23 = vector.multi_reduction <add>, %20, %cst_14 [1] : vector<8x8xf32> to vector<8xf32>
    %24 = vector.shape_cast %23 : vector<8xf32> to vector<8x1xf32>
    %25 = arith.addf %22, %24 : vector<8x1xf32>
    %c0_15 = arith.constant 0 : index
    %c0_16 = arith.constant 0 : index
    %26 = vector.load %arg10[%c0_15, %c0_16] : memref<8x1xf32, #tpu.memory_space<vmem>>, vector<8x1xf32>
    tpu.vector_store %arg10[%c0_15, %c0_16], %25 {strides = array<i32>} : memref<8x1xf32, #tpu.memory_space<vmem>>, vector<8x1xf32>,
    %c0_17 = arith.constant 0 : index
    %c0_18 = arith.constant 0 : index
    %27 = vector.load %arg11[%c0_17, %c0_18] : memref<8x128xf32, #tpu.memory_space<vmem>>, vector<8x128xf32>
    %28 = vector.broadcast %17 : vector<8x1xf32> to vector<8x128xf32>
    %29 = arith.mulf %28, %27 : vector<8x128xf32>
    %30 = arith.truncf %20 : vector<8x8xf32> to vector<8x8xbf16>
    %c0_19 = arith.constant 0 : index
    %c0_20 = arith.constant 0 : index
    %c0_21 = arith.constant 0 : index
    %31 = vector.load %arg6[%c0_19, %c0_20, %c0_21] : memref<1x8x128xbf16, #tpu.memory_space<vmem>>, vector<1x8x128xbf16>
    %32 = vector.shape_cast %31 : vector<1x8x128xbf16> to vector<8x128xbf16>
    %cst_22 = arith.constant dense<0.000000e+00> : vector<8x128xf32>
    %33 = tpu.matmul %30, %32, %cst_22 {dimension_numbers = #tpu.dot_dimension_numbers<[1], [0], [0], [1], [0, 0, 1, 1], [], []>} : vector<8x8xbf16>, vector<8x128xbf16>, vector<8x128xf32> -> vector<8x128xf32>
    %34 = arith.addf %29, %33 : vector<8x128xf32>
    %c0_23 = arith.constant 0 : index
    %c0_24 = arith.constant 0 : index
    %35 = vector.load %arg11[%c0_23, %c0_24] : memref<8x128xf32, #tpu.memory_space<vmem>>, vector<8x128xf32>
    tpu.vector_store %arg11[%c0_23, %c0_24], %34 {strides = array<i32>} : memref<8x128xf32, #tpu.memory_space<vmem>>, vector<8x128xf32>,
    %c0_25 = arith.constant 0 : index
    %c0_26 = arith.constant 0 : index
    %36 = vector.load %arg9[%c0_25, %c0_26] : memref<8x1xf32, #tpu.memory_space<vmem>>, vector<8x1xf32>
    tpu.vector_store %arg9[%c0_25, %c0_26], %15 {strides = array<i32>} : memref<8x1xf32, #tpu.memory_space<vmem>>, vector<8x1xf32>,
    %c0_i32_27 = arith.constant 0 : i32
    %37 = arith.cmpi eq, %arg3, %c0_i32_27 : i32
    %38 = arith.extui %37 : i1 to i32
    %c0_i32_28 = arith.constant 0 : i32
    %39 = arith.cmpi ne, %38, %c0_i32_28 : i32
    scf.if %39 {
      %c0_29 = arith.constant 0 : index
      %c0_30 = arith.constant 0 : index
      %40 = vector.load %arg11[%c0_29, %c0_30] : memref<8x128xf32, #tpu.memory_space<vmem>>, vector<8x128xf32>
      %c0_31 = arith.constant 0 : index
      %c0_32 = arith.constant 0 : index
      %41 = vector.load %arg10[%c0_31, %c0_32] : memref<8x1xf32, #tpu.memory_space<vmem>>, vector<8x1xf32>
      %42 = tpu.reciprocal %41 {approx = true} : vector<8x1xf32> -> vector<8x1xf32>
      %43 = vector.broadcast %42 : vector<8x1xf32> to vector<8x128xf32>
      %44 = arith.mulf %40, %43 : vector<8x128xf32>
      %45 = arith.truncf %44 : vector<8x128xf32> to vector<8x128xbf16>
      %c0_33 = arith.constant 0 : index
      %c0_34 = arith.constant 0 : index
      %c0_35 = arith.constant 0 : index
      %46 = vector.load %arg8[%c0_33, %c0_34, %c0_35] : memref<1x8x128xbf16, #tpu.memory_space<vmem>>, vector<1x8x128xbf16>
      %47 = vector.shape_cast %46 : vector<1x8x128xbf16> to vector<8x128xbf16>
      %48 = vector.shape_cast %45 : vector<8x128xbf16> to vector<1x8x128xbf16>
      tpu.vector_store %arg8[%c0_33, %c0_34, %c0_35], %48 {strides = array<i32>} : memref<1x8x128xbf16, #tpu.memory_space<vmem>>, vector<1x8x128xbf16>,
    } else {
    }
    return
  }
  func.func @transform_0(%arg0: i32, %arg1: i32, %arg2: i32, %arg3: i32) -> (i32, i32, i32) {
    %c0_i32 = arith.constant 0 : i32
    return %arg0, %arg2, %arg1 : i32, i32, i32
  }
  func.func @transform_1(%arg0: i32, %arg1: i32, %arg2: i32, %arg3: i32) -> (i32, i32, i32) {
    %c2_i32 = arith.constant 2 : i32
    %0 = arith.addi %c2_i32, %arg1 : i32
    %c0_i32 = arith.constant 0 : i32
    return %arg0, %arg3, %0 : i32, i32, i32
  }
  func.func @transform_2(%arg0: i32, %arg1: i32, %arg2: i32, %arg3: i32) -> (i32, i32, i32) {
    %c4_i32 = arith.constant 4 : i32
    %0 = arith.addi %c4_i32, %arg1 : i32
    %c0_i32 = arith.constant 0 : i32
    return %arg0, %arg3, %0 : i32, i32, i32
  }
  func.func @transform_3(%arg0: i32, %arg1: i32, %arg2: i32, %arg3: i32) -> (i32, i32, i32) {
    %c0_i32 = arith.constant 0 : i32
    return %arg0, %arg2, %arg3 : i32, i32, i32
  }
  func.func @transform_4(%arg0: i32, %arg1: i32, %arg2: i32, %arg3: i32) -> (i32, i32, i32) {
    %c0_i32 = arith.constant 0 : i32
    return %arg0, %arg2, %arg1 : i32, i32, i32
  }
}

module attributes {stable_mosaic.version = 11 : i64} {
  func.func @_linear_kernel(%arg0: i32, %arg1: i32, %arg2: memref<16x256xbf16, #tpu.memory_space<vmem>>, %arg3: memref<256x256xbf16, #tpu.memory_space<vmem>>, %arg4: memref<1x256xf32, #tpu.memory_space<vmem>>, %arg5: memref<16x256xbf16, #tpu.memory_space<vmem>>, %arg6: memref<16x256xbf16, #tpu.memory_space<vmem>>) attributes {dimension_semantics = [#tpu.dimension_semantics<parallel>, #tpu.dimension_semantics<parallel>], iteration_bounds = array<i64: 1, 1>, scalar_prefetch = 0 : i64, scratch_operands = 0 : i64, tpu.core_type = #tpu.core_type<tc>, window_params = [{transform_indices = @transform_0, window_bounds = array<i64: 16, 256>}, {transform_indices = @transform_1, window_bounds = array<i64: 256, 256>}, {transform_indices = @transform_2, window_bounds = array<i64: 1, 256>}, {transform_indices = @transform_3, window_bounds = array<i64: 16, 256>}, {transform_indices = @transform_4, window_bounds = array<i64: 16, 256>}]} {
    %c0 = arith.constant 0 : index
    %c0_0 = arith.constant 0 : index
    %0 = vector.load %arg2[%c0, %c0_0] : memref<16x256xbf16, #tpu.memory_space<vmem>>, vector<16x256xbf16>
    %c0_1 = arith.constant 0 : index
    %c0_2 = arith.constant 0 : index
    %1 = vector.load %arg3[%c0_1, %c0_2] : memref<256x256xbf16, #tpu.memory_space<vmem>>, vector<256x256xbf16>
    %cst = arith.constant dense<0.000000e+00> : vector<16x256xf32>
    %2 = tpu.matmul %0, %1, %cst {dimension_numbers = #tpu.dot_dimension_numbers<[1], [0], [0], [1], [0, 0, 1, 1], [], []>} : vector<16x256xbf16>, vector<256x256xbf16>, vector<16x256xf32> -> vector<16x256xf32>
    %c0_3 = arith.constant 0 : index
    %c0_4 = arith.constant 0 : index
    %3 = vector.load %arg4[%c0_3, %c0_4] : memref<1x256xf32, #tpu.memory_space<vmem>>, vector<1x256xf32>
    %4 = vector.broadcast %3 : vector<1x256xf32> to vector<16x256xf32>
    %5 = arith.addf %2, %4 : vector<16x256xf32>
    %c0_5 = arith.constant 0 : index
    %c0_6 = arith.constant 0 : index
    %6 = vector.load %arg5[%c0_5, %c0_6] : memref<16x256xbf16, #tpu.memory_space<vmem>>, vector<16x256xbf16>
    %7 = arith.extf %6 : vector<16x256xbf16> to vector<16x256xf32>
    %8 = arith.addf %5, %7 : vector<16x256xf32>
    %9 = arith.truncf %8 : vector<16x256xf32> to vector<16x256xbf16>
    %c0_7 = arith.constant 0 : index
    %c0_8 = arith.constant 0 : index
    %10 = vector.load %arg6[%c0_7, %c0_8] : memref<16x256xbf16, #tpu.memory_space<vmem>>, vector<16x256xbf16>
    tpu.vector_store %arg6[%c0_7, %c0_8], %9 {strides = array<i32>} : memref<16x256xbf16, #tpu.memory_space<vmem>>, vector<16x256xbf16>,
    return
  }
  func.func @transform_0(%arg0: i32, %arg1: i32) -> (i32, i32) {
    %c0_i32 = arith.constant 0 : i32
    %c0_i32_0 = arith.constant 0 : i32
    return %arg0, %c0_i32 : i32, i32
  }
  func.func @transform_1(%arg0: i32, %arg1: i32) -> (i32, i32) {
    %c0_i32 = arith.constant 0 : i32
    %c0_i32_0 = arith.constant 0 : i32
    return %c0_i32, %arg1 : i32, i32
  }
  func.func @transform_2(%arg0: i32, %arg1: i32) -> (i32, i32) {
    %c0_i32 = arith.constant 0 : i32
    %c0_i32_0 = arith.constant 0 : i32
    return %c0_i32, %arg1 : i32, i32
  }
  func.func @transform_3(%arg0: i32, %arg1: i32) -> (i32, i32) {
    %c0_i32 = arith.constant 0 : i32
    return %arg0, %arg1 : i32, i32
  }
  func.func @transform_4(%arg0: i32, %arg1: i32) -> (i32, i32) {
    %c0_i32 = arith.constant 0 : i32
    return %arg0, %arg1 : i32, i32
  }
}

module attributes {stable_mosaic.version = 11 : i64} {
  func.func @_linear_kernel(%arg0: i32, %arg1: i32, %arg2: memref<16x256xbf16, #tpu.memory_space<vmem>>, %arg3: memref<1x256xf32, #tpu.memory_space<vmem>>, %arg4: memref<1x256xf32, #tpu.memory_space<vmem>>, %arg5: memref<256x512xbf16, #tpu.memory_space<vmem>>, %arg6: memref<1x512xf32, #tpu.memory_space<vmem>>, %arg7: memref<16x512xbf16, #tpu.memory_space<vmem>>) attributes {dimension_semantics = [#tpu.dimension_semantics<parallel>, #tpu.dimension_semantics<parallel>], iteration_bounds = array<i64: 1, 4>, scalar_prefetch = 0 : i64, scratch_operands = 0 : i64, tpu.core_type = #tpu.core_type<tc>, window_params = [{transform_indices = @transform_0, window_bounds = array<i64: 16, 256>}, {pipeline_mode = #tpu.pipeline_mode<synchronous>, transform_indices = @transform_1, window_bounds = array<i64: 1, 256>}, {pipeline_mode = #tpu.pipeline_mode<synchronous>, transform_indices = @transform_2, window_bounds = array<i64: 1, 256>}, {transform_indices = @transform_3, window_bounds = array<i64: 256, 512>}, {transform_indices = @transform_4, window_bounds = array<i64: 1, 512>}, {transform_indices = @transform_5, window_bounds = array<i64: 16, 512>}]} {
    %c0 = arith.constant 0 : index
    %c0_0 = arith.constant 0 : index
    %0 = vector.load %arg2[%c0, %c0_0] : memref<16x256xbf16, #tpu.memory_space<vmem>>, vector<16x256xbf16>
    %1 = arith.extf %0 : vector<16x256xbf16> to vector<16x256xf32>
    %cst = arith.constant dense<0.000000e+00> : vector<16xf32>
    %2 = vector.multi_reduction <add>, %1, %cst [1] : vector<16x256xf32> to vector<16xf32>
    %3 = vector.shape_cast %2 : vector<16xf32> to vector<16x1xf32>
    %cst_1 = arith.constant 2.560000e+02 : f32
    %4 = vector.broadcast %cst_1 : f32 to vector<16x1xf32>
    %5 = arith.divf %3, %4 : vector<16x1xf32>
    %6 = vector.broadcast %5 : vector<16x1xf32> to vector<16x256xf32>
    %7 = arith.subf %1, %6 : vector<16x256xf32>
    %8 = arith.mulf %7, %7 : vector<16x256xf32>
    %cst_2 = arith.constant dense<0.000000e+00> : vector<16xf32>
    %9 = vector.multi_reduction <add>, %8, %cst_2 [1] : vector<16x256xf32> to vector<16xf32>
    %10 = vector.shape_cast %9 : vector<16xf32> to vector<16x1xf32>
    %cst_3 = arith.constant 2.550000e+02 : f32
    %11 = vector.broadcast %cst_3 : f32 to vector<16x1xf32>
    %12 = arith.divf %10, %11 : vector<16x1xf32>
    %13 = math.sqrt %12 : vector<16x1xf32>
    %cst_4 = arith.constant 9.99999997E-7 : f32
    %14 = vector.broadcast %cst_4 : f32 to vector<16x1xf32>
    %15 = arith.addf %13, %14 : vector<16x1xf32>
    %cst_5 = arith.constant 1.000000e+00 : f32
    %16 = vector.broadcast %cst_5 : f32 to vector<16x1xf32>
    %17 = arith.divf %16, %15 : vector<16x1xf32>
    %c0_6 = arith.constant 0 : index
    %c0_7 = arith.constant 0 : index
    %18 = vector.load %arg3[%c0_6, %c0_7] : memref<1x256xf32, #tpu.memory_space<vmem>>, vector<1x256xf32>
    %19 = vector.broadcast %5 : vector<16x1xf32> to vector<16x256xf32>
    %20 = arith.subf %1, %19 : vector<16x256xf32>
    %21 = vector.broadcast %18 : vector<1x256xf32> to vector<16x256xf32>
    %22 = arith.mulf %21, %20 : vector<16x256xf32>
    %23 = vector.broadcast %17 : vector<16x1xf32> to vector<16x256xf32>
    %24 = arith.mulf %22, %23 : vector<16x256xf32>
    %c0_8 = arith.constant 0 : index
    %c0_9 = arith.constant 0 : index
    %25 = vector.load %arg4[%c0_8, %c0_9] : memref<1x256xf32, #tpu.memory_space<vmem>>, vector<1x256xf32>
    %26 = vector.broadcast %25 : vector<1x256xf32> to vector<16x256xf32>
    %27 = arith.addf %24, %26 : vector<16x256xf32>
    %28 = arith.truncf %27 : vector<16x256xf32> to vector<16x256xbf16>
    %c0_10 = arith.constant 0 : index
    %c0_11 = arith.constant 0 : index
    %29 = vector.load %arg5[%c0_10, %c0_11] : memref<256x512xbf16, #tpu.memory_space<vmem>>, vector<256x512xbf16>
    %cst_12 = arith.constant dense<0.000000e+00> : vector<16x512xf32>
    %30 = tpu.matmul %28, %29, %cst_12 {dimension_numbers = #tpu.dot_dimension_numbers<[1], [0], [0], [1], [0, 0, 1, 1], [], []>} : vector<16x256xbf16>, vector<256x512xbf16>, vector<16x512xf32> -> vector<16x512xf32>
    %c0_13 = arith.constant 0 : index
    %c0_14 = arith.constant 0 : index
    %31 = vector.load %arg6[%c0_13, %c0_14] : memref<1x512xf32, #tpu.memory_space<vmem>>, vector<1x512xf32>
    %32 = vector.broadcast %31 : vector<1x512xf32> to vector<16x512xf32>
    %33 = arith.addf %30, %32 : vector<16x512xf32>
    %cst_15 = arith.constant 0.000000e+00 : f32
    %34 = vector.broadcast %cst_15 : f32 to vector<16x512xf32>
    %35 = arith.maximumf %33, %34 : vector<16x512xf32>
    %36 = arith.truncf %35 : vector<16x512xf32> to vector<16x512xbf16>
    %c0_16 = arith.constant 0 : index
    %c0_17 = arith.constant 0 : index
    %37 = vector.load %arg7[%c0_16, %c0_17] : memref<16x512xbf16, #tpu.memory_space<vmem>>, vector<16x512xbf16>
    tpu.vector_store %arg7[%c0_16, %c0_17], %36 {strides = array<i32>} : memref<16x512xbf16, #tpu.memory_space<vmem>>, vector<16x512xbf16>,
    return
  }
  func.func @transform_0(%arg0: i32, %arg1: i32) -> (i32, i32) {
    %c0_i32 = arith.constant 0 : i32
    %c0_i32_0 = arith.constant 0 : i32
    return %arg0, %c0_i32 : i32, i32
  }
  func.func @transform_1(%arg0: i32, %arg1: i32) -> (i32, i32) {
    %c0_i32 = arith.constant 0 : i32
    %c0_i32_0 = arith.constant 0 : i32
    %c0_i32_1 = arith.constant 0 : i32
    return %c0_i32, %c0_i32_0 : i32, i32
  }
  func.func @transform_2(%arg0: i32, %arg1: i32) -> (i32, i32) {
    %c0_i32 = arith.constant 0 : i32
    %c0_i32_0 = arith.constant 0 : i32
    %c0_i32_1 = arith.constant 0 : i32
    return %c0_i32, %c0_i32_0 : i32, i32
  }
  func.func @transform_3(%arg0: i32, %arg1: i32) -> (i32, i32) {
    %c0_i32 = arith.constant 0 : i32
    %c0_i32_0 = arith.constant 0 : i32
    return %c0_i32, %arg1 : i32, i32
  }
  func.func @transform_4(%arg0: i32, %arg1: i32) -> (i32, i32) {
    %c0_i32 = arith.constant 0 : i32
    %c0_i32_0 = arith.constant 0 : i32
    return %c0_i32, %arg1 : i32, i32
  }
  func.func @transform_5(%arg0: i32, %arg1: i32) -> (i32, i32) {
    %c0_i32 = arith.constant 0 : i32
    return %arg0, %arg1 : i32, i32
  }
}

module attributes {stable_mosaic.version = 11 : i64} {
  func.func @_linear_kernel(%arg0: i32, %arg1: i32, %arg2: i32, %arg3: memref<16x1024xbf16, #tpu.memory_space<vmem>>, %arg4: memref<1024x256xbf16, #tpu.memory_space<vmem>>, %arg5: memref<1x256xf32, #tpu.memory_space<vmem>>, %arg6: memref<16x256xbf16, #tpu.memory_space<vmem>>, %arg7: memref<16x256xbf16, #tpu.memory_space<vmem>>, %arg8: memref<16x256xf32, #tpu.memory_space<vmem>>) attributes {dimension_semantics = [#tpu.dimension_semantics<parallel>, #tpu.dimension_semantics<parallel>, #tpu.dimension_semantics<arbitrary>], iteration_bounds = array<i64: 1, 1, 2>, scalar_prefetch = 0 : i64, scratch_operands = 1 : i64, tpu.core_type = #tpu.core_type<tc>, window_params = [{transform_indices = @transform_0, window_bounds = array<i64: 16, 1024>}, {transform_indices = @transform_1, window_bounds = array<i64: 1024, 256>}, {transform_indices = @transform_2, window_bounds = array<i64: 1, 256>}, {transform_indices = @transform_3, window_bounds = array<i64: 16, 256>}, {transform_indices = @transform_4, window_bounds = array<i64: 16, 256>}]} {
    %c0 = arith.constant 0 : index
    %c0_0 = arith.constant 0 : index
    %0 = vector.load %arg3[%c0, %c0_0] : memref<16x1024xbf16, #tpu.memory_space<vmem>>, vector<16x1024xbf16>
    %c0_1 = arith.constant 0 : index
    %c0_2 = arith.constant 0 : index
    %1 = vector.load %arg4[%c0_1, %c0_2] : memref<1024x256xbf16, #tpu.memory_space<vmem>>, vector<1024x256xbf16>
    %cst = arith.constant dense<0.000000e+00> : vector<16x256xf32>
    %2 = tpu.matmul %0, %1, %cst {dimension_numbers = #tpu.dot_dimension_numbers<[1], [0], [0], [1], [0, 0, 1, 1], [], []>} : vector<16x1024xbf16>, vector<1024x256xbf16>, vector<16x256xf32> -> vector<16x256xf32>
    %c0_i32 = arith.constant 0 : i32
    %3 = arith.cmpi eq, %arg2, %c0_i32 : i32
    %4 = arith.extui %3 : i1 to i32
    %c0_i32_3 = arith.constant 0 : i32
    %5 = arith.cmpi ne, %4, %c0_i32_3 : i32
    scf.if %5 {
      %cst_9 = arith.constant 0.000000e+00 : f32
      %12 = vector.broadcast %cst_9 : f32 to vector<16x256xf32>
      %c0_10 = arith.constant 0 : index
      %c0_11 = arith.constant 0 : index
      %13 = vector.load %arg8[%c0_10, %c0_11] : memref<16x256xf32, #tpu.memory_space<vmem>>, vector<16x256xf32>
      tpu.vector_store %arg8[%c0_10, %c0_11], %12 {strides = array<i32>} : memref<16x256xf32, #tpu.memory_space<vmem>>, vector<16x256xf32>,
    } else {
    }
    %c0_4 = arith.constant 0 : index
    %c0_5 = arith.constant 0 : index
    %6 = vector.load %arg8[%c0_4, %c0_5] : memref<16x256xf32, #tpu.memory_space<vmem>>, vector<16x256xf32>
    %7 = arith.addf %6, %2 : vector<16x256xf32>
    %c0_6 = arith.constant 0 : index
    %c0_7 = arith.constant 0 : index
    %8 = vector.load %arg8[%c0_6, %c0_7] : memref<16x256xf32, #tpu.memory_space<vmem>>, vector<16x256xf32>
    tpu.vector_store %arg8[%c0_6, %c0_7], %7 {strides = array<i32>} : memref<16x256xf32, #tpu.memory_space<vmem>>, vector<16x256xf32>,
    %c1_i32 = arith.constant 1 : i32
    %9 = arith.cmpi eq, %arg2, %c1_i32 : i32
    %10 = arith.extui %9 : i1 to i32
    %c0_i32_8 = arith.constant 0 : i32
    %11 = arith.cmpi ne, %10, %c0_i32_8 : i32
    scf.if %11 {
      %c0_9 = arith.constant 0 : index
      %c0_10 = arith.constant 0 : index
      %12 = vector.load %arg8[%c0_9, %c0_10] : memref<16x256xf32, #tpu.memory_space<vmem>>, vector<16x256xf32>
      %c0_11 = arith.constant 0 : index
      %c0_12 = arith.constant 0 : index
      %13 = vector.load %arg5[%c0_11, %c0_12] : memref<1x256xf32, #tpu.memory_space<vmem>>, vector<1x256xf32>
      %14 = vector.broadcast %13 : vector<1x256xf32> to vector<16x256xf32>
      %15 = arith.addf %12, %14 : vector<16x256xf32>
      %c0_13 = arith.constant 0 : index
      %c0_14 = arith.constant 0 : index
      %16 = vector.load %arg6[%c0_13, %c0_14] : memref<16x256xbf16, #tpu.memory_space<vmem>>, vector<16x256xbf16>
      %17 = arith.extf %16 : vector<16x256xbf16> to vector<16x256xf32>
      %18 = arith.addf %15, %17 : vector<16x256xf32>
      %19 = arith.truncf %18 : vector<16x256xf32> to vector<16x256xbf16>
      %c0_15 = arith.constant 0 : index
      %c0_16 = arith.constant 0 : index
      %20 = vector.load %arg7[%c0_15, %c0_16] : memref<16x256xbf16, #tpu.memory_space<vmem>>, vector<16x256xbf16>
      tpu.vector_store %arg7[%c0_15, %c0_16], %19 {strides = array<i32>} : memref<16x256xbf16, #tpu.memory_space<vmem>>, vector<16x256xbf16>,
    } else {
    }
    return
  }
  func.func @transform_0(%arg0: i32, %arg1: i32, %arg2: i32) -> (i32, i32) {
    %c0_i32 = arith.constant 0 : i32
    return %arg0, %arg2 : i32, i32
  }
  func.func @transform_1(%arg0: i32, %arg1: i32, %arg2: i32) -> (i32, i32) {
    %c0_i32 = arith.constant 0 : i32
    return %arg2, %arg1 : i32, i32
  }
  func.func @transform_2(%arg0: i32, %arg1: i32, %arg2: i32) -> (i32, i32) {
    %c0_i32 = arith.constant 0 : i32
    %c0_i32_0 = arith.constant 0 : i32
    return %c0_i32, %arg1 : i32, i32
  }
  func.func @transform_3(%arg0: i32, %arg1: i32, %arg2: i32) -> (i32, i32) {
    %c0_i32 = arith.constant 0 : i32
    return %arg0, %arg1 : i32, i32
  }
  func.func @transform_4(%arg0: i32, %arg1: i32, %arg2: i32) -> (i32, i32) {
    %c0_i32 = arith.constant 0 : i32
    return %arg0, %arg1 : i32, i32
  }
}

module attributes {stable_mosaic.version = 11 : i64} {
  func.func @_linear_kernel(%arg0: i32, %arg1: i32, %arg2: memref<16x256xbf16, #tpu.memory_space<vmem>>, %arg3: memref<1x256xf32, #tpu.memory_space<vmem>>, %arg4: memref<1x256xf32, #tpu.memory_space<vmem>>, %arg5: memref<256x256xbf16, #tpu.memory_space<vmem>>, %arg6: memref<1x256xf32, #tpu.memory_space<vmem>>, %arg7: memref<16x256xbf16, #tpu.memory_space<vmem>>) attributes {dimension_semantics = [#tpu.dimension_semantics<parallel>, #tpu.dimension_semantics<parallel>], iteration_bounds = array<i64: 1, 3>, scalar_prefetch = 0 : i64, scratch_operands = 0 : i64, tpu.core_type = #tpu.core_type<tc>, window_params = [{transform_indices = @transform_0, window_bounds = array<i64: 16, 256>}, {pipeline_mode = #tpu.pipeline_mode<synchronous>, transform_indices = @transform_1, window_bounds = array<i64: 1, 256>}, {pipeline_mode = #tpu.pipeline_mode<synchronous>, transform_indices = @transform_2, window_bounds = array<i64: 1, 256>}, {transform_indices = @transform_3, window_bounds = array<i64: 256, 256>}, {transform_indices = @transform_4, window_bounds = array<i64: 1, 256>}, {transform_indices = @transform_5, window_bounds = array<i64: 16, 256>}]} {
    %c0 = arith.constant 0 : index
    %c0_0 = arith.constant 0 : index
    %0 = vector.load %arg2[%c0, %c0_0] : memref<16x256xbf16, #tpu.memory_space<vmem>>, vector<16x256xbf16>
    %1 = arith.extf %0 : vector<16x256xbf16> to vector<16x256xf32>
    %cst = arith.constant dense<0.000000e+00> : vector<16xf32>
    %2 = vector.multi_reduction <add>, %1, %cst [1] : vector<16x256xf32> to vector<16xf32>
    %3 = vector.shape_cast %2 : vector<16xf32> to vector<16x1xf32>
    %cst_1 = arith.constant 2.560000e+02 : f32
    %4 = vector.broadcast %cst_1 : f32 to vector<16x1xf32>
    %5 = arith.divf %3, %4 : vector<16x1xf32>
    %6 = vector.broadcast %5 : vector<16x1xf32> to vector<16x256xf32>
    %7 = arith.subf %1, %6 : vector<16x256xf32>
    %8 = arith.mulf %7, %7 : vector<16x256xf32>
    %cst_2 = arith.constant dense<0.000000e+00> : vector<16xf32>
    %9 = vector.multi_reduction <add>, %8, %cst_2 [1] : vector<16x256xf32> to vector<16xf32>
    %10 = vector.shape_cast %9 : vector<16xf32> to vector<16x1xf32>
    %cst_3 = arith.constant 2.550000e+02 : f32
    %11 = vector.broadcast %cst_3 : f32 to vector<16x1xf32>
    %12 = arith.divf %10, %11 : vector<16x1xf32>
    %13 = math.sqrt %12 : vector<16x1xf32>
    %cst_4 = arith.constant 9.99999997E-7 : f32
    %14 = vector.broadcast %cst_4 : f32 to vector<16x1xf32>
    %15 = arith.addf %13, %14 : vector<16x1xf32>
    %cst_5 = arith.constant 1.000000e+00 : f32
    %16 = vector.broadcast %cst_5 : f32 to vector<16x1xf32>
    %17 = arith.divf %16, %15 : vector<16x1xf32>
    %c0_6 = arith.constant 0 : index
    %c0_7 = arith.constant 0 : index
    %18 = vector.load %arg3[%c0_6, %c0_7] : memref<1x256xf32, #tpu.memory_space<vmem>>, vector<1x256xf32>
    %19 = vector.broadcast %5 : vector<16x1xf32> to vector<16x256xf32>
    %20 = arith.subf %1, %19 : vector<16x256xf32>
    %21 = vector.broadcast %18 : vector<1x256xf32> to vector<16x256xf32>
    %22 = arith.mulf %21, %20 : vector<16x256xf32>
    %23 = vector.broadcast %17 : vector<16x1xf32> to vector<16x256xf32>
    %24 = arith.mulf %22, %23 : vector<16x256xf32>
    %c0_8 = arith.constant 0 : index
    %c0_9 = arith.constant 0 : index
    %25 = vector.load %arg4[%c0_8, %c0_9] : memref<1x256xf32, #tpu.memory_space<vmem>>, vector<1x256xf32>
    %26 = vector.broadcast %25 : vector<1x256xf32> to vector<16x256xf32>
    %27 = arith.addf %24, %26 : vector<16x256xf32>
    %28 = arith.truncf %27 : vector<16x256xf32> to vector<16x256xbf16>
    %c0_10 = arith.constant 0 : index
    %c0_11 = arith.constant 0 : index
    %29 = vector.load %arg5[%c0_10, %c0_11] : memref<256x256xbf16, #tpu.memory_space<vmem>>, vector<256x256xbf16>
    %cst_12 = arith.constant dense<0.000000e+00> : vector<16x256xf32>
    %30 = tpu.matmul %28, %29, %cst_12 {dimension_numbers = #tpu.dot_dimension_numbers<[1], [0], [0], [1], [0, 0, 1, 1], [], []>} : vector<16x256xbf16>, vector<256x256xbf16>, vector<16x256xf32> -> vector<16x256xf32>
    %c0_13 = arith.constant 0 : index
    %c0_14 = arith.constant 0 : index
    %31 = vector.load %arg6[%c0_13, %c0_14] : memref<1x256xf32, #tpu.memory_space<vmem>>, vector<1x256xf32>
    %32 = vector.broadcast %31 : vector<1x256xf32> to vector<16x256xf32>
    %33 = arith.addf %30, %32 : vector<16x256xf32>
    %34 = arith.truncf %33 : vector<16x256xf32> to vector<16x256xbf16>
    %c0_15 = arith.constant 0 : index
    %c0_16 = arith.constant 0 : index
    %35 = vector.load %arg7[%c0_15, %c0_16] : memref<16x256xbf16, #tpu.memory_space<vmem>>, vector<16x256xbf16>
    tpu.vector_store %arg7[%c0_15, %c0_16], %34 {strides = array<i32>} : memref<16x256xbf16, #tpu.memory_space<vmem>>, vector<16x256xbf16>,
    return
  }
  func.func @transform_0(%arg0: i32, %arg1: i32) -> (i32, i32) {
    %c0_i32 = arith.constant 0 : i32
    %c0_i32_0 = arith.constant 0 : i32
    return %arg0, %c0_i32 : i32, i32
  }
  func.func @transform_1(%arg0: i32, %arg1: i32) -> (i32, i32) {
    %c0_i32 = arith.constant 0 : i32
    %c0_i32_0 = arith.constant 0 : i32
    %c0_i32_1 = arith.constant 0 : i32
    return %c0_i32, %c0_i32_0 : i32, i32
  }
  func.func @transform_2(%arg0: i32, %arg1: i32) -> (i32, i32) {
    %c0_i32 = arith.constant 0 : i32
    %c0_i32_0 = arith.constant 0 : i32
    %c0_i32_1 = arith.constant 0 : i32
    return %c0_i32, %c0_i32_0 : i32, i32
  }
  func.func @transform_3(%arg0: i32, %arg1: i32) -> (i32, i32) {
    %c0_i32 = arith.constant 0 : i32
    %c0_i32_0 = arith.constant 0 : i32
    return %c0_i32, %arg1 : i32, i32
  }
  func.func @transform_4(%arg0: i32, %arg1: i32) -> (i32, i32) {
    %c0_i32 = arith.constant 0 : i32
    %c0_i32_0 = arith.constant 0 : i32
    return %c0_i32, %arg1 : i32, i32
  }
  func.func @transform_5(%arg0: i32, %arg1: i32) -> (i32, i32) {
    %c0_i32 = arith.constant 0 : i32
    return %arg0, %arg1 : i32, i32
  }
}

module attributes {stable_mosaic.version = 11 : i64} {
  func.func @_linear_kernel(%arg0: i32, %arg1: i32, %arg2: memref<16x256xbf16, #tpu.memory_space<vmem>>, %arg3: memref<1x256xf32, #tpu.memory_space<vmem>>, %arg4: memref<1x256xf32, #tpu.memory_space<vmem>>, %arg5: memref<256x16xbf16, #tpu.memory_space<vmem>>, %arg6: memref<1x16xf32, #tpu.memory_space<vmem>>, %arg7: memref<16x16xf32, #tpu.memory_space<vmem>>) attributes {dimension_semantics = [#tpu.dimension_semantics<parallel>, #tpu.dimension_semantics<parallel>], iteration_bounds = array<i64: 1, 1>, scalar_prefetch = 0 : i64, scratch_operands = 0 : i64, tpu.core_type = #tpu.core_type<tc>, window_params = [{transform_indices = @transform_0, window_bounds = array<i64: 16, 256>}, {pipeline_mode = #tpu.pipeline_mode<synchronous>, transform_indices = @transform_1, window_bounds = array<i64: 1, 256>}, {pipeline_mode = #tpu.pipeline_mode<synchronous>, transform_indices = @transform_2, window_bounds = array<i64: 1, 256>}, {transform_indices = @transform_3, window_bounds = array<i64: 256, 16>}, {transform_indices = @transform_4, window_bounds = array<i64: 1, 16>}, {transform_indices = @transform_5, window_bounds = array<i64: 16, 16>}]} {
    %c0 = arith.constant 0 : index
    %c0_0 = arith.constant 0 : index
    %0 = vector.load %arg2[%c0, %c0_0] : memref<16x256xbf16, #tpu.memory_space<vmem>>, vector<16x256xbf16>
    %1 = arith.extf %0 : vector<16x256xbf16> to vector<16x256xf32>
    %cst = arith.constant dense<0.000000e+00> : vector<16xf32>
    %2 = vector.multi_reduction <add>, %1, %cst [1] : vector<16x256xf32> to vector<16xf32>
    %3 = vector.shape_cast %2 : vector<16xf32> to vector<16x1xf32>
    %cst_1 = arith.constant 2.560000e+02 : f32
    %4 = vector.broadcast %cst_1 : f32 to vector<16x1xf32>
    %5 = arith.divf %3, %4 : vector<16x1xf32>
    %6 = vector.broadcast %5 : vector<16x1xf32> to vector<16x256xf32>
    %7 = arith.subf %1, %6 : vector<16x256xf32>
    %8 = arith.mulf %7, %7 : vector<16x256xf32>
    %cst_2 = arith.constant dense<0.000000e+00> : vector<16xf32>
    %9 = vector.multi_reduction <add>, %8, %cst_2 [1] : vector<16x256xf32> to vector<16xf32>
    %10 = vector.shape_cast %9 : vector<16xf32> to vector<16x1xf32>
    %cst_3 = arith.constant 2.550000e+02 : f32
    %11 = vector.broadcast %cst_3 : f32 to vector<16x1xf32>
    %12 = arith.divf %10, %11 : vector<16x1xf32>
    %13 = math.sqrt %12 : vector<16x1xf32>
    %cst_4 = arith.constant 9.99999997E-7 : f32
    %14 = vector.broadcast %cst_4 : f32 to vector<16x1xf32>
    %15 = arith.addf %13, %14 : vector<16x1xf32>
    %cst_5 = arith.constant 1.000000e+00 : f32
    %16 = vector.broadcast %cst_5 : f32 to vector<16x1xf32>
    %17 = arith.divf %16, %15 : vector<16x1xf32>
    %c0_6 = arith.constant 0 : index
    %c0_7 = arith.constant 0 : index
    %18 = vector.load %arg3[%c0_6, %c0_7] : memref<1x256xf32, #tpu.memory_space<vmem>>, vector<1x256xf32>
    %19 = vector.broadcast %5 : vector<16x1xf32> to vector<16x256xf32>
    %20 = arith.subf %1, %19 : vector<16x256xf32>
    %21 = vector.broadcast %18 : vector<1x256xf32> to vector<16x256xf32>
    %22 = arith.mulf %21, %20 : vector<16x256xf32>
    %23 = vector.broadcast %17 : vector<16x1xf32> to vector<16x256xf32>
    %24 = arith.mulf %22, %23 : vector<16x256xf32>
    %c0_8 = arith.constant 0 : index
    %c0_9 = arith.constant 0 : index
    %25 = vector.load %arg4[%c0_8, %c0_9] : memref<1x256xf32, #tpu.memory_space<vmem>>, vector<1x256xf32>
    %26 = vector.broadcast %25 : vector<1x256xf32> to vector<16x256xf32>
    %27 = arith.addf %24, %26 : vector<16x256xf32>
    %28 = arith.truncf %27 : vector<16x256xf32> to vector<16x256xbf16>
    %c0_10 = arith.constant 0 : index
    %c0_11 = arith.constant 0 : index
    %29 = vector.load %arg5[%c0_10, %c0_11] : memref<256x16xbf16, #tpu.memory_space<vmem>>, vector<256x16xbf16>
    %cst_12 = arith.constant dense<0.000000e+00> : vector<16x16xf32>
    %30 = tpu.matmul %28, %29, %cst_12 {dimension_numbers = #tpu.dot_dimension_numbers<[1], [0], [0], [1], [0, 0, 1, 1], [], []>} : vector<16x256xbf16>, vector<256x16xbf16>, vector<16x16xf32> -> vector<16x16xf32>
    %c0_13 = arith.constant 0 : index
    %c0_14 = arith.constant 0 : index
    %31 = vector.load %arg6[%c0_13, %c0_14] : memref<1x16xf32, #tpu.memory_space<vmem>>, vector<1x16xf32>
    %32 = vector.broadcast %31 : vector<1x16xf32> to vector<16x16xf32>
    %33 = arith.addf %30, %32 : vector<16x16xf32>
    %c0_15 = arith.constant 0 : index
    %c0_16 = arith.constant 0 : index
    %34 = vector.load %arg7[%c0_15, %c0_16] : memref<16x16xf32, #tpu.memory_space<vmem>>, vector<16x16xf32>
    tpu.vector_store %arg7[%c0_15, %c0_16], %33 {strides = array<i32>} : memref<16x16xf32, #tpu.memory_space<vmem>>, vector<16x16xf32>,
    return
  }
  func.func @transform_0(%arg0: i32, %arg1: i32) -> (i32, i32) {
    %c0_i32 = arith.constant 0 : i32
    %c0_i32_0 = arith.constant 0 : i32
    return %arg0, %c0_i32 : i32, i32
  }
  func.func @transform_1(%arg0: i32, %arg1: i32) -> (i32, i32) {
    %c0_i32 = arith.constant 0 : i32
    %c0_i32_0 = arith.constant 0 : i32
    %c0_i32_1 = arith.constant 0 : i32
    return %c0_i32, %c0_i32_0 : i32, i32
  }
  func.func @transform_2(%arg0: i32, %arg1: i32) -> (i32, i32) {
    %c0_i32 = arith.constant 0 : i32
    %c0_i32_0 = arith.constant 0 : i32
    %c0_i32_1 = arith.constant 0 : i32
    return %c0_i32, %c0_i32_0 : i32, i32
  }
  func.func @transform_3(%arg0: i32, %arg1: i32) -> (i32, i32) {
    %c0_i32 = arith.constant 0 : i32
    %c0_i32_0 = arith.constant 0 : i32
    return %c0_i32, %arg1 : i32, i32
  }
  func.func @transform_4(%arg0: i32, %arg1: i32) -> (i32, i32) {
    %c0_i32 = arith.constant 0 : i32
    %c0_i32_0 = arith.constant 0 : i32
    return %c0_i32, %arg1 : i32, i32
  }
  func.func @transform_5(%arg0: i32, %arg1: i32) -> (i32, i32) {
    %c0_i32 = arith.constant 0 : i32
    return %arg0, %arg1 : i32, i32
  }
}

</mosaic_0001>

<llo_original>
// kernel: transformer_forward.15
$region0: #{transformer_forward.15}
  #allocation0 [shape = 'u32[]', space=smem, size = 0x4, offset = 0x4, fixed_abs, tag = 'smem constant byte address 0x4 - core index']
  #allocation1 [shape = 'u32[144,128]{1,0:T(1,128)}', space=vmem, size = 0x12000, scoped, tag = 'internal scratch']
  %s0 = inlined_call_operand.vmem [shape: bf16[16,256], index: 0, kind: input, shape index: {}]
  %s1 = inlined_call_operand.vmem [shape: bf16[256,256], index: 1, kind: input, shape index: {}]
  %s2 = inlined_call_operand.vmem [shape: f32[1,256], index: 2, kind: input, shape index: {}]
  %s3 = inlined_call_operand.vmem [shape: bf16[16,256], index: 3, kind: input, shape index: {}]
  %s4 = inlined_call_operand.vmem [shape: bf16[16,256], index: 4, kind: output, shape index: {}]
  %s5 = sld [smem:[#allocation0]]
  $region26: #{transformer_forward.15} parent=0
    _
  %s7 = ssub.s32 1, %s5
  %s8 = scalar_select 0, %s7, %s5
  // Predicated region
  $region2: #{transformer_forward.15} parent=0 // pred_check
    _
  $region3: #{transformer_forward.15} parent=0 // pred_check_branch
    %10 = sbr.rel (0) target = $region5
  $region4: #{transformer_forward.15} parent=0 // pred_region
    _
  $region5: #{transformer_forward.15} parent=0 // pred_fallthru
    _
  // Predicated region
  $region6: #{transformer_forward.15} parent=0 // pred_check
    _
  $region7: #{transformer_forward.15} parent=0 // pred_check_branch
    %12 = sbr.rel (0) target = $region9
  $region8: #{transformer_forward.15} parent=0 // pred_region
    _
  $region9: #{transformer_forward.15} parent=0 // pred_fallthru
    _
  // Predicated region
  $region10: #{transformer_forward.15} parent=0 // pred_check
    _
  $region11: #{transformer_forward.15} parent=0 // pred_check_branch
    %14 = sbr.rel (0) target = $region13
  $region12: #{transformer_forward.15} parent=0 // pred_region
    _
  $region13: #{transformer_forward.15} parent=0 // pred_fallthru
    _
  // Predicated region
  $region14: #{transformer_forward.15} parent=0 // pred_check
    _
  $region15: #{transformer_forward.15} parent=0 // pred_check_branch
    %16 = sbr.rel (0) target = $region17
  $region16: #{transformer_forward.15} parent=0 // pred_region
    _
  $region17: #{transformer_forward.15} parent=0 // pred_fallthru
    _
  %v17 = vld [vmem:[%s0] sm:$0xff]
  %v18 = vld [vmem:[%s0 + $0x8] sm:$0xff]
  %v19 = vld [vmem:[%s1] sm:$0xff]
  %v20 = vld [vmem:[%s1 + $0x8] sm:$0xff]
  %v21 = vld [vmem:[%s1 + $0x10] sm:$0xff]
  %v22 = vld [vmem:[%s1 + $0x18] sm:$0xff]
  %v23 = vld [vmem:[%s1 + $0x20] sm:$0xff]
  %v24 = vld [vmem:[%s1 + $0x28] sm:$0xff]
  %v25 = vld [vmem:[%s1 + $0x30] sm:$0xff]
  %v26 = vld [vmem:[%s1 + $0x38] sm:$0xff]
  %v27 = vld [vmem:[%s1 + $0x40] sm:$0xff]
  %v28 = vld [vmem:[%s1 + $0x48] sm:$0xff]
  %v29 = vld [vmem:[%s1 + $0x50] sm:$0xff]
  %v30 = vld [vmem:[%s1 + $0x58] sm:$0xff]
  %v31 = vld [vmem:[%s1 + $0x60] sm:$0xff]
  %v32 = vld [vmem:[%s1 + $0x68] sm:$0xff]
  %v33 = vld [vmem:[%s1 + $0x70] sm:$0xff]
  %v34 = vld [vmem:[%s1 + $0x78] sm:$0xff]
  %v35 = vld [vmem:[%s1 + $0x80] sm:$0xff]
  %v36 = vld [vmem:[%s1 + $0x88] sm:$0xff]
  %v37 = vld [vmem:[%s1 + $0x90] sm:$0xff]
  %v38 = vld [vmem:[%s1 + $0x98] sm:$0xff]
  %v39 = vld [vmem:[%s1 + $0xa0] sm:$0xff]
  %v40 = vld [vmem:[%s1 + $0xa8] sm:$0xff]
  %v41 = vld [vmem:[%s1 + $0xb0] sm:$0xff]
  %v42 = vld [vmem:[%s1 + $0xb8] sm:$0xff]
  %v43 = vld [vmem:[%s1 + $0xc0] sm:$0xff]
  %v44 = vld [vmem:[%s1 + $0xc8] sm:$0xff]
  %v45 = vld [vmem:[%s1 + $0xd0] sm:$0xff]
  %v46 = vld [vmem:[%s1 + $0xd8] sm:$0xff]
  %v47 = vld [vmem:[%s1 + $0xe0] sm:$0xff]
  %v48 = vld [vmem:[%s1 + $0xe8] sm:$0xff]
  %v49 = vld [vmem:[%s1 + $0xf0] sm:$0xff]
  %v50 = vld [vmem:[%s1 + $0xf8] sm:$0xff]
  %v51 = vld [vmem:[%s2] sm:$0x3]
  %v53 = vlaneseq
  %v54 = vshrl.u32 %v53, 7
  %v55 = vsub.s32 0, %v54
  %v56 = vrot.slane %v51, %v55
  %v57 = vlaneseq
  %v58 = vshrl.u32 %v57, 7
  %v59 = vsub.s32 1, %v58
  %v60 = vrot.slane %v51, %v59
  %v65 = vunpack.c.l.b16 %v17
  %v66 = vunpack.c.h.b16 %v17
  %v67 = vunpack.c.l.b16 %v18
  %v68 = vunpack.c.h.b16 %v18
  %v69 = vpack.c.b16 %v67, %v65
  %v70 = vpack.c.b16 %v68, %v66
  %v105 = vunpack.c.l.b16 %v19
  %v106 = vunpack.c.h.b16 %v19
  %v107 = vunpack.c.l.b16 %v20
  %v108 = vunpack.c.h.b16 %v20
  %v109 = vunpack.c.l.b16 %v21
  %v110 = vunpack.c.h.b16 %v21
  %v111 = vunpack.c.l.b16 %v22
  %v112 = vunpack.c.h.b16 %v22
  %v113 = vunpack.c.l.b16 %v23
  %v114 = vunpack.c.h.b16 %v23
  %v115 = vunpack.c.l.b16 %v24
  %v116 = vunpack.c.h.b16 %v24
  %v117 = vunpack.c.l.b16 %v25
  %v118 = vunpack.c.h.b16 %v25
  %v119 = vunpack.c.l.b16 %v26
  %v120 = vunpack.c.h.b16 %v26
  %v121 = vunpack.c.l.b16 %v27
  %v122 = vunpack.c.h.b16 %v27
  %v123 = vunpack.c.l.b16 %v28
  %v124 = vunpack.c.h.b16 %v28
  %v125 = vunpack.c.l.b16 %v29
  %v126 = vunpack.c.h.b16 %v29
  %v127 = vunpack.c.l.b16 %v30
  %v128 = vunpack.c.h.b16 %v30
  %v129 = vunpack.c.l.b16 %v31
  %v130 = vunpack.c.h.b16 %v31
  %v131 = vunpack.c.l.b16 %v32
  %v132 = vunpack.c.h.b16 %v32
  %v133 = vunpack.c.l.b16 %v33
  %v134 = vunpack.c.h.b16 %v33
  %v135 = vunpack.c.l.b16 %v34
  %v136 = vunpack.c.h.b16 %v34
  %v137 = vunpack.c.l.b16 %v35
  %v138 = vunpack.c.h.b16 %v35
  %v139 = vunpack.c.l.b16 %v36
  %v140 = vunpack.c.h.b16 %v36
  %v141 = vunpack.c.l.b16 %v37
  %v142 = vunpack.c.h.b16 %v37
  %v143 = vunpack.c.l.b16 %v38
  %v144 = vunpack.c.h.b16 %v38
  %v145 = vunpack.c.l.b16 %v39
  %v146 = vunpack.c.h.b16 %v39
  %v147 = vunpack.c.l.b16 %v40
  %v148 = vunpack.c.h.b16 %v40
  %v149 = vunpack.c.l.b16 %v41
  %v150 = vunpack.c.h.b16 %v41
  %v151 = vunpack.c.l.b16 %v42
  %v152 = vunpack.c.h.b16 %v42
  %v153 = vunpack.c.l.b16 %v43
  %v154 = vunpack.c.h.b16 %v43
  %v155 = vunpack.c.l.b16 %v44
  %v156 = vunpack.c.h.b16 %v44
  %v157 = vunpack.c.l.b16 %v45
  %v158 = vunpack.c.h.b16 %v45
  %v159 = vunpack.c.l.b16 %v46
  %v160 = vunpack.c.h.b16 %v46
  %v161 = vunpack.c.l.b16 %v47
  %v162 = vunpack.c.h.b16 %v47
  %v163 = vunpack.c.l.b16 %v48
  %v164 = vunpack.c.h.b16 %v48
  %v165 = vunpack.c.l.b16 %v49
  %v166 = vunpack.c.h.b16 %v49
  %v167 = vunpack.c.l.b16 %v50
  %v168 = vunpack.c.h.b16 %v50
  %v169 = vpack.c.b16 %v107, %v105
  %v170 = vpack.c.b16 %v108, %v106
  %v171 = vpack.c.b16 %v111, %v109
  %v172 = vpack.c.b16 %v112, %v110
  %v173 = vpack.c.b16 %v115, %v113
  %v174 = vpack.c.b16 %v116, %v114
  %v175 = vpack.c.b16 %v119, %v117
  %v176 = vpack.c.b16 %v120, %v118
  %v177 = vpack.c.b16 %v123, %v121
  %v178 = vpack.c.b16 %v124, %v122
  %v179 = vpack.c.b16 %v127, %v125
  %v180 = vpack.c.b16 %v128, %v126
  %v181 = vpack.c.b16 %v131, %v129
  %v182 = vpack.c.b16 %v132, %v130
  %v183 = vpack.c.b16 %v135, %v133
  %v184 = vpack.c.b16 %v136, %v134
  %v185 = vpack.c.b16 %v139, %v137
  %v186 = vpack.c.b16 %v140, %v138
  %v187 = vpack.c.b16 %v143, %v141
  %v188 = vpack.c.b16 %v144, %v142
  %v189 = vpack.c.b16 %v147, %v145
  %v190 = vpack.c.b16 %v148, %v146
  %v191 = vpack.c.b16 %v151, %v149
  %v192 = vpack.c.b16 %v152, %v150
  %v193 = vpack.c.b16 %v155, %v153
  %v194 = vpack.c.b16 %v156, %v154
  %v195 = vpack.c.b16 %v159, %v157
  %v196 = vpack.c.b16 %v160, %v158
  %v197 = vpack.c.b16 %v163, %v161
  %v198 = vpack.c.b16 %v164, %v162
  %v199 = vpack.c.b16 %v167, %v165
  %v200 = vpack.c.b16 %v168, %v166
  %233 = vmatprep.subr.bf16.mxu0 %v184
  %234 = vmatpush1.bf16.msra.mxu0 %v183
  %235 = vmatprep.subr.bf16.mxu0 %v182
  %236 = vmatpush1.bf16.msra.mxu0 %v181
  %237 = vmatprep.subr.bf16.mxu0 %v180
  %238 = vmatpush1.bf16.msra.mxu0 %v179
  %239 = vmatprep.subr.bf16.mxu0 %v178
  %240 = vmatpush1.bf16.msra.mxu0 %v177
  %241 = vmatprep.subr.bf16.mxu0 %v176
  %242 = vmatpush1.bf16.msra.mxu0 %v175
  %243 = vmatprep.subr.bf16.mxu0 %v174
  %244 = vmatpush1.bf16.msra.mxu0 %v173
  %245 = vmatprep.subr.bf16.mxu0 %v172
  %246 = vmatpush1.bf16.msra.mxu0 %v171
  %247 = vmatprep.subr.bf16.mxu0 %v170
  %248 = vmatpush1.bf16.msra.mxu0 %v169
  %249 = vmatprep.subr.bf16.mxu0 %v200
  %250 = vmatpush2.bf16.msra.mxu0 %v199
  %251 = vmatprep.subr.bf16.mxu0 %v198
  %252 = vmatpush2.bf16.msra.mxu0 %v197
  %253 = vmatprep.subr.bf16.mxu0 %v196
  %254 = vmatpush2.bf16.msra.mxu0 %v195
  %255 = vmatprep.subr.bf16.mxu0 %v194
  %256 = vmatpush2.bf16.msra.mxu0 %v193
  %257 = vmatprep.subr.bf16.mxu0 %v192
  %258 = vmatpush2.bf16.msra.mxu0 %v191
  %259 = vmatprep.subr.bf16.mxu0 %v190
  %260 = vmatpush2.bf16.msra.mxu0 %v189
  %261 = vmatprep.subr.bf16.mxu0 %v188
  %262 = vmatpush2.bf16.msra.mxu0 %v187
  %263 = vmatprep.subr.bf16.mxu0 %v186
  %264 = vmatpush2.bf16.msra.mxu0 %v185
  %265 = vmatprep.mubr.bf16.mxu0 %v70
  %266 = vmatmul.mubr.bf16.gmra.mxu0 %v69
  %v267 = vpop.f32.mrf.mxu0
  %v268 = vadd.f32 %v56, %v267
  %v269 = vpop.f32.mrf.mxu0
  %v270 = vadd.f32 %v60, %v269
  %v271 = vpop.f32.mrf.mxu0
  %v272 = vadd.f32 %v56, %v271
  %v273 = vpop.f32.mrf.mxu0
  %v274 = vadd.f32 %v60, %v273
  %275 = vdwg.mxu0
  %v276 = vld [vmem:[%s3] sm:$0xff]
  %v277 = vld [vmem:[%s3 + $0x8] sm:$0xff]
  %v278 = vunpack.c.l.bf16 %v276
  %v279 = vunpack.c.h.bf16 %v276
  %v280 = vunpack.c.l.bf16 %v277
  %v281 = vunpack.c.h.bf16 %v277
  %v282 = vadd.f32 %v268, %v278
  %v283 = vadd.f32 %v270, %v279
  %v284 = vadd.f32 %v272, %v280
  %v285 = vadd.f32 %v274, %v281
  %v286 = vpack.c.bf16 %v284, %v282
  %v287 = vpack.c.bf16 %v285, %v283
  %v290 = vunpack.c.l.b16 %v286
  %v291 = vunpack.c.l.b16 %v287
  %v292 = vunpack.c.h.b16 %v286
  %v293 = vunpack.c.h.b16 %v287
  %v294 = vpack.c.b16 %v291, %v290
  %v295 = vpack.c.b16 %v293, %v292
  %298 = vst [vmem:[%s4] sm:$0xff] %v294
  %299 = vst [vmem:[%s4 + $0x8] sm:$0xff] %v295
  // Predicated region
  $region18: #{transformer_forward.15} parent=0 // pred_check
    _
  $region19: #{transformer_forward.15} parent=0 // pred_check_branch
    %301 = sbr.rel (0) target = $region21
  $region20: #{transformer_forward.15} parent=0 // pred_region
    _
  $region21: #{transformer_forward.15} parent=0 // pred_fallthru
    _
  // Predicated region
  $region22: #{transformer_forward.15} parent=0 // pred_check
    _
  $region23: #{transformer_forward.15} parent=0 // pred_check_branch
    %303 = sbr.rel (0) target = $region25
  $region24: #{transformer_forward.15} parent=0 // pred_region
    _
  $region25: #{transformer_forward.15} parent=0 // pred_fallthru
    _

// kernel: transformer_forward.13
$region0: #{transformer_forward.13}
  #allocation0 [shape = 'u32[]', space=smem, size = 0x4, offset = 0x4, fixed_abs, tag = 'smem constant byte address 0x4 - core index']
  #allocation1 [shape = 'u32[144,128]{1,0:T(1,128)}', space=vmem, size = 0x12000, scoped, tag = 'internal scratch']
  %s0 = inlined_call_operand.vmem [shape: bf16[16,256], index: 0, kind: input, shape index: {}]
  %s1 = inlined_call_operand.vmem [shape: f32[1,256], index: 1, kind: input, shape index: {}]
  %s2 = inlined_call_operand.vmem [shape: f32[1,256], index: 2, kind: input, shape index: {}]
  %s3 = inlined_call_operand.hbm [shape: bf16[256,768], index: 3, kind: input, shape index: {}]
  %s4 = inlined_call_operand.vmem [shape: f32[1,768], index: 4, kind: input, shape index: {}]
  %s5 = inlined_call_operand.vmem [shape: bf16[16,768], index: 5, kind: output, shape index: {}]
  %s6 = sld [smem:[#allocation0]]
  $region91: #{transformer_forward.13} parent=0
    _
  %s8 = ssub.s32 1, %s6
  %s9 = scalar_select 0, %s8, %s6
  $region1: #{transformer_forward.13} parent=0
    #allocation2 [shape = 'u8[262144]{0}', space=vmem, size = 0x40000, scoped, tag = 'input window, operand 3']
    #allocation3 [shape = 's32[2]{0}', space=sflag, size = 0x8, scoped, tag = 'scoped memory for transformer_forward.13']
    #allocation4 [shape = 'u8[16384]{0}', space=vmem, size = 0x4000, scoped, tag = 'output window, operand 0']
    %10 = vsyncpa [#allocation3], 0
    %s11 = scalar_lea.sflag [#allocation3], 1
    %12 = vsyncpa %s11, 0
    loop: start=0, step=1, limit=5
    $region2: #{transformer_forward.13} parent=1 // loop_pre_header
      _
    $region3: #{transformer_forward.13} parent=1 // loop_header
      %s14 = sphi 0, %s18
      %p15 = scmp.ge.s32.totalorder %s14, 5
      %s21 = sphi 0, %s33
      %s22 = sphi 0, %s29
      %s23 = sphi 0, %s21
      %s24 = sphi 0, %s22
      %s25 = sphi 0, %s23
      %s26 = sphi 0, %s24
      %s36 = sphi 0, %s38
      %s39 = sphi 0, %s36
      %s40 = sphi 0, %s39
      %s56 = sphi 0, %s40
      %s60 = sphi 0, %s60
      %s62 = sphi 0, %s60
      %s63 = sphi 0, %s62
      %s77 = sphi 0, %s63
      %s81 = sphi 0, %s81
      %s83 = sphi 0, %s81
      %s84 = sphi 0, %s83
      %s98 = sphi 0, %s84
      %s104 = sphi 0, %s106
      %s107 = sphi 0, %s104
      %s108 = sphi 0, %s107
      %s124 = sphi 0, %s108
      %s130 = sphi 0, %s132
      %s133 = sphi 0, %s130
      %s134 = sphi 0, %s133
      %s150 = sphi 0, %s134
      %s158 = sphi 0, %s160
      %s161 = sphi 0, %s158
      %s162 = sphi 0, %s161
      %s178 = sphi 0, %s162
    $region4: #{transformer_forward.13} parent=1 // loop_header_branch
      %17 = sbr.rel (%p15) target = $region8
    $region5: #{transformer_forward.13} parent=1 // loop_body
      %s19 = ssub.s32 %s14, 1
      %s20 = ssub.s32 %s14, 2
      %s27 = sadd.s32 1, %s22
      %p28 = scmp.ge.s32.totalorder %s27, 3
      %s29 = scalar_select %p28, 0, %s27
      %s30 = sadd.s32 1, %s21
      %s31 = scalar_select %p28, %s30, %s21
      %p32 = scmp.ge.s32.totalorder %s31, 1
      %s33 = scalar_select %p32, 0, %s31
      %s34 = ssub.s32 %s21, %s33
      %p35 = scmp.eq.s32.totalorder %s34, 0
      %s37 = sadd.s32 %s36, 1
      %s38 = scalar_select %p35, %s36, %s37
      %p41 = pneg %p35
      %p42 = scmp.eq.s32.totalorder %s14, 2
      %p43 = por %p41, %p42
      %p44 = scmp.ne.s32.totalorder %s36, %s39
      %p45 = scmp.eq.s32.totalorder %s14, 0
      %p46 = por %p44, %p45
      %p47 = scmp.ne.s32.totalorder %s36, %s39
      %p48 = scmp.eq.s32.totalorder %s19, 2
      %p49 = por %p47, %p48
      %p50 = scmp.ne.s32.totalorder %s39, %s40
      %p51 = scmp.eq.s32.totalorder %s19, 0
      %p52 = por %p50, %p51
      %p53 = scmp.ne.s32.totalorder %s39, %s40
      %p54 = scmp.eq.s32.totalorder %s20, 2
      %p55 = por %p53, %p54
      %p57 = scmp.ne.s32.totalorder %s40, %s56
      %p58 = scmp.eq.s32.totalorder %s20, 0
      %p59 = por %p57, %p58
      %s61 = sadd.s32 %s60, 1
      %p64 = scmp.eq.s32.totalorder %s14, 2
      %p65 = scmp.ne.s32.totalorder %s60, %s62
      %p66 = scmp.eq.s32.totalorder %s14, 0
      %p67 = por %p65, %p66
      %p68 = scmp.ne.s32.totalorder %s60, %s62
      %p69 = scmp.eq.s32.totalorder %s19, 2
      %p70 = por %p68, %p69
      %p71 = scmp.ne.s32.totalorder %s62, %s63
      %p72 = scmp.eq.s32.totalorder %s19, 0
      %p73 = por %p71, %p72
      %p74 = scmp.ne.s32.totalorder %s62, %s63
      %p75 = scmp.eq.s32.totalorder %s20, 2
      %p76 = por %p74, %p75
      %p78 = scmp.ne.s32.totalorder %s63, %s77
      %p79 = scmp.eq.s32.totalorder %s20, 0
      %p80 = por %p78, %p79
      %s82 = sadd.s32 %s81, 1
      %p85 = scmp.eq.s32.totalorder %s14, 2
      %p86 = scmp.ne.s32.totalorder %s81, %s83
      %p87 = scmp.eq.s32.totalorder %s14, 0
      %p88 = por %p86, %p87
      %p89 = scmp.ne.s32.totalorder %s81, %s83
      %p90 = scmp.eq.s32.totalorder %s19, 2
      %p91 = por %p89, %p90
      %p92 = scmp.ne.s32.totalorder %s83, %s84
      %p93 = scmp.eq.s32.totalorder %s19, 0
      %p94 = por %p92, %p93
      %p95 = scmp.ne.s32.totalorder %s83, %s84
      %p96 = scmp.eq.s32.totalorder %s20, 2
      %p97 = por %p95, %p96
      %p99 = scmp.ne.s32.totalorder %s84, %s98
      %p100 = scmp.eq.s32.totalorder %s20, 0
      %p101 = por %p99, %p100
      %s102 = ssub.s32 %s22, %s29
      %p103 = scmp.eq.s32.totalorder %s102, 0
      %s105 = sadd.s32 %s104, 1
      %s106 = scalar_select %p103, %s104, %s105
      %p109 = pneg %p103
      %p110 = scmp.eq.s32.totalorder %s14, 2
      %p111 = por %p109, %p110
      %p112 = scmp.ne.s32.totalorder %s104, %s107
      %p113 = scmp.eq.s32.totalorder %s14, 0
      %p114 = por %p112, %p113
      %p115 = scmp.ne.s32.totalorder %s104, %s107
      %p116 = scmp.eq.s32.totalorder %s19, 2
      %p117 = por %p115, %p116
      %p118 = scmp.ne.s32.totalorder %s107, %s108
      %p119 = scmp.eq.s32.totalorder %s19, 0
      %p120 = por %p118, %p119
      %p121 = scmp.ne.s32.totalorder %s107, %s108
      %p122 = scmp.eq.s32.totalorder %s20, 2
      %p123 = por %p121, %p122
      %p125 = scmp.ne.s32.totalorder %s108, %s124
      %p126 = scmp.eq.s32.totalorder %s20, 0
      %p127 = por %p125, %p126
      %s128 = ssub.s32 %s22, %s29
      %p129 = scmp.eq.s32.totalorder %s128, 0
      %s131 = sadd.s32 %s130, 1
      %s132 = scalar_select %p129, %s130, %s131
      %p135 = pneg %p129
      %p136 = scmp.eq.s32.totalorder %s14, 2
      %p137 = por %p135, %p136
      %p138 = scmp.ne.s32.totalorder %s130, %s133
      %p139 = scmp.eq.s32.totalorder %s14, 0
      %p140 = por %p138, %p139
      %p141 = scmp.ne.s32.totalorder %s130, %s133
      %p142 = scmp.eq.s32.totalorder %s19, 2
      %p143 = por %p141, %p142
      %p144 = scmp.ne.s32.totalorder %s133, %s134
      %p145 = scmp.eq.s32.totalorder %s19, 0
      %p146 = por %p144, %p145
      %p147 = scmp.ne.s32.totalorder %s133, %s134
      %p148 = scmp.eq.s32.totalorder %s20, 2
      %p149 = por %p147, %p148
      %p151 = scmp.ne.s32.totalorder %s134, %s150
      %p152 = scmp.eq.s32.totalorder %s20, 0
      %p153 = por %p151, %p152
      %s154 = ssub.s32 %s21, %s33
      %s155 = ssub.s32 %s22, %s29
      %s156 = sor.u32 %s154, %s155
      %p157 = scmp.eq.s32.totalorder %s156, 0
      %s159 = sadd.s32 %s158, 1
      %s160 = scalar_select %p157, %s158, %s159
      %p163 = pneg %p157
      %p164 = scmp.eq.s32.totalorder %s14, 2
      %p165 = por %p163, %p164
      %p166 = scmp.ne.s32.totalorder %s158, %s161
      %p167 = scmp.eq.s32.totalorder %s14, 0
      %p168 = por %p166, %p167
      %p169 = scmp.ne.s32.totalorder %s158, %s161
      %p170 = scmp.eq.s32.totalorder %s19, 2
      %p171 = por %p169, %p170
      %p172 = scmp.ne.s32.totalorder %s161, %s162
      %p173 = scmp.eq.s32.totalorder %s19, 0
      %p174 = por %p172, %p173
      %p175 = scmp.ne.s32.totalorder %s161, %s162
      %p176 = scmp.eq.s32.totalorder %s20, 2
      %p177 = por %p175, %p176
      %p179 = scmp.ne.s32.totalorder %s162, %s178
      %p180 = scmp.eq.s32.totalorder %s20, 0
      %p181 = por %p179, %p180
      %p182 = scmp.le.s32.totalorder 1, %s14
      %p183 = scmp.lt.s32.totalorder %s14, 4
      %p184 = pnand %p182, %p183
      %p185 = pneg %p184
      // Predicated region
      $region9: #{transformer_forward.13} parent=5 // pred_check
        _
      $region10: #{transformer_forward.13} parent=5 // pred_check_branch
        %187 = sbr.rel (%p184) target = $region12
      $region11: #{transformer_forward.13} parent=5 // pred_region
        %s188 = ssub.s32 %s14, 1
        // Predicated region
        $region13: #{transformer_forward.13} parent=11 // pred_check
          %p189 = pneg %p52
        $region14: #{transformer_forward.13} parent=11 // pred_check_branch
          %191 = sbr.rel (%p189) target = $region16
        $region15: #{transformer_forward.13} parent=11 // pred_region
          %s192 = smul.u32 2, %s23
          %p193 = scmp.lt.s32.totalorder %s192, 1
          %s194 = scalar_select %p193, %s192, 1
          %s195 = smul.addr %s194, 2
          %s196 = smul.addr %s195, 4
          %s197 = scalar_lea.vmem %s0, %s196
          %s198 = smul.u32 2, %s23
        $region16: #{transformer_forward.13} parent=11 // pred_fallthru
          _
        // Predicated region
        $region17: #{transformer_forward.13} parent=11 // pred_check
          %p199 = pneg %p73
        $region18: #{transformer_forward.13} parent=11 // pred_check_branch
          %201 = sbr.rel (%p199) target = $region20
        $region19: #{transformer_forward.13} parent=11 // pred_region
          _
        $region20: #{transformer_forward.13} parent=11 // pred_fallthru
          _
        // Predicated region
        $region21: #{transformer_forward.13} parent=11 // pred_check
          %p202 = pneg %p94
        $region22: #{transformer_forward.13} parent=11 // pred_check_branch
          %204 = sbr.rel (%p202) target = $region24
        $region23: #{transformer_forward.13} parent=11 // pred_region
          _
        $region24: #{transformer_forward.13} parent=11 // pred_fallthru
          _
      $region12: #{transformer_forward.13} parent=5 // pred_fallthru
        _
      %p205 = scmp.lt.s32.totalorder %s14, 3
      // Predicated region
      $region25: #{transformer_forward.13} parent=5 // pred_check
        %p206 = pneg %p205
      $region26: #{transformer_forward.13} parent=5 // pred_check_branch
        %208 = sbr.rel (%p206) target = $region28
      $region27: #{transformer_forward.13} parent=5 // pred_region
        // Predicated region
        $region29: #{transformer_forward.13} parent=27 // pred_check
          %p209 = pneg %p114
        $region30: #{transformer_forward.13} parent=27 // pred_check_branch
          %211 = sbr.rel (%p209) target = $region32
        $region31: #{transformer_forward.13} parent=27 // pred_region
          %s212 = sand.u32 %s104, 1
          %s213 = scalar_lea.sflag [#allocation3], %s212
          %s214 = sand.u32 %s104, 1
          %s215 = smul.addr %s214, 256
          %s216 = scalar_lea.vmem [#allocation2], %s215
          %s217 = smul.u32 2, %s22
          %s219 = ssub.s32 4096, 4096
          %220 = vsyncadd %s213, %s219
          %s221 = smul.addr %s217, 64
          %s222 = scalar_lea.hbm %s3, %s221
          %s223 = sshll.u32 %s216, 4
          %s224 = int_to_ptr.vmem [resolvable:$true] %s223
          %229 = dma.hbm_to_vmem [thread:$0]  %s222, 4096, %s224, %s213, 384, 128, 8
        $region32: #{transformer_forward.13} parent=27 // pred_fallthru
          _
        // Predicated region
        $region33: #{transformer_forward.13} parent=27 // pred_check
          %p230 = pneg %p140
        $region34: #{transformer_forward.13} parent=27 // pred_check_branch
          %232 = sbr.rel (%p230) target = $region36
        $region35: #{transformer_forward.13} parent=27 // pred_region
          %s233 = smul.u32 2, %s22
          %p234 = scmp.lt.s32.totalorder %s233, 5
          %s235 = scalar_select %p234, %s233, 5
          %s236 = scalar_lea.vmem %s4, %s235
          %s237 = smul.u32 2, %s22
        $region36: #{transformer_forward.13} parent=27 // pred_fallthru
          _
      $region28: #{transformer_forward.13} parent=5 // pred_fallthru
        _
      %p238 = scmp.le.s32.totalorder 1, %s14
      %p239 = scmp.lt.s32.totalorder %s14, 4
      %p240 = pnand %p238, %p239
      %p241 = pneg %p240
      // Predicated region
      $region37: #{transformer_forward.13} parent=5 // pred_check
        _
      $region38: #{transformer_forward.13} parent=5 // pred_check_branch
        %243 = sbr.rel (%p240) target = $region40
      $region39: #{transformer_forward.13} parent=5 // pred_region
        %s244 = ssub.s32 %s14, 1
        %s245 = sand.u32 %s107, 1
        %s246 = scalar_lea.sflag [#allocation3], %s245
        %s247 = sand.u32 %s107, 1
        %s248 = smul.addr %s247, 256
        %s249 = scalar_lea.vmem [#allocation2], %s248
        // Predicated region
        $region41: #{transformer_forward.13} parent=39 // pred_check
          %p250 = pneg %p120
        $region42: #{transformer_forward.13} parent=39 // pred_check_branch
          %252 = sbr.rel (%p250) target = $region44
        $region43: #{transformer_forward.13} parent=39 // pred_region
          %253 = dma.done %s246, 4096
        $region44: #{transformer_forward.13} parent=39 // pred_fallthru
          _
        %s254 = smul.u32 2, %s23
        %p255 = scmp.lt.s32.totalorder %s254, 1
        %s256 = scalar_select %p255, %s254, 1
        %s257 = smul.addr %s256, 2
        %s258 = smul.addr %s257, 4
        %s259 = scalar_lea.vmem %s0, %s258
        %p260 = pneg %p52
        %p261 = pneg %p49
        %p262 = pneg %p73
        %p263 = pneg %p70
        %p264 = pneg %p94
        %p265 = pneg %p91
        %s266 = sand.u32 %s107, 1
        %s267 = scalar_lea.sflag [#allocation3], %s266
        %s268 = sand.u32 %s107, 1
        %s269 = smul.addr %s268, 256
        %s270 = scalar_lea.vmem [#allocation2], %s269
        %p271 = pneg %p120
        %p272 = pneg %p117
        %s273 = smul.u32 2, %s24
        %p274 = scmp.lt.s32.totalorder %s273, 5
        %s275 = scalar_select %p274, %s273, 5
        %s276 = scalar_lea.vmem %s4, %s275
        %p277 = pneg %p146
        %p278 = pneg %p143
        %p279 = pneg %p174
        %p280 = pneg %p171
        %s281 = sand.u32 %s161, 1
        %s282 = sand.u32 %s161, 1
        %s283 = smul.addr %s282, 16
        %s284 = scalar_lea.vmem [#allocation4], %s283
        %s285 = smul.u32 2, %s23
        %p286 = scmp.lt.s32.totalorder %s285, 1
        %s287 = scalar_select %p286, %s285, 1
        %s288 = smul.addr %s287, 2
        %s289 = smul.addr %s288, 4
        %s290 = scalar_lea.vmem %s0, %s289
        %s291 = smul.u32 2, %s23
        %s292 = smul.u32 2, %s24
        %s293 = smul.u32 2, %s24
        %p294 = scmp.lt.s32.totalorder %s293, 5
        %s295 = scalar_select %p294, %s293, 5
        %s296 = scalar_lea.vmem %s4, %s295
        %s297 = smul.u32 2, %s24
        %s298 = smul.u32 2, %s23
        %s299 = smul.u32 2, %s24
        %v300 = vld [vmem:[%s290] sm:$0xff]
        %v301 = vld [vmem:[%s290 + $0x8] sm:$0xff]
        %v302 = vunpack.c.l.bf16 %v300
        %v303 = vunpack.c.h.bf16 %v300
        %v304 = vunpack.c.l.bf16 %v301
        %v305 = vunpack.c.h.bf16 %v301
        %v306 = vadd.f32 %v302, %v303
        %307 = vadd.xlane.f32.xlu0 %v306
        %v308 = vpop.xlane.xlu0 %307
        %v309 = vadd.f32 %v304, %v305
        %310 = vadd.xlane.f32.xlu0 %v309
        %v311 = vpop.xlane.xlu0 %310
        %v312 = vrcp.pop 256.0
        %v313 = vmul.f32 %v308, %v312
        %v314 = vmul.f32 %v311, %v312
        %v315 = vsub.f32 %v302, %v313
        %v316 = vsub.f32 %v303, %v313
        %v317 = vsub.f32 %v304, %v314
        %v318 = vsub.f32 %v305, %v314
        %v319 = vmul.f32 %v315, %v315
        %v320 = vmul.f32 %v316, %v316
        %v321 = vmul.f32 %v317, %v317
        %v322 = vmul.f32 %v318, %v318
        %v323 = vadd.f32 %v319, %v320
        %324 = vadd.xlane.f32.xlu0 %v323
        %v325 = vpop.xlane.xlu0 %324
        %v326 = vadd.f32 %v321, %v322
        %327 = vadd.xlane.f32.xlu0 %v326
        %v328 = vpop.xlane.xlu0 %327
        %v329 = vrcp.pop 255.0
        %v330 = vmul.f32 %v325, %v329
        %v331 = vmul.f32 %v328, %v329
        %v332 = vrsqrt.pop %v330
        %v333 = vmul.f32 %v330, %v332
        %vm334 = vcmp.eq.f32.partialorder %v330, inf
        %v335 = vsel %vm334, %v330, %v333
        %vm336 = vcmp.eq.f32.partialorder %v330, 0.0
        %v337 = vand.u32 %v330, 2147483648
        %v338 = vsel %vm336, %v337, %v335
        %v339 = vrsqrt.pop %v331
        %v340 = vmul.f32 %v331, %v339
        %vm341 = vcmp.eq.f32.partialorder %v331, inf
        %v342 = vsel %vm341, %v331, %v340
        %vm343 = vcmp.eq.f32.partialorder %v331, 0.0
        %v344 = vand.u32 %v331, 2147483648
        %v345 = vsel %vm343, %v344, %v342
        %v346 = vadd.f32 %v338, 1e-06
        %v347 = vadd.f32 %v345, 1e-06
        %v348 = vrcp.pop %v346
        %v349 = vmul.f32 1.0, %v348
        %v350 = vrcp.pop %v347
        %v351 = vmul.f32 1.0, %v350
        %v352 = vld [vmem:[%s1] sm:$0x3]
        %v354 = vlaneseq
        %v355 = vshrl.u32 %v354, 7
        %v356 = vsub.s32 0, %v355
        %v357 = vrot.slane %v352, %v356
        %v358 = vlaneseq
        %v359 = vshrl.u32 %v358, 7
        %v360 = vsub.s32 1, %v359
        %v361 = vrot.slane %v352, %v360
        %v364 = vmul.f32 %v357, %v315
        %v365 = vmul.f32 %v361, %v316
        %v366 = vmul.f32 %v357, %v317
        %v367 = vmul.f32 %v361, %v318
        %v368 = vmul.f32 %v364, %v349
        %v369 = vmul.f32 %v365, %v349
        %v370 = vmul.f32 %v366, %v351
        %v371 = vmul.f32 %v367, %v351
        %v372 = vld [vmem:[%s2] sm:$0x3]
        %v374 = vlaneseq
        %v375 = vshrl.u32 %v374, 7
        %v376 = vsub.s32 0, %v375
        %v377 = vrot.slane %v372, %v376
        %v378 = vlaneseq
        %v379 = vshrl.u32 %v378, 7
        %v380 = vsub.s32 1, %v379
        %v381 = vrot.slane %v372, %v380
        %v384 = vadd.f32 %v368, %v377
        %v385 = vadd.f32 %v369, %v381
        %v386 = vadd.f32 %v370, %v377
        %v387 = vadd.f32 %v371, %v381
        %v388 = vpack.c.bf16 %v386, %v384
        %v389 = vpack.c.bf16 %v387, %v385
        %v390 = vld [vmem:[%s249] sm:$0xff]
        %v391 = vld [vmem:[%s249 + $0x8] sm:$0xff]
        %v392 = vld [vmem:[%s249 + $0x10] sm:$0xff]
        %v393 = vld [vmem:[%s249 + $0x18] sm:$0xff]
        %v394 = vld [vmem:[%s249 + $0x20] sm:$0xff]
        %v395 = vld [vmem:[%s249 + $0x28] sm:$0xff]
        %v396 = vld [vmem:[%s249 + $0x30] sm:$0xff]
        %v397 = vld [vmem:[%s249 + $0x38] sm:$0xff]
        %v398 = vld [vmem:[%s249 + $0x40] sm:$0xff]
        %v399 = vld [vmem:[%s249 + $0x48] sm:$0xff]
        %v400 = vld [vmem:[%s249 + $0x50] sm:$0xff]
        %v401 = vld [vmem:[%s249 + $0x58] sm:$0xff]
        %v402 = vld [vmem:[%s249 + $0x60] sm:$0xff]
        %v403 = vld [vmem:[%s249 + $0x68] sm:$0xff]
        %v404 = vld [vmem:[%s249 + $0x70] sm:$0xff]
        %v405 = vld [vmem:[%s249 + $0x78] sm:$0xff]
        %v406 = vld [vmem:[%s249 + $0x80] sm:$0xff]
        %v407 = vld [vmem:[%s249 + $0x88] sm:$0xff]
        %v408 = vld [vmem:[%s249 + $0x90] sm:$0xff]
        %v409 = vld [vmem:[%s249 + $0x98] sm:$0xff]
        %v410 = vld [vmem:[%s249 + $0xa0] sm:$0xff]
        %v411 = vld [vmem:[%s249 + $0xa8] sm:$0xff]
        %v412 = vld [vmem:[%s249 + $0xb0] sm:$0xff]
        %v413 = vld [vmem:[%s249 + $0xb8] sm:$0xff]
        %v414 = vld [vmem:[%s249 + $0xc0] sm:$0xff]
        %v415 = vld [vmem:[%s249 + $0xc8] sm:$0xff]
        %v416 = vld [vmem:[%s249 + $0xd0] sm:$0xff]
        %v417 = vld [vmem:[%s249 + $0xd8] sm:$0xff]
        %v418 = vld [vmem:[%s249 + $0xe0] sm:$0xff]
        %v419 = vld [vmem:[%s249 + $0xe8] sm:$0xff]
        %v420 = vld [vmem:[%s249 + $0xf0] sm:$0xff]
        %v421 = vld [vmem:[%s249 + $0xf8] sm:$0xff]
        %v422 = vld [vmem:[%s296] sm:$0x3]
        %v424 = vlaneseq
        %v425 = vshrl.u32 %v424, 7
        %v426 = vsub.s32 0, %v425
        %v427 = vrot.slane %v422, %v426
        %v428 = vlaneseq
        %v429 = vshrl.u32 %v428, 7
        %v430 = vsub.s32 1, %v429
        %v431 = vrot.slane %v422, %v430
        %v466 = vunpack.c.l.b16 %v390
        %v467 = vunpack.c.h.b16 %v390
        %v468 = vunpack.c.l.b16 %v391
        %v469 = vunpack.c.h.b16 %v391
        %v470 = vunpack.c.l.b16 %v392
        %v471 = vunpack.c.h.b16 %v392
        %v472 = vunpack.c.l.b16 %v393
        %v473 = vunpack.c.h.b16 %v393
        %v474 = vunpack.c.l.b16 %v394
        %v475 = vunpack.c.h.b16 %v394
        %v476 = vunpack.c.l.b16 %v395
        %v477 = vunpack.c.h.b16 %v395
        %v478 = vunpack.c.l.b16 %v396
        %v479 = vunpack.c.h.b16 %v396
        %v480 = vunpack.c.l.b16 %v397
        %v481 = vunpack.c.h.b16 %v397
        %v482 = vunpack.c.l.b16 %v398
        %v483 = vunpack.c.h.b16 %v398
        %v484 = vunpack.c.l.b16 %v399
        %v485 = vunpack.c.h.b16 %v399
        %v486 = vunpack.c.l.b16 %v400
        %v487 = vunpack.c.h.b16 %v400
        %v488 = vunpack.c.l.b16 %v401
        %v489 = vunpack.c.h.b16 %v401
        %v490 = vunpack.c.l.b16 %v402
        %v491 = vunpack.c.h.b16 %v402
        %v492 = vunpack.c.l.b16 %v403
        %v493 = vunpack.c.h.b16 %v403
        %v494 = vunpack.c.l.b16 %v404
        %v495 = vunpack.c.h.b16 %v404
        %v496 = vunpack.c.l.b16 %v405
        %v497 = vunpack.c.h.b16 %v405
        %v498 = vunpack.c.l.b16 %v406
        %v499 = vunpack.c.h.b16 %v406
        %v500 = vunpack.c.l.b16 %v407
        %v501 = vunpack.c.h.b16 %v407
        %v502 = vunpack.c.l.b16 %v408
        %v503 = vunpack.c.h.b16 %v408
        %v504 = vunpack.c.l.b16 %v409
        %v505 = vunpack.c.h.b16 %v409
        %v506 = vunpack.c.l.b16 %v410
        %v507 = vunpack.c.h.b16 %v410
        %v508 = vunpack.c.l.b16 %v411
        %v509 = vunpack.c.h.b16 %v411
        %v510 = vunpack.c.l.b16 %v412
        %v511 = vunpack.c.h.b16 %v412
        %v512 = vunpack.c.l.b16 %v413
        %v513 = vunpack.c.h.b16 %v413
        %v514 = vunpack.c.l.b16 %v414
        %v515 = vunpack.c.h.b16 %v414
        %v516 = vunpack.c.l.b16 %v415
        %v517 = vunpack.c.h.b16 %v415
        %v518 = vunpack.c.l.b16 %v416
        %v519 = vunpack.c.h.b16 %v416
        %v520 = vunpack.c.l.b16 %v417
        %v521 = vunpack.c.h.b16 %v417
        %v522 = vunpack.c.l.b16 %v418
        %v523 = vunpack.c.h.b16 %v418
        %v524 = vunpack.c.l.b16 %v419
        %v525 = vunpack.c.h.b16 %v419
        %v526 = vunpack.c.l.b16 %v420
        %v527 = vunpack.c.h.b16 %v420
        %v528 = vunpack.c.l.b16 %v421
        %v529 = vunpack.c.h.b16 %v421
        %v530 = vpack.c.b16 %v468, %v466
        %v531 = vpack.c.b16 %v469, %v467
        %v532 = vpack.c.b16 %v472, %v470
        %v533 = vpack.c.b16 %v473, %v471
        %v534 = vpack.c.b16 %v476, %v474
        %v535 = vpack.c.b16 %v477, %v475
        %v536 = vpack.c.b16 %v480, %v478
        %v537 = vpack.c.b16 %v481, %v479
        %v538 = vpack.c.b16 %v484, %v482
        %v539 = vpack.c.b16 %v485, %v483
        %v540 = vpack.c.b16 %v488, %v486
        %v541 = vpack.c.b16 %v489, %v487
        %v542 = vpack.c.b16 %v492, %v490
        %v543 = vpack.c.b16 %v493, %v491
        %v544 = vpack.c.b16 %v496, %v494
        %v545 = vpack.c.b16 %v497, %v495
        %v546 = vpack.c.b16 %v500, %v498
        %v547 = vpack.c.b16 %v501, %v499
        %v548 = vpack.c.b16 %v504, %v502
        %v549 = vpack.c.b16 %v505, %v503
        %v550 = vpack.c.b16 %v508, %v506
        %v551 = vpack.c.b16 %v509, %v507
        %v552 = vpack.c.b16 %v512, %v510
        %v553 = vpack.c.b16 %v513, %v511
        %v554 = vpack.c.b16 %v516, %v514
        %v555 = vpack.c.b16 %v517, %v515
        %v556 = vpack.c.b16 %v520, %v518
        %v557 = vpack.c.b16 %v521, %v519
        %v558 = vpack.c.b16 %v524, %v522
        %v559 = vpack.c.b16 %v525, %v523
        %v560 = vpack.c.b16 %v528, %v526
        %v561 = vpack.c.b16 %v529, %v527
        %594 = vmatprep.subr.bf16.mxu0 %v545
        %595 = vmatpush1.bf16.msra.mxu0 %v544
        %596 = vmatprep.subr.bf16.mxu0 %v543
        %597 = vmatpush1.bf16.msra.mxu0 %v542
        %598 = vmatprep.subr.bf16.mxu0 %v541
        %599 = vmatpush1.bf16.msra.mxu0 %v540
        %600 = vmatprep.subr.bf16.mxu0 %v539
        %601 = vmatpush1.bf16.msra.mxu0 %v538
        %602 = vmatprep.subr.bf16.mxu0 %v537
        %603 = vmatpush1.bf16.msra.mxu0 %v536
        %604 = vmatprep.subr.bf16.mxu0 %v535
        %605 = vmatpush1.bf16.msra.mxu0 %v534
        %606 = vmatprep.subr.bf16.mxu0 %v533
        %607 = vmatpush1.bf16.msra.mxu0 %v532
        %608 = vmatprep.subr.bf16.mxu0 %v531
        %609 = vmatpush1.bf16.msra.mxu0 %v530
        %610 = vmatprep.subr.bf16.mxu0 %v561
        %611 = vmatpush2.bf16.msra.mxu0 %v560
        %612 = vmatprep.subr.bf16.mxu0 %v559
        %613 = vmatpush2.bf16.msra.mxu0 %v558
        %614 = vmatprep.subr.bf16.mxu0 %v557
        %615 = vmatpush2.bf16.msra.mxu0 %v556
        %616 = vmatprep.subr.bf16.mxu0 %v555
        %617 = vmatpush2.bf16.msra.mxu0 %v554
        %618 = vmatprep.subr.bf16.mxu0 %v553
        %619 = vmatpush2.bf16.msra.mxu0 %v552
        %620 = vmatprep.subr.bf16.mxu0 %v551
        %621 = vmatpush2.bf16.msra.mxu0 %v550
        %622 = vmatprep.subr.bf16.mxu0 %v549
        %623 = vmatpush2.bf16.msra.mxu0 %v548
        %624 = vmatprep.subr.bf16.mxu0 %v547
        %625 = vmatpush2.bf16.msra.mxu0 %v546
        %626 = vmatprep.mubr.bf16.mxu0 %v389
        %627 = vmatmul.mubr.bf16.gmra.mxu0 %v388
        %v628 = vpop.f32.mrf.mxu0
        %v629 = vadd.f32 %v427, %v628
        %v630 = vpop.f32.mrf.mxu0
        %v631 = vadd.f32 %v431, %v630
        %v632 = vpop.f32.mrf.mxu0
        %v633 = vadd.f32 %v427, %v632
        %v634 = vpop.f32.mrf.mxu0
        %v635 = vadd.f32 %v431, %v634
        %636 = vdwg.mxu0
        %v637 = vpack.c.bf16 %v633, %v629
        %v638 = vpack.c.bf16 %v635, %v631
        %v641 = vunpack.c.l.b16 %v637
        %v642 = vunpack.c.l.b16 %v638
        %v643 = vunpack.c.h.b16 %v637
        %v644 = vunpack.c.h.b16 %v638
        %v645 = vpack.c.b16 %v642, %v641
        %v646 = vpack.c.b16 %v644, %v643
        %649 = vst [vmem:[%s284] sm:$0xff] %v645
        %650 = vst [vmem:[%s284 + $0x8] sm:$0xff] %v646
        %s651 = sand.u32 %s161, 1
        %s652 = sand.u32 %s161, 1
        %s653 = smul.addr %s652, 16
        %s654 = scalar_lea.vmem [#allocation4], %s653
        // Predicated region
        $region45: #{transformer_forward.13} parent=39 // pred_check
          %p655 = pneg %p171
        $region46: #{transformer_forward.13} parent=39 // pred_check_branch
          %657 = sbr.rel (%p655) target = $region48
        $region47: #{transformer_forward.13} parent=39 // pred_region
          %s658 = smul.u32 2, %s23
          %s659 = smul.u32 2, %s24
          %s660 = smul.addr %s658, 6
          %s661 = sadd.s32 %s659, %s660
          %s662 = smul.addr %s661, 4
          %s663 = scalar_lea.vmem %s5, %s662
          // Predicated region
          $region49: #{transformer_forward.13} parent=47 // pred_check
            _
          $region50: #{transformer_forward.13} parent=47 // pred_check_branch
            %665 = sbr.rel (0) target = $region52
          $region51: #{transformer_forward.13} parent=47 // pred_region
            // Predicated region
            $region53: #{transformer_forward.13} parent=51 // pred_check
              _
            $region54: #{transformer_forward.13} parent=51 // pred_check_branch
              %667 = sbr.rel (0) target = $region56
            $region55: #{transformer_forward.13} parent=51 // pred_region
              // Predicated region
              $region68: #{transformer_forward.13} parent=55 // pred_check
                _
              $region69: #{transformer_forward.13} parent=55 // pred_check_branch
                %685 = sbr.rel (0) target = $region71
              $region70: #{transformer_forward.13} parent=55 // pred_region
                loop: start=0, step=1, limit=1
                $region72: #{transformer_forward.13} parent=70 // loop_pre_header
                  _
                $region73: #{transformer_forward.13} parent=70 // loop_header
                  %s687 = sphi 0, %s691
                  %p688 = scmp.ge.s32.totalorder %s687, 1
                  %s692 = sphi %s654, %s654
                  %s693 = sphi %s663, %s663
                $region74: #{transformer_forward.13} parent=70 // loop_header_branch
                  %690 = sbr.rel (%p688) target = $region78
                $region75: #{transformer_forward.13} parent=70 // loop_body
                  %v694 = vld [vmem:[%s692] sm:$0xff]
                  %695 = vst [vmem:[%s693] sm:$0xff] %v694
                  %v696 = vld [vmem:[%s692 + $0x8] sm:$0xff]
                  %697 = vst [vmem:[%s693 + $0x18] sm:$0xff] %v696
                $region76: #{transformer_forward.13} parent=70 // loop_footer
                  %s691 = sadd.s32 1, %s687
                $region77: #{transformer_forward.13} parent=70 // loop_footer_branch
                  %686 = sbr.rel target = $region73
                $region78: #{transformer_forward.13} parent=70 // loop_exit
                  _
              $region71: #{transformer_forward.13} parent=55 // pred_fallthru
                _
              // Predicated region
              $region79: #{transformer_forward.13} parent=55 // pred_check
                _
              $region80: #{transformer_forward.13} parent=55 // pred_check_branch
                %699 = sbr.rel target = $region82
              $region81: #{transformer_forward.13} parent=55 // pred_region
                _
              $region82: #{transformer_forward.13} parent=55 // pred_fallthru
                _
            $region56: #{transformer_forward.13} parent=51 // pred_fallthru
              _
            // Predicated region
            $region57: #{transformer_forward.13} parent=51 // pred_check
              _
            $region58: #{transformer_forward.13} parent=51 // pred_check_branch
              %669 = sbr.rel target = $region60
            $region59: #{transformer_forward.13} parent=51 // pred_region
              %s671 = ssub.s32 256, 1
              loop: start=0, step=1, limit=1
              $region61: #{transformer_forward.13} parent=59 // loop_pre_header
                _
              $region62: #{transformer_forward.13} parent=59 // loop_header
                %s673 = sphi 0, %s677
                %p674 = scmp.ge.s32.totalorder %s673, 1
                %s678 = sphi %s654, %s654
                %s679 = sphi %s663, %s663
              $region63: #{transformer_forward.13} parent=59 // loop_header_branch
                %676 = sbr.rel (%p674) target = $region67
              $region64: #{transformer_forward.13} parent=59 // loop_body
                %v680 = vld [vmem:[%s678] sm:%s671]
                %681 = vst [vmem:[%s679] sm:%s671] %v680
                %v682 = vld [vmem:[%s678 + $0x8] sm:%s671]
                %683 = vst [vmem:[%s679 + $0x18] sm:%s671] %v682
              $region65: #{transformer_forward.13} parent=59 // loop_footer
                %s677 = sadd.s32 1, %s673
              $region66: #{transformer_forward.13} parent=59 // loop_footer_branch
                %672 = sbr.rel target = $region62
              $region67: #{transformer_forward.13} parent=59 // loop_exit
                _
            $region60: #{transformer_forward.13} parent=51 // pred_fallthru
              _
          $region52: #{transformer_forward.13} parent=47 // pred_fallthru
            _
          %700 = vnop
        $region48: #{transformer_forward.13} parent=39 // pred_fallthru
          _
      $region40: #{transformer_forward.13} parent=5 // pred_fallthru
        _
      %p701 = scmp.le.s32.totalorder 2, %s14
      // Predicated region
      $region83: #{transformer_forward.13} parent=5 // pred_check
        %p702 = pneg %p701
      $region84: #{transformer_forward.13} parent=5 // pred_check_branch
        %704 = sbr.rel (%p702) target = $region86
      $region85: #{transformer_forward.13} parent=5 // pred_region
        %s705 = ssub.s32 %s14, 2
        // Predicated region
        $region87: #{transformer_forward.13} parent=85 // pred_check
          %p706 = pneg %p177
        $region88: #{transformer_forward.13} parent=85 // pred_check_branch
          %708 = sbr.rel (%p706) target = $region90
        $region89: #{transformer_forward.13} parent=85 // pred_region
          %s709 = sand.u32 %s162, 1
          %s710 = sand.u32 %s162, 1
          %s711 = smul.addr %s710, 16
          %s712 = scalar_lea.vmem [#allocation4], %s711
        $region90: #{transformer_forward.13} parent=85 // pred_fallthru
          _
      $region86: #{transformer_forward.13} parent=5 // pred_fallthru
        _
    $region6: #{transformer_forward.13} parent=1 // loop_footer
      %s18 = sadd.s32 1, %s14
    $region7: #{transformer_forward.13} parent=1 // loop_footer_branch
      %13 = sbr.rel target = $region3
    $region8: #{transformer_forward.13} parent=1 // loop_exit
      _
    %713 = vsyncpa [#allocation3], 1
    %s714 = scalar_lea.sflag [#allocation3], 1
    %715 = vsyncpa %s714, 1

// kernel: transformer_forward.14
$region0: #{transformer_forward.14}
  #allocation0 [shape = 'u32[]', space=smem, size = 0x4, offset = 0x4, fixed_abs, tag = 'smem constant byte address 0x4 - core index']
  #allocation1 [shape = 'u32[144,128]{1,0:T(1,128)}', space=vmem, size = 0x12000, scoped, tag = 'internal scratch']
  #allocation2 [shape = 'f32[8,1]{1,0:T(8,128)}', space=vmem, size = 0x1000, scoped, tag = 'scratch operand']
  #allocation3 [shape = 'f32[8,1]{1,0:T(8,128)}', space=vmem, size = 0x1000, scoped, tag = 'scratch operand']
  #allocation4 [shape = 'f32[8,128]{1,0:T(8,128)}', space=vmem, size = 0x1000, scoped, tag = 'scratch operand']
  %s0 = inlined_call_operand.vmem [shape: bf16[2,8,768], index: 0, kind: input, shape index: {}, may-alias: {0,1,2}]
  %s1 = inlined_call_operand.vmem [shape: bf16[2,8,768], index: 1, kind: input, shape index: {}, may-alias: {0,1,2}]
  %s2 = inlined_call_operand.vmem [shape: bf16[2,8,768], index: 2, kind: input, shape index: {}, may-alias: {0,1,2}]
  %s3 = inlined_call_operand.vmem [shape: bf16[2,8,8], index: 3, kind: input, shape index: {}]
  %s4 = inlined_call_operand.vmem [shape: bf16[2,8,256], index: 4, kind: output, shape index: {}]
  %s5 = sld [smem:[#allocation0]]
  $region57: #{transformer_forward.14} parent=0
    _
  %s7 = ssub.s32 1, %s5
  %s8 = scalar_select 0, %s7, %s5
  loop: start=0, step=1, limit=6
  $region2: #{transformer_forward.14} parent=0 // loop_pre_header
    _
  $region3: #{transformer_forward.14} parent=0 // loop_header
    %s10 = sphi 0, %s14
    %p11 = scmp.ge.s32.totalorder %s10, 6
    %s17 = sphi 0, %s43
    %s18 = sphi 0, %s39
    %s19 = sphi 0, %s35
    %s20 = sphi 0, %s31
    %s21 = sphi 0, %s17
    %s22 = sphi 0, %s18
    %s23 = sphi 0, %s19
    %s24 = sphi 0, %s20
    %s25 = sphi 0, %s21
    %s26 = sphi 0, %s22
    %s27 = sphi 0, %s23
    %s28 = sphi 0, %s24
    %s50 = sphi 0, %s52
    %s53 = sphi 0, %s50
    %s54 = sphi 0, %s53
    %s70 = sphi 0, %s54
    %s82 = sphi 0, %s84
    %s85 = sphi 0, %s82
    %s86 = sphi 0, %s85
    %s102 = sphi 0, %s86
    %s114 = sphi 0, %s116
    %s117 = sphi 0, %s114
    %s118 = sphi 0, %s117
    %s134 = sphi 0, %s118
    %s144 = sphi 0, %s146
    %s147 = sphi 0, %s144
    %s148 = sphi 0, %s147
    %s164 = sphi 0, %s148
    %s174 = sphi 0, %s176
    %s177 = sphi 0, %s174
    %s178 = sphi 0, %s177
    %s194 = sphi 0, %s178
  $region4: #{transformer_forward.14} parent=0 // loop_header_branch
    %13 = sbr.rel (%p11) target = $region8
  $region5: #{transformer_forward.14} parent=0 // loop_body
    %s15 = ssub.s32 %s10, 1
    %s16 = ssub.s32 %s10, 2
    %s29 = sadd.s32 1, %s20
    %p30 = scmp.ge.s32.totalorder %s29, 1
    %s31 = scalar_select %p30, 0, %s29
    %s32 = sadd.s32 1, %s19
    %s33 = scalar_select %p30, %s32, %s19
    %p34 = scmp.ge.s32.totalorder %s33, 1
    %s35 = scalar_select %p34, 0, %s33
    %s36 = sadd.s32 1, %s18
    %s37 = scalar_select %p34, %s36, %s18
    %p38 = scmp.ge.s32.totalorder %s37, 2
    %s39 = scalar_select %p38, 0, %s37
    %s40 = sadd.s32 1, %s17
    %s41 = scalar_select %p38, %s40, %s17
    %p42 = scmp.ge.s32.totalorder %s41, 2
    %s43 = scalar_select %p42, 0, %s41
    %s44 = ssub.s32 %s17, %s43
    %s45 = ssub.s32 %s19, %s35
    %s46 = sor.u32 %s44, %s45
    %s47 = ssub.s32 %s18, %s39
    %s48 = sor.u32 %s46, %s47
    %p49 = scmp.eq.s32.totalorder %s48, 0
    %s51 = sadd.s32 %s50, 1
    %s52 = scalar_select %p49, %s50, %s51
    %p55 = pneg %p49
    %p56 = scmp.eq.s32.totalorder %s10, 3
    %p57 = por %p55, %p56
    %p58 = scmp.ne.s32.totalorder %s50, %s53
    %p59 = scmp.eq.s32.totalorder %s10, 0
    %p60 = por %p58, %p59
    %p61 = scmp.ne.s32.totalorder %s50, %s53
    %p62 = scmp.eq.s32.totalorder %s15, 3
    %p63 = por %p61, %p62
    %p64 = scmp.ne.s32.totalorder %s53, %s54
    %p65 = scmp.eq.s32.totalorder %s15, 0
    %p66 = por %p64, %p65
    %p67 = scmp.ne.s32.totalorder %s53, %s54
    %p68 = scmp.eq.s32.totalorder %s16, 3
    %p69 = por %p67, %p68
    %p71 = scmp.ne.s32.totalorder %s54, %s70
    %p72 = scmp.eq.s32.totalorder %s16, 0
    %p73 = por %p71, %p72
    %s74 = sadd.s32 %s18, 2
    %s75 = sadd.s32 %s39, 2
    %s76 = ssub.s32 %s17, %s43
    %s77 = ssub.s32 %s20, %s31
    %s78 = sor.u32 %s76, %s77
    %s79 = ssub.s32 %s74, %s75
    %s80 = sor.u32 %s78, %s79
    %p81 = scmp.eq.s32.totalorder %s80, 0
    %s83 = sadd.s32 %s82, 1
    %s84 = scalar_select %p81, %s82, %s83
    %p87 = pneg %p81
    %p88 = scmp.eq.s32.totalorder %s10, 3
    %p89 = por %p87, %p88
    %p90 = scmp.ne.s32.totalorder %s82, %s85
    %p91 = scmp.eq.s32.totalorder %s10, 0
    %p92 = por %p90, %p91
    %p93 = scmp.ne.s32.totalorder %s82, %s85
    %p94 = scmp.eq.s32.totalorder %s15, 3
    %p95 = por %p93, %p94
    %p96 = scmp.ne.s32.totalorder %s85, %s86
    %p97 = scmp.eq.s32.totalorder %s15, 0
    %p98 = por %p96, %p97
    %p99 = scmp.ne.s32.totalorder %s85, %s86
    %p100 = scmp.eq.s32.totalorder %s16, 3
    %p101 = por %p99, %p100
    %p103 = scmp.ne.s32.totalorder %s86, %s102
    %p104 = scmp.eq.s32.totalorder %s16, 0
    %p105 = por %p103, %p104
    %s106 = sadd.s32 %s18, 4
    %s107 = sadd.s32 %s39, 4
    %s108 = ssub.s32 %s17, %s43
    %s109 = ssub.s32 %s20, %s31
    %s110 = sor.u32 %s108, %s109
    %s111 = ssub.s32 %s106, %s107
    %s112 = sor.u32 %s110, %s111
    %p113 = scmp.eq.s32.totalorder %s112, 0
    %s115 = sadd.s32 %s114, 1
    %s116 = scalar_select %p113, %s114, %s115
    %p119 = pneg %p113
    %p120 = scmp.eq.s32.totalorder %s10, 3
    %p121 = por %p119, %p120
    %p122 = scmp.ne.s32.totalorder %s114, %s117
    %p123 = scmp.eq.s32.totalorder %s10, 0
    %p124 = por %p122, %p123
    %p125 = scmp.ne.s32.totalorder %s114, %s117
    %p126 = scmp.eq.s32.totalorder %s15, 3
    %p127 = por %p125, %p126
    %p128 = scmp.ne.s32.totalorder %s117, %s118
    %p129 = scmp.eq.s32.totalorder %s15, 0
    %p130 = por %p128, %p129
    %p131 = scmp.ne.s32.totalorder %s117, %s118
    %p132 = scmp.eq.s32.totalorder %s16, 3
    %p133 = por %p131, %p132
    %p135 = scmp.ne.s32.totalorder %s118, %s134
    %p136 = scmp.eq.s32.totalorder %s16, 0
    %p137 = por %p135, %p136
    %s138 = ssub.s32 %s17, %s43
    %s139 = ssub.s32 %s19, %s35
    %s140 = sor.u32 %s138, %s139
    %s141 = ssub.s32 %s20, %s31
    %s142 = sor.u32 %s140, %s141
    %p143 = scmp.eq.s32.totalorder %s142, 0
    %s145 = sadd.s32 %s144, 1
    %s146 = scalar_select %p143, %s144, %s145
    %p149 = pneg %p143
    %p150 = scmp.eq.s32.totalorder %s10, 3
    %p151 = por %p149, %p150
    %p152 = scmp.ne.s32.totalorder %s144, %s147
    %p153 = scmp.eq.s32.totalorder %s10, 0
    %p154 = por %p152, %p153
    %p155 = scmp.ne.s32.totalorder %s144, %s147
    %p156 = scmp.eq.s32.totalorder %s15, 3
    %p157 = por %p155, %p156
    %p158 = scmp.ne.s32.totalorder %s147, %s148
    %p159 = scmp.eq.s32.totalorder %s15, 0
    %p160 = por %p158, %p159
    %p161 = scmp.ne.s32.totalorder %s147, %s148
    %p162 = scmp.eq.s32.totalorder %s16, 3
    %p163 = por %p161, %p162
    %p165 = scmp.ne.s32.totalorder %s148, %s164
    %p166 = scmp.eq.s32.totalorder %s16, 0
    %p167 = por %p165, %p166
    %s168 = ssub.s32 %s17, %s43
    %s169 = ssub.s32 %s19, %s35
    %s170 = sor.u32 %s168, %s169
    %s171 = ssub.s32 %s18, %s39
    %s172 = sor.u32 %s170, %s171
    %p173 = scmp.eq.s32.totalorder %s172, 0
    %s175 = sadd.s32 %s174, 1
    %s176 = scalar_select %p173, %s174, %s175
    %p179 = pneg %p173
    %p180 = scmp.eq.s32.totalorder %s10, 3
    %p181 = por %p179, %p180
    %p182 = scmp.ne.s32.totalorder %s174, %s177
    %p183 = scmp.eq.s32.totalorder %s10, 0
    %p184 = por %p182, %p183
    %p185 = scmp.ne.s32.totalorder %s174, %s177
    %p186 = scmp.eq.s32.totalorder %s15, 3
    %p187 = por %p185, %p186
    %p188 = scmp.ne.s32.totalorder %s177, %s178
    %p189 = scmp.eq.s32.totalorder %s15, 0
    %p190 = por %p188, %p189
    %p191 = scmp.ne.s32.totalorder %s177, %s178
    %p192 = scmp.eq.s32.totalorder %s16, 3
    %p193 = por %p191, %p192
    %p195 = scmp.ne.s32.totalorder %s178, %s194
    %p196 = scmp.eq.s32.totalorder %s16, 0
    %p197 = por %p195, %p196
    %p198 = scmp.le.s32.totalorder 1, %s10
    %p199 = scmp.lt.s32.totalorder %s10, 5
    %p200 = pnand %p198, %p199
    %p201 = pneg %p200
    // Predicated region
    $region9: #{transformer_forward.14} parent=5 // pred_check
      _
    $region10: #{transformer_forward.14} parent=5 // pred_check_branch
      %203 = sbr.rel (%p200) target = $region12
    $region11: #{transformer_forward.14} parent=5 // pred_region
      %s204 = ssub.s32 %s10, 1
    $region12: #{transformer_forward.14} parent=5 // pred_fallthru
      _
    %p205 = scmp.lt.s32.totalorder %s10, 4
    // Predicated region
    $region13: #{transformer_forward.14} parent=5 // pred_check
      %p206 = pneg %p205
    $region14: #{transformer_forward.14} parent=5 // pred_check_branch
      %208 = sbr.rel (%p206) target = $region16
    $region15: #{transformer_forward.14} parent=5 // pred_region
      // Predicated region
      $region17: #{transformer_forward.14} parent=15 // pred_check
        %p209 = pneg %p60
      $region18: #{transformer_forward.14} parent=15 // pred_check_branch
        %211 = sbr.rel (%p209) target = $region20
      $region19: #{transformer_forward.14} parent=15 // pred_region
        %p212 = scmp.lt.s32.totalorder %s17, 1
        %s213 = scalar_select %p212, %s17, 1
        %p214 = scmp.lt.s32.totalorder %s19, 0
        %s215 = scalar_select %p214, %s19, 0
        %p216 = scmp.lt.s32.totalorder %s18, 5
        %s217 = scalar_select %p216, %s18, 5
        %s218 = smul.addr %s215, 6
        %s219 = sadd.s32 %s217, %s218
        %s220 = smul.addr %s213, 6
        %s221 = sadd.s32 %s219, %s220
        %s222 = smul.addr %s221, 4
        %s223 = scalar_lea.vmem %s0, %s222
      $region20: #{transformer_forward.14} parent=15 // pred_fallthru
        _
      // Predicated region
      $region21: #{transformer_forward.14} parent=15 // pred_check
        %p224 = pneg %p92
      $region22: #{transformer_forward.14} parent=15 // pred_check_branch
        %226 = sbr.rel (%p224) target = $region24
      $region23: #{transformer_forward.14} parent=15 // pred_region
        %s227 = sadd.s32 %s18, 2
        %p228 = scmp.lt.s32.totalorder %s17, 1
        %s229 = scalar_select %p228, %s17, 1
        %p230 = scmp.lt.s32.totalorder %s20, 0
        %s231 = scalar_select %p230, %s20, 0
        %p232 = scmp.lt.s32.totalorder %s227, 5
        %s233 = scalar_select %p232, %s227, 5
        %s234 = smul.addr %s231, 6
        %s235 = sadd.s32 %s233, %s234
        %s236 = smul.addr %s229, 6
        %s237 = sadd.s32 %s235, %s236
        %s238 = smul.addr %s237, 4
        %s239 = scalar_lea.vmem %s1, %s238
        %s240 = sadd.s32 %s18, 2
      $region24: #{transformer_forward.14} parent=15 // pred_fallthru
        _
      // Predicated region
      $region25: #{transformer_forward.14} parent=15 // pred_check
        %p241 = pneg %p124
      $region26: #{transformer_forward.14} parent=15 // pred_check_branch
        %243 = sbr.rel (%p241) target = $region28
      $region27: #{transformer_forward.14} parent=15 // pred_region
        %s244 = sadd.s32 %s18, 4
        %p245 = scmp.lt.s32.totalorder %s17, 1
        %s246 = scalar_select %p245, %s17, 1
        %p247 = scmp.lt.s32.totalorder %s20, 0
        %s248 = scalar_select %p247, %s20, 0
        %p249 = scmp.lt.s32.totalorder %s244, 5
        %s250 = scalar_select %p249, %s244, 5
        %s251 = smul.addr %s248, 6
        %s252 = sadd.s32 %s250, %s251
        %s253 = smul.addr %s246, 6
        %s254 = sadd.s32 %s252, %s253
        %s255 = smul.addr %s254, 4
        %s256 = scalar_lea.vmem %s2, %s255
        %s257 = sadd.s32 %s18, 4
      $region28: #{transformer_forward.14} parent=15 // pred_fallthru
        _
      // Predicated region
      $region29: #{transformer_forward.14} parent=15 // pred_check
        %p258 = pneg %p154
      $region30: #{transformer_forward.14} parent=15 // pred_check_branch
        %260 = sbr.rel (%p258) target = $region32
      $region31: #{transformer_forward.14} parent=15 // pred_region
        %p261 = scmp.lt.s32.totalorder %s17, 1
        %s262 = scalar_select %p261, %s17, 1
        %p263 = scmp.lt.s32.totalorder %s19, 0
        %s264 = scalar_select %p263, %s19, 0
        %p265 = scmp.lt.s32.totalorder %s20, 0
        %s266 = scalar_select %p265, %s20, 0
        %s267 = sadd.s32 %s266, %s264
        %s268 = sadd.s32 %s267, %s262
        %s269 = smul.addr %s268, 4
        %s270 = scalar_lea.vmem %s3, %s269
      $region32: #{transformer_forward.14} parent=15 // pred_fallthru
        _
    $region16: #{transformer_forward.14} parent=5 // pred_fallthru
      _
    %p271 = scmp.le.s32.totalorder 1, %s10
    %p272 = scmp.lt.s32.totalorder %s10, 5
    %p273 = pnand %p271, %p272
    %p274 = pneg %p273
    // Predicated region
    $region33: #{transformer_forward.14} parent=5 // pred_check
      _
    $region34: #{transformer_forward.14} parent=5 // pred_check_branch
      %276 = sbr.rel (%p273) target = $region36
    $region35: #{transformer_forward.14} parent=5 // pred_region
      %s277 = ssub.s32 %s10, 1
      %p278 = scmp.lt.s32.totalorder %s21, 1
      %s279 = scalar_select %p278, %s21, 1
      %p280 = scmp.lt.s32.totalorder %s23, 0
      %s281 = scalar_select %p280, %s23, 0
      %p282 = scmp.lt.s32.totalorder %s22, 5
      %s283 = scalar_select %p282, %s22, 5
      %s284 = smul.addr %s281, 6
      %s285 = sadd.s32 %s283, %s284
      %s286 = smul.addr %s279, 6
      %s287 = sadd.s32 %s285, %s286
      %s288 = smul.addr %s287, 4
      %s289 = scalar_lea.vmem %s0, %s288
      %p290 = pneg %p66
      %p291 = pneg %p63
      %s292 = sadd.s32 %s22, 2
      %p293 = scmp.lt.s32.totalorder %s21, 1
      %s294 = scalar_select %p293, %s21, 1
      %p295 = scmp.lt.s32.totalorder %s24, 0
      %s296 = scalar_select %p295, %s24, 0
      %p297 = scmp.lt.s32.totalorder %s292, 5
      %s298 = scalar_select %p297, %s292, 5
      %s299 = smul.addr %s296, 6
      %s300 = sadd.s32 %s298, %s299
      %s301 = smul.addr %s294, 6
      %s302 = sadd.s32 %s300, %s301
      %s303 = smul.addr %s302, 4
      %s304 = scalar_lea.vmem %s1, %s303
      %p305 = pneg %p98
      %p306 = pneg %p95
      %s307 = sadd.s32 %s22, 4
      %p308 = scmp.lt.s32.totalorder %s21, 1
      %s309 = scalar_select %p308, %s21, 1
      %p310 = scmp.lt.s32.totalorder %s24, 0
      %s311 = scalar_select %p310, %s24, 0
      %p312 = scmp.lt.s32.totalorder %s307, 5
      %s313 = scalar_select %p312, %s307, 5
      %s314 = smul.addr %s311, 6
      %s315 = sadd.s32 %s313, %s314
      %s316 = smul.addr %s309, 6
      %s317 = sadd.s32 %s315, %s316
      %s318 = smul.addr %s317, 4
      %s319 = scalar_lea.vmem %s2, %s318
      %p320 = pneg %p130
      %p321 = pneg %p127
      %p322 = scmp.lt.s32.totalorder %s21, 1
      %s323 = scalar_select %p322, %s21, 1
      %p324 = scmp.lt.s32.totalorder %s23, 0
      %s325 = scalar_select %p324, %s23, 0
      %p326 = scmp.lt.s32.totalorder %s24, 0
      %s327 = scalar_select %p326, %s24, 0
      %s328 = sadd.s32 %s327, %s325
      %s329 = sadd.s32 %s328, %s323
      %s330 = smul.addr %s329, 4
      %s331 = scalar_lea.vmem %s3, %s330
      %p332 = pneg %p160
      %p333 = pneg %p157
      %p334 = pneg %p190
      %p335 = pneg %p187
      %p336 = scmp.lt.s32.totalorder %s21, 1
      %s337 = scalar_select %p336, %s21, 1
      %p338 = scmp.lt.s32.totalorder %s23, 0
      %s339 = scalar_select %p338, %s23, 0
      %p340 = scmp.lt.s32.totalorder %s22, 1
      %s341 = scalar_select %p340, %s22, 1
      %s342 = smul.addr %s339, 2
      %s343 = sadd.s32 %s341, %s342
      %s344 = smul.addr %s337, 2
      %s345 = sadd.s32 %s343, %s344
      %s346 = smul.addr %s345, 4
      %s347 = scalar_lea.vmem %s4, %s346
      %p348 = scmp.lt.s32.totalorder %s21, 1
      %s349 = scalar_select %p348, %s21, 1
      %p350 = scmp.lt.s32.totalorder %s23, 0
      %s351 = scalar_select %p350, %s23, 0
      %p352 = scmp.lt.s32.totalorder %s22, 5
      %s353 = scalar_select %p352, %s22, 5
      %s354 = smul.addr %s351, 6
      %s355 = sadd.s32 %s353, %s354
      %s356 = smul.addr %s349, 6
      %s357 = sadd.s32 %s355, %s356
      %s358 = smul.addr %s357, 4
      %s359 = scalar_lea.vmem %s0, %s358
      %s360 = sadd.s32 %s22, 2
      %p361 = scmp.lt.s32.totalorder %s21, 1
      %s362 = scalar_select %p361, %s21, 1
      %p363 = scmp.lt.s32.totalorder %s24, 0
      %s364 = scalar_select %p363, %s24, 0
      %p365 = scmp.lt.s32.totalorder %s360, 5
      %s366 = scalar_select %p365, %s360, 5
      %s367 = smul.addr %s364, 6
      %s368 = sadd.s32 %s366, %s367
      %s369 = smul.addr %s362, 6
      %s370 = sadd.s32 %s368, %s369
      %s371 = smul.addr %s370, 4
      %s372 = scalar_lea.vmem %s1, %s371
      %s373 = sadd.s32 %s22, 2
      %s374 = sadd.s32 %s22, 4
      %p375 = scmp.lt.s32.totalorder %s21, 1
      %s376 = scalar_select %p375, %s21, 1
      %p377 = scmp.lt.s32.totalorder %s24, 0
      %s378 = scalar_select %p377, %s24, 0
      %p379 = scmp.lt.s32.totalorder %s374, 5
      %s380 = scalar_select %p379, %s374, 5
      %s381 = smul.addr %s378, 6
      %s382 = sadd.s32 %s380, %s381
      %s383 = smul.addr %s376, 6
      %s384 = sadd.s32 %s382, %s383
      %s385 = smul.addr %s384, 4
      %s386 = scalar_lea.vmem %s2, %s385
      %s387 = sadd.s32 %s22, 4
      %p388 = scmp.lt.s32.totalorder %s21, 1
      %s389 = scalar_select %p388, %s21, 1
      %p390 = scmp.lt.s32.totalorder %s23, 0
      %s391 = scalar_select %p390, %s23, 0
      %p392 = scmp.lt.s32.totalorder %s24, 0
      %s393 = scalar_select %p392, %s24, 0
      %s394 = sadd.s32 %s393, %s391
      %s395 = sadd.s32 %s394, %s389
      %s396 = smul.addr %s395, 4
      %s397 = scalar_lea.vmem %s3, %s396
      %p398 = scmp.lt.s32.totalorder %s21, 1
      %s399 = scalar_select %p398, %s21, 1
      %p400 = scmp.lt.s32.totalorder %s23, 0
      %s401 = scalar_select %p400, %s23, 0
      %p402 = scmp.lt.s32.totalorder %s22, 1
      %s403 = scalar_select %p402, %s22, 1
      %s404 = smul.addr %s401, 2
      %s405 = sadd.s32 %s403, %s404
      %s406 = smul.addr %s399, 2
      %s407 = sadd.s32 %s405, %s406
      %s408 = smul.addr %s407, 4
      %s409 = scalar_lea.vmem %s4, %s408
      %p411 = scmp.eq.s32.totalorder %s24, 0
      // Predicated region
      $region37: #{transformer_forward.14} parent=35 // pred_check
        %p412 = pneg %p411
      $region38: #{transformer_forward.14} parent=35 // pred_check_branch
        %414 = sbr.rel (%p412) target = $region40
      $region39: #{transformer_forward.14} parent=35 // pred_region
        %vm415 = vcmask 7168
        %416 = vst.msk [vmem:[#allocation2] sm:$0xff] %vm415, -inf
        %417 = vst.msk [vmem:[#allocation3] sm:$0xff] %vm415, 0.0
        %418 = vst [vmem:[#allocation4] sm:$0xff] 0.0
      $region40: #{transformer_forward.14} parent=35 // pred_fallthru
        _
      %v419 = vld [vmem:[%s359] sm:$0xf]
      %v420 = vld [vmem:[%s372] sm:$0xf]
      %v421 = vld [vmem:[%s397] sm:$0xf]
      %v422 = vunpack.c.l.bf16 %v421
      %423 = vmatprep.subr.bf16.mxu0 0
      %424 = vmatpush1.bf16.xpose.msra.mxu0 0
      %425 = vmatprep.subr.bf16.mxu0 0
      %426 = vmatpush1.bf16.xpose.msra.mxu0 0
      %427 = vmatprep.subr.bf16.mxu0 0
      %428 = vmatpush1.bf16.xpose.msra.mxu0 0
      %429 = vmatprep.subr.bf16.mxu0 0
      %430 = vmatpush1.bf16.xpose.msra.mxu0 0
      %431 = vmatprep.subr.bf16.mxu0 0
      %432 = vmatpush1.bf16.xpose.msra.mxu0 0
      %433 = vmatprep.subr.bf16.mxu0 0
      %434 = vmatpush1.bf16.xpose.msra.mxu0 0
      %435 = vmatprep.subr.bf16.mxu0 0
      %436 = vmatpush1.bf16.xpose.msra.mxu0 0
      %437 = vmatprep.subr.bf16.mxu0 0
      %438 = vmatpush1.bf16.xpose.msra.mxu0 %v420
      %439 = vmatprep.subr.bf16.mxu0 0
      %440 = vmatpush2.bf16.xpose.msra.mxu0 0
      %441 = vmatprep.subr.bf16.mxu0 0
      %442 = vmatpush2.bf16.xpose.msra.mxu0 0
      %443 = vmatprep.subr.bf16.mxu0 0
      %444 = vmatpush2.bf16.xpose.msra.mxu0 0
      %445 = vmatprep.subr.bf16.mxu0 0
      %446 = vmatpush2.bf16.xpose.msra.mxu0 0
      %447 = vmatprep.subr.bf16.mxu0 0
      %448 = vmatpush2.bf16.xpose.msra.mxu0 0
      %449 = vmatprep.subr.bf16.mxu0 0
      %450 = vmatpush2.bf16.xpose.msra.mxu0 0
      %451 = vmatprep.subr.bf16.mxu0 0
      %452 = vmatpush2.bf16.xpose.msra.mxu0 0
      %453 = vmatprep.subr.bf16.mxu0 0
      %454 = vmatpush2.bf16.xpose.msra.mxu0 0
      %455 = vmatprep.mubr.bf16.mxu0 0
      %456 = vmatmul.mubr.bf16.gmra.mxu0 %v419
      %v457 = vpop.f32.mrf.mxu0
      %v458 = vadd.f32 %v422, %v457
      %v459 = vpop.f32.mrf.mxu0
      %v460 = vpop.f32.mrf.mxu0
      %v461 = vpop.f32.mrf.mxu0
      %462 = vdwg.mxu0
      %v463 = vld [vmem:[#allocation2] sm:$0xff]
      %vm464 = vcmask 64512
      %v465 = vsel %vm464, %v458, -inf
      %466 = vmax.xlane.f32.xlu0 %v465
      %v467 = vpop.xlane.xlu0 %466
      %v468 = vmax.f32 %v463, %v467
      %v469 = vsub.f32 %v463, %v468
      %v470 = vmul.f32 %v469, 1.442695
      %v471 = vpow.pop %v470
      %473 = vset.pattern.permute.xlu0 0
      %474 = vperm.xlu0 %473, %v468
      %v475 = vpop.permute.xlu0 %474
      %v477 = vsub.f32 %v458, %v475
      %v478 = vmul.f32 %v477, 1.442695
      %v479 = vpow.pop %v478
      %v480 = vld [vmem:[#allocation3] sm:$0xff]
      %v481 = vmul.f32 %v471, %v480
      %v482 = vsel %vm464, %v479, 0.0
      %483 = vadd.xlane.f32.xlu0 %v482
      %v484 = vpop.xlane.xlu0 %483
      %v485 = vadd.f32 %v481, %v484
      %vm486 = vcmask 7168
      %487 = vst.msk [vmem:[#allocation3] sm:$0xff] %vm486, %v485
      %v488 = vld [vmem:[#allocation4] sm:$0xff]
      %490 = vset.pattern.permute.xlu0 0
      %491 = vperm.xlu0 %490, %v471
      %v492 = vpop.permute.xlu0 %491
      %v494 = vmul.f32 %v492, %v488
      %v495 = vpack.c.bf16 %v479, %v479
      %v496 = vld [vmem:[%s386] sm:$0xf]
      %v498 = vsel %vm464, %v495, 0
      %vm500 = vcmask 1043456
      %v502 = vsel %vm500, %v496, 0
      %504 = vmatprep.subr.bf16.mxu0 0
      %505 = vmatpush1.bf16.msra.mxu0 0
      %506 = vmatprep.subr.bf16.mxu0 0
      %507 = vmatpush1.bf16.msra.mxu0 0
      %508 = vmatprep.subr.bf16.mxu0 0
      %509 = vmatpush1.bf16.msra.mxu0 0
      %510 = vmatprep.subr.bf16.mxu0 0
      %511 = vmatpush1.bf16.msra.mxu0 0
      %512 = vmatprep.subr.bf16.mxu0 0
      %513 = vmatpush1.bf16.msra.mxu0 0
      %514 = vmatprep.subr.bf16.mxu0 0
      %515 = vmatpush1.bf16.msra.mxu0 0
      %516 = vmatprep.subr.bf16.mxu0 0
      %517 = vmatpush1.bf16.msra.mxu0 0
      %518 = vmatprep.subr.bf16.mxu0 0
      %519 = vmatpush1.bf16.msra.mxu0 %v502
      %520 = vmatprep.subr.bf16.mxu0 0
      %521 = vmatpush2.bf16.msra.mxu0 0
      %522 = vmatprep.subr.bf16.mxu0 0
      %523 = vmatpush2.bf16.msra.mxu0 0
      %524 = vmatprep.subr.bf16.mxu0 0
      %525 = vmatpush2.bf16.msra.mxu0 0
      %526 = vmatprep.subr.bf16.mxu0 0
      %527 = vmatpush2.bf16.msra.mxu0 0
      %528 = vmatprep.subr.bf16.mxu0 0
      %529 = vmatpush2.bf16.msra.mxu0 0
      %530 = vmatprep.subr.bf16.mxu0 0
      %531 = vmatpush2.bf16.msra.mxu0 0
      %532 = vmatprep.subr.bf16.mxu0 0
      %533 = vmatpush2.bf16.msra.mxu0 0
      %534 = vmatprep.subr.bf16.mxu0 0
      %535 = vmatpush2.bf16.msra.mxu0 0
      %536 = vmatprep.mubr.bf16.mxu0 0
      %537 = vmatmul.mubr.bf16.gmra.mxu0 %v498
      %v538 = vpop.f32.mrf.mxu0
      %v539 = vadd.f32 0.0, %v538
      %v540 = vpop.f32.mrf.mxu0
      %v541 = vpop.f32.mrf.mxu0
      %v542 = vpop.f32.mrf.mxu0
      %543 = vdwg.mxu0
      %v544 = vadd.f32 %v494, %v539
      %545 = vst [vmem:[#allocation4] sm:$0xff] %v544
      %546 = vst.msk [vmem:[#allocation2] sm:$0xff] %vm486, %v468
      // Predicated region
      $region41: #{transformer_forward.14} parent=35 // pred_check
        %p547 = pneg %p411
      $region42: #{transformer_forward.14} parent=35 // pred_check_branch
        %549 = sbr.rel (%p547) target = $region44
      $region43: #{transformer_forward.14} parent=35 // pred_region
        %v550 = vld [vmem:[#allocation4] sm:$0xff]
        %v551 = vld [vmem:[#allocation3] sm:$0xff]
        %v552 = vrcp.pop %v551
        %554 = vset.pattern.permute.xlu0 0
        %555 = vperm.xlu0 %554, %v552
        %v556 = vpop.permute.xlu0 %555
        %v558 = vmul.f32 %v550, %v556
        %v559 = vpack.c.bf16 %v558, %v558
        %560 = vst [vmem:[%s409] sm:$0xf] %v559
      $region44: #{transformer_forward.14} parent=35 // pred_fallthru
        _
      %p561 = scmp.lt.s32.totalorder %s21, 1
      %s562 = scalar_select %p561, %s21, 1
      %p563 = scmp.lt.s32.totalorder %s23, 0
      %s564 = scalar_select %p563, %s23, 0
      %p565 = scmp.lt.s32.totalorder %s22, 1
      %s566 = scalar_select %p565, %s22, 1
      %s567 = smul.addr %s564, 2
      %s568 = sadd.s32 %s566, %s567
      %s569 = smul.addr %s562, 2
      %s570 = sadd.s32 %s568, %s569
      %s571 = smul.addr %s570, 4
      %s572 = scalar_lea.vmem %s4, %s571
      // Predicated region
      $region45: #{transformer_forward.14} parent=35 // pred_check
        %p573 = pneg %p187
      $region46: #{transformer_forward.14} parent=35 // pred_check_branch
        %575 = sbr.rel (%p573) target = $region48
      $region47: #{transformer_forward.14} parent=35 // pred_region
        _
      $region48: #{transformer_forward.14} parent=35 // pred_fallthru
        _
    $region36: #{transformer_forward.14} parent=5 // pred_fallthru
      _
    %p576 = scmp.le.s32.totalorder 2, %s10
    // Predicated region
    $region49: #{transformer_forward.14} parent=5 // pred_check
      %p577 = pneg %p576
    $region50: #{transformer_forward.14} parent=5 // pred_check_branch
      %579 = sbr.rel (%p577) target = $region52
    $region51: #{transformer_forward.14} parent=5 // pred_region
      %s580 = ssub.s32 %s10, 2
      // Predicated region
      $region53: #{transformer_forward.14} parent=51 // pred_check
        %p581 = pneg %p193
      $region54: #{transformer_forward.14} parent=51 // pred_check_branch
        %583 = sbr.rel (%p581) target = $region56
      $region55: #{transformer_forward.14} parent=51 // pred_region
        %p584 = scmp.lt.s32.totalorder %s25, 1
        %s585 = scalar_select %p584, %s25, 1
        %p586 = scmp.lt.s32.totalorder %s27, 0
        %s587 = scalar_select %p586, %s27, 0
        %p588 = scmp.lt.s32.totalorder %s26, 1
        %s589 = scalar_select %p588, %s26, 1
        %s590 = smul.addr %s587, 2
        %s591 = sadd.s32 %s589, %s590
        %s592 = smul.addr %s585, 2
        %s593 = sadd.s32 %s591, %s592
        %s594 = smul.addr %s593, 4
        %s595 = scalar_lea.vmem %s4, %s594
      $region56: #{transformer_forward.14} parent=51 // pred_fallthru
        _
    $region52: #{transformer_forward.14} parent=5 // pred_fallthru
      _
  $region6: #{transformer_forward.14} parent=0 // loop_footer
    %s14 = sadd.s32 1, %s10
  $region7: #{transformer_forward.14} parent=0 // loop_footer_branch
    %9 = sbr.rel target = $region3
  $region8: #{transformer_forward.14} parent=0 // loop_exit
    _

// kernel: transformer_forward.12
$region0: #{transformer_forward.12}
  #allocation0 [shape = 'u32[]', space=smem, size = 0x4, offset = 0x4, fixed_abs, tag = 'smem constant byte address 0x4 - core index']
  #allocation1 [shape = 'u32[144,128]{1,0:T(1,128)}', space=vmem, size = 0x12000, scoped, tag = 'internal scratch']
  #allocation2 [shape = 'f32[16,256]{1,0:T(8,128)}', space=vmem, size = 0x4000, scoped, tag = 'scratch operand']
  %s0 = inlined_call_operand.vmem [shape: bf16[16,2048], index: 0, kind: input, shape index: {}]
  %s1 = inlined_call_operand.hbm [shape: bf16[2048,256], index: 1, kind: input, shape index: {}]
  %s2 = inlined_call_operand.vmem [shape: f32[1,256], index: 2, kind: input, shape index: {}]
  %s3 = inlined_call_operand.vmem [shape: bf16[16,256], index: 3, kind: output, shape index: {}]
  %s4 = sld [smem:[#allocation0]]
  $region80: #{transformer_forward.12} parent=0
    _
  %s6 = ssub.s32 1, %s4
  %s7 = scalar_select 0, %s6, %s4
  $region1: #{transformer_forward.12} parent=0
    #allocation3 [shape = 'u8[65536]{0}', space=vmem, size = 0x10000, scoped, tag = 'input window, operand 0']
    #allocation4 [shape = 'u8[1048576]{0}', space=vmem, size = 0x100000, scoped, tag = 'input window, operand 1']
    #allocation5 [shape = 's32[2]{0}', space=sflag, size = 0x8, scoped, tag = 'scoped memory for transformer_forward.12']
    %8 = vsyncpa [#allocation5], 0
    %s9 = scalar_lea.sflag [#allocation5], 1
    %10 = vsyncpa %s9, 0
    loop: start=0, step=1, limit=4
    $region2: #{transformer_forward.12} parent=1 // loop_pre_header
      _
    $region3: #{transformer_forward.12} parent=1 // loop_header
      %s12 = sphi 0, %s16
      %p13 = scmp.ge.s32.totalorder %s12, 4
      %s19 = sphi 0, %s38
      %s20 = sphi 0, %s34
      %s21 = sphi 0, %s30
      %s22 = sphi 0, %s19
      %s23 = sphi 0, %s20
      %s24 = sphi 0, %s21
      %s25 = sphi 0, %s22
      %s26 = sphi 0, %s23
      %s27 = sphi 0, %s24
      %s43 = sphi 0, %s45
      %s46 = sphi 0, %s43
      %s47 = sphi 0, %s46
      %s63 = sphi 0, %s47
      %s71 = sphi 0, %s73
      %s74 = sphi 0, %s71
      %s75 = sphi 0, %s74
      %s91 = sphi 0, %s75
      %s97 = sphi 0, %s99
      %s100 = sphi 0, %s97
      %s101 = sphi 0, %s100
      %s117 = sphi 0, %s101
      %s125 = sphi 0, %s127
      %s128 = sphi 0, %s125
      %s129 = sphi 0, %s128
      %s145 = sphi 0, %s129
    $region4: #{transformer_forward.12} parent=1 // loop_header_branch
      %15 = sbr.rel (%p13) target = $region8
    $region5: #{transformer_forward.12} parent=1 // loop_body
      %s17 = ssub.s32 %s12, 1
      %s18 = ssub.s32 %s12, 2
      %s28 = sadd.s32 1, %s21
      %p29 = scmp.ge.s32.totalorder %s28, 2
      %s30 = scalar_select %p29, 0, %s28
      %s31 = sadd.s32 1, %s20
      %s32 = scalar_select %p29, %s31, %s20
      %p33 = scmp.ge.s32.totalorder %s32, 1
      %s34 = scalar_select %p33, 0, %s32
      %s35 = sadd.s32 1, %s19
      %s36 = scalar_select %p33, %s35, %s19
      %p37 = scmp.ge.s32.totalorder %s36, 1
      %s38 = scalar_select %p37, 0, %s36
      %s39 = ssub.s32 %s19, %s38
      %s40 = ssub.s32 %s21, %s30
      %s41 = sor.u32 %s39, %s40
      %p42 = scmp.eq.s32.totalorder %s41, 0
      %s44 = sadd.s32 %s43, 1
      %s45 = scalar_select %p42, %s43, %s44
      %p48 = pneg %p42
      %p49 = scmp.eq.s32.totalorder %s12, 1
      %p50 = por %p48, %p49
      %p51 = scmp.ne.s32.totalorder %s43, %s46
      %p52 = scmp.eq.s32.totalorder %s12, 0
      %p53 = por %p51, %p52
      %p54 = scmp.ne.s32.totalorder %s43, %s46
      %p55 = scmp.eq.s32.totalorder %s17, 1
      %p56 = por %p54, %p55
      %p57 = scmp.ne.s32.totalorder %s46, %s47
      %p58 = scmp.eq.s32.totalorder %s17, 0
      %p59 = por %p57, %p58
      %p60 = scmp.ne.s32.totalorder %s46, %s47
      %p61 = scmp.eq.s32.totalorder %s18, 1
      %p62 = por %p60, %p61
      %p64 = scmp.ne.s32.totalorder %s47, %s63
      %p65 = scmp.eq.s32.totalorder %s18, 0
      %p66 = por %p64, %p65
      %s67 = ssub.s32 %s21, %s30
      %s68 = ssub.s32 %s20, %s34
      %s69 = sor.u32 %s67, %s68
      %p70 = scmp.eq.s32.totalorder %s69, 0
      %s72 = sadd.s32 %s71, 1
      %s73 = scalar_select %p70, %s71, %s72
      %p76 = pneg %p70
      %p77 = scmp.eq.s32.totalorder %s12, 1
      %p78 = por %p76, %p77
      %p79 = scmp.ne.s32.totalorder %s71, %s74
      %p80 = scmp.eq.s32.totalorder %s12, 0
      %p81 = por %p79, %p80
      %p82 = scmp.ne.s32.totalorder %s71, %s74
      %p83 = scmp.eq.s32.totalorder %s17, 1
      %p84 = por %p82, %p83
      %p85 = scmp.ne.s32.totalorder %s74, %s75
      %p86 = scmp.eq.s32.totalorder %s17, 0
      %p87 = por %p85, %p86
      %p88 = scmp.ne.s32.totalorder %s74, %s75
      %p89 = scmp.eq.s32.totalorder %s18, 1
      %p90 = por %p88, %p89
      %p92 = scmp.ne.s32.totalorder %s75, %s91
      %p93 = scmp.eq.s32.totalorder %s18, 0
      %p94 = por %p92, %p93
      %s95 = ssub.s32 %s20, %s34
      %p96 = scmp.eq.s32.totalorder %s95, 0
      %s98 = sadd.s32 %s97, 1
      %s99 = scalar_select %p96, %s97, %s98
      %p102 = pneg %p96
      %p103 = scmp.eq.s32.totalorder %s12, 1
      %p104 = por %p102, %p103
      %p105 = scmp.ne.s32.totalorder %s97, %s100
      %p106 = scmp.eq.s32.totalorder %s12, 0
      %p107 = por %p105, %p106
      %p108 = scmp.ne.s32.totalorder %s97, %s100
      %p109 = scmp.eq.s32.totalorder %s17, 1
      %p110 = por %p108, %p109
      %p111 = scmp.ne.s32.totalorder %s100, %s101
      %p112 = scmp.eq.s32.totalorder %s17, 0
      %p113 = por %p111, %p112
      %p114 = scmp.ne.s32.totalorder %s100, %s101
      %p115 = scmp.eq.s32.totalorder %s18, 1
      %p116 = por %p114, %p115
      %p118 = scmp.ne.s32.totalorder %s101, %s117
      %p119 = scmp.eq.s32.totalorder %s18, 0
      %p120 = por %p118, %p119
      %s121 = ssub.s32 %s19, %s38
      %s122 = ssub.s32 %s20, %s34
      %s123 = sor.u32 %s121, %s122
      %p124 = scmp.eq.s32.totalorder %s123, 0
      %s126 = sadd.s32 %s125, 1
      %s127 = scalar_select %p124, %s125, %s126
      %p130 = pneg %p124
      %p131 = scmp.eq.s32.totalorder %s12, 1
      %p132 = por %p130, %p131
      %p133 = scmp.ne.s32.totalorder %s125, %s128
      %p134 = scmp.eq.s32.totalorder %s12, 0
      %p135 = por %p133, %p134
      %p136 = scmp.ne.s32.totalorder %s125, %s128
      %p137 = scmp.eq.s32.totalorder %s17, 1
      %p138 = por %p136, %p137
      %p139 = scmp.ne.s32.totalorder %s128, %s129
      %p140 = scmp.eq.s32.totalorder %s17, 0
      %p141 = por %p139, %p140
      %p142 = scmp.ne.s32.totalorder %s128, %s129
      %p143 = scmp.eq.s32.totalorder %s18, 1
      %p144 = por %p142, %p143
      %p146 = scmp.ne.s32.totalorder %s129, %s145
      %p147 = scmp.eq.s32.totalorder %s18, 0
      %p148 = por %p146, %p147
      %p149 = scmp.le.s32.totalorder 1, %s12
      %p150 = scmp.lt.s32.totalorder %s12, 3
      %p151 = pnand %p149, %p150
      %p152 = pneg %p151
      // Predicated region
      $region9: #{transformer_forward.12} parent=5 // pred_check
        _
      $region10: #{transformer_forward.12} parent=5 // pred_check_branch
        %154 = sbr.rel (%p151) target = $region12
      $region11: #{transformer_forward.12} parent=5 // pred_region
        %s155 = ssub.s32 %s12, 1
        // Predicated region
        $region13: #{transformer_forward.12} parent=11 // pred_check
          %p156 = pneg %p113
        $region14: #{transformer_forward.12} parent=11 // pred_check_branch
          %158 = sbr.rel (%p156) target = $region16
        $region15: #{transformer_forward.12} parent=11 // pred_region
          %s159 = smul.u32 2, %s23
          %p160 = scmp.lt.s32.totalorder %s159, 1
          %s161 = scalar_select %p160, %s159, 1
          %s162 = scalar_lea.vmem %s2, %s161
          %s163 = smul.u32 2, %s23
        $region16: #{transformer_forward.12} parent=11 // pred_fallthru
          _
      $region12: #{transformer_forward.12} parent=5 // pred_fallthru
        _
      %p164 = scmp.lt.s32.totalorder %s12, 2
      // Predicated region
      $region17: #{transformer_forward.12} parent=5 // pred_check
        %p165 = pneg %p164
      $region18: #{transformer_forward.12} parent=5 // pred_check_branch
        %167 = sbr.rel (%p165) target = $region20
      $region19: #{transformer_forward.12} parent=5 // pred_region
        // Predicated region
        $region21: #{transformer_forward.12} parent=19 // pred_check
          %p168 = pneg %p53
        $region22: #{transformer_forward.12} parent=19 // pred_check_branch
          %170 = sbr.rel (%p168) target = $region24
        $region23: #{transformer_forward.12} parent=19 // pred_region
          %s171 = sand.u32 %s43, 1
          %s172 = sand.u32 %s43, 1
          %s173 = smul.addr %s172, 64
          %s174 = scalar_lea.vmem [#allocation3], %s173
          %s175 = smul.u32 2, %s19
          %s176 = smul.u32 8, %s21
          %s177 = smul.addr %s175, 16
          %s178 = sadd.s32 %s176, %s177
          %s179 = smul.addr %s178, 4
          %s180 = scalar_lea.vmem %s0, %s179
          // Predicated region
          $region25: #{transformer_forward.12} parent=23 // pred_check
            _
          $region26: #{transformer_forward.12} parent=23 // pred_check_branch
            %182 = sbr.rel (0) target = $region28
          $region27: #{transformer_forward.12} parent=23 // pred_region
            // Predicated region
            $region29: #{transformer_forward.12} parent=27 // pred_check
              _
            $region30: #{transformer_forward.12} parent=27 // pred_check_branch
              %184 = sbr.rel (0) target = $region32
            $region31: #{transformer_forward.12} parent=27 // pred_region
              loop: start=0, step=1, limit=1
              $region33: #{transformer_forward.12} parent=31 // loop_pre_header
                _
              $region34: #{transformer_forward.12} parent=31 // loop_header
                %s186 = sphi 0, %s190
                %p187 = scmp.ge.s32.totalorder %s186, 1
                %s191 = sphi %s180, %s180
                %s192 = sphi %s174, %s174
              $region35: #{transformer_forward.12} parent=31 // loop_header_branch
                %189 = sbr.rel (%p187) target = $region39
              $region36: #{transformer_forward.12} parent=31 // loop_body
                %v193 = vld [vmem:[%s191] sm:$0xff]
                %194 = vst [vmem:[%s192] sm:$0xff] %v193
                %v195 = vld [vmem:[%s191 + $0x8] sm:$0xff]
                %196 = vst [vmem:[%s192 + $0x8] sm:$0xff] %v195
                %v197 = vld [vmem:[%s191 + $0x10] sm:$0xff]
                %198 = vst [vmem:[%s192 + $0x10] sm:$0xff] %v197
                %v199 = vld [vmem:[%s191 + $0x18] sm:$0xff]
                %200 = vst [vmem:[%s192 + $0x18] sm:$0xff] %v199
                %v201 = vld [vmem:[%s191 + $0x40] sm:$0xff]
                %202 = vst [vmem:[%s192 + $0x20] sm:$0xff] %v201
                %v203 = vld [vmem:[%s191 + $0x48] sm:$0xff]
                %204 = vst [vmem:[%s192 + $0x28] sm:$0xff] %v203
                %v205 = vld [vmem:[%s191 + $0x50] sm:$0xff]
                %206 = vst [vmem:[%s192 + $0x30] sm:$0xff] %v205
                %v207 = vld [vmem:[%s191 + $0x58] sm:$0xff]
                %208 = vst [vmem:[%s192 + $0x38] sm:$0xff] %v207
              $region37: #{transformer_forward.12} parent=31 // loop_footer
                %s190 = sadd.s32 1, %s186
              $region38: #{transformer_forward.12} parent=31 // loop_footer_branch
                %185 = sbr.rel target = $region34
              $region39: #{transformer_forward.12} parent=31 // loop_exit
                _
            $region32: #{transformer_forward.12} parent=27 // pred_fallthru
              _
            // Predicated region
            $region40: #{transformer_forward.12} parent=27 // pred_check
              _
            $region41: #{transformer_forward.12} parent=27 // pred_check_branch
              %210 = sbr.rel target = $region43
            $region42: #{transformer_forward.12} parent=27 // pred_region
              _
            $region43: #{transformer_forward.12} parent=27 // pred_fallthru
              _
          $region28: #{transformer_forward.12} parent=23 // pred_fallthru
            _
          %211 = vnop
        $region24: #{transformer_forward.12} parent=19 // pred_fallthru
          _
        // Predicated region
        $region44: #{transformer_forward.12} parent=19 // pred_check
          %p212 = pneg %p81
        $region45: #{transformer_forward.12} parent=19 // pred_check_branch
          %214 = sbr.rel (%p212) target = $region47
        $region46: #{transformer_forward.12} parent=19 // pred_region
          %s215 = sand.u32 %s71, 1
          %s216 = scalar_lea.sflag [#allocation5], %s215
          %s217 = sand.u32 %s71, 1
          %s218 = smul.addr %s217, 1024
          %s219 = scalar_lea.vmem [#allocation4], %s218
          %s220 = smul.u32 128, %s21
          %s221 = smul.u32 2, %s20
          %s223 = ssub.s32 16384, 16384
          %224 = vsyncadd %s216, %s223
          %s225 = smul.addr %s220, 2
          %s226 = sadd.s32 %s221, %s225
          %s227 = smul.addr %s226, 64
          %s228 = scalar_lea.hbm %s1, %s227
          %s229 = sshll.u32 %s219, 4
          %s230 = int_to_ptr.vmem [resolvable:$true] %s229
          %235 = dma.hbm_to_vmem [thread:$0]  %s228, 16384, %s230, %s216, 128, 128, 8
        $region47: #{transformer_forward.12} parent=19 // pred_fallthru
          _
      $region20: #{transformer_forward.12} parent=5 // pred_fallthru
        _
      %p236 = scmp.le.s32.totalorder 1, %s12
      %p237 = scmp.lt.s32.totalorder %s12, 3
      %p238 = pnand %p236, %p237
      %p239 = pneg %p238
      // Predicated region
      $region48: #{transformer_forward.12} parent=5 // pred_check
        _
      $region49: #{transformer_forward.12} parent=5 // pred_check_branch
        %241 = sbr.rel (%p238) target = $region51
      $region50: #{transformer_forward.12} parent=5 // pred_region
        %s242 = ssub.s32 %s12, 1
        %s243 = sand.u32 %s46, 1
        %s244 = sand.u32 %s46, 1
        %s245 = smul.addr %s244, 64
        %s246 = scalar_lea.vmem [#allocation3], %s245
        // Predicated region
        $region52: #{transformer_forward.12} parent=50 // pred_check
          %p247 = pneg %p59
        $region53: #{transformer_forward.12} parent=50 // pred_check_branch
          %249 = sbr.rel (%p247) target = $region55
        $region54: #{transformer_forward.12} parent=50 // pred_region
          _
        $region55: #{transformer_forward.12} parent=50 // pred_fallthru
          _
        %s250 = sand.u32 %s74, 1
        %s251 = scalar_lea.sflag [#allocation5], %s250
        %s252 = sand.u32 %s74, 1
        %s253 = smul.addr %s252, 1024
        %s254 = scalar_lea.vmem [#allocation4], %s253
        // Predicated region
        $region56: #{transformer_forward.12} parent=50 // pred_check
          %p255 = pneg %p87
        $region57: #{transformer_forward.12} parent=50 // pred_check_branch
          %257 = sbr.rel (%p255) target = $region59
        $region58: #{transformer_forward.12} parent=50 // pred_region
          %258 = dma.done %s251, 16384
        $region59: #{transformer_forward.12} parent=50 // pred_fallthru
          _
        %s259 = sand.u32 %s46, 1
        %s260 = sand.u32 %s46, 1
        %s261 = smul.addr %s260, 64
        %s262 = scalar_lea.vmem [#allocation3], %s261
        %p263 = pneg %p59
        %p264 = pneg %p56
        %s265 = sand.u32 %s74, 1
        %s266 = scalar_lea.sflag [#allocation5], %s265
        %s267 = sand.u32 %s74, 1
        %s268 = smul.addr %s267, 1024
        %s269 = scalar_lea.vmem [#allocation4], %s268
        %p270 = pneg %p87
        %p271 = pneg %p84
        %s272 = smul.u32 2, %s23
        %p273 = scmp.lt.s32.totalorder %s272, 1
        %s274 = scalar_select %p273, %s272, 1
        %s275 = scalar_lea.vmem %s2, %s274
        %p276 = pneg %p113
        %p277 = pneg %p110
        %p278 = pneg %p141
        %p279 = pneg %p138
        %s280 = smul.u32 2, %s22
        %s281 = smul.u32 2, %s23
        %p282 = scmp.lt.s32.totalorder %s280, 1
        %s283 = scalar_select %p282, %s280, 1
        %p284 = scmp.lt.s32.totalorder %s281, 1
        %s285 = scalar_select %p284, %s281, 1
        %s286 = smul.addr %s283, 2
        %s287 = sadd.s32 %s285, %s286
        %s288 = smul.addr %s287, 4
        %s289 = scalar_lea.vmem %s3, %s288
        %s290 = smul.u32 2, %s22
        %s291 = smul.u32 8, %s24
        %s292 = smul.u32 128, %s24
        %s293 = smul.u32 2, %s23
        %s294 = smul.u32 2, %s23
        %p295 = scmp.lt.s32.totalorder %s294, 1
        %s296 = scalar_select %p295, %s294, 1
        %s297 = scalar_lea.vmem %s2, %s296
        %s298 = smul.u32 2, %s23
        %s299 = smul.u32 2, %s22
        %s300 = smul.u32 2, %s23
        %p301 = scmp.lt.s32.totalorder %s299, 1
        %s302 = scalar_select %p301, %s299, 1
        %p303 = scmp.lt.s32.totalorder %s300, 1
        %s304 = scalar_select %p303, %s300, 1
        %s305 = smul.addr %s302, 2
        %s306 = sadd.s32 %s304, %s305
        %s307 = smul.addr %s306, 4
        %s308 = scalar_lea.vmem %s3, %s307
        %s309 = smul.u32 2, %s22
        %s310 = smul.u32 2, %s23
        %v311 = vld [vmem:[%s246] sm:$0xff]
        %v312 = vld [vmem:[%s246 + $0x8] sm:$0xff]
        %v313 = vld [vmem:[%s246 + $0x10] sm:$0xff]
        %v314 = vld [vmem:[%s246 + $0x18] sm:$0xff]
        %v315 = vld [vmem:[%s246 + $0x20] sm:$0xff]
        %v316 = vld [vmem:[%s246 + $0x28] sm:$0xff]
        %v317 = vld [vmem:[%s246 + $0x30] sm:$0xff]
        %v318 = vld [vmem:[%s246 + $0x38] sm:$0xff]
        %v319 = vld [vmem:[%s254] sm:$0xff]
        %v320 = vld [vmem:[%s254 + $0x8] sm:$0xff]
        %v321 = vld [vmem:[%s254 + $0x10] sm:$0xff]
        %v322 = vld [vmem:[%s254 + $0x18] sm:$0xff]
        %v323 = vld [vmem:[%s254 + $0x20] sm:$0xff]
        %v324 = vld [vmem:[%s254 + $0x28] sm:$0xff]
        %v325 = vld [vmem:[%s254 + $0x30] sm:$0xff]
        %v326 = vld [vmem:[%s254 + $0x38] sm:$0xff]
        %v327 = vld [vmem:[%s254 + $0x40] sm:$0xff]
        %v328 = vld [vmem:[%s254 + $0x48] sm:$0xff]
        %v329 = vld [vmem:[%s254 + $0x50] sm:$0xff]
        %v330 = vld [vmem:[%s254 + $0x58] sm:$0xff]
        %v331 = vld [vmem:[%s254 + $0x60] sm:$0xff]
        %v332 = vld [vmem:[%s254 + $0x68] sm:$0xff]
        %v333 = vld [vmem:[%s254 + $0x70] sm:$0xff]
        %v334 = vld [vmem:[%s254 + $0x78] sm:$0xff]
        %v335 = vld [vmem:[%s254 + $0x80] sm:$0xff]
        %v336 = vld [vmem:[%s254 + $0x88] sm:$0xff]
        %v337 = vld [vmem:[%s254 + $0x90] sm:$0xff]
        %v338 = vld [vmem:[%s254 + $0x98] sm:$0xff]
        %v339 = vld [vmem:[%s254 + $0xa0] sm:$0xff]
        %v340 = vld [vmem:[%s254 + $0xa8] sm:$0xff]
        %v341 = vld [vmem:[%s254 + $0xb0] sm:$0xff]
        %v342 = vld [vmem:[%s254 + $0xb8] sm:$0xff]
        %v343 = vld [vmem:[%s254 + $0xc0] sm:$0xff]
        %v344 = vld [vmem:[%s254 + $0xc8] sm:$0xff]
        %v345 = vld [vmem:[%s254 + $0xd0] sm:$0xff]
        %v346 = vld [vmem:[%s254 + $0xd8] sm:$0xff]
        %v347 = vld [vmem:[%s254 + $0xe0] sm:$0xff]
        %v348 = vld [vmem:[%s254 + $0xe8] sm:$0xff]
        %v349 = vld [vmem:[%s254 + $0xf0] sm:$0xff]
        %v350 = vld [vmem:[%s254 + $0xf8] sm:$0xff]
        %v351 = vld [vmem:[%s254 + $0x100] sm:$0xff]
        %v352 = vld [vmem:[%s254 + $0x108] sm:$0xff]
        %v353 = vld [vmem:[%s254 + $0x110] sm:$0xff]
        %v354 = vld [vmem:[%s254 + $0x118] sm:$0xff]
        %v355 = vld [vmem:[%s254 + $0x120] sm:$0xff]
        %v356 = vld [vmem:[%s254 + $0x128] sm:$0xff]
        %v357 = vld [vmem:[%s254 + $0x130] sm:$0xff]
        %v358 = vld [vmem:[%s254 + $0x138] sm:$0xff]
        %v359 = vld [vmem:[%s254 + $0x140] sm:$0xff]
        %v360 = vld [vmem:[%s254 + $0x148] sm:$0xff]
        %v361 = vld [vmem:[%s254 + $0x150] sm:$0xff]
        %v362 = vld [vmem:[%s254 + $0x158] sm:$0xff]
        %v363 = vld [vmem:[%s254 + $0x160] sm:$0xff]
        %v364 = vld [vmem:[%s254 + $0x168] sm:$0xff]
        %v365 = vld [vmem:[%s254 + $0x170] sm:$0xff]
        %v366 = vld [vmem:[%s254 + $0x178] sm:$0xff]
        %v367 = vld [vmem:[%s254 + $0x180] sm:$0xff]
        %v368 = vld [vmem:[%s254 + $0x188] sm:$0xff]
        %v369 = vld [vmem:[%s254 + $0x190] sm:$0xff]
        %v370 = vld [vmem:[%s254 + $0x198] sm:$0xff]
        %v371 = vld [vmem:[%s254 + $0x1a0] sm:$0xff]
        %v372 = vld [vmem:[%s254 + $0x1a8] sm:$0xff]
        %v373 = vld [vmem:[%s254 + $0x1b0] sm:$0xff]
        %v374 = vld [vmem:[%s254 + $0x1b8] sm:$0xff]
        %v375 = vld [vmem:[%s254 + $0x1c0] sm:$0xff]
        %v376 = vld [vmem:[%s254 + $0x1c8] sm:$0xff]
        %v377 = vld [vmem:[%s254 + $0x1d0] sm:$0xff]
        %v378 = vld [vmem:[%s254 + $0x1d8] sm:$0xff]
        %v379 = vld [vmem:[%s254 + $0x1e0] sm:$0xff]
        %v380 = vld [vmem:[%s254 + $0x1e8] sm:$0xff]
        %v381 = vld [vmem:[%s254 + $0x1f0] sm:$0xff]
        %v382 = vld [vmem:[%s254 + $0x1f8] sm:$0xff]
        %v383 = vld [vmem:[%s254 + $0x200] sm:$0xff]
        %v384 = vld [vmem:[%s254 + $0x208] sm:$0xff]
        %v385 = vld [vmem:[%s254 + $0x210] sm:$0xff]
        %v386 = vld [vmem:[%s254 + $0x218] sm:$0xff]
        %v387 = vld [vmem:[%s254 + $0x220] sm:$0xff]
        %v388 = vld [vmem:[%s254 + $0x228] sm:$0xff]
        %v389 = vld [vmem:[%s254 + $0x230] sm:$0xff]
        %v390 = vld [vmem:[%s254 + $0x238] sm:$0xff]
        %v391 = vld [vmem:[%s254 + $0x240] sm:$0xff]
        %v392 = vld [vmem:[%s254 + $0x248] sm:$0xff]
        %v393 = vld [vmem:[%s254 + $0x250] sm:$0xff]
        %v394 = vld [vmem:[%s254 + $0x258] sm:$0xff]
        %v395 = vld [vmem:[%s254 + $0x260] sm:$0xff]
        %v396 = vld [vmem:[%s254 + $0x268] sm:$0xff]
        %v397 = vld [vmem:[%s254 + $0x270] sm:$0xff]
        %v398 = vld [vmem:[%s254 + $0x278] sm:$0xff]
        %v399 = vld [vmem:[%s254 + $0x280] sm:$0xff]
        %v400 = vld [vmem:[%s254 + $0x288] sm:$0xff]
        %v401 = vld [vmem:[%s254 + $0x290] sm:$0xff]
        %v402 = vld [vmem:[%s254 + $0x298] sm:$0xff]
        %v403 = vld [vmem:[%s254 + $0x2a0] sm:$0xff]
        %v404 = vld [vmem:[%s254 + $0x2a8] sm:$0xff]
        %v405 = vld [vmem:[%s254 + $0x2b0] sm:$0xff]
        %v406 = vld [vmem:[%s254 + $0x2b8] sm:$0xff]
        %v407 = vld [vmem:[%s254 + $0x2c0] sm:$0xff]
        %v408 = vld [vmem:[%s254 + $0x2c8] sm:$0xff]
        %v409 = vld [vmem:[%s254 + $0x2d0] sm:$0xff]
        %v410 = vld [vmem:[%s254 + $0x2d8] sm:$0xff]
        %v411 = vld [vmem:[%s254 + $0x2e0] sm:$0xff]
        %v412 = vld [vmem:[%s254 + $0x2e8] sm:$0xff]
        %v413 = vld [vmem:[%s254 + $0x2f0] sm:$0xff]
        %v414 = vld [vmem:[%s254 + $0x2f8] sm:$0xff]
        %v415 = vld [vmem:[%s254 + $0x300] sm:$0xff]
        %v416 = vld [vmem:[%s254 + $0x308] sm:$0xff]
        %v417 = vld [vmem:[%s254 + $0x310] sm:$0xff]
        %v418 = vld [vmem:[%s254 + $0x318] sm:$0xff]
        %v419 = vld [vmem:[%s254 + $0x320] sm:$0xff]
        %v420 = vld [vmem:[%s254 + $0x328] sm:$0xff]
        %v421 = vld [vmem:[%s254 + $0x330] sm:$0xff]
        %v422 = vld [vmem:[%s254 + $0x338] sm:$0xff]
        %v423 = vld [vmem:[%s254 + $0x340] sm:$0xff]
        %v424 = vld [vmem:[%s254 + $0x348] sm:$0xff]
        %v425 = vld [vmem:[%s254 + $0x350] sm:$0xff]
        %v426 = vld [vmem:[%s254 + $0x358] sm:$0xff]
        %v427 = vld [vmem:[%s254 + $0x360] sm:$0xff]
        %v428 = vld [vmem:[%s254 + $0x368] sm:$0xff]
        %v429 = vld [vmem:[%s254 + $0x370] sm:$0xff]
        %v430 = vld [vmem:[%s254 + $0x378] sm:$0xff]
        %v431 = vld [vmem:[%s254 + $0x380] sm:$0xff]
        %v432 = vld [vmem:[%s254 + $0x388] sm:$0xff]
        %v433 = vld [vmem:[%s254 + $0x390] sm:$0xff]
        %v434 = vld [vmem:[%s254 + $0x398] sm:$0xff]
        %v435 = vld [vmem:[%s254 + $0x3a0] sm:$0xff]
        %v436 = vld [vmem:[%s254 + $0x3a8] sm:$0xff]
        %v437 = vld [vmem:[%s254 + $0x3b0] sm:$0xff]
        %v438 = vld [vmem:[%s254 + $0x3b8] sm:$0xff]
        %v439 = vld [vmem:[%s254 + $0x3c0] sm:$0xff]
        %v440 = vld [vmem:[%s254 + $0x3c8] sm:$0xff]
        %v441 = vld [vmem:[%s254 + $0x3d0] sm:$0xff]
        %v442 = vld [vmem:[%s254 + $0x3d8] sm:$0xff]
        %v443 = vld [vmem:[%s254 + $0x3e0] sm:$0xff]
        %v444 = vld [vmem:[%s254 + $0x3e8] sm:$0xff]
        %v445 = vld [vmem:[%s254 + $0x3f0] sm:$0xff]
        %v446 = vld [vmem:[%s254 + $0x3f8] sm:$0xff]
        %v455 = vunpack.c.l.b16 %v311
        %v456 = vunpack.c.h.b16 %v311
        %v457 = vunpack.c.l.b16 %v312
        %v458 = vunpack.c.h.b16 %v312
        %v459 = vunpack.c.l.b16 %v313
        %v460 = vunpack.c.h.b16 %v313
        %v461 = vunpack.c.l.b16 %v314
        %v462 = vunpack.c.h.b16 %v314
        %v463 = vunpack.c.l.b16 %v315
        %v464 = vunpack.c.h.b16 %v315
        %v465 = vunpack.c.l.b16 %v316
        %v466 = vunpack.c.h.b16 %v316
        %v467 = vunpack.c.l.b16 %v317
        %v468 = vunpack.c.h.b16 %v317
        %v469 = vunpack.c.l.b16 %v318
        %v470 = vunpack.c.h.b16 %v318
        %v471 = vpack.c.b16 %v463, %v455
        %v472 = vpack.c.b16 %v464, %v456
        %v473 = vpack.c.b16 %v465, %v457
        %v474 = vpack.c.b16 %v466, %v458
        %v475 = vpack.c.b16 %v467, %v459
        %v476 = vpack.c.b16 %v468, %v460
        %v477 = vpack.c.b16 %v469, %v461
        %v478 = vpack.c.b16 %v470, %v462
        %v615 = vunpack.c.l.b16 %v319
        %v616 = vunpack.c.h.b16 %v319
        %v617 = vunpack.c.l.b16 %v320
        %v618 = vunpack.c.h.b16 %v320
        %v619 = vunpack.c.l.b16 %v321
        %v620 = vunpack.c.h.b16 %v321
        %v621 = vunpack.c.l.b16 %v322
        %v622 = vunpack.c.h.b16 %v322
        %v623 = vunpack.c.l.b16 %v323
        %v624 = vunpack.c.h.b16 %v323
        %v625 = vunpack.c.l.b16 %v324
        %v626 = vunpack.c.h.b16 %v324
        %v627 = vunpack.c.l.b16 %v325
        %v628 = vunpack.c.h.b16 %v325
        %v629 = vunpack.c.l.b16 %v326
        %v630 = vunpack.c.h.b16 %v326
        %v631 = vunpack.c.l.b16 %v327
        %v632 = vunpack.c.h.b16 %v327
        %v633 = vunpack.c.l.b16 %v328
        %v634 = vunpack.c.h.b16 %v328
        %v635 = vunpack.c.l.b16 %v329
        %v636 = vunpack.c.h.b16 %v329
        %v637 = vunpack.c.l.b16 %v330
        %v638 = vunpack.c.h.b16 %v330
        %v639 = vunpack.c.l.b16 %v331
        %v640 = vunpack.c.h.b16 %v331
        %v641 = vunpack.c.l.b16 %v332
        %v642 = vunpack.c.h.b16 %v332
        %v643 = vunpack.c.l.b16 %v333
        %v644 = vunpack.c.h.b16 %v333
        %v645 = vunpack.c.l.b16 %v334
        %v646 = vunpack.c.h.b16 %v334
        %v647 = vunpack.c.l.b16 %v335
        %v648 = vunpack.c.h.b16 %v335
        %v649 = vunpack.c.l.b16 %v336
        %v650 = vunpack.c.h.b16 %v336
        %v651 = vunpack.c.l.b16 %v337
        %v652 = vunpack.c.h.b16 %v337
        %v653 = vunpack.c.l.b16 %v338
        %v654 = vunpack.c.h.b16 %v338
        %v655 = vunpack.c.l.b16 %v339
        %v656 = vunpack.c.h.b16 %v339
        %v657 = vunpack.c.l.b16 %v340
        %v658 = vunpack.c.h.b16 %v340
        %v659 = vunpack.c.l.b16 %v341
        %v660 = vunpack.c.h.b16 %v341
        %v661 = vunpack.c.l.b16 %v342
        %v662 = vunpack.c.h.b16 %v342
        %v663 = vunpack.c.l.b16 %v343
        %v664 = vunpack.c.h.b16 %v343
        %v665 = vunpack.c.l.b16 %v344
        %v666 = vunpack.c.h.b16 %v344
        %v667 = vunpack.c.l.b16 %v345
        %v668 = vunpack.c.h.b16 %v345
        %v669 = vunpack.c.l.b16 %v346
        %v670 = vunpack.c.h.b16 %v346
        %v671 = vunpack.c.l.b16 %v347
        %v672 = vunpack.c.h.b16 %v347
        %v673 = vunpack.c.l.b16 %v348
        %v674 = vunpack.c.h.b16 %v348
        %v675 = vunpack.c.l.b16 %v349
        %v676 = vunpack.c.h.b16 %v349
        %v677 = vunpack.c.l.b16 %v350
        %v678 = vunpack.c.h.b16 %v350
        %v679 = vunpack.c.l.b16 %v351
        %v680 = vunpack.c.h.b16 %v351
        %v681 = vunpack.c.l.b16 %v352
        %v682 = vunpack.c.h.b16 %v352
        %v683 = vunpack.c.l.b16 %v353
        %v684 = vunpack.c.h.b16 %v353
        %v685 = vunpack.c.l.b16 %v354
        %v686 = vunpack.c.h.b16 %v354
        %v687 = vunpack.c.l.b16 %v355
        %v688 = vunpack.c.h.b16 %v355
        %v689 = vunpack.c.l.b16 %v356
        %v690 = vunpack.c.h.b16 %v356
        %v691 = vunpack.c.l.b16 %v357
        %v692 = vunpack.c.h.b16 %v357
        %v693 = vunpack.c.l.b16 %v358
        %v694 = vunpack.c.h.b16 %v358
        %v695 = vunpack.c.l.b16 %v359
        %v696 = vunpack.c.h.b16 %v359
        %v697 = vunpack.c.l.b16 %v360
        %v698 = vunpack.c.h.b16 %v360
        %v699 = vunpack.c.l.b16 %v361
        %v700 = vunpack.c.h.b16 %v361
        %v701 = vunpack.c.l.b16 %v362
        %v702 = vunpack.c.h.b16 %v362
        %v703 = vunpack.c.l.b16 %v363
        %v704 = vunpack.c.h.b16 %v363
        %v705 = vunpack.c.l.b16 %v364
        %v706 = vunpack.c.h.b16 %v364
        %v707 = vunpack.c.l.b16 %v365
        %v708 = vunpack.c.h.b16 %v365
        %v709 = vunpack.c.l.b16 %v366
        %v710 = vunpack.c.h.b16 %v366
        %v711 = vunpack.c.l.b16 %v367
        %v712 = vunpack.c.h.b16 %v367
        %v713 = vunpack.c.l.b16 %v368
        %v714 = vunpack.c.h.b16 %v368
        %v715 = vunpack.c.l.b16 %v369
        %v716 = vunpack.c.h.b16 %v369
        %v717 = vunpack.c.l.b16 %v370
        %v718 = vunpack.c.h.b16 %v370
        %v719 = vunpack.c.l.b16 %v371
        %v720 = vunpack.c.h.b16 %v371
        %v721 = vunpack.c.l.b16 %v372
        %v722 = vunpack.c.h.b16 %v372
        %v723 = vunpack.c.l.b16 %v373
        %v724 = vunpack.c.h.b16 %v373
        %v725 = vunpack.c.l.b16 %v374
        %v726 = vunpack.c.h.b16 %v374
        %v727 = vunpack.c.l.b16 %v375
        %v728 = vunpack.c.h.b16 %v375
        %v729 = vunpack.c.l.b16 %v376
        %v730 = vunpack.c.h.b16 %v376
        %v731 = vunpack.c.l.b16 %v377
        %v732 = vunpack.c.h.b16 %v377
        %v733 = vunpack.c.l.b16 %v378
        %v734 = vunpack.c.h.b16 %v378
        %v735 = vunpack.c.l.b16 %v379
        %v736 = vunpack.c.h.b16 %v379
        %v737 = vunpack.c.l.b16 %v380
        %v738 = vunpack.c.h.b16 %v380
        %v739 = vunpack.c.l.b16 %v381
        %v740 = vunpack.c.h.b16 %v381
        %v741 = vunpack.c.l.b16 %v382
        %v742 = vunpack.c.h.b16 %v382
        %v743 = vunpack.c.l.b16 %v383
        %v744 = vunpack.c.h.b16 %v383
        %v745 = vunpack.c.l.b16 %v384
        %v746 = vunpack.c.h.b16 %v384
        %v747 = vunpack.c.l.b16 %v385
        %v748 = vunpack.c.h.b16 %v385
        %v749 = vunpack.c.l.b16 %v386
        %v750 = vunpack.c.h.b16 %v386
        %v751 = vunpack.c.l.b16 %v387
        %v752 = vunpack.c.h.b16 %v387
        %v753 = vunpack.c.l.b16 %v388
        %v754 = vunpack.c.h.b16 %v388
        %v755 = vunpack.c.l.b16 %v389
        %v756 = vunpack.c.h.b16 %v389
        %v757 = vunpack.c.l.b16 %v390
        %v758 = vunpack.c.h.b16 %v390
        %v759 = vunpack.c.l.b16 %v391
        %v760 = vunpack.c.h.b16 %v391
        %v761 = vunpack.c.l.b16 %v392
        %v762 = vunpack.c.h.b16 %v392
        %v763 = vunpack.c.l.b16 %v393
        %v764 = vunpack.c.h.b16 %v393
        %v765 = vunpack.c.l.b16 %v394
        %v766 = vunpack.c.h.b16 %v394
        %v767 = vunpack.c.l.b16 %v395
        %v768 = vunpack.c.h.b16 %v395
        %v769 = vunpack.c.l.b16 %v396
        %v770 = vunpack.c.h.b16 %v396
        %v771 = vunpack.c.l.b16 %v397
        %v772 = vunpack.c.h.b16 %v397
        %v773 = vunpack.c.l.b16 %v398
        %v774 = vunpack.c.h.b16 %v398
        %v775 = vunpack.c.l.b16 %v399
        %v776 = vunpack.c.h.b16 %v399
        %v777 = vunpack.c.l.b16 %v400
        %v778 = vunpack.c.h.b16 %v400
        %v779 = vunpack.c.l.b16 %v401
        %v780 = vunpack.c.h.b16 %v401
        %v781 = vunpack.c.l.b16 %v402
        %v782 = vunpack.c.h.b16 %v402
        %v783 = vunpack.c.l.b16 %v403
        %v784 = vunpack.c.h.b16 %v403
        %v785 = vunpack.c.l.b16 %v404
        %v786 = vunpack.c.h.b16 %v404
        %v787 = vunpack.c.l.b16 %v405
        %v788 = vunpack.c.h.b16 %v405
        %v789 = vunpack.c.l.b16 %v406
        %v790 = vunpack.c.h.b16 %v406
        %v791 = vunpack.c.l.b16 %v407
        %v792 = vunpack.c.h.b16 %v407
        %v793 = vunpack.c.l.b16 %v408
        %v794 = vunpack.c.h.b16 %v408
        %v795 = vunpack.c.l.b16 %v409
        %v796 = vunpack.c.h.b16 %v409
        %v797 = vunpack.c.l.b16 %v410
        %v798 = vunpack.c.h.b16 %v410
        %v799 = vunpack.c.l.b16 %v411
        %v800 = vunpack.c.h.b16 %v411
        %v801 = vunpack.c.l.b16 %v412
        %v802 = vunpack.c.h.b16 %v412
        %v803 = vunpack.c.l.b16 %v413
        %v804 = vunpack.c.h.b16 %v413
        %v805 = vunpack.c.l.b16 %v414
        %v806 = vunpack.c.h.b16 %v414
        %v807 = vunpack.c.l.b16 %v415
        %v808 = vunpack.c.h.b16 %v415
        %v809 = vunpack.c.l.b16 %v416
        %v810 = vunpack.c.h.b16 %v416
        %v811 = vunpack.c.l.b16 %v417
        %v812 = vunpack.c.h.b16 %v417
        %v813 = vunpack.c.l.b16 %v418
        %v814 = vunpack.c.h.b16 %v418
        %v815 = vunpack.c.l.b16 %v419
        %v816 = vunpack.c.h.b16 %v419
        %v817 = vunpack.c.l.b16 %v420
        %v818 = vunpack.c.h.b16 %v420
        %v819 = vunpack.c.l.b16 %v421
        %v820 = vunpack.c.h.b16 %v421
        %v821 = vunpack.c.l.b16 %v422
        %v822 = vunpack.c.h.b16 %v422
        %v823 = vunpack.c.l.b16 %v423
        %v824 = vunpack.c.h.b16 %v423
        %v825 = vunpack.c.l.b16 %v424
        %v826 = vunpack.c.h.b16 %v424
        %v827 = vunpack.c.l.b16 %v425
        %v828 = vunpack.c.h.b16 %v425
        %v829 = vunpack.c.l.b16 %v426
        %v830 = vunpack.c.h.b16 %v426
        %v831 = vunpack.c.l.b16 %v427
        %v832 = vunpack.c.h.b16 %v427
        %v833 = vunpack.c.l.b16 %v428
        %v834 = vunpack.c.h.b16 %v428
        %v835 = vunpack.c.l.b16 %v429
        %v836 = vunpack.c.h.b16 %v429
        %v837 = vunpack.c.l.b16 %v430
        %v838 = vunpack.c.h.b16 %v430
        %v839 = vunpack.c.l.b16 %v431
        %v840 = vunpack.c.h.b16 %v431
        %v841 = vunpack.c.l.b16 %v432
        %v842 = vunpack.c.h.b16 %v432
        %v843 = vunpack.c.l.b16 %v433
        %v844 = vunpack.c.h.b16 %v433
        %v845 = vunpack.c.l.b16 %v434
        %v846 = vunpack.c.h.b16 %v434
        %v847 = vunpack.c.l.b16 %v435
        %v848 = vunpack.c.h.b16 %v435
        %v849 = vunpack.c.l.b16 %v436
        %v850 = vunpack.c.h.b16 %v436
        %v851 = vunpack.c.l.b16 %v437
        %v852 = vunpack.c.h.b16 %v437
        %v853 = vunpack.c.l.b16 %v438
        %v854 = vunpack.c.h.b16 %v438
        %v855 = vunpack.c.l.b16 %v439
        %v856 = vunpack.c.h.b16 %v439
        %v857 = vunpack.c.l.b16 %v440
        %v858 = vunpack.c.h.b16 %v440
        %v859 = vunpack.c.l.b16 %v441
        %v860 = vunpack.c.h.b16 %v441
        %v861 = vunpack.c.l.b16 %v442
        %v862 = vunpack.c.h.b16 %v442
        %v863 = vunpack.c.l.b16 %v443
        %v864 = vunpack.c.h.b16 %v443
        %v865 = vunpack.c.l.b16 %v444
        %v866 = vunpack.c.h.b16 %v444
        %v867 = vunpack.c.l.b16 %v445
        %v868 = vunpack.c.h.b16 %v445
        %v869 = vunpack.c.l.b16 %v446
        %v870 = vunpack.c.h.b16 %v446
        %v871 = vpack.c.b16 %v617, %v615
        %v872 = vpack.c.b16 %v618, %v616
        %v873 = vpack.c.b16 %v621, %v619
        %v874 = vpack.c.b16 %v622, %v620
        %v875 = vpack.c.b16 %v625, %v623
        %v876 = vpack.c.b16 %v626, %v624
        %v877 = vpack.c.b16 %v629, %v627
        %v878 = vpack.c.b16 %v630, %v628
        %v879 = vpack.c.b16 %v633, %v631
        %v880 = vpack.c.b16 %v634, %v632
        %v881 = vpack.c.b16 %v637, %v635
        %v882 = vpack.c.b16 %v638, %v636
        %v883 = vpack.c.b16 %v641, %v639
        %v884 = vpack.c.b16 %v642, %v640
        %v885 = vpack.c.b16 %v645, %v643
        %v886 = vpack.c.b16 %v646, %v644
        %v887 = vpack.c.b16 %v649, %v647
        %v888 = vpack.c.b16 %v650, %v648
        %v889 = vpack.c.b16 %v653, %v651
        %v890 = vpack.c.b16 %v654, %v652
        %v891 = vpack.c.b16 %v657, %v655
        %v892 = vpack.c.b16 %v658, %v656
        %v893 = vpack.c.b16 %v661, %v659
        %v894 = vpack.c.b16 %v662, %v660
        %v895 = vpack.c.b16 %v665, %v663
        %v896 = vpack.c.b16 %v666, %v664
        %v897 = vpack.c.b16 %v669, %v667
        %v898 = vpack.c.b16 %v670, %v668
        %v899 = vpack.c.b16 %v673, %v671
        %v900 = vpack.c.b16 %v674, %v672
        %v901 = vpack.c.b16 %v677, %v675
        %v902 = vpack.c.b16 %v678, %v676
        %v903 = vpack.c.b16 %v681, %v679
        %v904 = vpack.c.b16 %v682, %v680
        %v905 = vpack.c.b16 %v685, %v683
        %v906 = vpack.c.b16 %v686, %v684
        %v907 = vpack.c.b16 %v689, %v687
        %v908 = vpack.c.b16 %v690, %v688
        %v909 = vpack.c.b16 %v693, %v691
        %v910 = vpack.c.b16 %v694, %v692
        %v911 = vpack.c.b16 %v697, %v695
        %v912 = vpack.c.b16 %v698, %v696
        %v913 = vpack.c.b16 %v701, %v699
        %v914 = vpack.c.b16 %v702, %v700
        %v915 = vpack.c.b16 %v705, %v703
        %v916 = vpack.c.b16 %v706, %v704
        %v917 = vpack.c.b16 %v709, %v707
        %v918 = vpack.c.b16 %v710, %v708
        %v919 = vpack.c.b16 %v713, %v711
        %v920 = vpack.c.b16 %v714, %v712
        %v921 = vpack.c.b16 %v717, %v715
        %v922 = vpack.c.b16 %v718, %v716
        %v923 = vpack.c.b16 %v721, %v719
        %v924 = vpack.c.b16 %v722, %v720
        %v925 = vpack.c.b16 %v725, %v723
        %v926 = vpack.c.b16 %v726, %v724
        %v927 = vpack.c.b16 %v729, %v727
        %v928 = vpack.c.b16 %v730, %v728
        %v929 = vpack.c.b16 %v733, %v731
        %v930 = vpack.c.b16 %v734, %v732
        %v931 = vpack.c.b16 %v737, %v735
        %v932 = vpack.c.b16 %v738, %v736
        %v933 = vpack.c.b16 %v741, %v739
        %v934 = vpack.c.b16 %v742, %v740
        %v935 = vpack.c.b16 %v745, %v743
        %v936 = vpack.c.b16 %v746, %v744
        %v937 = vpack.c.b16 %v749, %v747
        %v938 = vpack.c.b16 %v750, %v748
        %v939 = vpack.c.b16 %v753, %v751
        %v940 = vpack.c.b16 %v754, %v752
        %v941 = vpack.c.b16 %v757, %v755
        %v942 = vpack.c.b16 %v758, %v756
        %v943 = vpack.c.b16 %v761, %v759
        %v944 = vpack.c.b16 %v762, %v760
        %v945 = vpack.c.b16 %v765, %v763
        %v946 = vpack.c.b16 %v766, %v764
        %v947 = vpack.c.b16 %v769, %v767
        %v948 = vpack.c.b16 %v770, %v768
        %v949 = vpack.c.b16 %v773, %v771
        %v950 = vpack.c.b16 %v774, %v772
        %v951 = vpack.c.b16 %v777, %v775
        %v952 = vpack.c.b16 %v778, %v776
        %v953 = vpack.c.b16 %v781, %v779
        %v954 = vpack.c.b16 %v782, %v780
        %v955 = vpack.c.b16 %v785, %v783
        %v956 = vpack.c.b16 %v786, %v784
        %v957 = vpack.c.b16 %v789, %v787
        %v958 = vpack.c.b16 %v790, %v788
        %v959 = vpack.c.b16 %v793, %v791
        %v960 = vpack.c.b16 %v794, %v792
        %v961 = vpack.c.b16 %v797, %v795
        %v962 = vpack.c.b16 %v798, %v796
        %v963 = vpack.c.b16 %v801, %v799
        %v964 = vpack.c.b16 %v802, %v800
        %v965 = vpack.c.b16 %v805, %v803
        %v966 = vpack.c.b16 %v806, %v804
        %v967 = vpack.c.b16 %v809, %v807
        %v968 = vpack.c.b16 %v810, %v808
        %v969 = vpack.c.b16 %v813, %v811
        %v970 = vpack.c.b16 %v814, %v812
        %v971 = vpack.c.b16 %v817, %v815
        %v972 = vpack.c.b16 %v818, %v816
        %v973 = vpack.c.b16 %v821, %v819
        %v974 = vpack.c.b16 %v822, %v820
        %v975 = vpack.c.b16 %v825, %v823
        %v976 = vpack.c.b16 %v826, %v824
        %v977 = vpack.c.b16 %v829, %v827
        %v978 = vpack.c.b16 %v830, %v828
        %v979 = vpack.c.b16 %v833, %v831
        %v980 = vpack.c.b16 %v834, %v832
        %v981 = vpack.c.b16 %v837, %v835
        %v982 = vpack.c.b16 %v838, %v836
        %v983 = vpack.c.b16 %v841, %v839
        %v984 = vpack.c.b16 %v842, %v840
        %v985 = vpack.c.b16 %v845, %v843
        %v986 = vpack.c.b16 %v846, %v844
        %v987 = vpack.c.b16 %v849, %v847
        %v988 = vpack.c.b16 %v850, %v848
        %v989 = vpack.c.b16 %v853, %v851
        %v990 = vpack.c.b16 %v854, %v852
        %v991 = vpack.c.b16 %v857, %v855
        %v992 = vpack.c.b16 %v858, %v856
        %v993 = vpack.c.b16 %v861, %v859
        %v994 = vpack.c.b16 %v862, %v860
        %v995 = vpack.c.b16 %v865, %v863
        %v996 = vpack.c.b16 %v866, %v864
        %v997 = vpack.c.b16 %v869, %v867
        %v998 = vpack.c.b16 %v870, %v868
        %1127 = vmatprep.subr.bf16.mxu0 %v886
        %1128 = vmatpush1.bf16.msra.mxu0 %v885
        %1129 = vmatprep.subr.bf16.mxu0 %v884
        %1130 = vmatpush1.bf16.msra.mxu0 %v883
        %1131 = vmatprep.subr.bf16.mxu0 %v882
        %1132 = vmatpush1.bf16.msra.mxu0 %v881
        %1133 = vmatprep.subr.bf16.mxu0 %v880
        %1134 = vmatpush1.bf16.msra.mxu0 %v879
        %1135 = vmatprep.subr.bf16.mxu0 %v878
        %1136 = vmatpush1.bf16.msra.mxu0 %v877
        %1137 = vmatprep.subr.bf16.mxu0 %v876
        %1138 = vmatpush1.bf16.msra.mxu0 %v875
        %1139 = vmatprep.subr.bf16.mxu0 %v874
        %1140 = vmatpush1.bf16.msra.mxu0 %v873
        %1141 = vmatprep.subr.bf16.mxu0 %v872
        %1142 = vmatpush1.bf16.msra.mxu0 %v871
        %1143 = vmatprep.subr.bf16.mxu0 %v902
        %1144 = vmatpush2.bf16.msra.mxu0 %v901
        %1145 = vmatprep.subr.bf16.mxu0 %v900
        %1146 = vmatpush2.bf16.msra.mxu0 %v899
        %1147 = vmatprep.subr.bf16.mxu0 %v898
        %1148 = vmatpush2.bf16.msra.mxu0 %v897
        %1149 = vmatprep.subr.bf16.mxu0 %v896
        %1150 = vmatpush2.bf16.msra.mxu0 %v895
        %1151 = vmatprep.subr.bf16.mxu0 %v894
        %1152 = vmatpush2.bf16.msra.mxu0 %v893
        %1153 = vmatprep.subr.bf16.mxu0 %v892
        %1154 = vmatpush2.bf16.msra.mxu0 %v891
        %1155 = vmatprep.subr.bf16.mxu0 %v890
        %1156 = vmatpush2.bf16.msra.mxu0 %v889
        %1157 = vmatprep.subr.bf16.mxu0 %v888
        %1158 = vmatpush2.bf16.msra.mxu0 %v887
        %1159 = vmatprep.mubr.bf16.mxu0 %v472
        %1160 = vmatmul.mubr.bf16.gmra.mxu0 %v471
        %v1161 = vpop.f32.mrf.mxu0
        %v1162 = vadd.f32 0.0, %v1161
        %v1163 = vpop.f32.mrf.mxu0
        %v1164 = vadd.f32 0.0, %v1163
        %v1165 = vpop.f32.mrf.mxu0
        %v1166 = vadd.f32 0.0, %v1165
        %v1167 = vpop.f32.mrf.mxu0
        %v1168 = vadd.f32 0.0, %v1167
        %1169 = vdwg.mxu0
        %1170 = vmatprep.subr.bf16.mxu0 %v918
        %1171 = vmatpush1.bf16.msra.mxu0 %v917
        %1172 = vmatprep.subr.bf16.mxu0 %v916
        %1173 = vmatpush1.bf16.msra.mxu0 %v915
        %1174 = vmatprep.subr.bf16.mxu0 %v914
        %1175 = vmatpush1.bf16.msra.mxu0 %v913
        %1176 = vmatprep.subr.bf16.mxu0 %v912
        %1177 = vmatpush1.bf16.msra.mxu0 %v911
        %1178 = vmatprep.subr.bf16.mxu0 %v910
        %1179 = vmatpush1.bf16.msra.mxu0 %v909
        %1180 = vmatprep.subr.bf16.mxu0 %v908
        %1181 = vmatpush1.bf16.msra.mxu0 %v907
        %1182 = vmatprep.subr.bf16.mxu0 %v906
        %1183 = vmatpush1.bf16.msra.mxu0 %v905
        %1184 = vmatprep.subr.bf16.mxu0 %v904
        %1185 = vmatpush1.bf16.msra.mxu0 %v903
        %1186 = vmatprep.subr.bf16.mxu0 %v934
        %1187 = vmatpush2.bf16.msra.mxu0 %v933
        %1188 = vmatprep.subr.bf16.mxu0 %v932
        %1189 = vmatpush2.bf16.msra.mxu0 %v931
        %1190 = vmatprep.subr.bf16.mxu0 %v930
        %1191 = vmatpush2.bf16.msra.mxu0 %v929
        %1192 = vmatprep.subr.bf16.mxu0 %v928
        %1193 = vmatpush2.bf16.msra.mxu0 %v927
        %1194 = vmatprep.subr.bf16.mxu0 %v926
        %1195 = vmatpush2.bf16.msra.mxu0 %v925
        %1196 = vmatprep.subr.bf16.mxu0 %v924
        %1197 = vmatpush2.bf16.msra.mxu0 %v923
        %1198 = vmatprep.subr.bf16.mxu0 %v922
        %1199 = vmatpush2.bf16.msra.mxu0 %v921
        %1200 = vmatprep.subr.bf16.mxu0 %v920
        %1201 = vmatpush2.bf16.msra.mxu0 %v919
        %1202 = vmatprep.mubr.bf16.mxu0 %v474
        %1203 = vmatmul.mubr.bf16.gmra.mxu0 %v473
        %v1204 = vpop.f32.mrf.mxu0
        %v1205 = vadd.f32 %v1162, %v1204
        %v1206 = vpop.f32.mrf.mxu0
        %v1207 = vadd.f32 %v1164, %v1206
        %v1208 = vpop.f32.mrf.mxu0
        %v1209 = vadd.f32 %v1166, %v1208
        %v1210 = vpop.f32.mrf.mxu0
        %v1211 = vadd.f32 %v1168, %v1210
        %1212 = vdwg.mxu0
        %1213 = vmatprep.subr.bf16.mxu0 %v950
        %1214 = vmatpush1.bf16.msra.mxu0 %v949
        %1215 = vmatprep.subr.bf16.mxu0 %v948
        %1216 = vmatpush1.bf16.msra.mxu0 %v947
        %1217 = vmatprep.subr.bf16.mxu0 %v946
        %1218 = vmatpush1.bf16.msra.mxu0 %v945
        %1219 = vmatprep.subr.bf16.mxu0 %v944
        %1220 = vmatpush1.bf16.msra.mxu0 %v943
        %1221 = vmatprep.subr.bf16.mxu0 %v942
        %1222 = vmatpush1.bf16.msra.mxu0 %v941
        %1223 = vmatprep.subr.bf16.mxu0 %v940
        %1224 = vmatpush1.bf16.msra.mxu0 %v939
        %1225 = vmatprep.subr.bf16.mxu0 %v938
        %1226 = vmatpush1.bf16.msra.mxu0 %v937
        %1227 = vmatprep.subr.bf16.mxu0 %v936
        %1228 = vmatpush1.bf16.msra.mxu0 %v935
        %1229 = vmatprep.subr.bf16.mxu0 %v966
        %1230 = vmatpush2.bf16.msra.mxu0 %v965
        %1231 = vmatprep.subr.bf16.mxu0 %v964
        %1232 = vmatpush2.bf16.msra.mxu0 %v963
        %1233 = vmatprep.subr.bf16.mxu0 %v962
        %1234 = vmatpush2.bf16.msra.mxu0 %v961
        %1235 = vmatprep.subr.bf16.mxu0 %v960
        %1236 = vmatpush2.bf16.msra.mxu0 %v959
        %1237 = vmatprep.subr.bf16.mxu0 %v958
        %1238 = vmatpush2.bf16.msra.mxu0 %v957
        %1239 = vmatprep.subr.bf16.mxu0 %v956
        %1240 = vmatpush2.bf16.msra.mxu0 %v955
        %1241 = vmatprep.subr.bf16.mxu0 %v954
        %1242 = vmatpush2.bf16.msra.mxu0 %v953
        %1243 = vmatprep.subr.bf16.mxu0 %v952
        %1244 = vmatpush2.bf16.msra.mxu0 %v951
        %1245 = vmatprep.mubr.bf16.mxu0 %v476
        %1246 = vmatmul.mubr.bf16.gmra.mxu0 %v475
        %v1247 = vpop.f32.mrf.mxu0
        %v1248 = vadd.f32 %v1205, %v1247
        %v1249 = vpop.f32.mrf.mxu0
        %v1250 = vadd.f32 %v1207, %v1249
        %v1251 = vpop.f32.mrf.mxu0
        %v1252 = vadd.f32 %v1209, %v1251
        %v1253 = vpop.f32.mrf.mxu0
        %v1254 = vadd.f32 %v1211, %v1253
        %1255 = vdwg.mxu0
        %1256 = vmatprep.subr.bf16.mxu0 %v982
        %1257 = vmatpush1.bf16.msra.mxu0 %v981
        %1258 = vmatprep.subr.bf16.mxu0 %v980
        %1259 = vmatpush1.bf16.msra.mxu0 %v979
        %1260 = vmatprep.subr.bf16.mxu0 %v978
        %1261 = vmatpush1.bf16.msra.mxu0 %v977
        %1262 = vmatprep.subr.bf16.mxu0 %v976
        %1263 = vmatpush1.bf16.msra.mxu0 %v975
        %1264 = vmatprep.subr.bf16.mxu0 %v974
        %1265 = vmatpush1.bf16.msra.mxu0 %v973
        %1266 = vmatprep.subr.bf16.mxu0 %v972
        %1267 = vmatpush1.bf16.msra.mxu0 %v971
        %1268 = vmatprep.subr.bf16.mxu0 %v970
        %1269 = vmatpush1.bf16.msra.mxu0 %v969
        %1270 = vmatprep.subr.bf16.mxu0 %v968
        %1271 = vmatpush1.bf16.msra.mxu0 %v967
        %1272 = vmatprep.subr.bf16.mxu0 %v998
        %1273 = vmatpush2.bf16.msra.mxu0 %v997
        %1274 = vmatprep.subr.bf16.mxu0 %v996
        %1275 = vmatpush2.bf16.msra.mxu0 %v995
        %1276 = vmatprep.subr.bf16.mxu0 %v994
        %1277 = vmatpush2.bf16.msra.mxu0 %v993
        %1278 = vmatprep.subr.bf16.mxu0 %v992
        %1279 = vmatpush2.bf16.msra.mxu0 %v991
        %1280 = vmatprep.subr.bf16.mxu0 %v990
        %1281 = vmatpush2.bf16.msra.mxu0 %v989
        %1282 = vmatprep.subr.bf16.mxu0 %v988
        %1283 = vmatpush2.bf16.msra.mxu0 %v987
        %1284 = vmatprep.subr.bf16.mxu0 %v986
        %1285 = vmatpush2.bf16.msra.mxu0 %v985
        %1286 = vmatprep.subr.bf16.mxu0 %v984
        %1287 = vmatpush2.bf16.msra.mxu0 %v983
        %1288 = vmatprep.mubr.bf16.mxu0 %v478
        %1289 = vmatmul.mubr.bf16.gmra.mxu0 %v477
        %v1290 = vpop.f32.mrf.mxu0
        %v1291 = vadd.f32 %v1248, %v1290
        %v1292 = vpop.f32.mrf.mxu0
        %v1293 = vadd.f32 %v1250, %v1292
        %v1294 = vpop.f32.mrf.mxu0
        %v1295 = vadd.f32 %v1252, %v1294
        %v1296 = vpop.f32.mrf.mxu0
        %v1297 = vadd.f32 %v1254, %v1296
        %1298 = vdwg.mxu0
        %p1299 = scmp.eq.s32.totalorder %s24, 0
        // Predicated region
        $region60: #{transformer_forward.12} parent=50 // pred_check
          %p1300 = pneg %p1299
        $region61: #{transformer_forward.12} parent=50 // pred_check_branch
          %1302 = sbr.rel (%p1300) target = $region63
        $region62: #{transformer_forward.12} parent=50 // pred_region
          %1303 = vst [vmem:[#allocation2] sm:$0xff] 0.0
          %1304 = vst [vmem:[#allocation2 + $0x8] sm:$0xff] 0.0
          %1305 = vst [vmem:[#allocation2 + $0x10] sm:$0xff] 0.0
          %1306 = vst [vmem:[#allocation2 + $0x18] sm:$0xff] 0.0
        $region63: #{transformer_forward.12} parent=50 // pred_fallthru
          _
        %v1307 = vld [vmem:[#allocation2] sm:$0xff]
        %v1308 = vld [vmem:[#allocation2 + $0x8] sm:$0xff]
        %v1309 = vld [vmem:[#allocation2 + $0x10] sm:$0xff]
        %v1310 = vld [vmem:[#allocation2 + $0x18] sm:$0xff]
        %v1311 = vadd.f32 %v1307, %v1291
        %v1312 = vadd.f32 %v1308, %v1293
        %v1313 = vadd.f32 %v1309, %v1295
        %v1314 = vadd.f32 %v1310, %v1297
        %1315 = vst [vmem:[#allocation2] sm:$0xff] %v1311
        %1316 = vst [vmem:[#allocation2 + $0x8] sm:$0xff] %v1312
        %1317 = vst [vmem:[#allocation2 + $0x10] sm:$0xff] %v1313
        %1318 = vst [vmem:[#allocation2 + $0x18] sm:$0xff] %v1314
        %p1319 = scmp.eq.s32.totalorder %s24, 1
        // Predicated region
        $region64: #{transformer_forward.12} parent=50 // pred_check
          %p1320 = pneg %p1319
        $region65: #{transformer_forward.12} parent=50 // pred_check_branch
          %1322 = sbr.rel (%p1320) target = $region67
        $region66: #{transformer_forward.12} parent=50 // pred_region
          %v1323 = vld [vmem:[#allocation2] sm:$0xff]
          %v1324 = vld [vmem:[#allocation2 + $0x8] sm:$0xff]
          %v1325 = vld [vmem:[#allocation2 + $0x10] sm:$0xff]
          %v1326 = vld [vmem:[#allocation2 + $0x18] sm:$0xff]
          %v1327 = vld [vmem:[%s297] sm:$0x3]
          %v1329 = vlaneseq
          %v1330 = vshrl.u32 %v1329, 7
          %v1331 = vsub.s32 0, %v1330
          %v1332 = vrot.slane %v1327, %v1331
          %v1333 = vlaneseq
          %v1334 = vshrl.u32 %v1333, 7
          %v1335 = vsub.s32 1, %v1334
          %v1336 = vrot.slane %v1327, %v1335
          %v1339 = vadd.f32 %v1323, %v1332
          %v1340 = vadd.f32 %v1324, %v1336
          %v1341 = vadd.f32 %v1325, %v1332
          %v1342 = vadd.f32 %v1326, %v1336
          %v1343 = vpack.c.bf16 %v1341, %v1339
          %v1344 = vpack.c.bf16 %v1342, %v1340
          %v1347 = vunpack.c.l.b16 %v1343
          %v1348 = vunpack.c.l.b16 %v1344
          %v1349 = vunpack.c.h.b16 %v1343
          %v1350 = vunpack.c.h.b16 %v1344
          %v1351 = vpack.c.b16 %v1348, %v1347
          %v1352 = vpack.c.b16 %v1350, %v1349
          %1355 = vst [vmem:[%s308] sm:$0xff] %v1351
          %1356 = vst [vmem:[%s308 + $0x8] sm:$0xff] %v1352
        $region67: #{transformer_forward.12} parent=50 // pred_fallthru
          _
        %s1357 = smul.u32 2, %s22
        %s1358 = smul.u32 2, %s23
        %p1359 = scmp.lt.s32.totalorder %s1357, 1
        %s1360 = scalar_select %p1359, %s1357, 1
        %p1361 = scmp.lt.s32.totalorder %s1358, 1
        %s1362 = scalar_select %p1361, %s1358, 1
        %s1363 = smul.addr %s1360, 2
        %s1364 = sadd.s32 %s1362, %s1363
        %s1365 = smul.addr %s1364, 4
        %s1366 = scalar_lea.vmem %s3, %s1365
        // Predicated region
        $region68: #{transformer_forward.12} parent=50 // pred_check
          %p1367 = pneg %p138
        $region69: #{transformer_forward.12} parent=50 // pred_check_branch
          %1369 = sbr.rel (%p1367) target = $region71
        $region70: #{transformer_forward.12} parent=50 // pred_region
          %s1370 = smul.u32 2, %s22
          %s1371 = smul.u32 2, %s23
        $region71: #{transformer_forward.12} parent=50 // pred_fallthru
          _
        // Predicated region
        $region72: #{transformer_forward.12} parent=50 // pred_check
          %p1372 = pneg %p138
        $region73: #{transformer_forward.12} parent=50 // pred_check_branch
          %1374 = sbr.rel (%p1372) target = $region75
        $region74: #{transformer_forward.12} parent=50 // pred_region
          %s1375 = smul.u32 2, %s22
          %s1376 = smul.u32 2, %s23
          %p1377 = scmp.lt.s32.totalorder %s1375, 1
          %s1378 = scalar_select %p1377, %s1375, 1
          %p1379 = scmp.lt.s32.totalorder %s1376, 1
          %s1380 = scalar_select %p1379, %s1376, 1
          %s1381 = smul.addr %s1378, 2
          %s1382 = sadd.s32 %s1380, %s1381
          %s1383 = smul.addr %s1382, 4
          %s1384 = scalar_lea.vmem %s3, %s1383
        $region75: #{transformer_forward.12} parent=50 // pred_fallthru
          _
      $region51: #{transformer_forward.12} parent=5 // pred_fallthru
        _
      %p1385 = scmp.le.s32.totalorder 2, %s12
      // Predicated region
      $region76: #{transformer_forward.12} parent=5 // pred_check
        %p1386 = pneg %p1385
      $region77: #{transformer_forward.12} parent=5 // pred_check_branch
        %1388 = sbr.rel (%p1386) target = $region79
      $region78: #{transformer_forward.12} parent=5 // pred_region
        %s1389 = ssub.s32 %s12, 2
      $region79: #{transformer_forward.12} parent=5 // pred_fallthru
        _
    $region6: #{transformer_forward.12} parent=1 // loop_footer
      %s16 = sadd.s32 1, %s12
    $region7: #{transformer_forward.12} parent=1 // loop_footer_branch
      %11 = sbr.rel target = $region3
    $region8: #{transformer_forward.12} parent=1 // loop_exit
      _
    %1390 = vsyncpa [#allocation5], 1
    %s1391 = scalar_lea.sflag [#allocation5], 1
    %1392 = vsyncpa %s1391, 1

// kernel: transformer_forward.16
$region0: #{transformer_forward.16}
  #allocation0 [shape = 'u32[]', space=smem, size = 0x4, offset = 0x4, fixed_abs, tag = 'smem constant byte address 0x4 - core index']
  #allocation1 [shape = 'u32[144,128]{1,0:T(1,128)}', space=vmem, size = 0x12000, scoped, tag = 'internal scratch']
  %s0 = inlined_call_operand.vmem [shape: bf16[16,256], index: 0, kind: input, shape index: {}]
  %s1 = inlined_call_operand.vmem [shape: f32[1,256], index: 1, kind: input, shape index: {}]
  %s2 = inlined_call_operand.vmem [shape: f32[1,256], index: 2, kind: input, shape index: {}]
  %s3 = inlined_call_operand.vmem [shape: bf16[256,2048], index: 3, kind: input, shape index: {}]
  %s4 = inlined_call_operand.vmem [shape: f32[1,2048], index: 4, kind: input, shape index: {}]
  %s5 = inlined_call_operand.vmem [shape: bf16[16,2048], index: 5, kind: output, shape index: {}]
  %s6 = sld [smem:[#allocation0]]
  $region95: #{transformer_forward.16} parent=0
    _
  %s8 = ssub.s32 1, %s6
  %s9 = scalar_select 0, %s8, %s6
  $region1: #{transformer_forward.16} parent=0
    #allocation2 [shape = 'u8[524288]{0}', space=vmem, size = 0x80000, scoped, tag = 'input window, operand 3']
    #allocation3 [shape = 'u8[32768]{0}', space=vmem, size = 0x8000, scoped, tag = 'output window, operand 0']
    loop: start=0, step=1, limit=6
    $region2: #{transformer_forward.16} parent=1 // loop_pre_header
      _
    $region3: #{transformer_forward.16} parent=1 // loop_header
      %s11 = sphi 0, %s15
      %p12 = scmp.ge.s32.totalorder %s11, 6
      %s18 = sphi 0, %s30
      %s19 = sphi 0, %s26
      %s20 = sphi 0, %s18
      %s21 = sphi 0, %s19
      %s22 = sphi 0, %s20
      %s23 = sphi 0, %s21
      %s33 = sphi 0, %s35
      %s36 = sphi 0, %s33
      %s37 = sphi 0, %s36
      %s53 = sphi 0, %s37
      %s57 = sphi 0, %s57
      %s59 = sphi 0, %s57
      %s60 = sphi 0, %s59
      %s74 = sphi 0, %s60
      %s78 = sphi 0, %s78
      %s80 = sphi 0, %s78
      %s81 = sphi 0, %s80
      %s95 = sphi 0, %s81
      %s101 = sphi 0, %s103
      %s104 = sphi 0, %s101
      %s105 = sphi 0, %s104
      %s121 = sphi 0, %s105
      %s127 = sphi 0, %s129
      %s130 = sphi 0, %s127
      %s131 = sphi 0, %s130
      %s147 = sphi 0, %s131
      %s155 = sphi 0, %s157
      %s158 = sphi 0, %s155
      %s159 = sphi 0, %s158
      %s175 = sphi 0, %s159
    $region4: #{transformer_forward.16} parent=1 // loop_header_branch
      %14 = sbr.rel (%p12) target = $region8
    $region5: #{transformer_forward.16} parent=1 // loop_body
      %s16 = ssub.s32 %s11, 1
      %s17 = ssub.s32 %s11, 2
      %s24 = sadd.s32 1, %s19
      %p25 = scmp.ge.s32.totalorder %s24, 4
      %s26 = scalar_select %p25, 0, %s24
      %s27 = sadd.s32 1, %s18
      %s28 = scalar_select %p25, %s27, %s18
      %p29 = scmp.ge.s32.totalorder %s28, 1
      %s30 = scalar_select %p29, 0, %s28
      %s31 = ssub.s32 %s18, %s30
      %p32 = scmp.eq.s32.totalorder %s31, 0
      %s34 = sadd.s32 %s33, 1
      %s35 = scalar_select %p32, %s33, %s34
      %p38 = pneg %p32
      %p39 = scmp.eq.s32.totalorder %s11, 3
      %p40 = por %p38, %p39
      %p41 = scmp.ne.s32.totalorder %s33, %s36
      %p42 = scmp.eq.s32.totalorder %s11, 0
      %p43 = por %p41, %p42
      %p44 = scmp.ne.s32.totalorder %s33, %s36
      %p45 = scmp.eq.s32.totalorder %s16, 3
      %p46 = por %p44, %p45
      %p47 = scmp.ne.s32.totalorder %s36, %s37
      %p48 = scmp.eq.s32.totalorder %s16, 0
      %p49 = por %p47, %p48
      %p50 = scmp.ne.s32.totalorder %s36, %s37
      %p51 = scmp.eq.s32.totalorder %s17, 3
      %p52 = por %p50, %p51
      %p54 = scmp.ne.s32.totalorder %s37, %s53
      %p55 = scmp.eq.s32.totalorder %s17, 0
      %p56 = por %p54, %p55
      %s58 = sadd.s32 %s57, 1
      %p61 = scmp.eq.s32.totalorder %s11, 3
      %p62 = scmp.ne.s32.totalorder %s57, %s59
      %p63 = scmp.eq.s32.totalorder %s11, 0
      %p64 = por %p62, %p63
      %p65 = scmp.ne.s32.totalorder %s57, %s59
      %p66 = scmp.eq.s32.totalorder %s16, 3
      %p67 = por %p65, %p66
      %p68 = scmp.ne.s32.totalorder %s59, %s60
      %p69 = scmp.eq.s32.totalorder %s16, 0
      %p70 = por %p68, %p69
      %p71 = scmp.ne.s32.totalorder %s59, %s60
      %p72 = scmp.eq.s32.totalorder %s17, 3
      %p73 = por %p71, %p72
      %p75 = scmp.ne.s32.totalorder %s60, %s74
      %p76 = scmp.eq.s32.totalorder %s17, 0
      %p77 = por %p75, %p76
      %s79 = sadd.s32 %s78, 1
      %p82 = scmp.eq.s32.totalorder %s11, 3
      %p83 = scmp.ne.s32.totalorder %s78, %s80
      %p84 = scmp.eq.s32.totalorder %s11, 0
      %p85 = por %p83, %p84
      %p86 = scmp.ne.s32.totalorder %s78, %s80
      %p87 = scmp.eq.s32.totalorder %s16, 3
      %p88 = por %p86, %p87
      %p89 = scmp.ne.s32.totalorder %s80, %s81
      %p90 = scmp.eq.s32.totalorder %s16, 0
      %p91 = por %p89, %p90
      %p92 = scmp.ne.s32.totalorder %s80, %s81
      %p93 = scmp.eq.s32.totalorder %s17, 3
      %p94 = por %p92, %p93
      %p96 = scmp.ne.s32.totalorder %s81, %s95
      %p97 = scmp.eq.s32.totalorder %s17, 0
      %p98 = por %p96, %p97
      %s99 = ssub.s32 %s19, %s26
      %p100 = scmp.eq.s32.totalorder %s99, 0
      %s102 = sadd.s32 %s101, 1
      %s103 = scalar_select %p100, %s101, %s102
      %p106 = pneg %p100
      %p107 = scmp.eq.s32.totalorder %s11, 3
      %p108 = por %p106, %p107
      %p109 = scmp.ne.s32.totalorder %s101, %s104
      %p110 = scmp.eq.s32.totalorder %s11, 0
      %p111 = por %p109, %p110
      %p112 = scmp.ne.s32.totalorder %s101, %s104
      %p113 = scmp.eq.s32.totalorder %s16, 3
      %p114 = por %p112, %p113
      %p115 = scmp.ne.s32.totalorder %s104, %s105
      %p116 = scmp.eq.s32.totalorder %s16, 0
      %p117 = por %p115, %p116
      %p118 = scmp.ne.s32.totalorder %s104, %s105
      %p119 = scmp.eq.s32.totalorder %s17, 3
      %p120 = por %p118, %p119
      %p122 = scmp.ne.s32.totalorder %s105, %s121
      %p123 = scmp.eq.s32.totalorder %s17, 0
      %p124 = por %p122, %p123
      %s125 = ssub.s32 %s19, %s26
      %p126 = scmp.eq.s32.totalorder %s125, 0
      %s128 = sadd.s32 %s127, 1
      %s129 = scalar_select %p126, %s127, %s128
      %p132 = pneg %p126
      %p133 = scmp.eq.s32.totalorder %s11, 3
      %p134 = por %p132, %p133
      %p135 = scmp.ne.s32.totalorder %s127, %s130
      %p136 = scmp.eq.s32.totalorder %s11, 0
      %p137 = por %p135, %p136
      %p138 = scmp.ne.s32.totalorder %s127, %s130
      %p139 = scmp.eq.s32.totalorder %s16, 3
      %p140 = por %p138, %p139
      %p141 = scmp.ne.s32.totalorder %s130, %s131
      %p142 = scmp.eq.s32.totalorder %s16, 0
      %p143 = por %p141, %p142
      %p144 = scmp.ne.s32.totalorder %s130, %s131
      %p145 = scmp.eq.s32.totalorder %s17, 3
      %p146 = por %p144, %p145
      %p148 = scmp.ne.s32.totalorder %s131, %s147
      %p149 = scmp.eq.s32.totalorder %s17, 0
      %p150 = por %p148, %p149
      %s151 = ssub.s32 %s18, %s30
      %s152 = ssub.s32 %s19, %s26
      %s153 = sor.u32 %s151, %s152
      %p154 = scmp.eq.s32.totalorder %s153, 0
      %s156 = sadd.s32 %s155, 1
      %s157 = scalar_select %p154, %s155, %s156
      %p160 = pneg %p154
      %p161 = scmp.eq.s32.totalorder %s11, 3
      %p162 = por %p160, %p161
      %p163 = scmp.ne.s32.totalorder %s155, %s158
      %p164 = scmp.eq.s32.totalorder %s11, 0
      %p165 = por %p163, %p164
      %p166 = scmp.ne.s32.totalorder %s155, %s158
      %p167 = scmp.eq.s32.totalorder %s16, 3
      %p168 = por %p166, %p167
      %p169 = scmp.ne.s32.totalorder %s158, %s159
      %p170 = scmp.eq.s32.totalorder %s16, 0
      %p171 = por %p169, %p170
      %p172 = scmp.ne.s32.totalorder %s158, %s159
      %p173 = scmp.eq.s32.totalorder %s17, 3
      %p174 = por %p172, %p173
      %p176 = scmp.ne.s32.totalorder %s159, %s175
      %p177 = scmp.eq.s32.totalorder %s17, 0
      %p178 = por %p176, %p177
      %p179 = scmp.le.s32.totalorder 1, %s11
      %p180 = scmp.lt.s32.totalorder %s11, 5
      %p181 = pnand %p179, %p180
      %p182 = pneg %p181
      // Predicated region
      $region9: #{transformer_forward.16} parent=5 // pred_check
        _
      $region10: #{transformer_forward.16} parent=5 // pred_check_branch
        %184 = sbr.rel (%p181) target = $region12
      $region11: #{transformer_forward.16} parent=5 // pred_region
        %s185 = ssub.s32 %s11, 1
        // Predicated region
        $region13: #{transformer_forward.16} parent=11 // pred_check
          %p186 = pneg %p49
        $region14: #{transformer_forward.16} parent=11 // pred_check_branch
          %188 = sbr.rel (%p186) target = $region16
        $region15: #{transformer_forward.16} parent=11 // pred_region
          %s189 = smul.u32 2, %s20
          %p190 = scmp.lt.s32.totalorder %s189, 1
          %s191 = scalar_select %p190, %s189, 1
          %s192 = smul.addr %s191, 2
          %s193 = smul.addr %s192, 4
          %s194 = scalar_lea.vmem %s0, %s193
          %s195 = smul.u32 2, %s20
        $region16: #{transformer_forward.16} parent=11 // pred_fallthru
          _
        // Predicated region
        $region17: #{transformer_forward.16} parent=11 // pred_check
          %p196 = pneg %p70
        $region18: #{transformer_forward.16} parent=11 // pred_check_branch
          %198 = sbr.rel (%p196) target = $region20
        $region19: #{transformer_forward.16} parent=11 // pred_region
          _
        $region20: #{transformer_forward.16} parent=11 // pred_fallthru
          _
        // Predicated region
        $region21: #{transformer_forward.16} parent=11 // pred_check
          %p199 = pneg %p91
        $region22: #{transformer_forward.16} parent=11 // pred_check_branch
          %201 = sbr.rel (%p199) target = $region24
        $region23: #{transformer_forward.16} parent=11 // pred_region
          _
        $region24: #{transformer_forward.16} parent=11 // pred_fallthru
          _
      $region12: #{transformer_forward.16} parent=5 // pred_fallthru
        _
      %p202 = scmp.lt.s32.totalorder %s11, 4
      // Predicated region
      $region25: #{transformer_forward.16} parent=5 // pred_check
        %p203 = pneg %p202
      $region26: #{transformer_forward.16} parent=5 // pred_check_branch
        %205 = sbr.rel (%p203) target = $region28
      $region27: #{transformer_forward.16} parent=5 // pred_region
        // Predicated region
        $region29: #{transformer_forward.16} parent=27 // pred_check
          %p206 = pneg %p111
        $region30: #{transformer_forward.16} parent=27 // pred_check_branch
          %208 = sbr.rel (%p206) target = $region32
        $region31: #{transformer_forward.16} parent=27 // pred_region
          %s209 = sand.u32 %s101, 1
          %s210 = sand.u32 %s101, 1
          %s211 = smul.addr %s210, 512
          %s212 = scalar_lea.vmem [#allocation2], %s211
          %s213 = smul.u32 4, %s19
          %s214 = smul.addr %s213, 4
          %s215 = scalar_lea.vmem %s3, %s214
          // Predicated region
          $region33: #{transformer_forward.16} parent=31 // pred_check
            _
          $region34: #{transformer_forward.16} parent=31 // pred_check_branch
            %217 = sbr.rel (0) target = $region36
          $region35: #{transformer_forward.16} parent=31 // pred_region
            // Predicated region
            $region37: #{transformer_forward.16} parent=35 // pred_check
              _
            $region38: #{transformer_forward.16} parent=35 // pred_check_branch
              %219 = sbr.rel (0) target = $region40
            $region39: #{transformer_forward.16} parent=35 // pred_region
              loop: start=0, step=1, limit=1
              $region41: #{transformer_forward.16} parent=39 // loop_pre_header
                _
              $region42: #{transformer_forward.16} parent=39 // loop_header
                %s221 = sphi 0, %s225
                %p222 = scmp.ge.s32.totalorder %s221, 1
                %s226 = sphi %s215, %s215
                %s227 = sphi %s212, %s212
              $region43: #{transformer_forward.16} parent=39 // loop_header_branch
                %224 = sbr.rel (%p222) target = $region47
              $region44: #{transformer_forward.16} parent=39 // loop_body
                %v228 = vld [vmem:[%s226] sm:$0xff]
                %229 = vst [vmem:[%s227] sm:$0xff] %v228
                %v230 = vld [vmem:[%s226 + $0x8] sm:$0xff]
                %231 = vst [vmem:[%s227 + $0x8] sm:$0xff] %v230
                %v232 = vld [vmem:[%s226 + $0x40] sm:$0xff]
                %233 = vst [vmem:[%s227 + $0x10] sm:$0xff] %v232
                %v234 = vld [vmem:[%s226 + $0x48] sm:$0xff]
                %235 = vst [vmem:[%s227 + $0x18] sm:$0xff] %v234
                %v236 = vld [vmem:[%s226 + $0x80] sm:$0xff]
                %237 = vst [vmem:[%s227 + $0x20] sm:$0xff] %v236
                %v238 = vld [vmem:[%s226 + $0x88] sm:$0xff]
                %239 = vst [vmem:[%s227 + $0x28] sm:$0xff] %v238
                %v240 = vld [vmem:[%s226 + $0xc0] sm:$0xff]
                %241 = vst [vmem:[%s227 + $0x30] sm:$0xff] %v240
                %v242 = vld [vmem:[%s226 + $0xc8] sm:$0xff]
                %243 = vst [vmem:[%s227 + $0x38] sm:$0xff] %v242
                %v244 = vld [vmem:[%s226 + $0x100] sm:$0xff]
                %245 = vst [vmem:[%s227 + $0x40] sm:$0xff] %v244
                %v246 = vld [vmem:[%s226 + $0x108] sm:$0xff]
                %247 = vst [vmem:[%s227 + $0x48] sm:$0xff] %v246
                %v248 = vld [vmem:[%s226 + $0x140] sm:$0xff]
                %249 = vst [vmem:[%s227 + $0x50] sm:$0xff] %v248
                %v250 = vld [vmem:[%s226 + $0x148] sm:$0xff]
                %251 = vst [vmem:[%s227 + $0x58] sm:$0xff] %v250
                %v252 = vld [vmem:[%s226 + $0x180] sm:$0xff]
                %253 = vst [vmem:[%s227 + $0x60] sm:$0xff] %v252
                %v254 = vld [vmem:[%s226 + $0x188] sm:$0xff]
                %255 = vst [vmem:[%s227 + $0x68] sm:$0xff] %v254
                %v256 = vld [vmem:[%s226 + $0x1c0] sm:$0xff]
                %257 = vst [vmem:[%s227 + $0x70] sm:$0xff] %v256
                %v258 = vld [vmem:[%s226 + $0x1c8] sm:$0xff]
                %259 = vst [vmem:[%s227 + $0x78] sm:$0xff] %v258
                %v260 = vld [vmem:[%s226 + $0x200] sm:$0xff]
                %261 = vst [vmem:[%s227 + $0x80] sm:$0xff] %v260
                %v262 = vld [vmem:[%s226 + $0x208] sm:$0xff]
                %263 = vst [vmem:[%s227 + $0x88] sm:$0xff] %v262
                %v264 = vld [vmem:[%s226 + $0x240] sm:$0xff]
                %265 = vst [vmem:[%s227 + $0x90] sm:$0xff] %v264
                %v266 = vld [vmem:[%s226 + $0x248] sm:$0xff]
                %267 = vst [vmem:[%s227 + $0x98] sm:$0xff] %v266
                %v268 = vld [vmem:[%s226 + $0x280] sm:$0xff]
                %269 = vst [vmem:[%s227 + $0xa0] sm:$0xff] %v268
                %v270 = vld [vmem:[%s226 + $0x288] sm:$0xff]
                %271 = vst [vmem:[%s227 + $0xa8] sm:$0xff] %v270
                %v272 = vld [vmem:[%s226 + $0x2c0] sm:$0xff]
                %273 = vst [vmem:[%s227 + $0xb0] sm:$0xff] %v272
                %v274 = vld [vmem:[%s226 + $0x2c8] sm:$0xff]
                %275 = vst [vmem:[%s227 + $0xb8] sm:$0xff] %v274
                %v276 = vld [vmem:[%s226 + $0x300] sm:$0xff]
                %277 = vst [vmem:[%s227 + $0xc0] sm:$0xff] %v276
                %v278 = vld [vmem:[%s226 + $0x308] sm:$0xff]
                %279 = vst [vmem:[%s227 + $0xc8] sm:$0xff] %v278
                %v280 = vld [vmem:[%s226 + $0x340] sm:$0xff]
                %281 = vst [vmem:[%s227 + $0xd0] sm:$0xff] %v280
                %v282 = vld [vmem:[%s226 + $0x348] sm:$0xff]
                %283 = vst [vmem:[%s227 + $0xd8] sm:$0xff] %v282
                %v284 = vld [vmem:[%s226 + $0x380] sm:$0xff]
                %285 = vst [vmem:[%s227 + $0xe0] sm:$0xff] %v284
                %v286 = vld [vmem:[%s226 + $0x388] sm:$0xff]
                %287 = vst [vmem:[%s227 + $0xe8] sm:$0xff] %v286
                %v288 = vld [vmem:[%s226 + $0x3c0] sm:$0xff]
                %289 = vst [vmem:[%s227 + $0xf0] sm:$0xff] %v288
                %v290 = vld [vmem:[%s226 + $0x3c8] sm:$0xff]
                %291 = vst [vmem:[%s227 + $0xf8] sm:$0xff] %v290
                %v292 = vld [vmem:[%s226 + $0x400] sm:$0xff]
                %293 = vst [vmem:[%s227 + $0x100] sm:$0xff] %v292
                %v294 = vld [vmem:[%s226 + $0x408] sm:$0xff]
                %295 = vst [vmem:[%s227 + $0x108] sm:$0xff] %v294
                %v296 = vld [vmem:[%s226 + $0x440] sm:$0xff]
                %297 = vst [vmem:[%s227 + $0x110] sm:$0xff] %v296
                %v298 = vld [vmem:[%s226 + $0x448] sm:$0xff]
                %299 = vst [vmem:[%s227 + $0x118] sm:$0xff] %v298
                %v300 = vld [vmem:[%s226 + $0x480] sm:$0xff]
                %301 = vst [vmem:[%s227 + $0x120] sm:$0xff] %v300
                %v302 = vld [vmem:[%s226 + $0x488] sm:$0xff]
                %303 = vst [vmem:[%s227 + $0x128] sm:$0xff] %v302
                %v304 = vld [vmem:[%s226 + $0x4c0] sm:$0xff]
                %305 = vst [vmem:[%s227 + $0x130] sm:$0xff] %v304
                %v306 = vld [vmem:[%s226 + $0x4c8] sm:$0xff]
                %307 = vst [vmem:[%s227 + $0x138] sm:$0xff] %v306
                %v308 = vld [vmem:[%s226 + $0x500] sm:$0xff]
                %309 = vst [vmem:[%s227 + $0x140] sm:$0xff] %v308
                %v310 = vld [vmem:[%s226 + $0x508] sm:$0xff]
                %311 = vst [vmem:[%s227 + $0x148] sm:$0xff] %v310
                %v312 = vld [vmem:[%s226 + $0x540] sm:$0xff]
                %313 = vst [vmem:[%s227 + $0x150] sm:$0xff] %v312
                %v314 = vld [vmem:[%s226 + $0x548] sm:$0xff]
                %315 = vst [vmem:[%s227 + $0x158] sm:$0xff] %v314
                %v316 = vld [vmem:[%s226 + $0x580] sm:$0xff]
                %317 = vst [vmem:[%s227 + $0x160] sm:$0xff] %v316
                %v318 = vld [vmem:[%s226 + $0x588] sm:$0xff]
                %319 = vst [vmem:[%s227 + $0x168] sm:$0xff] %v318
                %v320 = vld [vmem:[%s226 + $0x5c0] sm:$0xff]
                %321 = vst [vmem:[%s227 + $0x170] sm:$0xff] %v320
                %v322 = vld [vmem:[%s226 + $0x5c8] sm:$0xff]
                %323 = vst [vmem:[%s227 + $0x178] sm:$0xff] %v322
                %v324 = vld [vmem:[%s226 + $0x600] sm:$0xff]
                %325 = vst [vmem:[%s227 + $0x180] sm:$0xff] %v324
                %v326 = vld [vmem:[%s226 + $0x608] sm:$0xff]
                %327 = vst [vmem:[%s227 + $0x188] sm:$0xff] %v326
                %v328 = vld [vmem:[%s226 + $0x640] sm:$0xff]
                %329 = vst [vmem:[%s227 + $0x190] sm:$0xff] %v328
                %v330 = vld [vmem:[%s226 + $0x648] sm:$0xff]
                %331 = vst [vmem:[%s227 + $0x198] sm:$0xff] %v330
                %v332 = vld [vmem:[%s226 + $0x680] sm:$0xff]
                %333 = vst [vmem:[%s227 + $0x1a0] sm:$0xff] %v332
                %v334 = vld [vmem:[%s226 + $0x688] sm:$0xff]
                %335 = vst [vmem:[%s227 + $0x1a8] sm:$0xff] %v334
                %v336 = vld [vmem:[%s226 + $0x6c0] sm:$0xff]
                %337 = vst [vmem:[%s227 + $0x1b0] sm:$0xff] %v336
                %v338 = vld [vmem:[%s226 + $0x6c8] sm:$0xff]
                %339 = vst [vmem:[%s227 + $0x1b8] sm:$0xff] %v338
                %v340 = vld [vmem:[%s226 + $0x700] sm:$0xff]
                %341 = vst [vmem:[%s227 + $0x1c0] sm:$0xff] %v340
                %v342 = vld [vmem:[%s226 + $0x708] sm:$0xff]
                %343 = vst [vmem:[%s227 + $0x1c8] sm:$0xff] %v342
                %v344 = vld [vmem:[%s226 + $0x740] sm:$0xff]
                %345 = vst [vmem:[%s227 + $0x1d0] sm:$0xff] %v344
                %v346 = vld [vmem:[%s226 + $0x748] sm:$0xff]
                %347 = vst [vmem:[%s227 + $0x1d8] sm:$0xff] %v346
                %v348 = vld [vmem:[%s226 + $0x780] sm:$0xff]
                %349 = vst [vmem:[%s227 + $0x1e0] sm:$0xff] %v348
                %v350 = vld [vmem:[%s226 + $0x788] sm:$0xff]
                %351 = vst [vmem:[%s227 + $0x1e8] sm:$0xff] %v350
                %v352 = vld [vmem:[%s226 + $0x7c0] sm:$0xff]
                %353 = vst [vmem:[%s227 + $0x1f0] sm:$0xff] %v352
                %v354 = vld [vmem:[%s226 + $0x7c8] sm:$0xff]
                %355 = vst [vmem:[%s227 + $0x1f8] sm:$0xff] %v354
              $region45: #{transformer_forward.16} parent=39 // loop_footer
                %s225 = sadd.s32 1, %s221
              $region46: #{transformer_forward.16} parent=39 // loop_footer_branch
                %220 = sbr.rel target = $region42
              $region47: #{transformer_forward.16} parent=39 // loop_exit
                _
            $region40: #{transformer_forward.16} parent=35 // pred_fallthru
              _
            // Predicated region
            $region48: #{transformer_forward.16} parent=35 // pred_check
              _
            $region49: #{transformer_forward.16} parent=35 // pred_check_branch
              %357 = sbr.rel target = $region51
            $region50: #{transformer_forward.16} parent=35 // pred_region
              _
            $region51: #{transformer_forward.16} parent=35 // pred_fallthru
              _
          $region36: #{transformer_forward.16} parent=31 // pred_fallthru
            _
          %358 = vnop
        $region32: #{transformer_forward.16} parent=27 // pred_fallthru
          _
        // Predicated region
        $region52: #{transformer_forward.16} parent=27 // pred_check
          %p359 = pneg %p137
        $region53: #{transformer_forward.16} parent=27 // pred_check_branch
          %361 = sbr.rel (%p359) target = $region55
        $region54: #{transformer_forward.16} parent=27 // pred_region
          %s362 = smul.u32 4, %s19
          %p363 = scmp.lt.s32.totalorder %s362, 15
          %s364 = scalar_select %p363, %s362, 15
          %s365 = scalar_lea.vmem %s4, %s364
          %s366 = smul.u32 4, %s19
        $region55: #{transformer_forward.16} parent=27 // pred_fallthru
          _
      $region28: #{transformer_forward.16} parent=5 // pred_fallthru
        _
      %p367 = scmp.le.s32.totalorder 1, %s11
      %p368 = scmp.lt.s32.totalorder %s11, 5
      %p369 = pnand %p367, %p368
      %p370 = pneg %p369
      // Predicated region
      $region56: #{transformer_forward.16} parent=5 // pred_check
        _
      $region57: #{transformer_forward.16} parent=5 // pred_check_branch
        %372 = sbr.rel (%p369) target = $region59
      $region58: #{transformer_forward.16} parent=5 // pred_region
        %s373 = ssub.s32 %s11, 1
        %s374 = sand.u32 %s104, 1
        %s375 = sand.u32 %s104, 1
        %s376 = smul.addr %s375, 512
        %s377 = scalar_lea.vmem [#allocation2], %s376
        // Predicated region
        $region60: #{transformer_forward.16} parent=58 // pred_check
          %p378 = pneg %p117
        $region61: #{transformer_forward.16} parent=58 // pred_check_branch
          %380 = sbr.rel (%p378) target = $region63
        $region62: #{transformer_forward.16} parent=58 // pred_region
          _
        $region63: #{transformer_forward.16} parent=58 // pred_fallthru
          _
        %s381 = smul.u32 2, %s20
        %p382 = scmp.lt.s32.totalorder %s381, 1
        %s383 = scalar_select %p382, %s381, 1
        %s384 = smul.addr %s383, 2
        %s385 = smul.addr %s384, 4
        %s386 = scalar_lea.vmem %s0, %s385
        %p387 = pneg %p49
        %p388 = pneg %p46
        %p389 = pneg %p70
        %p390 = pneg %p67
        %p391 = pneg %p91
        %p392 = pneg %p88
        %s393 = sand.u32 %s104, 1
        %s394 = sand.u32 %s104, 1
        %s395 = smul.addr %s394, 512
        %s396 = scalar_lea.vmem [#allocation2], %s395
        %p397 = pneg %p117
        %p398 = pneg %p114
        %s399 = smul.u32 4, %s21
        %p400 = scmp.lt.s32.totalorder %s399, 15
        %s401 = scalar_select %p400, %s399, 15
        %s402 = scalar_lea.vmem %s4, %s401
        %p403 = pneg %p143
        %p404 = pneg %p140
        %p405 = pneg %p171
        %p406 = pneg %p168
        %s407 = sand.u32 %s158, 1
        %s408 = sand.u32 %s158, 1
        %s409 = smul.addr %s408, 32
        %s410 = scalar_lea.vmem [#allocation3], %s409
        %s411 = smul.u32 2, %s20
        %p412 = scmp.lt.s32.totalorder %s411, 1
        %s413 = scalar_select %p412, %s411, 1
        %s414 = smul.addr %s413, 2
        %s415 = smul.addr %s414, 4
        %s416 = scalar_lea.vmem %s0, %s415
        %s417 = smul.u32 2, %s20
        %s418 = smul.u32 4, %s21
        %s419 = smul.u32 4, %s21
        %p420 = scmp.lt.s32.totalorder %s419, 15
        %s421 = scalar_select %p420, %s419, 15
        %s422 = scalar_lea.vmem %s4, %s421
        %s423 = smul.u32 4, %s21
        %s424 = smul.u32 2, %s20
        %s425 = smul.u32 4, %s21
        %v426 = vld [vmem:[%s416] sm:$0xff]
        %v427 = vld [vmem:[%s416 + $0x8] sm:$0xff]
        %v428 = vunpack.c.l.bf16 %v426
        %v429 = vunpack.c.h.bf16 %v426
        %v430 = vunpack.c.l.bf16 %v427
        %v431 = vunpack.c.h.bf16 %v427
        %v432 = vadd.f32 %v428, %v429
        %433 = vadd.xlane.f32.xlu0 %v432
        %v434 = vpop.xlane.xlu0 %433
        %v435 = vadd.f32 %v430, %v431
        %436 = vadd.xlane.f32.xlu0 %v435
        %v437 = vpop.xlane.xlu0 %436
        %v438 = vrcp.pop 256.0
        %v439 = vmul.f32 %v434, %v438
        %v440 = vmul.f32 %v437, %v438
        %v441 = vsub.f32 %v428, %v439
        %v442 = vsub.f32 %v429, %v439
        %v443 = vsub.f32 %v430, %v440
        %v444 = vsub.f32 %v431, %v440
        %v445 = vmul.f32 %v441, %v441
        %v446 = vmul.f32 %v442, %v442
        %v447 = vmul.f32 %v443, %v443
        %v448 = vmul.f32 %v444, %v444
        %v449 = vadd.f32 %v445, %v446
        %450 = vadd.xlane.f32.xlu0 %v449
        %v451 = vpop.xlane.xlu0 %450
        %v452 = vadd.f32 %v447, %v448
        %453 = vadd.xlane.f32.xlu0 %v452
        %v454 = vpop.xlane.xlu0 %453
        %v455 = vrcp.pop 255.0
        %v456 = vmul.f32 %v451, %v455
        %v457 = vmul.f32 %v454, %v455
        %v458 = vrsqrt.pop %v456
        %v459 = vmul.f32 %v456, %v458
        %vm460 = vcmp.eq.f32.partialorder %v456, inf
        %v461 = vsel %vm460, %v456, %v459
        %vm462 = vcmp.eq.f32.partialorder %v456, 0.0
        %v463 = vand.u32 %v456, 2147483648
        %v464 = vsel %vm462, %v463, %v461
        %v465 = vrsqrt.pop %v457
        %v466 = vmul.f32 %v457, %v465
        %vm467 = vcmp.eq.f32.partialorder %v457, inf
        %v468 = vsel %vm467, %v457, %v466
        %vm469 = vcmp.eq.f32.partialorder %v457, 0.0
        %v470 = vand.u32 %v457, 2147483648
        %v471 = vsel %vm469, %v470, %v468
        %v472 = vadd.f32 %v464, 1e-06
        %v473 = vadd.f32 %v471, 1e-06
        %v474 = vrcp.pop %v472
        %v475 = vmul.f32 1.0, %v474
        %v476 = vrcp.pop %v473
        %v477 = vmul.f32 1.0, %v476
        %v478 = vld [vmem:[%s1] sm:$0x3]
        %v480 = vlaneseq
        %v481 = vshrl.u32 %v480, 7
        %v482 = vsub.s32 0, %v481
        %v483 = vrot.slane %v478, %v482
        %v484 = vlaneseq
        %v485 = vshrl.u32 %v484, 7
        %v486 = vsub.s32 1, %v485
        %v487 = vrot.slane %v478, %v486
        %v490 = vmul.f32 %v483, %v441
        %v491 = vmul.f32 %v487, %v442
        %v492 = vmul.f32 %v483, %v443
        %v493 = vmul.f32 %v487, %v444
        %v494 = vmul.f32 %v490, %v475
        %v495 = vmul.f32 %v491, %v475
        %v496 = vmul.f32 %v492, %v477
        %v497 = vmul.f32 %v493, %v477
        %v498 = vld [vmem:[%s2] sm:$0x3]
        %v500 = vlaneseq
        %v501 = vshrl.u32 %v500, 7
        %v502 = vsub.s32 0, %v501
        %v503 = vrot.slane %v498, %v502
        %v504 = vlaneseq
        %v505 = vshrl.u32 %v504, 7
        %v506 = vsub.s32 1, %v505
        %v507 = vrot.slane %v498, %v506
        %v510 = vadd.f32 %v494, %v503
        %v511 = vadd.f32 %v495, %v507
        %v512 = vadd.f32 %v496, %v503
        %v513 = vadd.f32 %v497, %v507
        %v514 = vpack.c.bf16 %v512, %v510
        %v515 = vpack.c.bf16 %v513, %v511
        %v516 = vld [vmem:[%s377] sm:$0xff]
        %v517 = vld [vmem:[%s377 + $0x8] sm:$0xff]
        %v518 = vld [vmem:[%s377 + $0x10] sm:$0xff]
        %v519 = vld [vmem:[%s377 + $0x18] sm:$0xff]
        %v520 = vld [vmem:[%s377 + $0x20] sm:$0xff]
        %v521 = vld [vmem:[%s377 + $0x28] sm:$0xff]
        %v522 = vld [vmem:[%s377 + $0x30] sm:$0xff]
        %v523 = vld [vmem:[%s377 + $0x38] sm:$0xff]
        %v524 = vld [vmem:[%s377 + $0x40] sm:$0xff]
        %v525 = vld [vmem:[%s377 + $0x48] sm:$0xff]
        %v526 = vld [vmem:[%s377 + $0x50] sm:$0xff]
        %v527 = vld [vmem:[%s377 + $0x58] sm:$0xff]
        %v528 = vld [vmem:[%s377 + $0x60] sm:$0xff]
        %v529 = vld [vmem:[%s377 + $0x68] sm:$0xff]
        %v530 = vld [vmem:[%s377 + $0x70] sm:$0xff]
        %v531 = vld [vmem:[%s377 + $0x78] sm:$0xff]
        %v532 = vld [vmem:[%s377 + $0x80] sm:$0xff]
        %v533 = vld [vmem:[%s377 + $0x88] sm:$0xff]
        %v534 = vld [vmem:[%s377 + $0x90] sm:$0xff]
        %v535 = vld [vmem:[%s377 + $0x98] sm:$0xff]
        %v536 = vld [vmem:[%s377 + $0xa0] sm:$0xff]
        %v537 = vld [vmem:[%s377 + $0xa8] sm:$0xff]
        %v538 = vld [vmem:[%s377 + $0xb0] sm:$0xff]
        %v539 = vld [vmem:[%s377 + $0xb8] sm:$0xff]
        %v540 = vld [vmem:[%s377 + $0xc0] sm:$0xff]
        %v541 = vld [vmem:[%s377 + $0xc8] sm:$0xff]
        %v542 = vld [vmem:[%s377 + $0xd0] sm:$0xff]
        %v543 = vld [vmem:[%s377 + $0xd8] sm:$0xff]
        %v544 = vld [vmem:[%s377 + $0xe0] sm:$0xff]
        %v545 = vld [vmem:[%s377 + $0xe8] sm:$0xff]
        %v546 = vld [vmem:[%s377 + $0xf0] sm:$0xff]
        %v547 = vld [vmem:[%s377 + $0xf8] sm:$0xff]
        %v548 = vld [vmem:[%s377 + $0x100] sm:$0xff]
        %v549 = vld [vmem:[%s377 + $0x108] sm:$0xff]
        %v550 = vld [vmem:[%s377 + $0x110] sm:$0xff]
        %v551 = vld [vmem:[%s377 + $0x118] sm:$0xff]
        %v552 = vld [vmem:[%s377 + $0x120] sm:$0xff]
        %v553 = vld [vmem:[%s377 + $0x128] sm:$0xff]
        %v554 = vld [vmem:[%s377 + $0x130] sm:$0xff]
        %v555 = vld [vmem:[%s377 + $0x138] sm:$0xff]
        %v556 = vld [vmem:[%s377 + $0x140] sm:$0xff]
        %v557 = vld [vmem:[%s377 + $0x148] sm:$0xff]
        %v558 = vld [vmem:[%s377 + $0x150] sm:$0xff]
        %v559 = vld [vmem:[%s377 + $0x158] sm:$0xff]
        %v560 = vld [vmem:[%s377 + $0x160] sm:$0xff]
        %v561 = vld [vmem:[%s377 + $0x168] sm:$0xff]
        %v562 = vld [vmem:[%s377 + $0x170] sm:$0xff]
        %v563 = vld [vmem:[%s377 + $0x178] sm:$0xff]
        %v564 = vld [vmem:[%s377 + $0x180] sm:$0xff]
        %v565 = vld [vmem:[%s377 + $0x188] sm:$0xff]
        %v566 = vld [vmem:[%s377 + $0x190] sm:$0xff]
        %v567 = vld [vmem:[%s377 + $0x198] sm:$0xff]
        %v568 = vld [vmem:[%s377 + $0x1a0] sm:$0xff]
        %v569 = vld [vmem:[%s377 + $0x1a8] sm:$0xff]
        %v570 = vld [vmem:[%s377 + $0x1b0] sm:$0xff]
        %v571 = vld [vmem:[%s377 + $0x1b8] sm:$0xff]
        %v572 = vld [vmem:[%s377 + $0x1c0] sm:$0xff]
        %v573 = vld [vmem:[%s377 + $0x1c8] sm:$0xff]
        %v574 = vld [vmem:[%s377 + $0x1d0] sm:$0xff]
        %v575 = vld [vmem:[%s377 + $0x1d8] sm:$0xff]
        %v576 = vld [vmem:[%s377 + $0x1e0] sm:$0xff]
        %v577 = vld [vmem:[%s377 + $0x1e8] sm:$0xff]
        %v578 = vld [vmem:[%s377 + $0x1f0] sm:$0xff]
        %v579 = vld [vmem:[%s377 + $0x1f8] sm:$0xff]
        %v580 = vld [vmem:[%s422] sm:$0xf]
        %v582 = vlaneseq
        %v583 = vshrl.u32 %v582, 7
        %v584 = vsub.s32 0, %v583
        %v585 = vrot.slane %v580, %v584
        %v586 = vlaneseq
        %v587 = vshrl.u32 %v586, 7
        %v588 = vsub.s32 1, %v587
        %v589 = vrot.slane %v580, %v588
        %v590 = vlaneseq
        %v591 = vshrl.u32 %v590, 7
        %v592 = vsub.s32 2, %v591
        %v593 = vrot.slane %v580, %v592
        %v594 = vlaneseq
        %v595 = vshrl.u32 %v594, 7
        %v596 = vsub.s32 3, %v595
        %v597 = vrot.slane %v580, %v596
        %v666 = vunpack.c.l.b16 %v516
        %v667 = vunpack.c.h.b16 %v516
        %v668 = vunpack.c.l.b16 %v517
        %v669 = vunpack.c.h.b16 %v517
        %v670 = vunpack.c.l.b16 %v518
        %v671 = vunpack.c.h.b16 %v518
        %v672 = vunpack.c.l.b16 %v519
        %v673 = vunpack.c.h.b16 %v519
        %v674 = vunpack.c.l.b16 %v520
        %v675 = vunpack.c.h.b16 %v520
        %v676 = vunpack.c.l.b16 %v521
        %v677 = vunpack.c.h.b16 %v521
        %v678 = vunpack.c.l.b16 %v522
        %v679 = vunpack.c.h.b16 %v522
        %v680 = vunpack.c.l.b16 %v523
        %v681 = vunpack.c.h.b16 %v523
        %v682 = vunpack.c.l.b16 %v524
        %v683 = vunpack.c.h.b16 %v524
        %v684 = vunpack.c.l.b16 %v525
        %v685 = vunpack.c.h.b16 %v525
        %v686 = vunpack.c.l.b16 %v526
        %v687 = vunpack.c.h.b16 %v526
        %v688 = vunpack.c.l.b16 %v527
        %v689 = vunpack.c.h.b16 %v527
        %v690 = vunpack.c.l.b16 %v528
        %v691 = vunpack.c.h.b16 %v528
        %v692 = vunpack.c.l.b16 %v529
        %v693 = vunpack.c.h.b16 %v529
        %v694 = vunpack.c.l.b16 %v530
        %v695 = vunpack.c.h.b16 %v530
        %v696 = vunpack.c.l.b16 %v531
        %v697 = vunpack.c.h.b16 %v531
        %v698 = vunpack.c.l.b16 %v532
        %v699 = vunpack.c.h.b16 %v532
        %v700 = vunpack.c.l.b16 %v533
        %v701 = vunpack.c.h.b16 %v533
        %v702 = vunpack.c.l.b16 %v534
        %v703 = vunpack.c.h.b16 %v534
        %v704 = vunpack.c.l.b16 %v535
        %v705 = vunpack.c.h.b16 %v535
        %v706 = vunpack.c.l.b16 %v536
        %v707 = vunpack.c.h.b16 %v536
        %v708 = vunpack.c.l.b16 %v537
        %v709 = vunpack.c.h.b16 %v537
        %v710 = vunpack.c.l.b16 %v538
        %v711 = vunpack.c.h.b16 %v538
        %v712 = vunpack.c.l.b16 %v539
        %v713 = vunpack.c.h.b16 %v539
        %v714 = vunpack.c.l.b16 %v540
        %v715 = vunpack.c.h.b16 %v540
        %v716 = vunpack.c.l.b16 %v541
        %v717 = vunpack.c.h.b16 %v541
        %v718 = vunpack.c.l.b16 %v542
        %v719 = vunpack.c.h.b16 %v542
        %v720 = vunpack.c.l.b16 %v543
        %v721 = vunpack.c.h.b16 %v543
        %v722 = vunpack.c.l.b16 %v544
        %v723 = vunpack.c.h.b16 %v544
        %v724 = vunpack.c.l.b16 %v545
        %v725 = vunpack.c.h.b16 %v545
        %v726 = vunpack.c.l.b16 %v546
        %v727 = vunpack.c.h.b16 %v546
        %v728 = vunpack.c.l.b16 %v547
        %v729 = vunpack.c.h.b16 %v547
        %v730 = vunpack.c.l.b16 %v548
        %v731 = vunpack.c.h.b16 %v548
        %v732 = vunpack.c.l.b16 %v549
        %v733 = vunpack.c.h.b16 %v549
        %v734 = vunpack.c.l.b16 %v550
        %v735 = vunpack.c.h.b16 %v550
        %v736 = vunpack.c.l.b16 %v551
        %v737 = vunpack.c.h.b16 %v551
        %v738 = vunpack.c.l.b16 %v552
        %v739 = vunpack.c.h.b16 %v552
        %v740 = vunpack.c.l.b16 %v553
        %v741 = vunpack.c.h.b16 %v553
        %v742 = vunpack.c.l.b16 %v554
        %v743 = vunpack.c.h.b16 %v554
        %v744 = vunpack.c.l.b16 %v555
        %v745 = vunpack.c.h.b16 %v555
        %v746 = vunpack.c.l.b16 %v556
        %v747 = vunpack.c.h.b16 %v556
        %v748 = vunpack.c.l.b16 %v557
        %v749 = vunpack.c.h.b16 %v557
        %v750 = vunpack.c.l.b16 %v558
        %v751 = vunpack.c.h.b16 %v558
        %v752 = vunpack.c.l.b16 %v559
        %v753 = vunpack.c.h.b16 %v559
        %v754 = vunpack.c.l.b16 %v560
        %v755 = vunpack.c.h.b16 %v560
        %v756 = vunpack.c.l.b16 %v561
        %v757 = vunpack.c.h.b16 %v561
        %v758 = vunpack.c.l.b16 %v562
        %v759 = vunpack.c.h.b16 %v562
        %v760 = vunpack.c.l.b16 %v563
        %v761 = vunpack.c.h.b16 %v563
        %v762 = vunpack.c.l.b16 %v564
        %v763 = vunpack.c.h.b16 %v564
        %v764 = vunpack.c.l.b16 %v565
        %v765 = vunpack.c.h.b16 %v565
        %v766 = vunpack.c.l.b16 %v566
        %v767 = vunpack.c.h.b16 %v566
        %v768 = vunpack.c.l.b16 %v567
        %v769 = vunpack.c.h.b16 %v567
        %v770 = vunpack.c.l.b16 %v568
        %v771 = vunpack.c.h.b16 %v568
        %v772 = vunpack.c.l.b16 %v569
        %v773 = vunpack.c.h.b16 %v569
        %v774 = vunpack.c.l.b16 %v570
        %v775 = vunpack.c.h.b16 %v570
        %v776 = vunpack.c.l.b16 %v571
        %v777 = vunpack.c.h.b16 %v571
        %v778 = vunpack.c.l.b16 %v572
        %v779 = vunpack.c.h.b16 %v572
        %v780 = vunpack.c.l.b16 %v573
        %v781 = vunpack.c.h.b16 %v573
        %v782 = vunpack.c.l.b16 %v574
        %v783 = vunpack.c.h.b16 %v574
        %v784 = vunpack.c.l.b16 %v575
        %v785 = vunpack.c.h.b16 %v575
        %v786 = vunpack.c.l.b16 %v576
        %v787 = vunpack.c.h.b16 %v576
        %v788 = vunpack.c.l.b16 %v577
        %v789 = vunpack.c.h.b16 %v577
        %v790 = vunpack.c.l.b16 %v578
        %v791 = vunpack.c.h.b16 %v578
        %v792 = vunpack.c.l.b16 %v579
        %v793 = vunpack.c.h.b16 %v579
        %v794 = vpack.c.b16 %v670, %v666
        %v795 = vpack.c.b16 %v671, %v667
        %v796 = vpack.c.b16 %v672, %v668
        %v797 = vpack.c.b16 %v673, %v669
        %v798 = vpack.c.b16 %v678, %v674
        %v799 = vpack.c.b16 %v679, %v675
        %v800 = vpack.c.b16 %v680, %v676
        %v801 = vpack.c.b16 %v681, %v677
        %v802 = vpack.c.b16 %v686, %v682
        %v803 = vpack.c.b16 %v687, %v683
        %v804 = vpack.c.b16 %v688, %v684
        %v805 = vpack.c.b16 %v689, %v685
        %v806 = vpack.c.b16 %v694, %v690
        %v807 = vpack.c.b16 %v695, %v691
        %v808 = vpack.c.b16 %v696, %v692
        %v809 = vpack.c.b16 %v697, %v693
        %v810 = vpack.c.b16 %v702, %v698
        %v811 = vpack.c.b16 %v703, %v699
        %v812 = vpack.c.b16 %v704, %v700
        %v813 = vpack.c.b16 %v705, %v701
        %v814 = vpack.c.b16 %v710, %v706
        %v815 = vpack.c.b16 %v711, %v707
        %v816 = vpack.c.b16 %v712, %v708
        %v817 = vpack.c.b16 %v713, %v709
        %v818 = vpack.c.b16 %v718, %v714
        %v819 = vpack.c.b16 %v719, %v715
        %v820 = vpack.c.b16 %v720, %v716
        %v821 = vpack.c.b16 %v721, %v717
        %v822 = vpack.c.b16 %v726, %v722
        %v823 = vpack.c.b16 %v727, %v723
        %v824 = vpack.c.b16 %v728, %v724
        %v825 = vpack.c.b16 %v729, %v725
        %v826 = vpack.c.b16 %v734, %v730
        %v827 = vpack.c.b16 %v735, %v731
        %v828 = vpack.c.b16 %v736, %v732
        %v829 = vpack.c.b16 %v737, %v733
        %v830 = vpack.c.b16 %v742, %v738
        %v831 = vpack.c.b16 %v743, %v739
        %v832 = vpack.c.b16 %v744, %v740
        %v833 = vpack.c.b16 %v745, %v741
        %v834 = vpack.c.b16 %v750, %v746
        %v835 = vpack.c.b16 %v751, %v747
        %v836 = vpack.c.b16 %v752, %v748
        %v837 = vpack.c.b16 %v753, %v749
        %v838 = vpack.c.b16 %v758, %v754
        %v839 = vpack.c.b16 %v759, %v755
        %v840 = vpack.c.b16 %v760, %v756
        %v841 = vpack.c.b16 %v761, %v757
        %v842 = vpack.c.b16 %v766, %v762
        %v843 = vpack.c.b16 %v767, %v763
        %v844 = vpack.c.b16 %v768, %v764
        %v845 = vpack.c.b16 %v769, %v765
        %v846 = vpack.c.b16 %v774, %v770
        %v847 = vpack.c.b16 %v775, %v771
        %v848 = vpack.c.b16 %v776, %v772
        %v849 = vpack.c.b16 %v777, %v773
        %v850 = vpack.c.b16 %v782, %v778
        %v851 = vpack.c.b16 %v783, %v779
        %v852 = vpack.c.b16 %v784, %v780
        %v853 = vpack.c.b16 %v785, %v781
        %v854 = vpack.c.b16 %v790, %v786
        %v855 = vpack.c.b16 %v791, %v787
        %v856 = vpack.c.b16 %v792, %v788
        %v857 = vpack.c.b16 %v793, %v789
        %922 = vmatprep.subr.bf16.mxu0 %v823
        %923 = vmatpush1.bf16.msra.mxu0 %v822
        %924 = vmatprep.subr.bf16.mxu0 %v819
        %925 = vmatpush1.bf16.msra.mxu0 %v818
        %926 = vmatprep.subr.bf16.mxu0 %v815
        %927 = vmatpush1.bf16.msra.mxu0 %v814
        %928 = vmatprep.subr.bf16.mxu0 %v811
        %929 = vmatpush1.bf16.msra.mxu0 %v810
        %930 = vmatprep.subr.bf16.mxu0 %v807
        %931 = vmatpush1.bf16.msra.mxu0 %v806
        %932 = vmatprep.subr.bf16.mxu0 %v803
        %933 = vmatpush1.bf16.msra.mxu0 %v802
        %934 = vmatprep.subr.bf16.mxu0 %v799
        %935 = vmatpush1.bf16.msra.mxu0 %v798
        %936 = vmatprep.subr.bf16.mxu0 %v795
        %937 = vmatpush1.bf16.msra.mxu0 %v794
        %938 = vmatprep.subr.bf16.mxu0 %v855
        %939 = vmatpush2.bf16.msra.mxu0 %v854
        %940 = vmatprep.subr.bf16.mxu0 %v851
        %941 = vmatpush2.bf16.msra.mxu0 %v850
        %942 = vmatprep.subr.bf16.mxu0 %v847
        %943 = vmatpush2.bf16.msra.mxu0 %v846
        %944 = vmatprep.subr.bf16.mxu0 %v843
        %945 = vmatpush2.bf16.msra.mxu0 %v842
        %946 = vmatprep.subr.bf16.mxu0 %v839
        %947 = vmatpush2.bf16.msra.mxu0 %v838
        %948 = vmatprep.subr.bf16.mxu0 %v835
        %949 = vmatpush2.bf16.msra.mxu0 %v834
        %950 = vmatprep.subr.bf16.mxu0 %v831
        %951 = vmatpush2.bf16.msra.mxu0 %v830
        %952 = vmatprep.subr.bf16.mxu0 %v827
        %953 = vmatpush2.bf16.msra.mxu0 %v826
        %954 = vmatprep.mubr.bf16.mxu0 %v515
        %955 = vmatmul.mubr.bf16.gmra.mxu0 %v514
        %v956 = vpop.f32.mrf.mxu0
        %v957 = vadd.f32 %v585, %v956
        %v958 = vpop.f32.mrf.mxu0
        %v959 = vadd.f32 %v589, %v958
        %v960 = vpop.f32.mrf.mxu0
        %v961 = vadd.f32 %v585, %v960
        %v962 = vpop.f32.mrf.mxu0
        %v963 = vadd.f32 %v589, %v962
        %964 = vdwg.mxu0
        %965 = vmatprep.subr.bf16.mxu0 %v825
        %966 = vmatpush1.bf16.msra.mxu0 %v824
        %967 = vmatprep.subr.bf16.mxu0 %v821
        %968 = vmatpush1.bf16.msra.mxu0 %v820
        %969 = vmatprep.subr.bf16.mxu0 %v817
        %970 = vmatpush1.bf16.msra.mxu0 %v816
        %971 = vmatprep.subr.bf16.mxu0 %v813
        %972 = vmatpush1.bf16.msra.mxu0 %v812
        %973 = vmatprep.subr.bf16.mxu0 %v809
        %974 = vmatpush1.bf16.msra.mxu0 %v808
        %975 = vmatprep.subr.bf16.mxu0 %v805
        %976 = vmatpush1.bf16.msra.mxu0 %v804
        %977 = vmatprep.subr.bf16.mxu0 %v801
        %978 = vmatpush1.bf16.msra.mxu0 %v800
        %979 = vmatprep.subr.bf16.mxu0 %v797
        %980 = vmatpush1.bf16.msra.mxu0 %v796
        %981 = vmatprep.subr.bf16.mxu0 %v857
        %982 = vmatpush2.bf16.msra.mxu0 %v856
        %983 = vmatprep.subr.bf16.mxu0 %v853
        %984 = vmatpush2.bf16.msra.mxu0 %v852
        %985 = vmatprep.subr.bf16.mxu0 %v849
        %986 = vmatpush2.bf16.msra.mxu0 %v848
        %987 = vmatprep.subr.bf16.mxu0 %v845
        %988 = vmatpush2.bf16.msra.mxu0 %v844
        %989 = vmatprep.subr.bf16.mxu0 %v841
        %990 = vmatpush2.bf16.msra.mxu0 %v840
        %991 = vmatprep.subr.bf16.mxu0 %v837
        %992 = vmatpush2.bf16.msra.mxu0 %v836
        %993 = vmatprep.subr.bf16.mxu0 %v833
        %994 = vmatpush2.bf16.msra.mxu0 %v832
        %995 = vmatprep.subr.bf16.mxu0 %v829
        %996 = vmatpush2.bf16.msra.mxu0 %v828
        %997 = vmatprep.mubr.bf16.mxu0 %v515
        %998 = vmatmul.mubr.bf16.gmra.mxu0 %v514
        %v999 = vpop.f32.mrf.mxu0
        %v1000 = vadd.f32 %v593, %v999
        %v1001 = vpop.f32.mrf.mxu0
        %v1002 = vadd.f32 %v597, %v1001
        %v1003 = vpop.f32.mrf.mxu0
        %v1004 = vadd.f32 %v593, %v1003
        %v1005 = vpop.f32.mrf.mxu0
        %v1006 = vadd.f32 %v597, %v1005
        %1007 = vdwg.mxu0
        %v1008 = vmax.f32 %v957, 0.0
        %v1009 = vmax.f32 %v959, 0.0
        %v1010 = vmax.f32 %v1000, 0.0
        %v1011 = vmax.f32 %v1002, 0.0
        %v1012 = vmax.f32 %v961, 0.0
        %v1013 = vmax.f32 %v963, 0.0
        %v1014 = vmax.f32 %v1004, 0.0
        %v1015 = vmax.f32 %v1006, 0.0
        %v1016 = vpack.c.bf16 %v1012, %v1008
        %v1017 = vpack.c.bf16 %v1013, %v1009
        %v1018 = vpack.c.bf16 %v1014, %v1010
        %v1019 = vpack.c.bf16 %v1015, %v1011
        %v1024 = vunpack.c.l.b16 %v1016
        %v1025 = vunpack.c.l.b16 %v1017
        %v1026 = vunpack.c.l.b16 %v1018
        %v1027 = vunpack.c.l.b16 %v1019
        %v1028 = vunpack.c.h.b16 %v1016
        %v1029 = vunpack.c.h.b16 %v1017
        %v1030 = vunpack.c.h.b16 %v1018
        %v1031 = vunpack.c.h.b16 %v1019
        %v1032 = vpack.c.b16 %v1025, %v1024
        %v1033 = vpack.c.b16 %v1027, %v1026
        %v1034 = vpack.c.b16 %v1029, %v1028
        %v1035 = vpack.c.b16 %v1031, %v1030
        %1040 = vst [vmem:[%s410] sm:$0xff] %v1032
        %1041 = vst [vmem:[%s410 + $0x8] sm:$0xff] %v1033
        %1042 = vst [vmem:[%s410 + $0x10] sm:$0xff] %v1034
        %1043 = vst [vmem:[%s410 + $0x18] sm:$0xff] %v1035
        %s1044 = sand.u32 %s158, 1
        %s1045 = sand.u32 %s158, 1
        %s1046 = smul.addr %s1045, 32
        %s1047 = scalar_lea.vmem [#allocation3], %s1046
        // Predicated region
        $region64: #{transformer_forward.16} parent=58 // pred_check
          %p1048 = pneg %p168
        $region65: #{transformer_forward.16} parent=58 // pred_check_branch
          %1050 = sbr.rel (%p1048) target = $region67
        $region66: #{transformer_forward.16} parent=58 // pred_region
          %s1051 = smul.u32 2, %s20
          %s1052 = smul.u32 4, %s21
          %s1053 = smul.addr %s1051, 16
          %s1054 = sadd.s32 %s1052, %s1053
          %s1055 = smul.addr %s1054, 4
          %s1056 = scalar_lea.vmem %s5, %s1055
          // Predicated region
          $region68: #{transformer_forward.16} parent=66 // pred_check
            _
          $region69: #{transformer_forward.16} parent=66 // pred_check_branch
            %1058 = sbr.rel (0) target = $region71
          $region70: #{transformer_forward.16} parent=66 // pred_region
            // Predicated region
            $region72: #{transformer_forward.16} parent=70 // pred_check
              _
            $region73: #{transformer_forward.16} parent=70 // pred_check_branch
              %1060 = sbr.rel (0) target = $region75
            $region74: #{transformer_forward.16} parent=70 // pred_region
              loop: start=0, step=1, limit=1
              $region76: #{transformer_forward.16} parent=74 // loop_pre_header
                _
              $region77: #{transformer_forward.16} parent=74 // loop_header
                %s1062 = sphi 0, %s1066
                %p1063 = scmp.ge.s32.totalorder %s1062, 1
                %s1067 = sphi %s1047, %s1047
                %s1068 = sphi %s1056, %s1056
              $region78: #{transformer_forward.16} parent=74 // loop_header_branch
                %1065 = sbr.rel (%p1063) target = $region82
              $region79: #{transformer_forward.16} parent=74 // loop_body
                %v1069 = vld [vmem:[%s1067] sm:$0xff]
                %1070 = vst [vmem:[%s1068] sm:$0xff] %v1069
                %v1071 = vld [vmem:[%s1067 + $0x8] sm:$0xff]
                %1072 = vst [vmem:[%s1068 + $0x8] sm:$0xff] %v1071
                %v1073 = vld [vmem:[%s1067 + $0x10] sm:$0xff]
                %1074 = vst [vmem:[%s1068 + $0x40] sm:$0xff] %v1073
                %v1075 = vld [vmem:[%s1067 + $0x18] sm:$0xff]
                %1076 = vst [vmem:[%s1068 + $0x48] sm:$0xff] %v1075
              $region80: #{transformer_forward.16} parent=74 // loop_footer
                %s1066 = sadd.s32 1, %s1062
              $region81: #{transformer_forward.16} parent=74 // loop_footer_branch
                %1061 = sbr.rel target = $region77
              $region82: #{transformer_forward.16} parent=74 // loop_exit
                _
            $region75: #{transformer_forward.16} parent=70 // pred_fallthru
              _
            // Predicated region
            $region83: #{transformer_forward.16} parent=70 // pred_check
              _
            $region84: #{transformer_forward.16} parent=70 // pred_check_branch
              %1078 = sbr.rel target = $region86
            $region85: #{transformer_forward.16} parent=70 // pred_region
              _
            $region86: #{transformer_forward.16} parent=70 // pred_fallthru
              _
          $region71: #{transformer_forward.16} parent=66 // pred_fallthru
            _
          %1079 = vnop
        $region67: #{transformer_forward.16} parent=58 // pred_fallthru
          _
      $region59: #{transformer_forward.16} parent=5 // pred_fallthru
        _
      %p1080 = scmp.le.s32.totalorder 2, %s11
      // Predicated region
      $region87: #{transformer_forward.16} parent=5 // pred_check
        %p1081 = pneg %p1080
      $region88: #{transformer_forward.16} parent=5 // pred_check_branch
        %1083 = sbr.rel (%p1081) target = $region90
      $region89: #{transformer_forward.16} parent=5 // pred_region
        %s1084 = ssub.s32 %s11, 2
        // Predicated region
        $region91: #{transformer_forward.16} parent=89 // pred_check
          %p1085 = pneg %p174
        $region92: #{transformer_forward.16} parent=89 // pred_check_branch
          %1087 = sbr.rel (%p1085) target = $region94
        $region93: #{transformer_forward.16} parent=89 // pred_region
          %s1088 = sand.u32 %s159, 1
          %s1089 = sand.u32 %s159, 1
          %s1090 = smul.addr %s1089, 32
          %s1091 = scalar_lea.vmem [#allocation3], %s1090
        $region94: #{transformer_forward.16} parent=89 // pred_fallthru
          _
      $region90: #{transformer_forward.16} parent=5 // pred_fallthru
        _
    $region6: #{transformer_forward.16} parent=1 // loop_footer
      %s15 = sadd.s32 1, %s11
    $region7: #{transformer_forward.16} parent=1 // loop_footer_branch
      %10 = sbr.rel target = $region3
    $region8: #{transformer_forward.16} parent=1 // loop_exit
      _

// kernel: transformer_forward.17
$region0: #{transformer_forward.17}
  #allocation0 [shape = 'u32[]', space=smem, size = 0x4, offset = 0x4, fixed_abs, tag = 'smem constant byte address 0x4 - core index']
  #allocation1 [shape = 'u32[144,128]{1,0:T(1,128)}', space=vmem, size = 0x12000, scoped, tag = 'internal scratch']
  #allocation2 [shape = 'f32[16,256]{1,0:T(8,128)}', space=vmem, size = 0x4000, scoped, tag = 'scratch operand']
  %s0 = inlined_call_operand.vmem [shape: bf16[16,2048], index: 0, kind: input, shape index: {}]
  %s1 = inlined_call_operand.vmem [shape: bf16[2048,256], index: 1, kind: input, shape index: {}]
  %s2 = inlined_call_operand.vmem [shape: f32[1,256], index: 2, kind: input, shape index: {}]
  %s3 = inlined_call_operand.vmem [shape: bf16[16,256], index: 3, kind: input, shape index: {}]
  %s4 = inlined_call_operand.vmem [shape: bf16[16,256], index: 4, kind: output, shape index: {}]
  %s5 = sld [smem:[#allocation0]]
  $region80: #{transformer_forward.17} parent=0
    _
  %s7 = ssub.s32 1, %s5
  %s8 = scalar_select 0, %s7, %s5
  $region1: #{transformer_forward.17} parent=0
    #allocation3 [shape = 'u8[65536]{0}', space=vmem, size = 0x10000, scoped, tag = 'input window, operand 0']
    loop: start=0, step=1, limit=4
    $region2: #{transformer_forward.17} parent=1 // loop_pre_header
      _
    $region3: #{transformer_forward.17} parent=1 // loop_header
      %s10 = sphi 0, %s14
      %p11 = scmp.ge.s32.totalorder %s10, 4
      %s17 = sphi 0, %s36
      %s18 = sphi 0, %s32
      %s19 = sphi 0, %s28
      %s20 = sphi 0, %s17
      %s21 = sphi 0, %s18
      %s22 = sphi 0, %s19
      %s23 = sphi 0, %s20
      %s24 = sphi 0, %s21
      %s25 = sphi 0, %s22
      %s41 = sphi 0, %s43
      %s44 = sphi 0, %s41
      %s45 = sphi 0, %s44
      %s61 = sphi 0, %s45
      %s69 = sphi 0, %s71
      %s72 = sphi 0, %s69
      %s73 = sphi 0, %s72
      %s89 = sphi 0, %s73
      %s95 = sphi 0, %s97
      %s98 = sphi 0, %s95
      %s99 = sphi 0, %s98
      %s115 = sphi 0, %s99
      %s123 = sphi 0, %s125
      %s126 = sphi 0, %s123
      %s127 = sphi 0, %s126
      %s143 = sphi 0, %s127
      %s151 = sphi 0, %s153
      %s154 = sphi 0, %s151
      %s155 = sphi 0, %s154
      %s171 = sphi 0, %s155
    $region4: #{transformer_forward.17} parent=1 // loop_header_branch
      %13 = sbr.rel (%p11) target = $region8
    $region5: #{transformer_forward.17} parent=1 // loop_body
      %s15 = ssub.s32 %s10, 1
      %s16 = ssub.s32 %s10, 2
      %s26 = sadd.s32 1, %s19
      %p27 = scmp.ge.s32.totalorder %s26, 2
      %s28 = scalar_select %p27, 0, %s26
      %s29 = sadd.s32 1, %s18
      %s30 = scalar_select %p27, %s29, %s18
      %p31 = scmp.ge.s32.totalorder %s30, 1
      %s32 = scalar_select %p31, 0, %s30
      %s33 = sadd.s32 1, %s17
      %s34 = scalar_select %p31, %s33, %s17
      %p35 = scmp.ge.s32.totalorder %s34, 1
      %s36 = scalar_select %p35, 0, %s34
      %s37 = ssub.s32 %s17, %s36
      %s38 = ssub.s32 %s19, %s28
      %s39 = sor.u32 %s37, %s38
      %p40 = scmp.eq.s32.totalorder %s39, 0
      %s42 = sadd.s32 %s41, 1
      %s43 = scalar_select %p40, %s41, %s42
      %p46 = pneg %p40
      %p47 = scmp.eq.s32.totalorder %s10, 1
      %p48 = por %p46, %p47
      %p49 = scmp.ne.s32.totalorder %s41, %s44
      %p50 = scmp.eq.s32.totalorder %s10, 0
      %p51 = por %p49, %p50
      %p52 = scmp.ne.s32.totalorder %s41, %s44
      %p53 = scmp.eq.s32.totalorder %s15, 1
      %p54 = por %p52, %p53
      %p55 = scmp.ne.s32.totalorder %s44, %s45
      %p56 = scmp.eq.s32.totalorder %s15, 0
      %p57 = por %p55, %p56
      %p58 = scmp.ne.s32.totalorder %s44, %s45
      %p59 = scmp.eq.s32.totalorder %s16, 1
      %p60 = por %p58, %p59
      %p62 = scmp.ne.s32.totalorder %s45, %s61
      %p63 = scmp.eq.s32.totalorder %s16, 0
      %p64 = por %p62, %p63
      %s65 = ssub.s32 %s19, %s28
      %s66 = ssub.s32 %s18, %s32
      %s67 = sor.u32 %s65, %s66
      %p68 = scmp.eq.s32.totalorder %s67, 0
      %s70 = sadd.s32 %s69, 1
      %s71 = scalar_select %p68, %s69, %s70
      %p74 = pneg %p68
      %p75 = scmp.eq.s32.totalorder %s10, 1
      %p76 = por %p74, %p75
      %p77 = scmp.ne.s32.totalorder %s69, %s72
      %p78 = scmp.eq.s32.totalorder %s10, 0
      %p79 = por %p77, %p78
      %p80 = scmp.ne.s32.totalorder %s69, %s72
      %p81 = scmp.eq.s32.totalorder %s15, 1
      %p82 = por %p80, %p81
      %p83 = scmp.ne.s32.totalorder %s72, %s73
      %p84 = scmp.eq.s32.totalorder %s15, 0
      %p85 = por %p83, %p84
      %p86 = scmp.ne.s32.totalorder %s72, %s73
      %p87 = scmp.eq.s32.totalorder %s16, 1
      %p88 = por %p86, %p87
      %p90 = scmp.ne.s32.totalorder %s73, %s89
      %p91 = scmp.eq.s32.totalorder %s16, 0
      %p92 = por %p90, %p91
      %s93 = ssub.s32 %s18, %s32
      %p94 = scmp.eq.s32.totalorder %s93, 0
      %s96 = sadd.s32 %s95, 1
      %s97 = scalar_select %p94, %s95, %s96
      %p100 = pneg %p94
      %p101 = scmp.eq.s32.totalorder %s10, 1
      %p102 = por %p100, %p101
      %p103 = scmp.ne.s32.totalorder %s95, %s98
      %p104 = scmp.eq.s32.totalorder %s10, 0
      %p105 = por %p103, %p104
      %p106 = scmp.ne.s32.totalorder %s95, %s98
      %p107 = scmp.eq.s32.totalorder %s15, 1
      %p108 = por %p106, %p107
      %p109 = scmp.ne.s32.totalorder %s98, %s99
      %p110 = scmp.eq.s32.totalorder %s15, 0
      %p111 = por %p109, %p110
      %p112 = scmp.ne.s32.totalorder %s98, %s99
      %p113 = scmp.eq.s32.totalorder %s16, 1
      %p114 = por %p112, %p113
      %p116 = scmp.ne.s32.totalorder %s99, %s115
      %p117 = scmp.eq.s32.totalorder %s16, 0
      %p118 = por %p116, %p117
      %s119 = ssub.s32 %s17, %s36
      %s120 = ssub.s32 %s18, %s32
      %s121 = sor.u32 %s119, %s120
      %p122 = scmp.eq.s32.totalorder %s121, 0
      %s124 = sadd.s32 %s123, 1
      %s125 = scalar_select %p122, %s123, %s124
      %p128 = pneg %p122
      %p129 = scmp.eq.s32.totalorder %s10, 1
      %p130 = por %p128, %p129
      %p131 = scmp.ne.s32.totalorder %s123, %s126
      %p132 = scmp.eq.s32.totalorder %s10, 0
      %p133 = por %p131, %p132
      %p134 = scmp.ne.s32.totalorder %s123, %s126
      %p135 = scmp.eq.s32.totalorder %s15, 1
      %p136 = por %p134, %p135
      %p137 = scmp.ne.s32.totalorder %s126, %s127
      %p138 = scmp.eq.s32.totalorder %s15, 0
      %p139 = por %p137, %p138
      %p140 = scmp.ne.s32.totalorder %s126, %s127
      %p141 = scmp.eq.s32.totalorder %s16, 1
      %p142 = por %p140, %p141
      %p144 = scmp.ne.s32.totalorder %s127, %s143
      %p145 = scmp.eq.s32.totalorder %s16, 0
      %p146 = por %p144, %p145
      %s147 = ssub.s32 %s17, %s36
      %s148 = ssub.s32 %s18, %s32
      %s149 = sor.u32 %s147, %s148
      %p150 = scmp.eq.s32.totalorder %s149, 0
      %s152 = sadd.s32 %s151, 1
      %s153 = scalar_select %p150, %s151, %s152
      %p156 = pneg %p150
      %p157 = scmp.eq.s32.totalorder %s10, 1
      %p158 = por %p156, %p157
      %p159 = scmp.ne.s32.totalorder %s151, %s154
      %p160 = scmp.eq.s32.totalorder %s10, 0
      %p161 = por %p159, %p160
      %p162 = scmp.ne.s32.totalorder %s151, %s154
      %p163 = scmp.eq.s32.totalorder %s15, 1
      %p164 = por %p162, %p163
      %p165 = scmp.ne.s32.totalorder %s154, %s155
      %p166 = scmp.eq.s32.totalorder %s15, 0
      %p167 = por %p165, %p166
      %p168 = scmp.ne.s32.totalorder %s154, %s155
      %p169 = scmp.eq.s32.totalorder %s16, 1
      %p170 = por %p168, %p169
      %p172 = scmp.ne.s32.totalorder %s155, %s171
      %p173 = scmp.eq.s32.totalorder %s16, 0
      %p174 = por %p172, %p173
      %p175 = scmp.le.s32.totalorder 1, %s10
      %p176 = scmp.lt.s32.totalorder %s10, 3
      %p177 = pnand %p175, %p176
      %p178 = pneg %p177
      // Predicated region
      $region9: #{transformer_forward.17} parent=5 // pred_check
        _
      $region10: #{transformer_forward.17} parent=5 // pred_check_branch
        %180 = sbr.rel (%p177) target = $region12
      $region11: #{transformer_forward.17} parent=5 // pred_region
        %s181 = ssub.s32 %s10, 1
        // Predicated region
        $region13: #{transformer_forward.17} parent=11 // pred_check
          %p182 = pneg %p111
        $region14: #{transformer_forward.17} parent=11 // pred_check_branch
          %184 = sbr.rel (%p182) target = $region16
        $region15: #{transformer_forward.17} parent=11 // pred_region
          %s185 = smul.u32 2, %s21
          %p186 = scmp.lt.s32.totalorder %s185, 1
          %s187 = scalar_select %p186, %s185, 1
          %s188 = scalar_lea.vmem %s2, %s187
          %s189 = smul.u32 2, %s21
        $region16: #{transformer_forward.17} parent=11 // pred_fallthru
          _
        // Predicated region
        $region17: #{transformer_forward.17} parent=11 // pred_check
          %p190 = pneg %p139
        $region18: #{transformer_forward.17} parent=11 // pred_check_branch
          %192 = sbr.rel (%p190) target = $region20
        $region19: #{transformer_forward.17} parent=11 // pred_region
          %s193 = smul.u32 2, %s20
          %s194 = smul.u32 2, %s21
          %p195 = scmp.lt.s32.totalorder %s193, 1
          %s196 = scalar_select %p195, %s193, 1
          %p197 = scmp.lt.s32.totalorder %s194, 1
          %s198 = scalar_select %p197, %s194, 1
          %s199 = smul.addr %s196, 2
          %s200 = sadd.s32 %s198, %s199
          %s201 = smul.addr %s200, 4
          %s202 = scalar_lea.vmem %s3, %s201
          %s203 = smul.u32 2, %s20
          %s204 = smul.u32 2, %s21
        $region20: #{transformer_forward.17} parent=11 // pred_fallthru
          _
      $region12: #{transformer_forward.17} parent=5 // pred_fallthru
        _
      %p205 = scmp.lt.s32.totalorder %s10, 2
      // Predicated region
      $region21: #{transformer_forward.17} parent=5 // pred_check
        %p206 = pneg %p205
      $region22: #{transformer_forward.17} parent=5 // pred_check_branch
        %208 = sbr.rel (%p206) target = $region24
      $region23: #{transformer_forward.17} parent=5 // pred_region
        // Predicated region
        $region25: #{transformer_forward.17} parent=23 // pred_check
          %p209 = pneg %p51
        $region26: #{transformer_forward.17} parent=23 // pred_check_branch
          %211 = sbr.rel (%p209) target = $region28
        $region27: #{transformer_forward.17} parent=23 // pred_region
          %s212 = sand.u32 %s41, 1
          %s213 = sand.u32 %s41, 1
          %s214 = smul.addr %s213, 64
          %s215 = scalar_lea.vmem [#allocation3], %s214
          %s216 = smul.u32 2, %s17
          %s217 = smul.u32 8, %s19
          %s218 = smul.addr %s216, 16
          %s219 = sadd.s32 %s217, %s218
          %s220 = smul.addr %s219, 4
          %s221 = scalar_lea.vmem %s0, %s220
          // Predicated region
          $region29: #{transformer_forward.17} parent=27 // pred_check
            _
          $region30: #{transformer_forward.17} parent=27 // pred_check_branch
            %223 = sbr.rel (0) target = $region32
          $region31: #{transformer_forward.17} parent=27 // pred_region
            // Predicated region
            $region33: #{transformer_forward.17} parent=31 // pred_check
              _
            $region34: #{transformer_forward.17} parent=31 // pred_check_branch
              %225 = sbr.rel (0) target = $region36
            $region35: #{transformer_forward.17} parent=31 // pred_region
              loop: start=0, step=1, limit=1
              $region37: #{transformer_forward.17} parent=35 // loop_pre_header
                _
              $region38: #{transformer_forward.17} parent=35 // loop_header
                %s227 = sphi 0, %s231
                %p228 = scmp.ge.s32.totalorder %s227, 1
                %s232 = sphi %s221, %s221
                %s233 = sphi %s215, %s215
              $region39: #{transformer_forward.17} parent=35 // loop_header_branch
                %230 = sbr.rel (%p228) target = $region43
              $region40: #{transformer_forward.17} parent=35 // loop_body
                %v234 = vld [vmem:[%s232] sm:$0xff]
                %235 = vst [vmem:[%s233] sm:$0xff] %v234
                %v236 = vld [vmem:[%s232 + $0x8] sm:$0xff]
                %237 = vst [vmem:[%s233 + $0x8] sm:$0xff] %v236
                %v238 = vld [vmem:[%s232 + $0x10] sm:$0xff]
                %239 = vst [vmem:[%s233 + $0x10] sm:$0xff] %v238
                %v240 = vld [vmem:[%s232 + $0x18] sm:$0xff]
                %241 = vst [vmem:[%s233 + $0x18] sm:$0xff] %v240
                %v242 = vld [vmem:[%s232 + $0x40] sm:$0xff]
                %243 = vst [vmem:[%s233 + $0x20] sm:$0xff] %v242
                %v244 = vld [vmem:[%s232 + $0x48] sm:$0xff]
                %245 = vst [vmem:[%s233 + $0x28] sm:$0xff] %v244
                %v246 = vld [vmem:[%s232 + $0x50] sm:$0xff]
                %247 = vst [vmem:[%s233 + $0x30] sm:$0xff] %v246
                %v248 = vld [vmem:[%s232 + $0x58] sm:$0xff]
                %249 = vst [vmem:[%s233 + $0x38] sm:$0xff] %v248
              $region41: #{transformer_forward.17} parent=35 // loop_footer
                %s231 = sadd.s32 1, %s227
              $region42: #{transformer_forward.17} parent=35 // loop_footer_branch
                %226 = sbr.rel target = $region38
              $region43: #{transformer_forward.17} parent=35 // loop_exit
                _
            $region36: #{transformer_forward.17} parent=31 // pred_fallthru
              _
            // Predicated region
            $region44: #{transformer_forward.17} parent=31 // pred_check
              _
            $region45: #{transformer_forward.17} parent=31 // pred_check_branch
              %251 = sbr.rel target = $region47
            $region46: #{transformer_forward.17} parent=31 // pred_region
              _
            $region47: #{transformer_forward.17} parent=31 // pred_fallthru
              _
          $region32: #{transformer_forward.17} parent=27 // pred_fallthru
            _
          %252 = vnop
        $region28: #{transformer_forward.17} parent=23 // pred_fallthru
          _
        // Predicated region
        $region48: #{transformer_forward.17} parent=23 // pred_check
          %p253 = pneg %p79
        $region49: #{transformer_forward.17} parent=23 // pred_check_branch
          %255 = sbr.rel (%p253) target = $region51
        $region50: #{transformer_forward.17} parent=23 // pred_region
          %s256 = smul.u32 128, %s19
          %s257 = smul.u32 2, %s18
          %p258 = scmp.lt.s32.totalorder %s256, 255
          %s259 = scalar_select %p258, %s256, 255
          %p260 = scmp.lt.s32.totalorder %s257, 1
          %s261 = scalar_select %p260, %s257, 1
          %s262 = smul.addr %s259, 2
          %s263 = sadd.s32 %s261, %s262
          %s264 = smul.addr %s263, 4
          %s265 = scalar_lea.vmem %s1, %s264
          %s266 = smul.u32 128, %s19
          %s267 = smul.u32 2, %s18
        $region51: #{transformer_forward.17} parent=23 // pred_fallthru
          _
      $region24: #{transformer_forward.17} parent=5 // pred_fallthru
        _
      %p268 = scmp.le.s32.totalorder 1, %s10
      %p269 = scmp.lt.s32.totalorder %s10, 3
      %p270 = pnand %p268, %p269
      %p271 = pneg %p270
      // Predicated region
      $region52: #{transformer_forward.17} parent=5 // pred_check
        _
      $region53: #{transformer_forward.17} parent=5 // pred_check_branch
        %273 = sbr.rel (%p270) target = $region55
      $region54: #{transformer_forward.17} parent=5 // pred_region
        %s274 = ssub.s32 %s10, 1
        %s275 = sand.u32 %s44, 1
        %s276 = sand.u32 %s44, 1
        %s277 = smul.addr %s276, 64
        %s278 = scalar_lea.vmem [#allocation3], %s277
        // Predicated region
        $region56: #{transformer_forward.17} parent=54 // pred_check
          %p279 = pneg %p57
        $region57: #{transformer_forward.17} parent=54 // pred_check_branch
          %281 = sbr.rel (%p279) target = $region59
        $region58: #{transformer_forward.17} parent=54 // pred_region
          _
        $region59: #{transformer_forward.17} parent=54 // pred_fallthru
          _
        %s282 = sand.u32 %s44, 1
        %s283 = sand.u32 %s44, 1
        %s284 = smul.addr %s283, 64
        %s285 = scalar_lea.vmem [#allocation3], %s284
        %p286 = pneg %p57
        %p287 = pneg %p54
        %s288 = smul.u32 128, %s22
        %s289 = smul.u32 2, %s21
        %p290 = scmp.lt.s32.totalorder %s288, 255
        %s291 = scalar_select %p290, %s288, 255
        %p292 = scmp.lt.s32.totalorder %s289, 1
        %s293 = scalar_select %p292, %s289, 1
        %s294 = smul.addr %s291, 2
        %s295 = sadd.s32 %s293, %s294
        %s296 = smul.addr %s295, 4
        %s297 = scalar_lea.vmem %s1, %s296
        %p298 = pneg %p85
        %p299 = pneg %p82
        %s300 = smul.u32 2, %s21
        %p301 = scmp.lt.s32.totalorder %s300, 1
        %s302 = scalar_select %p301, %s300, 1
        %s303 = scalar_lea.vmem %s2, %s302
        %p304 = pneg %p111
        %p305 = pneg %p108
        %s306 = smul.u32 2, %s20
        %s307 = smul.u32 2, %s21
        %p308 = scmp.lt.s32.totalorder %s306, 1
        %s309 = scalar_select %p308, %s306, 1
        %p310 = scmp.lt.s32.totalorder %s307, 1
        %s311 = scalar_select %p310, %s307, 1
        %s312 = smul.addr %s309, 2
        %s313 = sadd.s32 %s311, %s312
        %s314 = smul.addr %s313, 4
        %s315 = scalar_lea.vmem %s3, %s314
        %p316 = pneg %p139
        %p317 = pneg %p136
        %p318 = pneg %p167
        %p319 = pneg %p164
        %s320 = smul.u32 2, %s20
        %s321 = smul.u32 2, %s21
        %p322 = scmp.lt.s32.totalorder %s320, 1
        %s323 = scalar_select %p322, %s320, 1
        %p324 = scmp.lt.s32.totalorder %s321, 1
        %s325 = scalar_select %p324, %s321, 1
        %s326 = smul.addr %s323, 2
        %s327 = sadd.s32 %s325, %s326
        %s328 = smul.addr %s327, 4
        %s329 = scalar_lea.vmem %s4, %s328
        %s330 = smul.u32 2, %s20
        %s331 = smul.u32 8, %s22
        %s332 = smul.u32 128, %s22
        %s333 = smul.u32 2, %s21
        %p334 = scmp.lt.s32.totalorder %s332, 255
        %s335 = scalar_select %p334, %s332, 255
        %p336 = scmp.lt.s32.totalorder %s333, 1
        %s337 = scalar_select %p336, %s333, 1
        %s338 = smul.addr %s335, 2
        %s339 = sadd.s32 %s337, %s338
        %s340 = smul.addr %s339, 4
        %s341 = scalar_lea.vmem %s1, %s340
        %s342 = smul.u32 128, %s22
        %s343 = smul.u32 2, %s21
        %s344 = smul.u32 2, %s21
        %p345 = scmp.lt.s32.totalorder %s344, 1
        %s346 = scalar_select %p345, %s344, 1
        %s347 = scalar_lea.vmem %s2, %s346
        %s348 = smul.u32 2, %s21
        %s349 = smul.u32 2, %s20
        %s350 = smul.u32 2, %s21
        %p351 = scmp.lt.s32.totalorder %s349, 1
        %s352 = scalar_select %p351, %s349, 1
        %p353 = scmp.lt.s32.totalorder %s350, 1
        %s354 = scalar_select %p353, %s350, 1
        %s355 = smul.addr %s352, 2
        %s356 = sadd.s32 %s354, %s355
        %s357 = smul.addr %s356, 4
        %s358 = scalar_lea.vmem %s3, %s357
        %s359 = smul.u32 2, %s20
        %s360 = smul.u32 2, %s21
        %s361 = smul.u32 2, %s20
        %s362 = smul.u32 2, %s21
        %p363 = scmp.lt.s32.totalorder %s361, 1
        %s364 = scalar_select %p363, %s361, 1
        %p365 = scmp.lt.s32.totalorder %s362, 1
        %s366 = scalar_select %p365, %s362, 1
        %s367 = smul.addr %s364, 2
        %s368 = sadd.s32 %s366, %s367
        %s369 = smul.addr %s368, 4
        %s370 = scalar_lea.vmem %s4, %s369
        %s371 = smul.u32 2, %s20
        %s372 = smul.u32 2, %s21
        %v373 = vld [vmem:[%s278] sm:$0xff]
        %v374 = vld [vmem:[%s278 + $0x8] sm:$0xff]
        %v375 = vld [vmem:[%s278 + $0x10] sm:$0xff]
        %v376 = vld [vmem:[%s278 + $0x18] sm:$0xff]
        %v377 = vld [vmem:[%s278 + $0x20] sm:$0xff]
        %v378 = vld [vmem:[%s278 + $0x28] sm:$0xff]
        %v379 = vld [vmem:[%s278 + $0x30] sm:$0xff]
        %v380 = vld [vmem:[%s278 + $0x38] sm:$0xff]
        %v381 = vld [vmem:[%s341] sm:$0xff]
        %v382 = vld [vmem:[%s341 + $0x8] sm:$0xff]
        %v383 = vld [vmem:[%s341 + $0x10] sm:$0xff]
        %v384 = vld [vmem:[%s341 + $0x18] sm:$0xff]
        %v385 = vld [vmem:[%s341 + $0x20] sm:$0xff]
        %v386 = vld [vmem:[%s341 + $0x28] sm:$0xff]
        %v387 = vld [vmem:[%s341 + $0x30] sm:$0xff]
        %v388 = vld [vmem:[%s341 + $0x38] sm:$0xff]
        %v389 = vld [vmem:[%s341 + $0x40] sm:$0xff]
        %v390 = vld [vmem:[%s341 + $0x48] sm:$0xff]
        %v391 = vld [vmem:[%s341 + $0x50] sm:$0xff]
        %v392 = vld [vmem:[%s341 + $0x58] sm:$0xff]
        %v393 = vld [vmem:[%s341 + $0x60] sm:$0xff]
        %v394 = vld [vmem:[%s341 + $0x68] sm:$0xff]
        %v395 = vld [vmem:[%s341 + $0x70] sm:$0xff]
        %v396 = vld [vmem:[%s341 + $0x78] sm:$0xff]
        %v397 = vld [vmem:[%s341 + $0x80] sm:$0xff]
        %v398 = vld [vmem:[%s341 + $0x88] sm:$0xff]
        %v399 = vld [vmem:[%s341 + $0x90] sm:$0xff]
        %v400 = vld [vmem:[%s341 + $0x98] sm:$0xff]
        %v401 = vld [vmem:[%s341 + $0xa0] sm:$0xff]
        %v402 = vld [vmem:[%s341 + $0xa8] sm:$0xff]
        %v403 = vld [vmem:[%s341 + $0xb0] sm:$0xff]
        %v404 = vld [vmem:[%s341 + $0xb8] sm:$0xff]
        %v405 = vld [vmem:[%s341 + $0xc0] sm:$0xff]
        %v406 = vld [vmem:[%s341 + $0xc8] sm:$0xff]
        %v407 = vld [vmem:[%s341 + $0xd0] sm:$0xff]
        %v408 = vld [vmem:[%s341 + $0xd8] sm:$0xff]
        %v409 = vld [vmem:[%s341 + $0xe0] sm:$0xff]
        %v410 = vld [vmem:[%s341 + $0xe8] sm:$0xff]
        %v411 = vld [vmem:[%s341 + $0xf0] sm:$0xff]
        %v412 = vld [vmem:[%s341 + $0xf8] sm:$0xff]
        %v413 = vld [vmem:[%s341 + $0x100] sm:$0xff]
        %v414 = vld [vmem:[%s341 + $0x108] sm:$0xff]
        %v415 = vld [vmem:[%s341 + $0x110] sm:$0xff]
        %v416 = vld [vmem:[%s341 + $0x118] sm:$0xff]
        %v417 = vld [vmem:[%s341 + $0x120] sm:$0xff]
        %v418 = vld [vmem:[%s341 + $0x128] sm:$0xff]
        %v419 = vld [vmem:[%s341 + $0x130] sm:$0xff]
        %v420 = vld [vmem:[%s341 + $0x138] sm:$0xff]
        %v421 = vld [vmem:[%s341 + $0x140] sm:$0xff]
        %v422 = vld [vmem:[%s341 + $0x148] sm:$0xff]
        %v423 = vld [vmem:[%s341 + $0x150] sm:$0xff]
        %v424 = vld [vmem:[%s341 + $0x158] sm:$0xff]
        %v425 = vld [vmem:[%s341 + $0x160] sm:$0xff]
        %v426 = vld [vmem:[%s341 + $0x168] sm:$0xff]
        %v427 = vld [vmem:[%s341 + $0x170] sm:$0xff]
        %v428 = vld [vmem:[%s341 + $0x178] sm:$0xff]
        %v429 = vld [vmem:[%s341 + $0x180] sm:$0xff]
        %v430 = vld [vmem:[%s341 + $0x188] sm:$0xff]
        %v431 = vld [vmem:[%s341 + $0x190] sm:$0xff]
        %v432 = vld [vmem:[%s341 + $0x198] sm:$0xff]
        %v433 = vld [vmem:[%s341 + $0x1a0] sm:$0xff]
        %v434 = vld [vmem:[%s341 + $0x1a8] sm:$0xff]
        %v435 = vld [vmem:[%s341 + $0x1b0] sm:$0xff]
        %v436 = vld [vmem:[%s341 + $0x1b8] sm:$0xff]
        %v437 = vld [vmem:[%s341 + $0x1c0] sm:$0xff]
        %v438 = vld [vmem:[%s341 + $0x1c8] sm:$0xff]
        %v439 = vld [vmem:[%s341 + $0x1d0] sm:$0xff]
        %v440 = vld [vmem:[%s341 + $0x1d8] sm:$0xff]
        %v441 = vld [vmem:[%s341 + $0x1e0] sm:$0xff]
        %v442 = vld [vmem:[%s341 + $0x1e8] sm:$0xff]
        %v443 = vld [vmem:[%s341 + $0x1f0] sm:$0xff]
        %v444 = vld [vmem:[%s341 + $0x1f8] sm:$0xff]
        %v445 = vld [vmem:[%s341 + $0x200] sm:$0xff]
        %v446 = vld [vmem:[%s341 + $0x208] sm:$0xff]
        %v447 = vld [vmem:[%s341 + $0x210] sm:$0xff]
        %v448 = vld [vmem:[%s341 + $0x218] sm:$0xff]
        %v449 = vld [vmem:[%s341 + $0x220] sm:$0xff]
        %v450 = vld [vmem:[%s341 + $0x228] sm:$0xff]
        %v451 = vld [vmem:[%s341 + $0x230] sm:$0xff]
        %v452 = vld [vmem:[%s341 + $0x238] sm:$0xff]
        %v453 = vld [vmem:[%s341 + $0x240] sm:$0xff]
        %v454 = vld [vmem:[%s341 + $0x248] sm:$0xff]
        %v455 = vld [vmem:[%s341 + $0x250] sm:$0xff]
        %v456 = vld [vmem:[%s341 + $0x258] sm:$0xff]
        %v457 = vld [vmem:[%s341 + $0x260] sm:$0xff]
        %v458 = vld [vmem:[%s341 + $0x268] sm:$0xff]
        %v459 = vld [vmem:[%s341 + $0x270] sm:$0xff]
        %v460 = vld [vmem:[%s341 + $0x278] sm:$0xff]
        %v461 = vld [vmem:[%s341 + $0x280] sm:$0xff]
        %v462 = vld [vmem:[%s341 + $0x288] sm:$0xff]
        %v463 = vld [vmem:[%s341 + $0x290] sm:$0xff]
        %v464 = vld [vmem:[%s341 + $0x298] sm:$0xff]
        %v465 = vld [vmem:[%s341 + $0x2a0] sm:$0xff]
        %v466 = vld [vmem:[%s341 + $0x2a8] sm:$0xff]
        %v467 = vld [vmem:[%s341 + $0x2b0] sm:$0xff]
        %v468 = vld [vmem:[%s341 + $0x2b8] sm:$0xff]
        %v469 = vld [vmem:[%s341 + $0x2c0] sm:$0xff]
        %v470 = vld [vmem:[%s341 + $0x2c8] sm:$0xff]
        %v471 = vld [vmem:[%s341 + $0x2d0] sm:$0xff]
        %v472 = vld [vmem:[%s341 + $0x2d8] sm:$0xff]
        %v473 = vld [vmem:[%s341 + $0x2e0] sm:$0xff]
        %v474 = vld [vmem:[%s341 + $0x2e8] sm:$0xff]
        %v475 = vld [vmem:[%s341 + $0x2f0] sm:$0xff]
        %v476 = vld [vmem:[%s341 + $0x2f8] sm:$0xff]
        %v477 = vld [vmem:[%s341 + $0x300] sm:$0xff]
        %v478 = vld [vmem:[%s341 + $0x308] sm:$0xff]
        %v479 = vld [vmem:[%s341 + $0x310] sm:$0xff]
        %v480 = vld [vmem:[%s341 + $0x318] sm:$0xff]
        %v481 = vld [vmem:[%s341 + $0x320] sm:$0xff]
        %v482 = vld [vmem:[%s341 + $0x328] sm:$0xff]
        %v483 = vld [vmem:[%s341 + $0x330] sm:$0xff]
        %v484 = vld [vmem:[%s341 + $0x338] sm:$0xff]
        %v485 = vld [vmem:[%s341 + $0x340] sm:$0xff]
        %v486 = vld [vmem:[%s341 + $0x348] sm:$0xff]
        %v487 = vld [vmem:[%s341 + $0x350] sm:$0xff]
        %v488 = vld [vmem:[%s341 + $0x358] sm:$0xff]
        %v489 = vld [vmem:[%s341 + $0x360] sm:$0xff]
        %v490 = vld [vmem:[%s341 + $0x368] sm:$0xff]
        %v491 = vld [vmem:[%s341 + $0x370] sm:$0xff]
        %v492 = vld [vmem:[%s341 + $0x378] sm:$0xff]
        %v493 = vld [vmem:[%s341 + $0x380] sm:$0xff]
        %v494 = vld [vmem:[%s341 + $0x388] sm:$0xff]
        %v495 = vld [vmem:[%s341 + $0x390] sm:$0xff]
        %v496 = vld [vmem:[%s341 + $0x398] sm:$0xff]
        %v497 = vld [vmem:[%s341 + $0x3a0] sm:$0xff]
        %v498 = vld [vmem:[%s341 + $0x3a8] sm:$0xff]
        %v499 = vld [vmem:[%s341 + $0x3b0] sm:$0xff]
        %v500 = vld [vmem:[%s341 + $0x3b8] sm:$0xff]
        %v501 = vld [vmem:[%s341 + $0x3c0] sm:$0xff]
        %v502 = vld [vmem:[%s341 + $0x3c8] sm:$0xff]
        %v503 = vld [vmem:[%s341 + $0x3d0] sm:$0xff]
        %v504 = vld [vmem:[%s341 + $0x3d8] sm:$0xff]
        %v505 = vld [vmem:[%s341 + $0x3e0] sm:$0xff]
        %v506 = vld [vmem:[%s341 + $0x3e8] sm:$0xff]
        %v507 = vld [vmem:[%s341 + $0x3f0] sm:$0xff]
        %v508 = vld [vmem:[%s341 + $0x3f8] sm:$0xff]
        %v517 = vunpack.c.l.b16 %v373
        %v518 = vunpack.c.h.b16 %v373
        %v519 = vunpack.c.l.b16 %v374
        %v520 = vunpack.c.h.b16 %v374
        %v521 = vunpack.c.l.b16 %v375
        %v522 = vunpack.c.h.b16 %v375
        %v523 = vunpack.c.l.b16 %v376
        %v524 = vunpack.c.h.b16 %v376
        %v525 = vunpack.c.l.b16 %v377
        %v526 = vunpack.c.h.b16 %v377
        %v527 = vunpack.c.l.b16 %v378
        %v528 = vunpack.c.h.b16 %v378
        %v529 = vunpack.c.l.b16 %v379
        %v530 = vunpack.c.h.b16 %v379
        %v531 = vunpack.c.l.b16 %v380
        %v532 = vunpack.c.h.b16 %v380
        %v533 = vpack.c.b16 %v525, %v517
        %v534 = vpack.c.b16 %v526, %v518
        %v535 = vpack.c.b16 %v527, %v519
        %v536 = vpack.c.b16 %v528, %v520
        %v537 = vpack.c.b16 %v529, %v521
        %v538 = vpack.c.b16 %v530, %v522
        %v539 = vpack.c.b16 %v531, %v523
        %v540 = vpack.c.b16 %v532, %v524
        %v677 = vunpack.c.l.b16 %v381
        %v678 = vunpack.c.h.b16 %v381
        %v679 = vunpack.c.l.b16 %v382
        %v680 = vunpack.c.h.b16 %v382
        %v681 = vunpack.c.l.b16 %v383
        %v682 = vunpack.c.h.b16 %v383
        %v683 = vunpack.c.l.b16 %v384
        %v684 = vunpack.c.h.b16 %v384
        %v685 = vunpack.c.l.b16 %v385
        %v686 = vunpack.c.h.b16 %v385
        %v687 = vunpack.c.l.b16 %v386
        %v688 = vunpack.c.h.b16 %v386
        %v689 = vunpack.c.l.b16 %v387
        %v690 = vunpack.c.h.b16 %v387
        %v691 = vunpack.c.l.b16 %v388
        %v692 = vunpack.c.h.b16 %v388
        %v693 = vunpack.c.l.b16 %v389
        %v694 = vunpack.c.h.b16 %v389
        %v695 = vunpack.c.l.b16 %v390
        %v696 = vunpack.c.h.b16 %v390
        %v697 = vunpack.c.l.b16 %v391
        %v698 = vunpack.c.h.b16 %v391
        %v699 = vunpack.c.l.b16 %v392
        %v700 = vunpack.c.h.b16 %v392
        %v701 = vunpack.c.l.b16 %v393
        %v702 = vunpack.c.h.b16 %v393
        %v703 = vunpack.c.l.b16 %v394
        %v704 = vunpack.c.h.b16 %v394
        %v705 = vunpack.c.l.b16 %v395
        %v706 = vunpack.c.h.b16 %v395
        %v707 = vunpack.c.l.b16 %v396
        %v708 = vunpack.c.h.b16 %v396
        %v709 = vunpack.c.l.b16 %v397
        %v710 = vunpack.c.h.b16 %v397
        %v711 = vunpack.c.l.b16 %v398
        %v712 = vunpack.c.h.b16 %v398
        %v713 = vunpack.c.l.b16 %v399
        %v714 = vunpack.c.h.b16 %v399
        %v715 = vunpack.c.l.b16 %v400
        %v716 = vunpack.c.h.b16 %v400
        %v717 = vunpack.c.l.b16 %v401
        %v718 = vunpack.c.h.b16 %v401
        %v719 = vunpack.c.l.b16 %v402
        %v720 = vunpack.c.h.b16 %v402
        %v721 = vunpack.c.l.b16 %v403
        %v722 = vunpack.c.h.b16 %v403
        %v723 = vunpack.c.l.b16 %v404
        %v724 = vunpack.c.h.b16 %v404
        %v725 = vunpack.c.l.b16 %v405
        %v726 = vunpack.c.h.b16 %v405
        %v727 = vunpack.c.l.b16 %v406
        %v728 = vunpack.c.h.b16 %v406
        %v729 = vunpack.c.l.b16 %v407
        %v730 = vunpack.c.h.b16 %v407
        %v731 = vunpack.c.l.b16 %v408
        %v732 = vunpack.c.h.b16 %v408
        %v733 = vunpack.c.l.b16 %v409
        %v734 = vunpack.c.h.b16 %v409
        %v735 = vunpack.c.l.b16 %v410
        %v736 = vunpack.c.h.b16 %v410
        %v737 = vunpack.c.l.b16 %v411
        %v738 = vunpack.c.h.b16 %v411
        %v739 = vunpack.c.l.b16 %v412
        %v740 = vunpack.c.h.b16 %v412
        %v741 = vunpack.c.l.b16 %v413
        %v742 = vunpack.c.h.b16 %v413
        %v743 = vunpack.c.l.b16 %v414
        %v744 = vunpack.c.h.b16 %v414
        %v745 = vunpack.c.l.b16 %v415
        %v746 = vunpack.c.h.b16 %v415
        %v747 = vunpack.c.l.b16 %v416
        %v748 = vunpack.c.h.b16 %v416
        %v749 = vunpack.c.l.b16 %v417
        %v750 = vunpack.c.h.b16 %v417
        %v751 = vunpack.c.l.b16 %v418
        %v752 = vunpack.c.h.b16 %v418
        %v753 = vunpack.c.l.b16 %v419
        %v754 = vunpack.c.h.b16 %v419
        %v755 = vunpack.c.l.b16 %v420
        %v756 = vunpack.c.h.b16 %v420
        %v757 = vunpack.c.l.b16 %v421
        %v758 = vunpack.c.h.b16 %v421
        %v759 = vunpack.c.l.b16 %v422
        %v760 = vunpack.c.h.b16 %v422
        %v761 = vunpack.c.l.b16 %v423
        %v762 = vunpack.c.h.b16 %v423
        %v763 = vunpack.c.l.b16 %v424
        %v764 = vunpack.c.h.b16 %v424
        %v765 = vunpack.c.l.b16 %v425
        %v766 = vunpack.c.h.b16 %v425
        %v767 = vunpack.c.l.b16 %v426
        %v768 = vunpack.c.h.b16 %v426
        %v769 = vunpack.c.l.b16 %v427
        %v770 = vunpack.c.h.b16 %v427
        %v771 = vunpack.c.l.b16 %v428
        %v772 = vunpack.c.h.b16 %v428
        %v773 = vunpack.c.l.b16 %v429
        %v774 = vunpack.c.h.b16 %v429
        %v775 = vunpack.c.l.b16 %v430
        %v776 = vunpack.c.h.b16 %v430
        %v777 = vunpack.c.l.b16 %v431
        %v778 = vunpack.c.h.b16 %v431
        %v779 = vunpack.c.l.b16 %v432
        %v780 = vunpack.c.h.b16 %v432
        %v781 = vunpack.c.l.b16 %v433
        %v782 = vunpack.c.h.b16 %v433
        %v783 = vunpack.c.l.b16 %v434
        %v784 = vunpack.c.h.b16 %v434
        %v785 = vunpack.c.l.b16 %v435
        %v786 = vunpack.c.h.b16 %v435
        %v787 = vunpack.c.l.b16 %v436
        %v788 = vunpack.c.h.b16 %v436
        %v789 = vunpack.c.l.b16 %v437
        %v790 = vunpack.c.h.b16 %v437
        %v791 = vunpack.c.l.b16 %v438
        %v792 = vunpack.c.h.b16 %v438
        %v793 = vunpack.c.l.b16 %v439
        %v794 = vunpack.c.h.b16 %v439
        %v795 = vunpack.c.l.b16 %v440
        %v796 = vunpack.c.h.b16 %v440
        %v797 = vunpack.c.l.b16 %v441
        %v798 = vunpack.c.h.b16 %v441
        %v799 = vunpack.c.l.b16 %v442
        %v800 = vunpack.c.h.b16 %v442
        %v801 = vunpack.c.l.b16 %v443
        %v802 = vunpack.c.h.b16 %v443
        %v803 = vunpack.c.l.b16 %v444
        %v804 = vunpack.c.h.b16 %v444
        %v805 = vunpack.c.l.b16 %v445
        %v806 = vunpack.c.h.b16 %v445
        %v807 = vunpack.c.l.b16 %v446
        %v808 = vunpack.c.h.b16 %v446
        %v809 = vunpack.c.l.b16 %v447
        %v810 = vunpack.c.h.b16 %v447
        %v811 = vunpack.c.l.b16 %v448
        %v812 = vunpack.c.h.b16 %v448
        %v813 = vunpack.c.l.b16 %v449
        %v814 = vunpack.c.h.b16 %v449
        %v815 = vunpack.c.l.b16 %v450
        %v816 = vunpack.c.h.b16 %v450
        %v817 = vunpack.c.l.b16 %v451
        %v818 = vunpack.c.h.b16 %v451
        %v819 = vunpack.c.l.b16 %v452
        %v820 = vunpack.c.h.b16 %v452
        %v821 = vunpack.c.l.b16 %v453
        %v822 = vunpack.c.h.b16 %v453
        %v823 = vunpack.c.l.b16 %v454
        %v824 = vunpack.c.h.b16 %v454
        %v825 = vunpack.c.l.b16 %v455
        %v826 = vunpack.c.h.b16 %v455
        %v827 = vunpack.c.l.b16 %v456
        %v828 = vunpack.c.h.b16 %v456
        %v829 = vunpack.c.l.b16 %v457
        %v830 = vunpack.c.h.b16 %v457
        %v831 = vunpack.c.l.b16 %v458
        %v832 = vunpack.c.h.b16 %v458
        %v833 = vunpack.c.l.b16 %v459
        %v834 = vunpack.c.h.b16 %v459
        %v835 = vunpack.c.l.b16 %v460
        %v836 = vunpack.c.h.b16 %v460
        %v837 = vunpack.c.l.b16 %v461
        %v838 = vunpack.c.h.b16 %v461
        %v839 = vunpack.c.l.b16 %v462
        %v840 = vunpack.c.h.b16 %v462
        %v841 = vunpack.c.l.b16 %v463
        %v842 = vunpack.c.h.b16 %v463
        %v843 = vunpack.c.l.b16 %v464
        %v844 = vunpack.c.h.b16 %v464
        %v845 = vunpack.c.l.b16 %v465
        %v846 = vunpack.c.h.b16 %v465
        %v847 = vunpack.c.l.b16 %v466
        %v848 = vunpack.c.h.b16 %v466
        %v849 = vunpack.c.l.b16 %v467
        %v850 = vunpack.c.h.b16 %v467
        %v851 = vunpack.c.l.b16 %v468
        %v852 = vunpack.c.h.b16 %v468
        %v853 = vunpack.c.l.b16 %v469
        %v854 = vunpack.c.h.b16 %v469
        %v855 = vunpack.c.l.b16 %v470
        %v856 = vunpack.c.h.b16 %v470
        %v857 = vunpack.c.l.b16 %v471
        %v858 = vunpack.c.h.b16 %v471
        %v859 = vunpack.c.l.b16 %v472
        %v860 = vunpack.c.h.b16 %v472
        %v861 = vunpack.c.l.b16 %v473
        %v862 = vunpack.c.h.b16 %v473
        %v863 = vunpack.c.l.b16 %v474
        %v864 = vunpack.c.h.b16 %v474
        %v865 = vunpack.c.l.b16 %v475
        %v866 = vunpack.c.h.b16 %v475
        %v867 = vunpack.c.l.b16 %v476
        %v868 = vunpack.c.h.b16 %v476
        %v869 = vunpack.c.l.b16 %v477
        %v870 = vunpack.c.h.b16 %v477
        %v871 = vunpack.c.l.b16 %v478
        %v872 = vunpack.c.h.b16 %v478
        %v873 = vunpack.c.l.b16 %v479
        %v874 = vunpack.c.h.b16 %v479
        %v875 = vunpack.c.l.b16 %v480
        %v876 = vunpack.c.h.b16 %v480
        %v877 = vunpack.c.l.b16 %v481
        %v878 = vunpack.c.h.b16 %v481
        %v879 = vunpack.c.l.b16 %v482
        %v880 = vunpack.c.h.b16 %v482
        %v881 = vunpack.c.l.b16 %v483
        %v882 = vunpack.c.h.b16 %v483
        %v883 = vunpack.c.l.b16 %v484
        %v884 = vunpack.c.h.b16 %v484
        %v885 = vunpack.c.l.b16 %v485
        %v886 = vunpack.c.h.b16 %v485
        %v887 = vunpack.c.l.b16 %v486
        %v888 = vunpack.c.h.b16 %v486
        %v889 = vunpack.c.l.b16 %v487
        %v890 = vunpack.c.h.b16 %v487
        %v891 = vunpack.c.l.b16 %v488
        %v892 = vunpack.c.h.b16 %v488
        %v893 = vunpack.c.l.b16 %v489
        %v894 = vunpack.c.h.b16 %v489
        %v895 = vunpack.c.l.b16 %v490
        %v896 = vunpack.c.h.b16 %v490
        %v897 = vunpack.c.l.b16 %v491
        %v898 = vunpack.c.h.b16 %v491
        %v899 = vunpack.c.l.b16 %v492
        %v900 = vunpack.c.h.b16 %v492
        %v901 = vunpack.c.l.b16 %v493
        %v902 = vunpack.c.h.b16 %v493
        %v903 = vunpack.c.l.b16 %v494
        %v904 = vunpack.c.h.b16 %v494
        %v905 = vunpack.c.l.b16 %v495
        %v906 = vunpack.c.h.b16 %v495
        %v907 = vunpack.c.l.b16 %v496
        %v908 = vunpack.c.h.b16 %v496
        %v909 = vunpack.c.l.b16 %v497
        %v910 = vunpack.c.h.b16 %v497
        %v911 = vunpack.c.l.b16 %v498
        %v912 = vunpack.c.h.b16 %v498
        %v913 = vunpack.c.l.b16 %v499
        %v914 = vunpack.c.h.b16 %v499
        %v915 = vunpack.c.l.b16 %v500
        %v916 = vunpack.c.h.b16 %v500
        %v917 = vunpack.c.l.b16 %v501
        %v918 = vunpack.c.h.b16 %v501
        %v919 = vunpack.c.l.b16 %v502
        %v920 = vunpack.c.h.b16 %v502
        %v921 = vunpack.c.l.b16 %v503
        %v922 = vunpack.c.h.b16 %v503
        %v923 = vunpack.c.l.b16 %v504
        %v924 = vunpack.c.h.b16 %v504
        %v925 = vunpack.c.l.b16 %v505
        %v926 = vunpack.c.h.b16 %v505
        %v927 = vunpack.c.l.b16 %v506
        %v928 = vunpack.c.h.b16 %v506
        %v929 = vunpack.c.l.b16 %v507
        %v930 = vunpack.c.h.b16 %v507
        %v931 = vunpack.c.l.b16 %v508
        %v932 = vunpack.c.h.b16 %v508
        %v933 = vpack.c.b16 %v679, %v677
        %v934 = vpack.c.b16 %v680, %v678
        %v935 = vpack.c.b16 %v683, %v681
        %v936 = vpack.c.b16 %v684, %v682
        %v937 = vpack.c.b16 %v687, %v685
        %v938 = vpack.c.b16 %v688, %v686
        %v939 = vpack.c.b16 %v691, %v689
        %v940 = vpack.c.b16 %v692, %v690
        %v941 = vpack.c.b16 %v695, %v693
        %v942 = vpack.c.b16 %v696, %v694
        %v943 = vpack.c.b16 %v699, %v697
        %v944 = vpack.c.b16 %v700, %v698
        %v945 = vpack.c.b16 %v703, %v701
        %v946 = vpack.c.b16 %v704, %v702
        %v947 = vpack.c.b16 %v707, %v705
        %v948 = vpack.c.b16 %v708, %v706
        %v949 = vpack.c.b16 %v711, %v709
        %v950 = vpack.c.b16 %v712, %v710
        %v951 = vpack.c.b16 %v715, %v713
        %v952 = vpack.c.b16 %v716, %v714
        %v953 = vpack.c.b16 %v719, %v717
        %v954 = vpack.c.b16 %v720, %v718
        %v955 = vpack.c.b16 %v723, %v721
        %v956 = vpack.c.b16 %v724, %v722
        %v957 = vpack.c.b16 %v727, %v725
        %v958 = vpack.c.b16 %v728, %v726
        %v959 = vpack.c.b16 %v731, %v729
        %v960 = vpack.c.b16 %v732, %v730
        %v961 = vpack.c.b16 %v735, %v733
        %v962 = vpack.c.b16 %v736, %v734
        %v963 = vpack.c.b16 %v739, %v737
        %v964 = vpack.c.b16 %v740, %v738
        %v965 = vpack.c.b16 %v743, %v741
        %v966 = vpack.c.b16 %v744, %v742
        %v967 = vpack.c.b16 %v747, %v745
        %v968 = vpack.c.b16 %v748, %v746
        %v969 = vpack.c.b16 %v751, %v749
        %v970 = vpack.c.b16 %v752, %v750
        %v971 = vpack.c.b16 %v755, %v753
        %v972 = vpack.c.b16 %v756, %v754
        %v973 = vpack.c.b16 %v759, %v757
        %v974 = vpack.c.b16 %v760, %v758
        %v975 = vpack.c.b16 %v763, %v761
        %v976 = vpack.c.b16 %v764, %v762
        %v977 = vpack.c.b16 %v767, %v765
        %v978 = vpack.c.b16 %v768, %v766
        %v979 = vpack.c.b16 %v771, %v769
        %v980 = vpack.c.b16 %v772, %v770
        %v981 = vpack.c.b16 %v775, %v773
        %v982 = vpack.c.b16 %v776, %v774
        %v983 = vpack.c.b16 %v779, %v777
        %v984 = vpack.c.b16 %v780, %v778
        %v985 = vpack.c.b16 %v783, %v781
        %v986 = vpack.c.b16 %v784, %v782
        %v987 = vpack.c.b16 %v787, %v785
        %v988 = vpack.c.b16 %v788, %v786
        %v989 = vpack.c.b16 %v791, %v789
        %v990 = vpack.c.b16 %v792, %v790
        %v991 = vpack.c.b16 %v795, %v793
        %v992 = vpack.c.b16 %v796, %v794
        %v993 = vpack.c.b16 %v799, %v797
        %v994 = vpack.c.b16 %v800, %v798
        %v995 = vpack.c.b16 %v803, %v801
        %v996 = vpack.c.b16 %v804, %v802
        %v997 = vpack.c.b16 %v807, %v805
        %v998 = vpack.c.b16 %v808, %v806
        %v999 = vpack.c.b16 %v811, %v809
        %v1000 = vpack.c.b16 %v812, %v810
        %v1001 = vpack.c.b16 %v815, %v813
        %v1002 = vpack.c.b16 %v816, %v814
        %v1003 = vpack.c.b16 %v819, %v817
        %v1004 = vpack.c.b16 %v820, %v818
        %v1005 = vpack.c.b16 %v823, %v821
        %v1006 = vpack.c.b16 %v824, %v822
        %v1007 = vpack.c.b16 %v827, %v825
        %v1008 = vpack.c.b16 %v828, %v826
        %v1009 = vpack.c.b16 %v831, %v829
        %v1010 = vpack.c.b16 %v832, %v830
        %v1011 = vpack.c.b16 %v835, %v833
        %v1012 = vpack.c.b16 %v836, %v834
        %v1013 = vpack.c.b16 %v839, %v837
        %v1014 = vpack.c.b16 %v840, %v838
        %v1015 = vpack.c.b16 %v843, %v841
        %v1016 = vpack.c.b16 %v844, %v842
        %v1017 = vpack.c.b16 %v847, %v845
        %v1018 = vpack.c.b16 %v848, %v846
        %v1019 = vpack.c.b16 %v851, %v849
        %v1020 = vpack.c.b16 %v852, %v850
        %v1021 = vpack.c.b16 %v855, %v853
        %v1022 = vpack.c.b16 %v856, %v854
        %v1023 = vpack.c.b16 %v859, %v857
        %v1024 = vpack.c.b16 %v860, %v858
        %v1025 = vpack.c.b16 %v863, %v861
        %v1026 = vpack.c.b16 %v864, %v862
        %v1027 = vpack.c.b16 %v867, %v865
        %v1028 = vpack.c.b16 %v868, %v866
        %v1029 = vpack.c.b16 %v871, %v869
        %v1030 = vpack.c.b16 %v872, %v870
        %v1031 = vpack.c.b16 %v875, %v873
        %v1032 = vpack.c.b16 %v876, %v874
        %v1033 = vpack.c.b16 %v879, %v877
        %v1034 = vpack.c.b16 %v880, %v878
        %v1035 = vpack.c.b16 %v883, %v881
        %v1036 = vpack.c.b16 %v884, %v882
        %v1037 = vpack.c.b16 %v887, %v885
        %v1038 = vpack.c.b16 %v888, %v886
        %v1039 = vpack.c.b16 %v891, %v889
        %v1040 = vpack.c.b16 %v892, %v890
        %v1041 = vpack.c.b16 %v895, %v893
        %v1042 = vpack.c.b16 %v896, %v894
        %v1043 = vpack.c.b16 %v899, %v897
        %v1044 = vpack.c.b16 %v900, %v898
        %v1045 = vpack.c.b16 %v903, %v901
        %v1046 = vpack.c.b16 %v904, %v902
        %v1047 = vpack.c.b16 %v907, %v905
        %v1048 = vpack.c.b16 %v908, %v906
        %v1049 = vpack.c.b16 %v911, %v909
        %v1050 = vpack.c.b16 %v912, %v910
        %v1051 = vpack.c.b16 %v915, %v913
        %v1052 = vpack.c.b16 %v916, %v914
        %v1053 = vpack.c.b16 %v919, %v917
        %v1054 = vpack.c.b16 %v920, %v918
        %v1055 = vpack.c.b16 %v923, %v921
        %v1056 = vpack.c.b16 %v924, %v922
        %v1057 = vpack.c.b16 %v927, %v925
        %v1058 = vpack.c.b16 %v928, %v926
        %v1059 = vpack.c.b16 %v931, %v929
        %v1060 = vpack.c.b16 %v932, %v930
        %1189 = vmatprep.subr.bf16.mxu0 %v948
        %1190 = vmatpush1.bf16.msra.mxu0 %v947
        %1191 = vmatprep.subr.bf16.mxu0 %v946
        %1192 = vmatpush1.bf16.msra.mxu0 %v945
        %1193 = vmatprep.subr.bf16.mxu0 %v944
        %1194 = vmatpush1.bf16.msra.mxu0 %v943
        %1195 = vmatprep.subr.bf16.mxu0 %v942
        %1196 = vmatpush1.bf16.msra.mxu0 %v941
        %1197 = vmatprep.subr.bf16.mxu0 %v940
        %1198 = vmatpush1.bf16.msra.mxu0 %v939
        %1199 = vmatprep.subr.bf16.mxu0 %v938
        %1200 = vmatpush1.bf16.msra.mxu0 %v937
        %1201 = vmatprep.subr.bf16.mxu0 %v936
        %1202 = vmatpush1.bf16.msra.mxu0 %v935
        %1203 = vmatprep.subr.bf16.mxu0 %v934
        %1204 = vmatpush1.bf16.msra.mxu0 %v933
        %1205 = vmatprep.subr.bf16.mxu0 %v964
        %1206 = vmatpush2.bf16.msra.mxu0 %v963
        %1207 = vmatprep.subr.bf16.mxu0 %v962
        %1208 = vmatpush2.bf16.msra.mxu0 %v961
        %1209 = vmatprep.subr.bf16.mxu0 %v960
        %1210 = vmatpush2.bf16.msra.mxu0 %v959
        %1211 = vmatprep.subr.bf16.mxu0 %v958
        %1212 = vmatpush2.bf16.msra.mxu0 %v957
        %1213 = vmatprep.subr.bf16.mxu0 %v956
        %1214 = vmatpush2.bf16.msra.mxu0 %v955
        %1215 = vmatprep.subr.bf16.mxu0 %v954
        %1216 = vmatpush2.bf16.msra.mxu0 %v953
        %1217 = vmatprep.subr.bf16.mxu0 %v952
        %1218 = vmatpush2.bf16.msra.mxu0 %v951
        %1219 = vmatprep.subr.bf16.mxu0 %v950
        %1220 = vmatpush2.bf16.msra.mxu0 %v949
        %1221 = vmatprep.mubr.bf16.mxu0 %v534
        %1222 = vmatmul.mubr.bf16.gmra.mxu0 %v533
        %v1223 = vpop.f32.mrf.mxu0
        %v1224 = vadd.f32 0.0, %v1223
        %v1225 = vpop.f32.mrf.mxu0
        %v1226 = vadd.f32 0.0, %v1225
        %v1227 = vpop.f32.mrf.mxu0
        %v1228 = vadd.f32 0.0, %v1227
        %v1229 = vpop.f32.mrf.mxu0
        %v1230 = vadd.f32 0.0, %v1229
        %1231 = vdwg.mxu0
        %1232 = vmatprep.subr.bf16.mxu0 %v980
        %1233 = vmatpush1.bf16.msra.mxu0 %v979
        %1234 = vmatprep.subr.bf16.mxu0 %v978
        %1235 = vmatpush1.bf16.msra.mxu0 %v977
        %1236 = vmatprep.subr.bf16.mxu0 %v976
        %1237 = vmatpush1.bf16.msra.mxu0 %v975
        %1238 = vmatprep.subr.bf16.mxu0 %v974
        %1239 = vmatpush1.bf16.msra.mxu0 %v973
        %1240 = vmatprep.subr.bf16.mxu0 %v972
        %1241 = vmatpush1.bf16.msra.mxu0 %v971
        %1242 = vmatprep.subr.bf16.mxu0 %v970
        %1243 = vmatpush1.bf16.msra.mxu0 %v969
        %1244 = vmatprep.subr.bf16.mxu0 %v968
        %1245 = vmatpush1.bf16.msra.mxu0 %v967
        %1246 = vmatprep.subr.bf16.mxu0 %v966
        %1247 = vmatpush1.bf16.msra.mxu0 %v965
        %1248 = vmatprep.subr.bf16.mxu0 %v996
        %1249 = vmatpush2.bf16.msra.mxu0 %v995
        %1250 = vmatprep.subr.bf16.mxu0 %v994
        %1251 = vmatpush2.bf16.msra.mxu0 %v993
        %1252 = vmatprep.subr.bf16.mxu0 %v992
        %1253 = vmatpush2.bf16.msra.mxu0 %v991
        %1254 = vmatprep.subr.bf16.mxu0 %v990
        %1255 = vmatpush2.bf16.msra.mxu0 %v989
        %1256 = vmatprep.subr.bf16.mxu0 %v988
        %1257 = vmatpush2.bf16.msra.mxu0 %v987
        %1258 = vmatprep.subr.bf16.mxu0 %v986
        %1259 = vmatpush2.bf16.msra.mxu0 %v985
        %1260 = vmatprep.subr.bf16.mxu0 %v984
        %1261 = vmatpush2.bf16.msra.mxu0 %v983
        %1262 = vmatprep.subr.bf16.mxu0 %v982
        %1263 = vmatpush2.bf16.msra.mxu0 %v981
        %1264 = vmatprep.mubr.bf16.mxu0 %v536
        %1265 = vmatmul.mubr.bf16.gmra.mxu0 %v535
        %v1266 = vpop.f32.mrf.mxu0
        %v1267 = vadd.f32 %v1224, %v1266
        %v1268 = vpop.f32.mrf.mxu0
        %v1269 = vadd.f32 %v1226, %v1268
        %v1270 = vpop.f32.mrf.mxu0
        %v1271 = vadd.f32 %v1228, %v1270
        %v1272 = vpop.f32.mrf.mxu0
        %v1273 = vadd.f32 %v1230, %v1272
        %1274 = vdwg.mxu0
        %1275 = vmatprep.subr.bf16.mxu0 %v1012
        %1276 = vmatpush1.bf16.msra.mxu0 %v1011
        %1277 = vmatprep.subr.bf16.mxu0 %v1010
        %1278 = vmatpush1.bf16.msra.mxu0 %v1009
        %1279 = vmatprep.subr.bf16.mxu0 %v1008
        %1280 = vmatpush1.bf16.msra.mxu0 %v1007
        %1281 = vmatprep.subr.bf16.mxu0 %v1006
        %1282 = vmatpush1.bf16.msra.mxu0 %v1005
        %1283 = vmatprep.subr.bf16.mxu0 %v1004
        %1284 = vmatpush1.bf16.msra.mxu0 %v1003
        %1285 = vmatprep.subr.bf16.mxu0 %v1002
        %1286 = vmatpush1.bf16.msra.mxu0 %v1001
        %1287 = vmatprep.subr.bf16.mxu0 %v1000
        %1288 = vmatpush1.bf16.msra.mxu0 %v999
        %1289 = vmatprep.subr.bf16.mxu0 %v998
        %1290 = vmatpush1.bf16.msra.mxu0 %v997
        %1291 = vmatprep.subr.bf16.mxu0 %v1028
        %1292 = vmatpush2.bf16.msra.mxu0 %v1027
        %1293 = vmatprep.subr.bf16.mxu0 %v1026
        %1294 = vmatpush2.bf16.msra.mxu0 %v1025
        %1295 = vmatprep.subr.bf16.mxu0 %v1024
        %1296 = vmatpush2.bf16.msra.mxu0 %v1023
        %1297 = vmatprep.subr.bf16.mxu0 %v1022
        %1298 = vmatpush2.bf16.msra.mxu0 %v1021
        %1299 = vmatprep.subr.bf16.mxu0 %v1020
        %1300 = vmatpush2.bf16.msra.mxu0 %v1019
        %1301 = vmatprep.subr.bf16.mxu0 %v1018
        %1302 = vmatpush2.bf16.msra.mxu0 %v1017
        %1303 = vmatprep.subr.bf16.mxu0 %v1016
        %1304 = vmatpush2.bf16.msra.mxu0 %v1015
        %1305 = vmatprep.subr.bf16.mxu0 %v1014
        %1306 = vmatpush2.bf16.msra.mxu0 %v1013
        %1307 = vmatprep.mubr.bf16.mxu0 %v538
        %1308 = vmatmul.mubr.bf16.gmra.mxu0 %v537
        %v1309 = vpop.f32.mrf.mxu0
        %v1310 = vadd.f32 %v1267, %v1309
        %v1311 = vpop.f32.mrf.mxu0
        %v1312 = vadd.f32 %v1269, %v1311
        %v1313 = vpop.f32.mrf.mxu0
        %v1314 = vadd.f32 %v1271, %v1313
        %v1315 = vpop.f32.mrf.mxu0
        %v1316 = vadd.f32 %v1273, %v1315
        %1317 = vdwg.mxu0
        %1318 = vmatprep.subr.bf16.mxu0 %v1044
        %1319 = vmatpush1.bf16.msra.mxu0 %v1043
        %1320 = vmatprep.subr.bf16.mxu0 %v1042
        %1321 = vmatpush1.bf16.msra.mxu0 %v1041
        %1322 = vmatprep.subr.bf16.mxu0 %v1040
        %1323 = vmatpush1.bf16.msra.mxu0 %v1039
        %1324 = vmatprep.subr.bf16.mxu0 %v1038
        %1325 = vmatpush1.bf16.msra.mxu0 %v1037
        %1326 = vmatprep.subr.bf16.mxu0 %v1036
        %1327 = vmatpush1.bf16.msra.mxu0 %v1035
        %1328 = vmatprep.subr.bf16.mxu0 %v1034
        %1329 = vmatpush1.bf16.msra.mxu0 %v1033
        %1330 = vmatprep.subr.bf16.mxu0 %v1032
        %1331 = vmatpush1.bf16.msra.mxu0 %v1031
        %1332 = vmatprep.subr.bf16.mxu0 %v1030
        %1333 = vmatpush1.bf16.msra.mxu0 %v1029
        %1334 = vmatprep.subr.bf16.mxu0 %v1060
        %1335 = vmatpush2.bf16.msra.mxu0 %v1059
        %1336 = vmatprep.subr.bf16.mxu0 %v1058
        %1337 = vmatpush2.bf16.msra.mxu0 %v1057
        %1338 = vmatprep.subr.bf16.mxu0 %v1056
        %1339 = vmatpush2.bf16.msra.mxu0 %v1055
        %1340 = vmatprep.subr.bf16.mxu0 %v1054
        %1341 = vmatpush2.bf16.msra.mxu0 %v1053
        %1342 = vmatprep.subr.bf16.mxu0 %v1052
        %1343 = vmatpush2.bf16.msra.mxu0 %v1051
        %1344 = vmatprep.subr.bf16.mxu0 %v1050
        %1345 = vmatpush2.bf16.msra.mxu0 %v1049
        %1346 = vmatprep.subr.bf16.mxu0 %v1048
        %1347 = vmatpush2.bf16.msra.mxu0 %v1047
        %1348 = vmatprep.subr.bf16.mxu0 %v1046
        %1349 = vmatpush2.bf16.msra.mxu0 %v1045
        %1350 = vmatprep.mubr.bf16.mxu0 %v540
        %1351 = vmatmul.mubr.bf16.gmra.mxu0 %v539
        %v1352 = vpop.f32.mrf.mxu0
        %v1353 = vadd.f32 %v1310, %v1352
        %v1354 = vpop.f32.mrf.mxu0
        %v1355 = vadd.f32 %v1312, %v1354
        %v1356 = vpop.f32.mrf.mxu0
        %v1357 = vadd.f32 %v1314, %v1356
        %v1358 = vpop.f32.mrf.mxu0
        %v1359 = vadd.f32 %v1316, %v1358
        %1360 = vdwg.mxu0
        %p1361 = scmp.eq.s32.totalorder %s22, 0
        // Predicated region
        $region60: #{transformer_forward.17} parent=54 // pred_check
          %p1362 = pneg %p1361
        $region61: #{transformer_forward.17} parent=54 // pred_check_branch
          %1364 = sbr.rel (%p1362) target = $region63
        $region62: #{transformer_forward.17} parent=54 // pred_region
          %1365 = vst [vmem:[#allocation2] sm:$0xff] 0.0
          %1366 = vst [vmem:[#allocation2 + $0x8] sm:$0xff] 0.0
          %1367 = vst [vmem:[#allocation2 + $0x10] sm:$0xff] 0.0
          %1368 = vst [vmem:[#allocation2 + $0x18] sm:$0xff] 0.0
        $region63: #{transformer_forward.17} parent=54 // pred_fallthru
          _
        %v1369 = vld [vmem:[#allocation2] sm:$0xff]
        %v1370 = vld [vmem:[#allocation2 + $0x8] sm:$0xff]
        %v1371 = vld [vmem:[#allocation2 + $0x10] sm:$0xff]
        %v1372 = vld [vmem:[#allocation2 + $0x18] sm:$0xff]
        %v1373 = vadd.f32 %v1369, %v1353
        %v1374 = vadd.f32 %v1370, %v1355
        %v1375 = vadd.f32 %v1371, %v1357
        %v1376 = vadd.f32 %v1372, %v1359
        %1377 = vst [vmem:[#allocation2] sm:$0xff] %v1373
        %1378 = vst [vmem:[#allocation2 + $0x8] sm:$0xff] %v1374
        %1379 = vst [vmem:[#allocation2 + $0x10] sm:$0xff] %v1375
        %1380 = vst [vmem:[#allocation2 + $0x18] sm:$0xff] %v1376
        %p1381 = scmp.eq.s32.totalorder %s22, 1
        // Predicated region
        $region64: #{transformer_forward.17} parent=54 // pred_check
          %p1382 = pneg %p1381
        $region65: #{transformer_forward.17} parent=54 // pred_check_branch
          %1384 = sbr.rel (%p1382) target = $region67
        $region66: #{transformer_forward.17} parent=54 // pred_region
          %v1385 = vld [vmem:[#allocation2] sm:$0xff]
          %v1386 = vld [vmem:[#allocation2 + $0x8] sm:$0xff]
          %v1387 = vld [vmem:[#allocation2 + $0x10] sm:$0xff]
          %v1388 = vld [vmem:[#allocation2 + $0x18] sm:$0xff]
          %v1389 = vld [vmem:[%s347] sm:$0x3]
          %v1391 = vlaneseq
          %v1392 = vshrl.u32 %v1391, 7
          %v1393 = vsub.s32 0, %v1392
          %v1394 = vrot.slane %v1389, %v1393
          %v1395 = vlaneseq
          %v1396 = vshrl.u32 %v1395, 7
          %v1397 = vsub.s32 1, %v1396
          %v1398 = vrot.slane %v1389, %v1397
          %v1401 = vadd.f32 %v1385, %v1394
          %v1402 = vadd.f32 %v1386, %v1398
          %v1403 = vadd.f32 %v1387, %v1394
          %v1404 = vadd.f32 %v1388, %v1398
          %v1405 = vld [vmem:[%s358] sm:$0xff]
          %v1406 = vld [vmem:[%s358 + $0x8] sm:$0xff]
          %v1407 = vunpack.c.l.bf16 %v1405
          %v1408 = vunpack.c.h.bf16 %v1405
          %v1409 = vunpack.c.l.bf16 %v1406
          %v1410 = vunpack.c.h.bf16 %v1406
          %v1411 = vadd.f32 %v1401, %v1407
          %v1412 = vadd.f32 %v1402, %v1408
          %v1413 = vadd.f32 %v1403, %v1409
          %v1414 = vadd.f32 %v1404, %v1410
          %v1415 = vpack.c.bf16 %v1413, %v1411
          %v1416 = vpack.c.bf16 %v1414, %v1412
          %v1419 = vunpack.c.l.b16 %v1415
          %v1420 = vunpack.c.l.b16 %v1416
          %v1421 = vunpack.c.h.b16 %v1415
          %v1422 = vunpack.c.h.b16 %v1416
          %v1423 = vpack.c.b16 %v1420, %v1419
          %v1424 = vpack.c.b16 %v1422, %v1421
          %1427 = vst [vmem:[%s370] sm:$0xff] %v1423
          %1428 = vst [vmem:[%s370 + $0x8] sm:$0xff] %v1424
        $region67: #{transformer_forward.17} parent=54 // pred_fallthru
          _
        %s1429 = smul.u32 2, %s20
        %s1430 = smul.u32 2, %s21
        %p1431 = scmp.lt.s32.totalorder %s1429, 1
        %s1432 = scalar_select %p1431, %s1429, 1
        %p1433 = scmp.lt.s32.totalorder %s1430, 1
        %s1434 = scalar_select %p1433, %s1430, 1
        %s1435 = smul.addr %s1432, 2
        %s1436 = sadd.s32 %s1434, %s1435
        %s1437 = smul.addr %s1436, 4
        %s1438 = scalar_lea.vmem %s4, %s1437
        // Predicated region
        $region68: #{transformer_forward.17} parent=54 // pred_check
          %p1439 = pneg %p164
        $region69: #{transformer_forward.17} parent=54 // pred_check_branch
          %1441 = sbr.rel (%p1439) target = $region71
        $region70: #{transformer_forward.17} parent=54 // pred_region
          %s1442 = smul.u32 2, %s20
          %s1443 = smul.u32 2, %s21
        $region71: #{transformer_forward.17} parent=54 // pred_fallthru
          _
        // Predicated region
        $region72: #{transformer_forward.17} parent=54 // pred_check
          %p1444 = pneg %p164
        $region73: #{transformer_forward.17} parent=54 // pred_check_branch
          %1446 = sbr.rel (%p1444) target = $region75
        $region74: #{transformer_forward.17} parent=54 // pred_region
          %s1447 = smul.u32 2, %s20
          %s1448 = smul.u32 2, %s21
          %p1449 = scmp.lt.s32.totalorder %s1447, 1
          %s1450 = scalar_select %p1449, %s1447, 1
          %p1451 = scmp.lt.s32.totalorder %s1448, 1
          %s1452 = scalar_select %p1451, %s1448, 1
          %s1453 = smul.addr %s1450, 2
          %s1454 = sadd.s32 %s1452, %s1453
          %s1455 = smul.addr %s1454, 4
          %s1456 = scalar_lea.vmem %s4, %s1455
        $region75: #{transformer_forward.17} parent=54 // pred_fallthru
          _
      $region55: #{transformer_forward.17} parent=5 // pred_fallthru
        _
      %p1457 = scmp.le.s32.totalorder 2, %s10
      // Predicated region
      $region76: #{transformer_forward.17} parent=5 // pred_check
        %p1458 = pneg %p1457
      $region77: #{transformer_forward.17} parent=5 // pred_check_branch
        %1460 = sbr.rel (%p1458) target = $region79
      $region78: #{transformer_forward.17} parent=5 // pred_region
        %s1461 = ssub.s32 %s10, 2
      $region79: #{transformer_forward.17} parent=5 // pred_fallthru
        _
    $region6: #{transformer_forward.17} parent=1 // loop_footer
      %s14 = sadd.s32 1, %s10
    $region7: #{transformer_forward.17} parent=1 // loop_footer_branch
      %9 = sbr.rel target = $region3
    $region8: #{transformer_forward.17} parent=1 // loop_exit
      _

// kernel: transformer_forward.18
$region0: #{transformer_forward.18}
  #allocation0 [shape = 'u32[]', space=smem, size = 0x4, offset = 0x4, fixed_abs, tag = 'smem constant byte address 0x4 - core index']
  #allocation1 [shape = 'u32[144,128]{1,0:T(1,128)}', space=vmem, size = 0x12000, scoped, tag = 'internal scratch']
  %s0 = inlined_call_operand.vmem [shape: bf16[16,256], index: 0, kind: input, shape index: {}]
  %s1 = inlined_call_operand.vmem [shape: f32[1,256], index: 1, kind: input, shape index: {}]
  %s2 = inlined_call_operand.vmem [shape: f32[1,256], index: 2, kind: input, shape index: {}]
  %s3 = inlined_call_operand.vmem [shape: bf16[256,768], index: 3, kind: input, shape index: {}]
  %s4 = inlined_call_operand.vmem [shape: f32[1,768], index: 4, kind: input, shape index: {}]
  %s5 = inlined_call_operand.vmem [shape: bf16[16,768], index: 5, kind: output, shape index: {}]
  %s6 = sld [smem:[#allocation0]]
  $region125: #{transformer_forward.18} parent=0
    _
  %s8 = ssub.s32 1, %s6
  %s9 = scalar_select 0, %s8, %s6
  $region1: #{transformer_forward.18} parent=0
    #allocation2 [shape = 'u8[262144]{0}', space=vmem, size = 0x40000, scoped, tag = 'input window, operand 3']
    #allocation3 [shape = 'u8[16384]{0}', space=vmem, size = 0x4000, scoped, tag = 'output window, operand 0']
    loop: start=0, step=1, limit=5
    $region2: #{transformer_forward.18} parent=1 // loop_pre_header
      _
    $region3: #{transformer_forward.18} parent=1 // loop_header
      %s11 = sphi 0, %s15
      %p12 = scmp.ge.s32.totalorder %s11, 5
      %s18 = sphi 0, %s30
      %s19 = sphi 0, %s26
      %s20 = sphi 0, %s18
      %s21 = sphi 0, %s19
      %s22 = sphi 0, %s20
      %s23 = sphi 0, %s21
      %s33 = sphi 0, %s35
      %s36 = sphi 0, %s33
      %s37 = sphi 0, %s36
      %s53 = sphi 0, %s37
      %s57 = sphi 0, %s57
      %s59 = sphi 0, %s57
      %s60 = sphi 0, %s59
      %s74 = sphi 0, %s60
      %s78 = sphi 0, %s78
      %s80 = sphi 0, %s78
      %s81 = sphi 0, %s80
      %s95 = sphi 0, %s81
      %s101 = sphi 0, %s103
      %s104 = sphi 0, %s101
      %s105 = sphi 0, %s104
      %s121 = sphi 0, %s105
      %s127 = sphi 0, %s129
      %s130 = sphi 0, %s127
      %s131 = sphi 0, %s130
      %s147 = sphi 0, %s131
      %s155 = sphi 0, %s157
      %s158 = sphi 0, %s155
      %s159 = sphi 0, %s158
      %s175 = sphi 0, %s159
    $region4: #{transformer_forward.18} parent=1 // loop_header_branch
      %14 = sbr.rel (%p12) target = $region8
    $region5: #{transformer_forward.18} parent=1 // loop_body
      %s16 = ssub.s32 %s11, 1
      %s17 = ssub.s32 %s11, 2
      %s24 = sadd.s32 1, %s19
      %p25 = scmp.ge.s32.totalorder %s24, 3
      %s26 = scalar_select %p25, 0, %s24
      %s27 = sadd.s32 1, %s18
      %s28 = scalar_select %p25, %s27, %s18
      %p29 = scmp.ge.s32.totalorder %s28, 1
      %s30 = scalar_select %p29, 0, %s28
      %s31 = ssub.s32 %s18, %s30
      %p32 = scmp.eq.s32.totalorder %s31, 0
      %s34 = sadd.s32 %s33, 1
      %s35 = scalar_select %p32, %s33, %s34
      %p38 = pneg %p32
      %p39 = scmp.eq.s32.totalorder %s11, 2
      %p40 = por %p38, %p39
      %p41 = scmp.ne.s32.totalorder %s33, %s36
      %p42 = scmp.eq.s32.totalorder %s11, 0
      %p43 = por %p41, %p42
      %p44 = scmp.ne.s32.totalorder %s33, %s36
      %p45 = scmp.eq.s32.totalorder %s16, 2
      %p46 = por %p44, %p45
      %p47 = scmp.ne.s32.totalorder %s36, %s37
      %p48 = scmp.eq.s32.totalorder %s16, 0
      %p49 = por %p47, %p48
      %p50 = scmp.ne.s32.totalorder %s36, %s37
      %p51 = scmp.eq.s32.totalorder %s17, 2
      %p52 = por %p50, %p51
      %p54 = scmp.ne.s32.totalorder %s37, %s53
      %p55 = scmp.eq.s32.totalorder %s17, 0
      %p56 = por %p54, %p55
      %s58 = sadd.s32 %s57, 1
      %p61 = scmp.eq.s32.totalorder %s11, 2
      %p62 = scmp.ne.s32.totalorder %s57, %s59
      %p63 = scmp.eq.s32.totalorder %s11, 0
      %p64 = por %p62, %p63
      %p65 = scmp.ne.s32.totalorder %s57, %s59
      %p66 = scmp.eq.s32.totalorder %s16, 2
      %p67 = por %p65, %p66
      %p68 = scmp.ne.s32.totalorder %s59, %s60
      %p69 = scmp.eq.s32.totalorder %s16, 0
      %p70 = por %p68, %p69
      %p71 = scmp.ne.s32.totalorder %s59, %s60
      %p72 = scmp.eq.s32.totalorder %s17, 2
      %p73 = por %p71, %p72
      %p75 = scmp.ne.s32.totalorder %s60, %s74
      %p76 = scmp.eq.s32.totalorder %s17, 0
      %p77 = por %p75, %p76
      %s79 = sadd.s32 %s78, 1
      %p82 = scmp.eq.s32.totalorder %s11, 2
      %p83 = scmp.ne.s32.totalorder %s78, %s80
      %p84 = scmp.eq.s32.totalorder %s11, 0
      %p85 = por %p83, %p84
      %p86 = scmp.ne.s32.totalorder %s78, %s80
      %p87 = scmp.eq.s32.totalorder %s16, 2
      %p88 = por %p86, %p87
      %p89 = scmp.ne.s32.totalorder %s80, %s81
      %p90 = scmp.eq.s32.totalorder %s16, 0
      %p91 = por %p89, %p90
      %p92 = scmp.ne.s32.totalorder %s80, %s81
      %p93 = scmp.eq.s32.totalorder %s17, 2
      %p94 = por %p92, %p93
      %p96 = scmp.ne.s32.totalorder %s81, %s95
      %p97 = scmp.eq.s32.totalorder %s17, 0
      %p98 = por %p96, %p97
      %s99 = ssub.s32 %s19, %s26
      %p100 = scmp.eq.s32.totalorder %s99, 0
      %s102 = sadd.s32 %s101, 1
      %s103 = scalar_select %p100, %s101, %s102
      %p106 = pneg %p100
      %p107 = scmp.eq.s32.totalorder %s11, 2
      %p108 = por %p106, %p107
      %p109 = scmp.ne.s32.totalorder %s101, %s104
      %p110 = scmp.eq.s32.totalorder %s11, 0
      %p111 = por %p109, %p110
      %p112 = scmp.ne.s32.totalorder %s101, %s104
      %p113 = scmp.eq.s32.totalorder %s16, 2
      %p114 = por %p112, %p113
      %p115 = scmp.ne.s32.totalorder %s104, %s105
      %p116 = scmp.eq.s32.totalorder %s16, 0
      %p117 = por %p115, %p116
      %p118 = scmp.ne.s32.totalorder %s104, %s105
      %p119 = scmp.eq.s32.totalorder %s17, 2
      %p120 = por %p118, %p119
      %p122 = scmp.ne.s32.totalorder %s105, %s121
      %p123 = scmp.eq.s32.totalorder %s17, 0
      %p124 = por %p122, %p123
      %s125 = ssub.s32 %s19, %s26
      %p126 = scmp.eq.s32.totalorder %s125, 0
      %s128 = sadd.s32 %s127, 1
      %s129 = scalar_select %p126, %s127, %s128
      %p132 = pneg %p126
      %p133 = scmp.eq.s32.totalorder %s11, 2
      %p134 = por %p132, %p133
      %p135 = scmp.ne.s32.totalorder %s127, %s130
      %p136 = scmp.eq.s32.totalorder %s11, 0
      %p137 = por %p135, %p136
      %p138 = scmp.ne.s32.totalorder %s127, %s130
      %p139 = scmp.eq.s32.totalorder %s16, 2
      %p140 = por %p138, %p139
      %p141 = scmp.ne.s32.totalorder %s130, %s131
      %p142 = scmp.eq.s32.totalorder %s16, 0
      %p143 = por %p141, %p142
      %p144 = scmp.ne.s32.totalorder %s130, %s131
      %p145 = scmp.eq.s32.totalorder %s17, 2
      %p146 = por %p144, %p145
      %p148 = scmp.ne.s32.totalorder %s131, %s147
      %p149 = scmp.eq.s32.totalorder %s17, 0
      %p150 = por %p148, %p149
      %s151 = ssub.s32 %s18, %s30
      %s152 = ssub.s32 %s19, %s26
      %s153 = sor.u32 %s151, %s152
      %p154 = scmp.eq.s32.totalorder %s153, 0
      %s156 = sadd.s32 %s155, 1
      %s157 = scalar_select %p154, %s155, %s156
      %p160 = pneg %p154
      %p161 = scmp.eq.s32.totalorder %s11, 2
      %p162 = por %p160, %p161
      %p163 = scmp.ne.s32.totalorder %s155, %s158
      %p164 = scmp.eq.s32.totalorder %s11, 0
      %p165 = por %p163, %p164
      %p166 = scmp.ne.s32.totalorder %s155, %s158
      %p167 = scmp.eq.s32.totalorder %s16, 2
      %p168 = por %p166, %p167
      %p169 = scmp.ne.s32.totalorder %s158, %s159
      %p170 = scmp.eq.s32.totalorder %s16, 0
      %p171 = por %p169, %p170
      %p172 = scmp.ne.s32.totalorder %s158, %s159
      %p173 = scmp.eq.s32.totalorder %s17, 2
      %p174 = por %p172, %p173
      %p176 = scmp.ne.s32.totalorder %s159, %s175
      %p177 = scmp.eq.s32.totalorder %s17, 0
      %p178 = por %p176, %p177
      %p179 = scmp.le.s32.totalorder 1, %s11
      %p180 = scmp.lt.s32.totalorder %s11, 4
      %p181 = pnand %p179, %p180
      %p182 = pneg %p181
      // Predicated region
      $region9: #{transformer_forward.18} parent=5 // pred_check
        _
      $region10: #{transformer_forward.18} parent=5 // pred_check_branch
        %184 = sbr.rel (%p181) target = $region12
      $region11: #{transformer_forward.18} parent=5 // pred_region
        %s185 = ssub.s32 %s11, 1
        // Predicated region
        $region13: #{transformer_forward.18} parent=11 // pred_check
          %p186 = pneg %p49
        $region14: #{transformer_forward.18} parent=11 // pred_check_branch
          %188 = sbr.rel (%p186) target = $region16
        $region15: #{transformer_forward.18} parent=11 // pred_region
          %s189 = smul.u32 2, %s20
          %p190 = scmp.lt.s32.totalorder %s189, 1
          %s191 = scalar_select %p190, %s189, 1
          %s192 = smul.addr %s191, 2
          %s193 = smul.addr %s192, 4
          %s194 = scalar_lea.vmem %s0, %s193
          %s195 = smul.u32 2, %s20
        $region16: #{transformer_forward.18} parent=11 // pred_fallthru
          _
        // Predicated region
        $region17: #{transformer_forward.18} parent=11 // pred_check
          %p196 = pneg %p70
        $region18: #{transformer_forward.18} parent=11 // pred_check_branch
          %198 = sbr.rel (%p196) target = $region20
        $region19: #{transformer_forward.18} parent=11 // pred_region
          _
        $region20: #{transformer_forward.18} parent=11 // pred_fallthru
          _
        // Predicated region
        $region21: #{transformer_forward.18} parent=11 // pred_check
          %p199 = pneg %p91
        $region22: #{transformer_forward.18} parent=11 // pred_check_branch
          %201 = sbr.rel (%p199) target = $region24
        $region23: #{transformer_forward.18} parent=11 // pred_region
          _
        $region24: #{transformer_forward.18} parent=11 // pred_fallthru
          _
      $region12: #{transformer_forward.18} parent=5 // pred_fallthru
        _
      %p202 = scmp.lt.s32.totalorder %s11, 3
      // Predicated region
      $region25: #{transformer_forward.18} parent=5 // pred_check
        %p203 = pneg %p202
      $region26: #{transformer_forward.18} parent=5 // pred_check_branch
        %205 = sbr.rel (%p203) target = $region28
      $region27: #{transformer_forward.18} parent=5 // pred_region
        // Predicated region
        $region29: #{transformer_forward.18} parent=27 // pred_check
          %p206 = pneg %p111
        $region30: #{transformer_forward.18} parent=27 // pred_check_branch
          %208 = sbr.rel (%p206) target = $region32
        $region31: #{transformer_forward.18} parent=27 // pred_region
          %s209 = sand.u32 %s101, 1
          %s210 = sand.u32 %s101, 1
          %s211 = smul.addr %s210, 256
          %s212 = scalar_lea.vmem [#allocation2], %s211
          %s213 = smul.u32 2, %s19
          %s214 = smul.addr %s213, 4
          %s215 = scalar_lea.vmem %s3, %s214
          // Predicated region
          $region33: #{transformer_forward.18} parent=31 // pred_check
            _
          $region34: #{transformer_forward.18} parent=31 // pred_check_branch
            %217 = sbr.rel (0) target = $region36
          $region35: #{transformer_forward.18} parent=31 // pred_region
            // Predicated region
            $region37: #{transformer_forward.18} parent=35 // pred_check
              _
            $region38: #{transformer_forward.18} parent=35 // pred_check_branch
              %219 = sbr.rel (0) target = $region40
            $region39: #{transformer_forward.18} parent=35 // pred_region
              // Predicated region
              $region52: #{transformer_forward.18} parent=39 // pred_check
                _
              $region53: #{transformer_forward.18} parent=39 // pred_check_branch
                %297 = sbr.rel (0) target = $region55
              $region54: #{transformer_forward.18} parent=39 // pred_region
                loop: start=0, step=1, limit=1
                $region56: #{transformer_forward.18} parent=54 // loop_pre_header
                  _
                $region57: #{transformer_forward.18} parent=54 // loop_header
                  %s299 = sphi 0, %s303
                  %p300 = scmp.ge.s32.totalorder %s299, 1
                  %s304 = sphi %s215, %s215
                  %s305 = sphi %s212, %s212
                $region58: #{transformer_forward.18} parent=54 // loop_header_branch
                  %302 = sbr.rel (%p300) target = $region62
                $region59: #{transformer_forward.18} parent=54 // loop_body
                  %v306 = vld [vmem:[%s304] sm:$0xff]
                  %307 = vst [vmem:[%s305] sm:$0xff] %v306
                  %v308 = vld [vmem:[%s304 + $0x18] sm:$0xff]
                  %309 = vst [vmem:[%s305 + $0x8] sm:$0xff] %v308
                  %v310 = vld [vmem:[%s304 + $0x30] sm:$0xff]
                  %311 = vst [vmem:[%s305 + $0x10] sm:$0xff] %v310
                  %v312 = vld [vmem:[%s304 + $0x48] sm:$0xff]
                  %313 = vst [vmem:[%s305 + $0x18] sm:$0xff] %v312
                  %v314 = vld [vmem:[%s304 + $0x60] sm:$0xff]
                  %315 = vst [vmem:[%s305 + $0x20] sm:$0xff] %v314
                  %v316 = vld [vmem:[%s304 + $0x78] sm:$0xff]
                  %317 = vst [vmem:[%s305 + $0x28] sm:$0xff] %v316
                  %v318 = vld [vmem:[%s304 + $0x90] sm:$0xff]
                  %319 = vst [vmem:[%s305 + $0x30] sm:$0xff] %v318
                  %v320 = vld [vmem:[%s304 + $0xa8] sm:$0xff]
                  %321 = vst [vmem:[%s305 + $0x38] sm:$0xff] %v320
                  %v322 = vld [vmem:[%s304 + $0xc0] sm:$0xff]
                  %323 = vst [vmem:[%s305 + $0x40] sm:$0xff] %v322
                  %v324 = vld [vmem:[%s304 + $0xd8] sm:$0xff]
                  %325 = vst [vmem:[%s305 + $0x48] sm:$0xff] %v324
                  %v326 = vld [vmem:[%s304 + $0xf0] sm:$0xff]
                  %327 = vst [vmem:[%s305 + $0x50] sm:$0xff] %v326
                  %v328 = vld [vmem:[%s304 + $0x108] sm:$0xff]
                  %329 = vst [vmem:[%s305 + $0x58] sm:$0xff] %v328
                  %v330 = vld [vmem:[%s304 + $0x120] sm:$0xff]
                  %331 = vst [vmem:[%s305 + $0x60] sm:$0xff] %v330
                  %v332 = vld [vmem:[%s304 + $0x138] sm:$0xff]
                  %333 = vst [vmem:[%s305 + $0x68] sm:$0xff] %v332
                  %v334 = vld [vmem:[%s304 + $0x150] sm:$0xff]
                  %335 = vst [vmem:[%s305 + $0x70] sm:$0xff] %v334
                  %v336 = vld [vmem:[%s304 + $0x168] sm:$0xff]
                  %337 = vst [vmem:[%s305 + $0x78] sm:$0xff] %v336
                  %v338 = vld [vmem:[%s304 + $0x180] sm:$0xff]
                  %339 = vst [vmem:[%s305 + $0x80] sm:$0xff] %v338
                  %v340 = vld [vmem:[%s304 + $0x198] sm:$0xff]
                  %341 = vst [vmem:[%s305 + $0x88] sm:$0xff] %v340
                  %v342 = vld [vmem:[%s304 + $0x1b0] sm:$0xff]
                  %343 = vst [vmem:[%s305 + $0x90] sm:$0xff] %v342
                  %v344 = vld [vmem:[%s304 + $0x1c8] sm:$0xff]
                  %345 = vst [vmem:[%s305 + $0x98] sm:$0xff] %v344
                  %v346 = vld [vmem:[%s304 + $0x1e0] sm:$0xff]
                  %347 = vst [vmem:[%s305 + $0xa0] sm:$0xff] %v346
                  %v348 = vld [vmem:[%s304 + $0x1f8] sm:$0xff]
                  %349 = vst [vmem:[%s305 + $0xa8] sm:$0xff] %v348
                  %v350 = vld [vmem:[%s304 + $0x210] sm:$0xff]
                  %351 = vst [vmem:[%s305 + $0xb0] sm:$0xff] %v350
                  %v352 = vld [vmem:[%s304 + $0x228] sm:$0xff]
                  %353 = vst [vmem:[%s305 + $0xb8] sm:$0xff] %v352
                  %v354 = vld [vmem:[%s304 + $0x240] sm:$0xff]
                  %355 = vst [vmem:[%s305 + $0xc0] sm:$0xff] %v354
                  %v356 = vld [vmem:[%s304 + $0x258] sm:$0xff]
                  %357 = vst [vmem:[%s305 + $0xc8] sm:$0xff] %v356
                  %v358 = vld [vmem:[%s304 + $0x270] sm:$0xff]
                  %359 = vst [vmem:[%s305 + $0xd0] sm:$0xff] %v358
                  %v360 = vld [vmem:[%s304 + $0x288] sm:$0xff]
                  %361 = vst [vmem:[%s305 + $0xd8] sm:$0xff] %v360
                  %v362 = vld [vmem:[%s304 + $0x2a0] sm:$0xff]
                  %363 = vst [vmem:[%s305 + $0xe0] sm:$0xff] %v362
                  %v364 = vld [vmem:[%s304 + $0x2b8] sm:$0xff]
                  %365 = vst [vmem:[%s305 + $0xe8] sm:$0xff] %v364
                  %v366 = vld [vmem:[%s304 + $0x2d0] sm:$0xff]
                  %367 = vst [vmem:[%s305 + $0xf0] sm:$0xff] %v366
                  %v368 = vld [vmem:[%s304 + $0x2e8] sm:$0xff]
                  %369 = vst [vmem:[%s305 + $0xf8] sm:$0xff] %v368
                $region60: #{transformer_forward.18} parent=54 // loop_footer
                  %s303 = sadd.s32 1, %s299
                $region61: #{transformer_forward.18} parent=54 // loop_footer_branch
                  %298 = sbr.rel target = $region57
                $region62: #{transformer_forward.18} parent=54 // loop_exit
                  _
              $region55: #{transformer_forward.18} parent=39 // pred_fallthru
                _
              // Predicated region
              $region63: #{transformer_forward.18} parent=39 // pred_check
                _
              $region64: #{transformer_forward.18} parent=39 // pred_check_branch
                %371 = sbr.rel target = $region66
              $region65: #{transformer_forward.18} parent=39 // pred_region
                _
              $region66: #{transformer_forward.18} parent=39 // pred_fallthru
                _
            $region40: #{transformer_forward.18} parent=35 // pred_fallthru
              _
            // Predicated region
            $region41: #{transformer_forward.18} parent=35 // pred_check
              _
            $region42: #{transformer_forward.18} parent=35 // pred_check_branch
              %221 = sbr.rel target = $region44
            $region43: #{transformer_forward.18} parent=35 // pred_region
              %s223 = ssub.s32 256, 1
              loop: start=0, step=1, limit=1
              $region45: #{transformer_forward.18} parent=43 // loop_pre_header
                _
              $region46: #{transformer_forward.18} parent=43 // loop_header
                %s225 = sphi 0, %s229
                %p226 = scmp.ge.s32.totalorder %s225, 1
                %s230 = sphi %s215, %s215
                %s231 = sphi %s212, %s212
              $region47: #{transformer_forward.18} parent=43 // loop_header_branch
                %228 = sbr.rel (%p226) target = $region51
              $region48: #{transformer_forward.18} parent=43 // loop_body
                %v232 = vld [vmem:[%s230] sm:%s223]
                %233 = vst [vmem:[%s231] sm:%s223] %v232
                %v234 = vld [vmem:[%s230 + $0x18] sm:%s223]
                %235 = vst [vmem:[%s231 + $0x8] sm:%s223] %v234
                %v236 = vld [vmem:[%s230 + $0x30] sm:%s223]
                %237 = vst [vmem:[%s231 + $0x10] sm:%s223] %v236
                %v238 = vld [vmem:[%s230 + $0x48] sm:%s223]
                %239 = vst [vmem:[%s231 + $0x18] sm:%s223] %v238
                %v240 = vld [vmem:[%s230 + $0x60] sm:%s223]
                %241 = vst [vmem:[%s231 + $0x20] sm:%s223] %v240
                %v242 = vld [vmem:[%s230 + $0x78] sm:%s223]
                %243 = vst [vmem:[%s231 + $0x28] sm:%s223] %v242
                %v244 = vld [vmem:[%s230 + $0x90] sm:%s223]
                %245 = vst [vmem:[%s231 + $0x30] sm:%s223] %v244
                %v246 = vld [vmem:[%s230 + $0xa8] sm:%s223]
                %247 = vst [vmem:[%s231 + $0x38] sm:%s223] %v246
                %v248 = vld [vmem:[%s230 + $0xc0] sm:%s223]
                %249 = vst [vmem:[%s231 + $0x40] sm:%s223] %v248
                %v250 = vld [vmem:[%s230 + $0xd8] sm:%s223]
                %251 = vst [vmem:[%s231 + $0x48] sm:%s223] %v250
                %v252 = vld [vmem:[%s230 + $0xf0] sm:%s223]
                %253 = vst [vmem:[%s231 + $0x50] sm:%s223] %v252
                %v254 = vld [vmem:[%s230 + $0x108] sm:%s223]
                %255 = vst [vmem:[%s231 + $0x58] sm:%s223] %v254
                %v256 = vld [vmem:[%s230 + $0x120] sm:%s223]
                %257 = vst [vmem:[%s231 + $0x60] sm:%s223] %v256
                %v258 = vld [vmem:[%s230 + $0x138] sm:%s223]
                %259 = vst [vmem:[%s231 + $0x68] sm:%s223] %v258
                %v260 = vld [vmem:[%s230 + $0x150] sm:%s223]
                %261 = vst [vmem:[%s231 + $0x70] sm:%s223] %v260
                %v262 = vld [vmem:[%s230 + $0x168] sm:%s223]
                %263 = vst [vmem:[%s231 + $0x78] sm:%s223] %v262
                %v264 = vld [vmem:[%s230 + $0x180] sm:%s223]
                %265 = vst [vmem:[%s231 + $0x80] sm:%s223] %v264
                %v266 = vld [vmem:[%s230 + $0x198] sm:%s223]
                %267 = vst [vmem:[%s231 + $0x88] sm:%s223] %v266
                %v268 = vld [vmem:[%s230 + $0x1b0] sm:%s223]
                %269 = vst [vmem:[%s231 + $0x90] sm:%s223] %v268
                %v270 = vld [vmem:[%s230 + $0x1c8] sm:%s223]
                %271 = vst [vmem:[%s231 + $0x98] sm:%s223] %v270
                %v272 = vld [vmem:[%s230 + $0x1e0] sm:%s223]
                %273 = vst [vmem:[%s231 + $0xa0] sm:%s223] %v272
                %v274 = vld [vmem:[%s230 + $0x1f8] sm:%s223]
                %275 = vst [vmem:[%s231 + $0xa8] sm:%s223] %v274
                %v276 = vld [vmem:[%s230 + $0x210] sm:%s223]
                %277 = vst [vmem:[%s231 + $0xb0] sm:%s223] %v276
                %v278 = vld [vmem:[%s230 + $0x228] sm:%s223]
                %279 = vst [vmem:[%s231 + $0xb8] sm:%s223] %v278
                %v280 = vld [vmem:[%s230 + $0x240] sm:%s223]
                %281 = vst [vmem:[%s231 + $0xc0] sm:%s223] %v280
                %v282 = vld [vmem:[%s230 + $0x258] sm:%s223]
                %283 = vst [vmem:[%s231 + $0xc8] sm:%s223] %v282
                %v284 = vld [vmem:[%s230 + $0x270] sm:%s223]
                %285 = vst [vmem:[%s231 + $0xd0] sm:%s223] %v284
                %v286 = vld [vmem:[%s230 + $0x288] sm:%s223]
                %287 = vst [vmem:[%s231 + $0xd8] sm:%s223] %v286
                %v288 = vld [vmem:[%s230 + $0x2a0] sm:%s223]
                %289 = vst [vmem:[%s231 + $0xe0] sm:%s223] %v288
                %v290 = vld [vmem:[%s230 + $0x2b8] sm:%s223]
                %291 = vst [vmem:[%s231 + $0xe8] sm:%s223] %v290
                %v292 = vld [vmem:[%s230 + $0x2d0] sm:%s223]
                %293 = vst [vmem:[%s231 + $0xf0] sm:%s223] %v292
                %v294 = vld [vmem:[%s230 + $0x2e8] sm:%s223]
                %295 = vst [vmem:[%s231 + $0xf8] sm:%s223] %v294
              $region49: #{transformer_forward.18} parent=43 // loop_footer
                %s229 = sadd.s32 1, %s225
              $region50: #{transformer_forward.18} parent=43 // loop_footer_branch
                %224 = sbr.rel target = $region46
              $region51: #{transformer_forward.18} parent=43 // loop_exit
                _
            $region44: #{transformer_forward.18} parent=35 // pred_fallthru
              _
          $region36: #{transformer_forward.18} parent=31 // pred_fallthru
            _
          %372 = vnop
        $region32: #{transformer_forward.18} parent=27 // pred_fallthru
          _
        // Predicated region
        $region67: #{transformer_forward.18} parent=27 // pred_check
          %p373 = pneg %p137
        $region68: #{transformer_forward.18} parent=27 // pred_check_branch
          %375 = sbr.rel (%p373) target = $region70
        $region69: #{transformer_forward.18} parent=27 // pred_region
          %s376 = smul.u32 2, %s19
          %p377 = scmp.lt.s32.totalorder %s376, 5
          %s378 = scalar_select %p377, %s376, 5
          %s379 = scalar_lea.vmem %s4, %s378
          %s380 = smul.u32 2, %s19
        $region70: #{transformer_forward.18} parent=27 // pred_fallthru
          _
      $region28: #{transformer_forward.18} parent=5 // pred_fallthru
        _
      %p381 = scmp.le.s32.totalorder 1, %s11
      %p382 = scmp.lt.s32.totalorder %s11, 4
      %p383 = pnand %p381, %p382
      %p384 = pneg %p383
      // Predicated region
      $region71: #{transformer_forward.18} parent=5 // pred_check
        _
      $region72: #{transformer_forward.18} parent=5 // pred_check_branch
        %386 = sbr.rel (%p383) target = $region74
      $region73: #{transformer_forward.18} parent=5 // pred_region
        %s387 = ssub.s32 %s11, 1
        %s388 = sand.u32 %s104, 1
        %s389 = sand.u32 %s104, 1
        %s390 = smul.addr %s389, 256
        %s391 = scalar_lea.vmem [#allocation2], %s390
        // Predicated region
        $region75: #{transformer_forward.18} parent=73 // pred_check
          %p392 = pneg %p117
        $region76: #{transformer_forward.18} parent=73 // pred_check_branch
          %394 = sbr.rel (%p392) target = $region78
        $region77: #{transformer_forward.18} parent=73 // pred_region
          _
        $region78: #{transformer_forward.18} parent=73 // pred_fallthru
          _
        %s395 = smul.u32 2, %s20
        %p396 = scmp.lt.s32.totalorder %s395, 1
        %s397 = scalar_select %p396, %s395, 1
        %s398 = smul.addr %s397, 2
        %s399 = smul.addr %s398, 4
        %s400 = scalar_lea.vmem %s0, %s399
        %p401 = pneg %p49
        %p402 = pneg %p46
        %p403 = pneg %p70
        %p404 = pneg %p67
        %p405 = pneg %p91
        %p406 = pneg %p88
        %s407 = sand.u32 %s104, 1
        %s408 = sand.u32 %s104, 1
        %s409 = smul.addr %s408, 256
        %s410 = scalar_lea.vmem [#allocation2], %s409
        %p411 = pneg %p117
        %p412 = pneg %p114
        %s413 = smul.u32 2, %s21
        %p414 = scmp.lt.s32.totalorder %s413, 5
        %s415 = scalar_select %p414, %s413, 5
        %s416 = scalar_lea.vmem %s4, %s415
        %p417 = pneg %p143
        %p418 = pneg %p140
        %p419 = pneg %p171
        %p420 = pneg %p168
        %s421 = sand.u32 %s158, 1
        %s422 = sand.u32 %s158, 1
        %s423 = smul.addr %s422, 16
        %s424 = scalar_lea.vmem [#allocation3], %s423
        %s425 = smul.u32 2, %s20
        %p426 = scmp.lt.s32.totalorder %s425, 1
        %s427 = scalar_select %p426, %s425, 1
        %s428 = smul.addr %s427, 2
        %s429 = smul.addr %s428, 4
        %s430 = scalar_lea.vmem %s0, %s429
        %s431 = smul.u32 2, %s20
        %s432 = smul.u32 2, %s21
        %s433 = smul.u32 2, %s21
        %p434 = scmp.lt.s32.totalorder %s433, 5
        %s435 = scalar_select %p434, %s433, 5
        %s436 = scalar_lea.vmem %s4, %s435
        %s437 = smul.u32 2, %s21
        %s438 = smul.u32 2, %s20
        %s439 = smul.u32 2, %s21
        %v440 = vld [vmem:[%s430] sm:$0xff]
        %v441 = vld [vmem:[%s430 + $0x8] sm:$0xff]
        %v442 = vunpack.c.l.bf16 %v440
        %v443 = vunpack.c.h.bf16 %v440
        %v444 = vunpack.c.l.bf16 %v441
        %v445 = vunpack.c.h.bf16 %v441
        %v446 = vadd.f32 %v442, %v443
        %447 = vadd.xlane.f32.xlu0 %v446
        %v448 = vpop.xlane.xlu0 %447
        %v449 = vadd.f32 %v444, %v445
        %450 = vadd.xlane.f32.xlu0 %v449
        %v451 = vpop.xlane.xlu0 %450
        %v452 = vrcp.pop 256.0
        %v453 = vmul.f32 %v448, %v452
        %v454 = vmul.f32 %v451, %v452
        %v455 = vsub.f32 %v442, %v453
        %v456 = vsub.f32 %v443, %v453
        %v457 = vsub.f32 %v444, %v454
        %v458 = vsub.f32 %v445, %v454
        %v459 = vmul.f32 %v455, %v455
        %v460 = vmul.f32 %v456, %v456
        %v461 = vmul.f32 %v457, %v457
        %v462 = vmul.f32 %v458, %v458
        %v463 = vadd.f32 %v459, %v460
        %464 = vadd.xlane.f32.xlu0 %v463
        %v465 = vpop.xlane.xlu0 %464
        %v466 = vadd.f32 %v461, %v462
        %467 = vadd.xlane.f32.xlu0 %v466
        %v468 = vpop.xlane.xlu0 %467
        %v469 = vrcp.pop 255.0
        %v470 = vmul.f32 %v465, %v469
        %v471 = vmul.f32 %v468, %v469
        %v472 = vrsqrt.pop %v470
        %v473 = vmul.f32 %v470, %v472
        %vm474 = vcmp.eq.f32.partialorder %v470, inf
        %v475 = vsel %vm474, %v470, %v473
        %vm476 = vcmp.eq.f32.partialorder %v470, 0.0
        %v477 = vand.u32 %v470, 2147483648
        %v478 = vsel %vm476, %v477, %v475
        %v479 = vrsqrt.pop %v471
        %v480 = vmul.f32 %v471, %v479
        %vm481 = vcmp.eq.f32.partialorder %v471, inf
        %v482 = vsel %vm481, %v471, %v480
        %vm483 = vcmp.eq.f32.partialorder %v471, 0.0
        %v484 = vand.u32 %v471, 2147483648
        %v485 = vsel %vm483, %v484, %v482
        %v486 = vadd.f32 %v478, 1e-06
        %v487 = vadd.f32 %v485, 1e-06
        %v488 = vrcp.pop %v486
        %v489 = vmul.f32 1.0, %v488
        %v490 = vrcp.pop %v487
        %v491 = vmul.f32 1.0, %v490
        %v492 = vld [vmem:[%s1] sm:$0x3]
        %v494 = vlaneseq
        %v495 = vshrl.u32 %v494, 7
        %v496 = vsub.s32 0, %v495
        %v497 = vrot.slane %v492, %v496
        %v498 = vlaneseq
        %v499 = vshrl.u32 %v498, 7
        %v500 = vsub.s32 1, %v499
        %v501 = vrot.slane %v492, %v500
        %v504 = vmul.f32 %v497, %v455
        %v505 = vmul.f32 %v501, %v456
        %v506 = vmul.f32 %v497, %v457
        %v507 = vmul.f32 %v501, %v458
        %v508 = vmul.f32 %v504, %v489
        %v509 = vmul.f32 %v505, %v489
        %v510 = vmul.f32 %v506, %v491
        %v511 = vmul.f32 %v507, %v491
        %v512 = vld [vmem:[%s2] sm:$0x3]
        %v514 = vlaneseq
        %v515 = vshrl.u32 %v514, 7
        %v516 = vsub.s32 0, %v515
        %v517 = vrot.slane %v512, %v516
        %v518 = vlaneseq
        %v519 = vshrl.u32 %v518, 7
        %v520 = vsub.s32 1, %v519
        %v521 = vrot.slane %v512, %v520
        %v524 = vadd.f32 %v508, %v517
        %v525 = vadd.f32 %v509, %v521
        %v526 = vadd.f32 %v510, %v517
        %v527 = vadd.f32 %v511, %v521
        %v528 = vpack.c.bf16 %v526, %v524
        %v529 = vpack.c.bf16 %v527, %v525
        %v530 = vld [vmem:[%s391] sm:$0xff]
        %v531 = vld [vmem:[%s391 + $0x8] sm:$0xff]
        %v532 = vld [vmem:[%s391 + $0x10] sm:$0xff]
        %v533 = vld [vmem:[%s391 + $0x18] sm:$0xff]
        %v534 = vld [vmem:[%s391 + $0x20] sm:$0xff]
        %v535 = vld [vmem:[%s391 + $0x28] sm:$0xff]
        %v536 = vld [vmem:[%s391 + $0x30] sm:$0xff]
        %v537 = vld [vmem:[%s391 + $0x38] sm:$0xff]
        %v538 = vld [vmem:[%s391 + $0x40] sm:$0xff]
        %v539 = vld [vmem:[%s391 + $0x48] sm:$0xff]
        %v540 = vld [vmem:[%s391 + $0x50] sm:$0xff]
        %v541 = vld [vmem:[%s391 + $0x58] sm:$0xff]
        %v542 = vld [vmem:[%s391 + $0x60] sm:$0xff]
        %v543 = vld [vmem:[%s391 + $0x68] sm:$0xff]
        %v544 = vld [vmem:[%s391 + $0x70] sm:$0xff]
        %v545 = vld [vmem:[%s391 + $0x78] sm:$0xff]
        %v546 = vld [vmem:[%s391 + $0x80] sm:$0xff]
        %v547 = vld [vmem:[%s391 + $0x88] sm:$0xff]
        %v548 = vld [vmem:[%s391 + $0x90] sm:$0xff]
        %v549 = vld [vmem:[%s391 + $0x98] sm:$0xff]
        %v550 = vld [vmem:[%s391 + $0xa0] sm:$0xff]
        %v551 = vld [vmem:[%s391 + $0xa8] sm:$0xff]
        %v552 = vld [vmem:[%s391 + $0xb0] sm:$0xff]
        %v553 = vld [vmem:[%s391 + $0xb8] sm:$0xff]
        %v554 = vld [vmem:[%s391 + $0xc0] sm:$0xff]
        %v555 = vld [vmem:[%s391 + $0xc8] sm:$0xff]
        %v556 = vld [vmem:[%s391 + $0xd0] sm:$0xff]
        %v557 = vld [vmem:[%s391 + $0xd8] sm:$0xff]
        %v558 = vld [vmem:[%s391 + $0xe0] sm:$0xff]
        %v559 = vld [vmem:[%s391 + $0xe8] sm:$0xff]
        %v560 = vld [vmem:[%s391 + $0xf0] sm:$0xff]
        %v561 = vld [vmem:[%s391 + $0xf8] sm:$0xff]
        %v562 = vld [vmem:[%s436] sm:$0x3]
        %v564 = vlaneseq
        %v565 = vshrl.u32 %v564, 7
        %v566 = vsub.s32 0, %v565
        %v567 = vrot.slane %v562, %v566
        %v568 = vlaneseq
        %v569 = vshrl.u32 %v568, 7
        %v570 = vsub.s32 1, %v569
        %v571 = vrot.slane %v562, %v570
        %v606 = vunpack.c.l.b16 %v530
        %v607 = vunpack.c.h.b16 %v530
        %v608 = vunpack.c.l.b16 %v531
        %v609 = vunpack.c.h.b16 %v531
        %v610 = vunpack.c.l.b16 %v532
        %v611 = vunpack.c.h.b16 %v532
        %v612 = vunpack.c.l.b16 %v533
        %v613 = vunpack.c.h.b16 %v533
        %v614 = vunpack.c.l.b16 %v534
        %v615 = vunpack.c.h.b16 %v534
        %v616 = vunpack.c.l.b16 %v535
        %v617 = vunpack.c.h.b16 %v535
        %v618 = vunpack.c.l.b16 %v536
        %v619 = vunpack.c.h.b16 %v536
        %v620 = vunpack.c.l.b16 %v537
        %v621 = vunpack.c.h.b16 %v537
        %v622 = vunpack.c.l.b16 %v538
        %v623 = vunpack.c.h.b16 %v538
        %v624 = vunpack.c.l.b16 %v539
        %v625 = vunpack.c.h.b16 %v539
        %v626 = vunpack.c.l.b16 %v540
        %v627 = vunpack.c.h.b16 %v540
        %v628 = vunpack.c.l.b16 %v541
        %v629 = vunpack.c.h.b16 %v541
        %v630 = vunpack.c.l.b16 %v542
        %v631 = vunpack.c.h.b16 %v542
        %v632 = vunpack.c.l.b16 %v543
        %v633 = vunpack.c.h.b16 %v543
        %v634 = vunpack.c.l.b16 %v544
        %v635 = vunpack.c.h.b16 %v544
        %v636 = vunpack.c.l.b16 %v545
        %v637 = vunpack.c.h.b16 %v545
        %v638 = vunpack.c.l.b16 %v546
        %v639 = vunpack.c.h.b16 %v546
        %v640 = vunpack.c.l.b16 %v547
        %v641 = vunpack.c.h.b16 %v547
        %v642 = vunpack.c.l.b16 %v548
        %v643 = vunpack.c.h.b16 %v548
        %v644 = vunpack.c.l.b16 %v549
        %v645 = vunpack.c.h.b16 %v549
        %v646 = vunpack.c.l.b16 %v550
        %v647 = vunpack.c.h.b16 %v550
        %v648 = vunpack.c.l.b16 %v551
        %v649 = vunpack.c.h.b16 %v551
        %v650 = vunpack.c.l.b16 %v552
        %v651 = vunpack.c.h.b16 %v552
        %v652 = vunpack.c.l.b16 %v553
        %v653 = vunpack.c.h.b16 %v553
        %v654 = vunpack.c.l.b16 %v554
        %v655 = vunpack.c.h.b16 %v554
        %v656 = vunpack.c.l.b16 %v555
        %v657 = vunpack.c.h.b16 %v555
        %v658 = vunpack.c.l.b16 %v556
        %v659 = vunpack.c.h.b16 %v556
        %v660 = vunpack.c.l.b16 %v557
        %v661 = vunpack.c.h.b16 %v557
        %v662 = vunpack.c.l.b16 %v558
        %v663 = vunpack.c.h.b16 %v558
        %v664 = vunpack.c.l.b16 %v559
        %v665 = vunpack.c.h.b16 %v559
        %v666 = vunpack.c.l.b16 %v560
        %v667 = vunpack.c.h.b16 %v560
        %v668 = vunpack.c.l.b16 %v561
        %v669 = vunpack.c.h.b16 %v561
        %v670 = vpack.c.b16 %v608, %v606
        %v671 = vpack.c.b16 %v609, %v607
        %v672 = vpack.c.b16 %v612, %v610
        %v673 = vpack.c.b16 %v613, %v611
        %v674 = vpack.c.b16 %v616, %v614
        %v675 = vpack.c.b16 %v617, %v615
        %v676 = vpack.c.b16 %v620, %v618
        %v677 = vpack.c.b16 %v621, %v619
        %v678 = vpack.c.b16 %v624, %v622
        %v679 = vpack.c.b16 %v625, %v623
        %v680 = vpack.c.b16 %v628, %v626
        %v681 = vpack.c.b16 %v629, %v627
        %v682 = vpack.c.b16 %v632, %v630
        %v683 = vpack.c.b16 %v633, %v631
        %v684 = vpack.c.b16 %v636, %v634
        %v685 = vpack.c.b16 %v637, %v635
        %v686 = vpack.c.b16 %v640, %v638
        %v687 = vpack.c.b16 %v641, %v639
        %v688 = vpack.c.b16 %v644, %v642
        %v689 = vpack.c.b16 %v645, %v643
        %v690 = vpack.c.b16 %v648, %v646
        %v691 = vpack.c.b16 %v649, %v647
        %v692 = vpack.c.b16 %v652, %v650
        %v693 = vpack.c.b16 %v653, %v651
        %v694 = vpack.c.b16 %v656, %v654
        %v695 = vpack.c.b16 %v657, %v655
        %v696 = vpack.c.b16 %v660, %v658
        %v697 = vpack.c.b16 %v661, %v659
        %v698 = vpack.c.b16 %v664, %v662
        %v699 = vpack.c.b16 %v665, %v663
        %v700 = vpack.c.b16 %v668, %v666
        %v701 = vpack.c.b16 %v669, %v667
        %734 = vmatprep.subr.bf16.mxu0 %v685
        %735 = vmatpush1.bf16.msra.mxu0 %v684
        %736 = vmatprep.subr.bf16.mxu0 %v683
        %737 = vmatpush1.bf16.msra.mxu0 %v682
        %738 = vmatprep.subr.bf16.mxu0 %v681
        %739 = vmatpush1.bf16.msra.mxu0 %v680
        %740 = vmatprep.subr.bf16.mxu0 %v679
        %741 = vmatpush1.bf16.msra.mxu0 %v678
        %742 = vmatprep.subr.bf16.mxu0 %v677
        %743 = vmatpush1.bf16.msra.mxu0 %v676
        %744 = vmatprep.subr.bf16.mxu0 %v675
        %745 = vmatpush1.bf16.msra.mxu0 %v674
        %746 = vmatprep.subr.bf16.mxu0 %v673
        %747 = vmatpush1.bf16.msra.mxu0 %v672
        %748 = vmatprep.subr.bf16.mxu0 %v671
        %749 = vmatpush1.bf16.msra.mxu0 %v670
        %750 = vmatprep.subr.bf16.mxu0 %v701
        %751 = vmatpush2.bf16.msra.mxu0 %v700
        %752 = vmatprep.subr.bf16.mxu0 %v699
        %753 = vmatpush2.bf16.msra.mxu0 %v698
        %754 = vmatprep.subr.bf16.mxu0 %v697
        %755 = vmatpush2.bf16.msra.mxu0 %v696
        %756 = vmatprep.subr.bf16.mxu0 %v695
        %757 = vmatpush2.bf16.msra.mxu0 %v694
        %758 = vmatprep.subr.bf16.mxu0 %v693
        %759 = vmatpush2.bf16.msra.mxu0 %v692
        %760 = vmatprep.subr.bf16.mxu0 %v691
        %761 = vmatpush2.bf16.msra.mxu0 %v690
        %762 = vmatprep.subr.bf16.mxu0 %v689
        %763 = vmatpush2.bf16.msra.mxu0 %v688
        %764 = vmatprep.subr.bf16.mxu0 %v687
        %765 = vmatpush2.bf16.msra.mxu0 %v686
        %766 = vmatprep.mubr.bf16.mxu0 %v529
        %767 = vmatmul.mubr.bf16.gmra.mxu0 %v528
        %v768 = vpop.f32.mrf.mxu0
        %v769 = vadd.f32 %v567, %v768
        %v770 = vpop.f32.mrf.mxu0
        %v771 = vadd.f32 %v571, %v770
        %v772 = vpop.f32.mrf.mxu0
        %v773 = vadd.f32 %v567, %v772
        %v774 = vpop.f32.mrf.mxu0
        %v775 = vadd.f32 %v571, %v774
        %776 = vdwg.mxu0
        %v777 = vpack.c.bf16 %v773, %v769
        %v778 = vpack.c.bf16 %v775, %v771
        %v781 = vunpack.c.l.b16 %v777
        %v782 = vunpack.c.l.b16 %v778
        %v783 = vunpack.c.h.b16 %v777
        %v784 = vunpack.c.h.b16 %v778
        %v785 = vpack.c.b16 %v782, %v781
        %v786 = vpack.c.b16 %v784, %v783
        %789 = vst [vmem:[%s424] sm:$0xff] %v785
        %790 = vst [vmem:[%s424 + $0x8] sm:$0xff] %v786
        %s791 = sand.u32 %s158, 1
        %s792 = sand.u32 %s158, 1
        %s793 = smul.addr %s792, 16
        %s794 = scalar_lea.vmem [#allocation3], %s793
        // Predicated region
        $region79: #{transformer_forward.18} parent=73 // pred_check
          %p795 = pneg %p168
        $region80: #{transformer_forward.18} parent=73 // pred_check_branch
          %797 = sbr.rel (%p795) target = $region82
        $region81: #{transformer_forward.18} parent=73 // pred_region
          %s798 = smul.u32 2, %s20
          %s799 = smul.u32 2, %s21
          %s800 = smul.addr %s798, 6
          %s801 = sadd.s32 %s799, %s800
          %s802 = smul.addr %s801, 4
          %s803 = scalar_lea.vmem %s5, %s802
          // Predicated region
          $region83: #{transformer_forward.18} parent=81 // pred_check
            _
          $region84: #{transformer_forward.18} parent=81 // pred_check_branch
            %805 = sbr.rel (0) target = $region86
          $region85: #{transformer_forward.18} parent=81 // pred_region
            // Predicated region
            $region87: #{transformer_forward.18} parent=85 // pred_check
              _
            $region88: #{transformer_forward.18} parent=85 // pred_check_branch
              %807 = sbr.rel (0) target = $region90
            $region89: #{transformer_forward.18} parent=85 // pred_region
              // Predicated region
              $region102: #{transformer_forward.18} parent=89 // pred_check
                _
              $region103: #{transformer_forward.18} parent=89 // pred_check_branch
                %825 = sbr.rel (0) target = $region105
              $region104: #{transformer_forward.18} parent=89 // pred_region
                loop: start=0, step=1, limit=1
                $region106: #{transformer_forward.18} parent=104 // loop_pre_header
                  _
                $region107: #{transformer_forward.18} parent=104 // loop_header
                  %s827 = sphi 0, %s831
                  %p828 = scmp.ge.s32.totalorder %s827, 1
                  %s832 = sphi %s794, %s794
                  %s833 = sphi %s803, %s803
                $region108: #{transformer_forward.18} parent=104 // loop_header_branch
                  %830 = sbr.rel (%p828) target = $region112
                $region109: #{transformer_forward.18} parent=104 // loop_body
                  %v834 = vld [vmem:[%s832] sm:$0xff]
                  %835 = vst [vmem:[%s833] sm:$0xff] %v834
                  %v836 = vld [vmem:[%s832 + $0x8] sm:$0xff]
                  %837 = vst [vmem:[%s833 + $0x18] sm:$0xff] %v836
                $region110: #{transformer_forward.18} parent=104 // loop_footer
                  %s831 = sadd.s32 1, %s827
                $region111: #{transformer_forward.18} parent=104 // loop_footer_branch
                  %826 = sbr.rel target = $region107
                $region112: #{transformer_forward.18} parent=104 // loop_exit
                  _
              $region105: #{transformer_forward.18} parent=89 // pred_fallthru
                _
              // Predicated region
              $region113: #{transformer_forward.18} parent=89 // pred_check
                _
              $region114: #{transformer_forward.18} parent=89 // pred_check_branch
                %839 = sbr.rel target = $region116
              $region115: #{transformer_forward.18} parent=89 // pred_region
                _
              $region116: #{transformer_forward.18} parent=89 // pred_fallthru
                _
            $region90: #{transformer_forward.18} parent=85 // pred_fallthru
              _
            // Predicated region
            $region91: #{transformer_forward.18} parent=85 // pred_check
              _
            $region92: #{transformer_forward.18} parent=85 // pred_check_branch
              %809 = sbr.rel target = $region94
            $region93: #{transformer_forward.18} parent=85 // pred_region
              %s811 = ssub.s32 256, 1
              loop: start=0, step=1, limit=1
              $region95: #{transformer_forward.18} parent=93 // loop_pre_header
                _
              $region96: #{transformer_forward.18} parent=93 // loop_header
                %s813 = sphi 0, %s817
                %p814 = scmp.ge.s32.totalorder %s813, 1
                %s818 = sphi %s794, %s794
                %s819 = sphi %s803, %s803
              $region97: #{transformer_forward.18} parent=93 // loop_header_branch
                %816 = sbr.rel (%p814) target = $region101
              $region98: #{transformer_forward.18} parent=93 // loop_body
                %v820 = vld [vmem:[%s818] sm:%s811]
                %821 = vst [vmem:[%s819] sm:%s811] %v820
                %v822 = vld [vmem:[%s818 + $0x8] sm:%s811]
                %823 = vst [vmem:[%s819 + $0x18] sm:%s811] %v822
              $region99: #{transformer_forward.18} parent=93 // loop_footer
                %s817 = sadd.s32 1, %s813
              $region100: #{transformer_forward.18} parent=93 // loop_footer_branch
                %812 = sbr.rel target = $region96
              $region101: #{transformer_forward.18} parent=93 // loop_exit
                _
            $region94: #{transformer_forward.18} parent=85 // pred_fallthru
              _
          $region86: #{transformer_forward.18} parent=81 // pred_fallthru
            _
          %840 = vnop
        $region82: #{transformer_forward.18} parent=73 // pred_fallthru
          _
      $region74: #{transformer_forward.18} parent=5 // pred_fallthru
        _
      %p841 = scmp.le.s32.totalorder 2, %s11
      // Predicated region
      $region117: #{transformer_forward.18} parent=5 // pred_check
        %p842 = pneg %p841
      $region118: #{transformer_forward.18} parent=5 // pred_check_branch
        %844 = sbr.rel (%p842) target = $region120
      $region119: #{transformer_forward.18} parent=5 // pred_region
        %s845 = ssub.s32 %s11, 2
        // Predicated region
        $region121: #{transformer_forward.18} parent=119 // pred_check
          %p846 = pneg %p174
        $region122: #{transformer_forward.18} parent=119 // pred_check_branch
          %848 = sbr.rel (%p846) target = $region124
        $region123: #{transformer_forward.18} parent=119 // pred_region
          %s849 = sand.u32 %s159, 1
          %s850 = sand.u32 %s159, 1
          %s851 = smul.addr %s850, 16
          %s852 = scalar_lea.vmem [#allocation3], %s851
        $region124: #{transformer_forward.18} parent=119 // pred_fallthru
          _
      $region120: #{transformer_forward.18} parent=5 // pred_fallthru
        _
    $region6: #{transformer_forward.18} parent=1 // loop_footer
      %s15 = sadd.s32 1, %s11
    $region7: #{transformer_forward.18} parent=1 // loop_footer_branch
      %10 = sbr.rel target = $region3
    $region8: #{transformer_forward.18} parent=1 // loop_exit
      _

// kernel: transformer_forward.23
$region0: #{transformer_forward.23}
  #allocation0 [shape = 'u32[]', space=smem, size = 0x4, offset = 0x4, fixed_abs, tag = 'smem constant byte address 0x4 - core index']
  #allocation1 [shape = 'u32[144,128]{1,0:T(1,128)}', space=vmem, size = 0x12000, scoped, tag = 'internal scratch']
  %s0 = inlined_call_operand.vmem [shape: bf16[16,256], index: 0, kind: input, shape index: {}]
  %s1 = inlined_call_operand.vmem [shape: f32[1,256], index: 1, kind: input, shape index: {}]
  %s2 = inlined_call_operand.vmem [shape: f32[1,256], index: 2, kind: input, shape index: {}]
  %s3 = inlined_call_operand.vmem [shape: bf16[256,16], index: 3, kind: input, shape index: {}]
  %s4 = inlined_call_operand.vmem [shape: f32[1,16], index: 4, kind: input, shape index: {}]
  %s5 = inlined_call_operand.hbm [shape: f32[16,16], index: 5, kind: output, shape index: {}]
  %s6 = sld [smem:[#allocation0]]
  $region30: #{transformer_forward.23} parent=0
    _
  %s8 = ssub.s32 1, %s6
  %s9 = scalar_select 0, %s8, %s6
  $region1: #{transformer_forward.23} parent=0
    #allocation2 [shape = 'u8[8192]{0}', space=vmem, size = 0x2000, scoped, tag = 'output window, operand 0, single buffered']
    #allocation3 [shape = 's32[1]{0}', space=sflag, size = 0x4, scoped, tag = 'scoped memory for transformer_forward.23']
    %10 = vsyncpa [#allocation3], 0
    // Predicated region
    $region2: #{transformer_forward.23} parent=1 // pred_check
      _
    $region3: #{transformer_forward.23} parent=1 // pred_check_branch
      %12 = sbr.rel (0) target = $region5
    $region4: #{transformer_forward.23} parent=1 // pred_region
      _
    $region5: #{transformer_forward.23} parent=1 // pred_fallthru
      _
    // Predicated region
    $region6: #{transformer_forward.23} parent=1 // pred_check
      _
    $region7: #{transformer_forward.23} parent=1 // pred_check_branch
      %14 = sbr.rel (0) target = $region9
    $region8: #{transformer_forward.23} parent=1 // pred_region
      _
    $region9: #{transformer_forward.23} parent=1 // pred_fallthru
      _
    // Predicated region
    $region10: #{transformer_forward.23} parent=1 // pred_check
      _
    $region11: #{transformer_forward.23} parent=1 // pred_check_branch
      %16 = sbr.rel (0) target = $region13
    $region12: #{transformer_forward.23} parent=1 // pred_region
      _
    $region13: #{transformer_forward.23} parent=1 // pred_fallthru
      _
    // Predicated region
    $region14: #{transformer_forward.23} parent=1 // pred_check
      _
    $region15: #{transformer_forward.23} parent=1 // pred_check_branch
      %18 = sbr.rel (0) target = $region17
    $region16: #{transformer_forward.23} parent=1 // pred_region
      _
    $region17: #{transformer_forward.23} parent=1 // pred_fallthru
      _
    // Predicated region
    $region18: #{transformer_forward.23} parent=1 // pred_check
      _
    $region19: #{transformer_forward.23} parent=1 // pred_check_branch
      %20 = sbr.rel (0) target = $region21
    $region20: #{transformer_forward.23} parent=1 // pred_region
      _
    $region21: #{transformer_forward.23} parent=1 // pred_fallthru
      _
    %v22 = vld [vmem:[%s0] sm:$0xff]
    %v23 = vld [vmem:[%s0 + $0x8] sm:$0xff]
    %v24 = vunpack.c.l.bf16 %v22
    %v25 = vunpack.c.h.bf16 %v22
    %v26 = vunpack.c.l.bf16 %v23
    %v27 = vunpack.c.h.bf16 %v23
    %v28 = vadd.f32 %v24, %v25
    %29 = vadd.xlane.f32.xlu0 %v28
    %v30 = vpop.xlane.xlu0 %29
    %v31 = vadd.f32 %v26, %v27
    %32 = vadd.xlane.f32.xlu0 %v31
    %v33 = vpop.xlane.xlu0 %32
    %v34 = vrcp.pop 256.0
    %v35 = vmul.f32 %v30, %v34
    %v36 = vmul.f32 %v33, %v34
    %v37 = vsub.f32 %v24, %v35
    %v38 = vsub.f32 %v25, %v35
    %v39 = vsub.f32 %v26, %v36
    %v40 = vsub.f32 %v27, %v36
    %v41 = vmul.f32 %v37, %v37
    %v42 = vmul.f32 %v38, %v38
    %v43 = vmul.f32 %v39, %v39
    %v44 = vmul.f32 %v40, %v40
    %v45 = vadd.f32 %v41, %v42
    %46 = vadd.xlane.f32.xlu0 %v45
    %v47 = vpop.xlane.xlu0 %46
    %v48 = vadd.f32 %v43, %v44
    %49 = vadd.xlane.f32.xlu0 %v48
    %v50 = vpop.xlane.xlu0 %49
    %v51 = vrcp.pop 255.0
    %v52 = vmul.f32 %v47, %v51
    %v53 = vmul.f32 %v50, %v51
    %v54 = vrsqrt.pop %v52
    %v55 = vmul.f32 %v52, %v54
    %vm56 = vcmp.eq.f32.partialorder %v52, inf
    %v57 = vsel %vm56, %v52, %v55
    %vm58 = vcmp.eq.f32.partialorder %v52, 0.0
    %v59 = vand.u32 %v52, 2147483648
    %v60 = vsel %vm58, %v59, %v57
    %v61 = vrsqrt.pop %v53
    %v62 = vmul.f32 %v53, %v61
    %vm63 = vcmp.eq.f32.partialorder %v53, inf
    %v64 = vsel %vm63, %v53, %v62
    %vm65 = vcmp.eq.f32.partialorder %v53, 0.0
    %v66 = vand.u32 %v53, 2147483648
    %v67 = vsel %vm65, %v66, %v64
    %v68 = vadd.f32 %v60, 1e-06
    %v69 = vadd.f32 %v67, 1e-06
    %v70 = vrcp.pop %v68
    %v71 = vmul.f32 1.0, %v70
    %v72 = vrcp.pop %v69
    %v73 = vmul.f32 1.0, %v72
    %v74 = vld [vmem:[%s1] sm:$0x3]
    %v76 = vlaneseq
    %v77 = vshrl.u32 %v76, 7
    %v78 = vsub.s32 0, %v77
    %v79 = vrot.slane %v74, %v78
    %v80 = vlaneseq
    %v81 = vshrl.u32 %v80, 7
    %v82 = vsub.s32 1, %v81
    %v83 = vrot.slane %v74, %v82
    %v86 = vmul.f32 %v79, %v37
    %v87 = vmul.f32 %v83, %v38
    %v88 = vmul.f32 %v79, %v39
    %v89 = vmul.f32 %v83, %v40
    %v90 = vmul.f32 %v86, %v71
    %v91 = vmul.f32 %v87, %v71
    %v92 = vmul.f32 %v88, %v73
    %v93 = vmul.f32 %v89, %v73
    %v94 = vld [vmem:[%s2] sm:$0x3]
    %v96 = vlaneseq
    %v97 = vshrl.u32 %v96, 7
    %v98 = vsub.s32 0, %v97
    %v99 = vrot.slane %v94, %v98
    %v100 = vlaneseq
    %v101 = vshrl.u32 %v100, 7
    %v102 = vsub.s32 1, %v101
    %v103 = vrot.slane %v94, %v102
    %v106 = vadd.f32 %v90, %v99
    %v107 = vadd.f32 %v91, %v103
    %v108 = vadd.f32 %v92, %v99
    %v109 = vadd.f32 %v93, %v103
    %v110 = vpack.c.bf16 %v108, %v106
    %v111 = vpack.c.bf16 %v109, %v107
    %v112 = vld [vmem:[%s3] sm:$0xf]
    %v113 = vld [vmem:[%s3 + $0x4] sm:$0xf]
    %v114 = vld [vmem:[%s3 + $0x8] sm:$0xf]
    %v115 = vld [vmem:[%s3 + $0xc] sm:$0xf]
    %v116 = vld [vmem:[%s3 + $0x10] sm:$0xf]
    %v117 = vld [vmem:[%s3 + $0x14] sm:$0xf]
    %v118 = vld [vmem:[%s3 + $0x18] sm:$0xf]
    %v119 = vld [vmem:[%s3 + $0x1c] sm:$0xf]
    %v120 = vld [vmem:[%s3 + $0x20] sm:$0xf]
    %v121 = vld [vmem:[%s3 + $0x24] sm:$0xf]
    %v122 = vld [vmem:[%s3 + $0x28] sm:$0xf]
    %v123 = vld [vmem:[%s3 + $0x2c] sm:$0xf]
    %v124 = vld [vmem:[%s3 + $0x30] sm:$0xf]
    %v125 = vld [vmem:[%s3 + $0x34] sm:$0xf]
    %v126 = vld [vmem:[%s3 + $0x38] sm:$0xf]
    %v127 = vld [vmem:[%s3 + $0x3c] sm:$0xf]
    %v128 = vld [vmem:[%s3 + $0x40] sm:$0xf]
    %v129 = vld [vmem:[%s3 + $0x44] sm:$0xf]
    %v130 = vld [vmem:[%s3 + $0x48] sm:$0xf]
    %v131 = vld [vmem:[%s3 + $0x4c] sm:$0xf]
    %v132 = vld [vmem:[%s3 + $0x50] sm:$0xf]
    %v133 = vld [vmem:[%s3 + $0x54] sm:$0xf]
    %v134 = vld [vmem:[%s3 + $0x58] sm:$0xf]
    %v135 = vld [vmem:[%s3 + $0x5c] sm:$0xf]
    %v136 = vld [vmem:[%s3 + $0x60] sm:$0xf]
    %v137 = vld [vmem:[%s3 + $0x64] sm:$0xf]
    %v138 = vld [vmem:[%s3 + $0x68] sm:$0xf]
    %v139 = vld [vmem:[%s3 + $0x6c] sm:$0xf]
    %v140 = vld [vmem:[%s3 + $0x70] sm:$0xf]
    %v141 = vld [vmem:[%s3 + $0x74] sm:$0xf]
    %v142 = vld [vmem:[%s3 + $0x78] sm:$0xf]
    %v143 = vld [vmem:[%s3 + $0x7c] sm:$0xf]
    %v144 = vld [vmem:[%s4] sm:$0x1]
    %v146 = vlaneseq
    %v147 = vshrl.u32 %v146, 7
    %v148 = vsub.s32 0, %v147
    %v149 = vrot.slane %v144, %v148
    %v183 = vunpack.c.l.b16 %v112
    %v184 = vunpack.c.l.b16 %v113
    %v185 = vunpack.c.l.b16 %v114
    %v186 = vunpack.c.l.b16 %v115
    %v187 = vunpack.c.l.b16 %v116
    %v188 = vunpack.c.l.b16 %v117
    %v189 = vunpack.c.l.b16 %v118
    %v190 = vunpack.c.l.b16 %v119
    %v191 = vunpack.c.l.b16 %v120
    %v192 = vunpack.c.l.b16 %v121
    %v193 = vunpack.c.l.b16 %v122
    %v194 = vunpack.c.l.b16 %v123
    %v195 = vunpack.c.l.b16 %v124
    %v196 = vunpack.c.l.b16 %v125
    %v197 = vunpack.c.l.b16 %v126
    %v198 = vunpack.c.l.b16 %v127
    %v199 = vunpack.c.l.b16 %v128
    %v200 = vunpack.c.l.b16 %v129
    %v201 = vunpack.c.l.b16 %v130
    %v202 = vunpack.c.l.b16 %v131
    %v203 = vunpack.c.l.b16 %v132
    %v204 = vunpack.c.l.b16 %v133
    %v205 = vunpack.c.l.b16 %v134
    %v206 = vunpack.c.l.b16 %v135
    %v207 = vunpack.c.l.b16 %v136
    %v208 = vunpack.c.l.b16 %v137
    %v209 = vunpack.c.l.b16 %v138
    %v210 = vunpack.c.l.b16 %v139
    %v211 = vunpack.c.l.b16 %v140
    %v212 = vunpack.c.l.b16 %v141
    %v213 = vunpack.c.l.b16 %v142
    %v214 = vunpack.c.l.b16 %v143
    %v215 = vpack.c.b16 %v184, %v183
    %v216 = vpack.c.b16 %v186, %v185
    %v217 = vpack.c.b16 %v188, %v187
    %v218 = vpack.c.b16 %v190, %v189
    %v219 = vpack.c.b16 %v192, %v191
    %v220 = vpack.c.b16 %v194, %v193
    %v221 = vpack.c.b16 %v196, %v195
    %v222 = vpack.c.b16 %v198, %v197
    %v223 = vpack.c.b16 %v200, %v199
    %v224 = vpack.c.b16 %v202, %v201
    %v225 = vpack.c.b16 %v204, %v203
    %v226 = vpack.c.b16 %v206, %v205
    %v227 = vpack.c.b16 %v208, %v207
    %v228 = vpack.c.b16 %v210, %v209
    %v229 = vpack.c.b16 %v212, %v211
    %v230 = vpack.c.b16 %v214, %v213
    %247 = vmatprep.subr.bf16.mxu0 0
    %248 = vmatpush1.bf16.msra.mxu0 %v222
    %249 = vmatprep.subr.bf16.mxu0 0
    %250 = vmatpush1.bf16.msra.mxu0 %v221
    %251 = vmatprep.subr.bf16.mxu0 0
    %252 = vmatpush1.bf16.msra.mxu0 %v220
    %253 = vmatprep.subr.bf16.mxu0 0
    %254 = vmatpush1.bf16.msra.mxu0 %v219
    %255 = vmatprep.subr.bf16.mxu0 0
    %256 = vmatpush1.bf16.msra.mxu0 %v218
    %257 = vmatprep.subr.bf16.mxu0 0
    %258 = vmatpush1.bf16.msra.mxu0 %v217
    %259 = vmatprep.subr.bf16.mxu0 0
    %260 = vmatpush1.bf16.msra.mxu0 %v216
    %261 = vmatprep.subr.bf16.mxu0 0
    %262 = vmatpush1.bf16.msra.mxu0 %v215
    %263 = vmatprep.subr.bf16.mxu0 0
    %264 = vmatpush2.bf16.msra.mxu0 %v230
    %265 = vmatprep.subr.bf16.mxu0 0
    %266 = vmatpush2.bf16.msra.mxu0 %v229
    %267 = vmatprep.subr.bf16.mxu0 0
    %268 = vmatpush2.bf16.msra.mxu0 %v228
    %269 = vmatprep.subr.bf16.mxu0 0
    %270 = vmatpush2.bf16.msra.mxu0 %v227
    %271 = vmatprep.subr.bf16.mxu0 0
    %272 = vmatpush2.bf16.msra.mxu0 %v226
    %273 = vmatprep.subr.bf16.mxu0 0
    %274 = vmatpush2.bf16.msra.mxu0 %v225
    %275 = vmatprep.subr.bf16.mxu0 0
    %276 = vmatpush2.bf16.msra.mxu0 %v224
    %277 = vmatprep.subr.bf16.mxu0 0
    %278 = vmatpush2.bf16.msra.mxu0 %v223
    %279 = vmatprep.mubr.bf16.mxu0 %v111
    %280 = vmatmul.mubr.bf16.gmra.mxu0 %v110
    %v281 = vpop.f32.mrf.mxu0
    %v282 = vadd.f32 %v149, %v281
    %v283 = vpop.f32.mrf.mxu0
    %v284 = vpop.f32.mrf.mxu0
    %v285 = vadd.f32 %v149, %v284
    %v286 = vpop.f32.mrf.mxu0
    %287 = vdwg.mxu0
    %vm288 = vcmask 130048
    %289 = vst.msk [vmem:[#allocation2] sm:$0xff] %vm288, %v282
    %290 = vst.msk [vmem:[#allocation2 + $0x8] sm:$0xff] %vm288, %v285
    // Predicated region
    $region22: #{transformer_forward.23} parent=1 // pred_check
      _
    $region23: #{transformer_forward.23} parent=1 // pred_check_branch
      %292 = sbr.rel (0) target = $region25
    $region24: #{transformer_forward.23} parent=1 // pred_region
      %s294 = ssub.s32 256, 256
      %295 = vsyncadd [#allocation3], %s294
      %s296 = sshll.u32 [#allocation2], 4
      %s297 = int_to_ptr.vmem [resolvable:$true] %s296
      %302 = dma.vmem_to_hbm [thread:$0]  %s297, 256, %s5, [#allocation3], 128, 128, 8
    $region25: #{transformer_forward.23} parent=1 // pred_fallthru
      _
    // Predicated region
    $region26: #{transformer_forward.23} parent=1 // pred_check
      _
    $region27: #{transformer_forward.23} parent=1 // pred_check_branch
      %304 = sbr.rel (0) target = $region29
    $region28: #{transformer_forward.23} parent=1 // pred_region
      %305 = dma.done [#allocation3], 256
    $region29: #{transformer_forward.23} parent=1 // pred_fallthru
      _
    %306 = vsyncpa [#allocation3], 1

</llo_original>
